<compile_context>
chip_gen: v5e
topology: v5e:2x2
jax: 0.10.0
libtpu: 0.0.40
codegen_flags: <defaults>
</compile_context>

<pallas_src>
import functools

import jax
import jax.numpy as jnp
from jax.experimental import pallas as pl
from jax.experimental.pallas import tpu as pltpu


def _round_up(x, m):
    return (x + m - 1) // m * m


def _pick_tk(K):
    """Pick a K tile: single step if small, else a multiple of 128 dividing K."""
    k128 = _round_up(K, 128)
    if k128 <= 2048:
        return k128
    for t in range(2048, 0, -128):
        if K % t == 0:
            return t
    return 512  # fallback: requires K padding


# ---------------------------------------------------------------------------
# Pallas kernels
# ---------------------------------------------------------------------------
def _epilogue(y, scale, shift, activation):
    y = y * scale + shift
    if activation == "relu":
        y = jnp.maximum(y, 0.0)
    elif activation == "sigmoid":
        y = jax.nn.sigmoid(y)
    return y


def mm_fused_kernel_acc(x_ref, w_ref, scale_ref, shift_ref, o_ref, acc_ref, *,
                        activation):
    """out = act((x @ w) * scale + shift), accumulated over the K grid axis."""

    @pl.when(pl.program_id(2) == 0)
    def _init():
        acc_ref[...] = jnp.zeros_like(acc_ref)

    acc_ref[...] += jnp.dot(x_ref[...], w_ref[...],
                            preferred_element_type=jnp.float32)

    @pl.when(pl.program_id(2) == pl.num_programs(2) - 1)
    def _finalize():
        y = _epilogue(acc_ref[...], scale_ref[...], shift_ref[...], activation)
        o_ref[...] = y.astype(o_ref.dtype)


def mm_fused_kernel_1k(x_ref, w_ref, scale_ref, shift_ref, o_ref, *, activation):
    """Single K-step variant: no accumulator scratch, epilogue fused directly."""
    y = jnp.dot(x_ref[...], w_ref[...], preferred_element_type=jnp.float32)
    y = _epilogue(y, scale_ref[...], shift_ref[...], activation)
    o_ref[...] = y.astype(o_ref.dtype)


# ---------------------------------------------------------------------------
# Pallas wrapper
# ---------------------------------------------------------------------------
def matmul_fused(x, w, scale, shift, *, activation="none", out_dtype=jnp.float32):
    """x: (M, K), w: (K, N). Returns act((x @ w) * scale + shift) as out_dtype.

    Operands are streamed to the MXU in bf16 (f32 accumulation, f32 epilogue).
    M, K, N are padded to tile multiples internally (N up to a multiple of 128
    so the output store path is lane-dense) and the result is sliced back.
    """
    M, K = x.shape
    Kw, N = w.shape
    assert K == Kw

    # --- tile selection ----------------------------------------------------
    tm = min(512, _round_up(M, 16))   # 16: bf16 sublane packing safe
    M_pad = _round_up(M, tm)

    tk = _pick_tk(K)
    K_pad = _round_up(K, tk)
    nk = K_pad // tk

    N_pad = _round_up(N, 128)
    if N_pad <= 512:
        tn = N_pad
    elif N_pad % 512 == 0:
        tn = 512
    else:
        tn = 128
    nn_ = N_pad // tn

    # --- operand prep (bf16 streams, zero-padded consistently) -------------
    x_p = x if x.dtype == jnp.bfloat16 else x.astype(jnp.bfloat16)
    if (M_pad - M) or (K_pad - K):
        x_p = jnp.pad(x_p, ((0, M_pad - M), (0, K_pad - K)))
    w_p = w if w.dtype == jnp.bfloat16 else w.astype(jnp.bfloat16)
    if (K_pad - K) or (N_pad - N):
        w_p = jnp.pad(w_p, ((0, K_pad - K), (0, N_pad - N)))
    scale_p = scale.astype(jnp.float32).reshape(1, N)
    shift_p = shift.astype(jnp.float32).reshape(1, N)
    if N_pad - N:
        scale_p = jnp.pad(scale_p, ((0, 0), (0, N_pad - N)))
        shift_p = jnp.pad(shift_p, ((0, 0), (0, N_pad - N)))

    out_shape = jax.ShapeDtypeStruct((M_pad, N_pad), out_dtype)

    if nk == 1:
        # All conv layers land here (K_pad <= 2048): no accumulator needed.
        out = pl.pallas_call(
            functools.partial(mm_fused_kernel_1k, activation=activation),
            out_shape=out_shape,
            grid_spec=pltpu.PrefetchScalarGridSpec(
                num_scalar_prefetch=0,
                grid=(M_pad // tm, nn_),
                in_specs=[
                    pl.BlockSpec((tm, K_pad), lambda i, j: (i, 0)),
                    pl.BlockSpec((K_pad, tn), lambda i, j: (0, j)),
                    pl.BlockSpec((1, tn), lambda i, j: (0, j)),
                    pl.BlockSpec((1, tn), lambda i, j: (0, j)),
                ],
                out_specs=pl.BlockSpec((tm, tn), lambda i, j: (i, j)),
            ),
            compiler_params=pltpu.CompilerParams(
                dimension_semantics=("parallel", "parallel"),
                vmem_limit_bytes=32 << 20,
            ),
        )(x_p, w_p, scale_p, shift_p)
    else:
        # fc1 lands here: grid (M-tiles, 2, 11), K innermost ("arbitrary"),
        # N tiles "parallel" so v7x's two TensorCores split the weight stream.
        out = pl.pallas_call(
            functools.partial(mm_fused_kernel_acc, activation=activation),
            out_shape=out_shape,
            grid_spec=pltpu.PrefetchScalarGridSpec(
                num_scalar_prefetch=0,
                grid=(M_pad // tm, nn_, nk),
                in_specs=[
                    pl.BlockSpec((tm, tk), lambda i, j, k: (i, k)),
                    pl.BlockSpec((tk, tn), lambda i, j, k: (k, j)),
                    pl.BlockSpec((1, tn), lambda i, j, k: (0, j)),
                    pl.BlockSpec((1, tn), lambda i, j, k: (0, j)),
                ],
                out_specs=pl.BlockSpec((tm, tn), lambda i, j, k: (i, j)),
                scratch_shapes=[pltpu.VMEM((tm, tn), jnp.float32)],
            ),
            compiler_params=pltpu.CompilerParams(
                dimension_semantics=("parallel", "parallel", "arbitrary"),
                vmem_limit_bytes=32 << 20,
            ),
        )(x_p, w_p, scale_p, shift_p)

    if (M_pad - M) or (N_pad - N):
        out = out[:M, :N]
    return out


# ---------------------------------------------------------------------------
# Conv / pool glue (plain JAX around the Pallas matmul)
# ---------------------------------------------------------------------------
def im2col(x_nhwc, *, ksize=3, stride=1, padding=1):
    N, H, W, C = x_nhwc.shape
    Ho = (H + 2 * padding - ksize) // stride + 1
    Wo = (W + 2 * padding - ksize) // stride + 1
    xp = jnp.pad(x_nhwc, ((0, 0), (padding, padding), (padding, padding), (0, 0)))
    cols = []
    for dy in range(ksize):
        for dx in range(ksize):
            cols.append(
                xp[:, dy:dy + (Ho - 1) * stride + 1:stride,
                      dx:dx + (Wo - 1) * stride + 1:stride, :]
            )
    patches = jnp.concatenate(cols, axis=-1)  # (N, Ho, Wo, k*k*C), cols = (kh, kw, cin)
    return patches.reshape(N * Ho * Wo, ksize * ksize * C), Ho, Wo


def conv_bn_act(x_nhwc, w, b, bn, *, stride=1, activation="relu"):
    """3x3 conv (padding=1) + folded BatchNorm + activation via Pallas matmul.

    Output activations are stored in bf16 (they are consumed in bf16 by the
    next matmul anyway); accumulation and the BN/act epilogue stay in f32.
    """
    kh, kw, cin, cout = w.shape
    patches, Ho, Wo = im2col(x_nhwc, ksize=kh, stride=stride, padding=1)
    gamma, beta, mean, var, eps = bn
    inv = gamma / jnp.sqrt(var + eps)
    scale = inv
    shift = (b - mean) * inv + beta
    y = matmul_fused(patches, w.reshape(kh * kw * cin, cout), scale, shift,
                     activation=activation, out_dtype=jnp.bfloat16)
    N = x_nhwc.shape[0]
    return y.reshape(N, Ho, Wo, cout)


def maxpool_2x2_pad1(x_nhwc):
    """MaxPool2d(kernel=2, stride=2, padding=1); tiny, so plain XLA (fused)."""
    N, H, W, C = x_nhwc.shape
    Ho = (H + 2 - 2) // 2 + 1
    Wo = (W + 2 - 2) // 2 + 1
    xp = jnp.pad(x_nhwc, ((0, 0), (1, 1), (1, 1), (0, 0)),
                 constant_values=-jnp.inf)

    def win(dy, dx):
        return xp[:, dy:dy + 2 * Ho:2, dx:dx + 2 * Wo:2, :]

    return jnp.maximum(jnp.maximum(win(0, 0), win(0, 1)),
                       jnp.maximum(win(1, 0), win(1, 1)))


# ---------------------------------------------------------------------------
# Parameters (deterministic, Kaiming-normal like the PyTorch module)
# ---------------------------------------------------------------------------
def _kaiming(key, shape, fan_in, dtype=jnp.float32):
    w = jax.random.normal(key, shape, jnp.float32) * jnp.sqrt(2.0 / fan_in)
    return w.astype(dtype)


def _bn(num_features):
    f = num_features
    return (jnp.ones((f,), jnp.float32),    # gamma
            jnp.zeros((f,), jnp.float32),   # beta
            jnp.zeros((f,), jnp.float32),   # running_mean
            jnp.ones((f,), jnp.float32),    # running_var
            jnp.float32(1e-5))              # eps


def init_params(key):
    ks = jax.random.split(key, 6)
    p = {
        # conv weights stored as (kh, kw, cin, cout)
        "conv1_w": _kaiming(ks[0], (3, 3, 1, 32), 1 * 9),
        "conv1_b": jnp.zeros((32,), jnp.float32),
        "conv2_w": _kaiming(ks[1], (3, 3, 32, 32), 32 * 9),
        "conv2_b": jnp.zeros((32,), jnp.float32),
        "conv3_w": _kaiming(ks[2], (3, 3, 32, 64), 32 * 9),
        "conv3_b": jnp.zeros((64,), jnp.float32),
        "conv4_w": _kaiming(ks[3], (3, 3, 64, 64), 64 * 9),
        "conv4_b": jnp.zeros((64,), jnp.float32),
        # fc1 weight stored (in, out) and in bf16: it is pure weight streaming,
        # keeping it bf16 halves HBM traffic and avoids a per-forward convert.
        "fc1_w": _kaiming(ks[4], (15488, 1024), 15488, dtype=jnp.bfloat16),
        "fc1_b": jnp.zeros((1024,), jnp.float32),
        "fcout_w": _kaiming(ks[5], (1024, 10), 1024),
        "fcout_b": jnp.zeros((10,), jnp.float32),
        "bn1": _bn(32), "bn2": _bn(32), "bn3": _bn(64), "bn4": _bn(64),
        "bnfc1": _bn(1024),
    }
    return p


# ---------------------------------------------------------------------------
# Forward pass (mirrors CNN.forward, eval mode)
# ---------------------------------------------------------------------------
def cnn_forward(params, sounds_nchw):
    # NCHW -> NHWC once; activations flow in bf16 (MXU input dtype) from here.
    x = jnp.transpose(sounds_nchw, (0, 2, 3, 1)).astype(jnp.bfloat16)

    x = conv_bn_act(x, params["conv1_w"], params["conv1_b"], params["bn1"])
    # dropout: identity in eval mode
    x = conv_bn_act(x, params["conv2_w"], params["conv2_b"], params["bn2"])
    x = maxpool_2x2_pad1(x)
    x = conv_bn_act(x, params["conv3_w"], params["conv3_b"], params["bn3"])
    x = conv_bn_act(x, params["conv4_w"], params["conv4_b"], params["bn4"], stride=2)

    # torch.flatten(x, start_dim=1) on NCHW -> transpose back before flattening
    N = x.shape[0]
    x = jnp.transpose(x, (0, 3, 1, 2)).reshape(N, -1)  # (N, 64*22*11) = (N, 15488)

    # fc1 + BatchNorm1d + sigmoid (folded into the Pallas matmul epilogue)
    gamma, beta, mean, var, eps = params["bnfc1"]
    inv = gamma / jnp.sqrt(var + eps)
    x = matmul_fused(x, params["fc1_w"], inv,
                     (params["fc1_b"] - mean) * inv + beta,
                     activation="sigmoid", out_dtype=jnp.float32)

    # fcout: 2x1024x10 affine — plain XLA dot (a pallas_call here is pure overhead)
    x = jnp.dot(x, params["fcout_w"],
                preferred_element_type=jnp.float32) + params["fcout_b"]
    return x


if __name__ == "__main__":
    key = jax.random.PRNGKey(0)
    pkey, xkey = jax.random.split(key)
    params = init_params(pkey)

    # fc1 expects 15488 = 64 * 22 * 11 features -> input spatial 85 x 41, 1 channel.
    # Small batch of 2, NCHW like the PyTorch module.
    sounds = jax.random.normal(xkey, (2, 1, 85, 41), jnp.float32)

    fwd = jax.jit(cnn_forward)
    out = fwd(params, sounds)
    out = jax.block_until_ready(out)

    assert out.shape == (2, 10), out.shape
    assert bool(jnp.all(jnp.isfinite(out)))
    print("KERNEL_OK")
</pallas_src>

<mosaic_0001>
module attributes {stable_mosaic.version = 11 : i64} {
  func.func @mm_fused_kernel_1k(%arg0: i32, %arg1: i32, %arg2: memref<512x128xbf16, #tpu.memory_space<vmem>>, %arg3: memref<128x128xbf16, #tpu.memory_space<vmem>>, %arg4: memref<1x128xf32, #tpu.memory_space<vmem>>, %arg5: memref<1x128xf32, #tpu.memory_space<vmem>>, %arg6: memref<512x128xbf16, #tpu.memory_space<vmem>>) attributes {dimension_semantics = [#tpu.dimension_semantics<parallel>, #tpu.dimension_semantics<parallel>], iteration_bounds = array<i64: 14, 1>, scalar_prefetch = 0 : i64, scratch_operands = 0 : i64, tpu.core_type = #tpu.core_type<tc>, window_params = [{transform_indices = @transform_0, window_bounds = array<i64: 512, 128>}, {transform_indices = @transform_1, window_bounds = array<i64: 128, 128>}, {transform_indices = @transform_2, window_bounds = array<i64: 1, 128>}, {transform_indices = @transform_3, window_bounds = array<i64: 1, 128>}, {transform_indices = @transform_4, window_bounds = array<i64: 512, 128>}]} {
    %c0 = arith.constant 0 : index
    %c0_0 = arith.constant 0 : index
    %0 = vector.load %arg2[%c0, %c0_0] : memref<512x128xbf16, #tpu.memory_space<vmem>>, vector<512x128xbf16>
    %c0_1 = arith.constant 0 : index
    %c0_2 = arith.constant 0 : index
    %1 = vector.load %arg3[%c0_1, %c0_2] : memref<128x128xbf16, #tpu.memory_space<vmem>>, vector<128x128xbf16>
    %cst = arith.constant dense<0.000000e+00> : vector<512x128xf32>
    %2 = tpu.matmul %0, %1, %cst {dimension_numbers = #tpu.dot_dimension_numbers<[1], [0], [0], [1], [0, 0, 1, 1], [], []>} : vector<512x128xbf16>, vector<128x128xbf16>, vector<512x128xf32> -> vector<512x128xf32>
    %c0_3 = arith.constant 0 : index
    %c0_4 = arith.constant 0 : index
    %3 = vector.load %arg4[%c0_3, %c0_4] : memref<1x128xf32, #tpu.memory_space<vmem>>, vector<1x128xf32>
    %c0_5 = arith.constant 0 : index
    %c0_6 = arith.constant 0 : index
    %4 = vector.load %arg5[%c0_5, %c0_6] : memref<1x128xf32, #tpu.memory_space<vmem>>, vector<1x128xf32>
    %5 = vector.broadcast %3 : vector<1x128xf32> to vector<512x128xf32>
    %6 = arith.mulf %2, %5 : vector<512x128xf32>
    %7 = vector.broadcast %4 : vector<1x128xf32> to vector<512x128xf32>
    %8 = arith.addf %6, %7 : vector<512x128xf32>
    %cst_7 = arith.constant 0.000000e+00 : f32
    %9 = vector.broadcast %cst_7 : f32 to vector<512x128xf32>
    %10 = arith.maximumf %8, %9 : vector<512x128xf32>
    %11 = arith.truncf %10 : vector<512x128xf32> to vector<512x128xbf16>
    %c0_8 = arith.constant 0 : index
    %c0_9 = arith.constant 0 : index
    %12 = vector.load %arg6[%c0_8, %c0_9] : memref<512x128xbf16, #tpu.memory_space<vmem>>, vector<512x128xbf16>
    tpu.vector_store %arg6[%c0_8, %c0_9], %11 {strides = array<i32>} : memref<512x128xbf16, #tpu.memory_space<vmem>>, vector<512x128xbf16>,
    return
  }
  func.func @transform_0(%arg0: i32, %arg1: i32) -> (i32, i32) {
    %c0_i32 = arith.constant 0 : i32
    %c0_i32_0 = arith.constant 0 : i32
    return %arg0, %c0_i32 : i32, i32
  }
  func.func @transform_1(%arg0: i32, %arg1: i32) -> (i32, i32) {
    %c0_i32 = arith.constant 0 : i32
    %c0_i32_0 = arith.constant 0 : i32
    return %c0_i32, %arg1 : i32, i32
  }
  func.func @transform_2(%arg0: i32, %arg1: i32) -> (i32, i32) {
    %c0_i32 = arith.constant 0 : i32
    %c0_i32_0 = arith.constant 0 : i32
    return %c0_i32, %arg1 : i32, i32
  }
  func.func @transform_3(%arg0: i32, %arg1: i32) -> (i32, i32) {
    %c0_i32 = arith.constant 0 : i32
    %c0_i32_0 = arith.constant 0 : i32
    return %c0_i32, %arg1 : i32, i32
  }
  func.func @transform_4(%arg0: i32, %arg1: i32) -> (i32, i32) {
    %c0_i32 = arith.constant 0 : i32
    return %arg0, %arg1 : i32, i32
  }
}

module attributes {stable_mosaic.version = 11 : i64} {
  func.func @mm_fused_kernel_1k(%arg0: i32, %arg1: i32, %arg2: memref<512x384xbf16, #tpu.memory_space<vmem>>, %arg3: memref<384x128xbf16, #tpu.memory_space<vmem>>, %arg4: memref<1x128xf32, #tpu.memory_space<vmem>>, %arg5: memref<1x128xf32, #tpu.memory_space<vmem>>, %arg6: memref<512x128xbf16, #tpu.memory_space<vmem>>) attributes {dimension_semantics = [#tpu.dimension_semantics<parallel>, #tpu.dimension_semantics<parallel>], iteration_bounds = array<i64: 14, 1>, scalar_prefetch = 0 : i64, scratch_operands = 0 : i64, tpu.core_type = #tpu.core_type<tc>, window_params = [{transform_indices = @transform_0, window_bounds = array<i64: 512, 384>}, {transform_indices = @transform_1, window_bounds = array<i64: 384, 128>}, {transform_indices = @transform_2, window_bounds = array<i64: 1, 128>}, {transform_indices = @transform_3, window_bounds = array<i64: 1, 128>}, {transform_indices = @transform_4, window_bounds = array<i64: 512, 128>}]} {
    %c0 = arith.constant 0 : index
    %c0_0 = arith.constant 0 : index
    %0 = vector.load %arg2[%c0, %c0_0] : memref<512x384xbf16, #tpu.memory_space<vmem>>, vector<512x384xbf16>
    %c0_1 = arith.constant 0 : index
    %c0_2 = arith.constant 0 : index
    %1 = vector.load %arg3[%c0_1, %c0_2] : memref<384x128xbf16, #tpu.memory_space<vmem>>, vector<384x128xbf16>
    %cst = arith.constant dense<0.000000e+00> : vector<512x128xf32>
    %2 = tpu.matmul %0, %1, %cst {dimension_numbers = #tpu.dot_dimension_numbers<[1], [0], [0], [1], [0, 0, 1, 1], [], []>} : vector<512x384xbf16>, vector<384x128xbf16>, vector<512x128xf32> -> vector<512x128xf32>
    %c0_3 = arith.constant 0 : index
    %c0_4 = arith.constant 0 : index
    %3 = vector.load %arg4[%c0_3, %c0_4] : memref<1x128xf32, #tpu.memory_space<vmem>>, vector<1x128xf32>
    %c0_5 = arith.constant 0 : index
    %c0_6 = arith.constant 0 : index
    %4 = vector.load %arg5[%c0_5, %c0_6] : memref<1x128xf32, #tpu.memory_space<vmem>>, vector<1x128xf32>
    %5 = vector.broadcast %3 : vector<1x128xf32> to vector<512x128xf32>
    %6 = arith.mulf %2, %5 : vector<512x128xf32>
    %7 = vector.broadcast %4 : vector<1x128xf32> to vector<512x128xf32>
    %8 = arith.addf %6, %7 : vector<512x128xf32>
    %cst_7 = arith.constant 0.000000e+00 : f32
    %9 = vector.broadcast %cst_7 : f32 to vector<512x128xf32>
    %10 = arith.maximumf %8, %9 : vector<512x128xf32>
    %11 = arith.truncf %10 : vector<512x128xf32> to vector<512x128xbf16>
    %c0_8 = arith.constant 0 : index
    %c0_9 = arith.constant 0 : index
    %12 = vector.load %arg6[%c0_8, %c0_9] : memref<512x128xbf16, #tpu.memory_space<vmem>>, vector<512x128xbf16>
    tpu.vector_store %arg6[%c0_8, %c0_9], %11 {strides = array<i32>} : memref<512x128xbf16, #tpu.memory_space<vmem>>, vector<512x128xbf16>,
    return
  }
  func.func @transform_0(%arg0: i32, %arg1: i32) -> (i32, i32) {
    %c0_i32 = arith.constant 0 : i32
    %c0_i32_0 = arith.constant 0 : i32
    return %arg0, %c0_i32 : i32, i32
  }
  func.func @transform_1(%arg0: i32, %arg1: i32) -> (i32, i32) {
    %c0_i32 = arith.constant 0 : i32
    %c0_i32_0 = arith.constant 0 : i32
    return %c0_i32, %arg1 : i32, i32
  }
  func.func @transform_2(%arg0: i32, %arg1: i32) -> (i32, i32) {
    %c0_i32 = arith.constant 0 : i32
    %c0_i32_0 = arith.constant 0 : i32
    return %c0_i32, %arg1 : i32, i32
  }
  func.func @transform_3(%arg0: i32, %arg1: i32) -> (i32, i32) {
    %c0_i32 = arith.constant 0 : i32
    %c0_i32_0 = arith.constant 0 : i32
    return %c0_i32, %arg1 : i32, i32
  }
  func.func @transform_4(%arg0: i32, %arg1: i32) -> (i32, i32) {
    %c0_i32 = arith.constant 0 : i32
    return %arg0, %arg1 : i32, i32
  }
}

module attributes {stable_mosaic.version = 11 : i64} {
  func.func @mm_fused_kernel_1k(%arg0: i32, %arg1: i32, %arg2: memref<512x384xbf16, #tpu.memory_space<vmem>>, %arg3: memref<384x128xbf16, #tpu.memory_space<vmem>>, %arg4: memref<1x128xf32, #tpu.memory_space<vmem>>, %arg5: memref<1x128xf32, #tpu.memory_space<vmem>>, %arg6: memref<512x128xbf16, #tpu.memory_space<vmem>>) attributes {dimension_semantics = [#tpu.dimension_semantics<parallel>, #tpu.dimension_semantics<parallel>], iteration_bounds = array<i64: 4, 1>, scalar_prefetch = 0 : i64, scratch_operands = 0 : i64, tpu.core_type = #tpu.core_type<tc>, window_params = [{transform_indices = @transform_0, window_bounds = array<i64: 512, 384>}, {transform_indices = @transform_1, window_bounds = array<i64: 384, 128>}, {transform_indices = @transform_2, window_bounds = array<i64: 1, 128>}, {transform_indices = @transform_3, window_bounds = array<i64: 1, 128>}, {transform_indices = @transform_4, window_bounds = array<i64: 512, 128>}]} {
    %c0 = arith.constant 0 : index
    %c0_0 = arith.constant 0 : index
    %0 = vector.load %arg2[%c0, %c0_0] : memref<512x384xbf16, #tpu.memory_space<vmem>>, vector<512x384xbf16>
    %c0_1 = arith.constant 0 : index
    %c0_2 = arith.constant 0 : index
    %1 = vector.load %arg3[%c0_1, %c0_2] : memref<384x128xbf16, #tpu.memory_space<vmem>>, vector<384x128xbf16>
    %cst = arith.constant dense<0.000000e+00> : vector<512x128xf32>
    %2 = tpu.matmul %0, %1, %cst {dimension_numbers = #tpu.dot_dimension_numbers<[1], [0], [0], [1], [0, 0, 1, 1], [], []>} : vector<512x384xbf16>, vector<384x128xbf16>, vector<512x128xf32> -> vector<512x128xf32>
    %c0_3 = arith.constant 0 : index
    %c0_4 = arith.constant 0 : index
    %3 = vector.load %arg4[%c0_3, %c0_4] : memref<1x128xf32, #tpu.memory_space<vmem>>, vector<1x128xf32>
    %c0_5 = arith.constant 0 : index
    %c0_6 = arith.constant 0 : index
    %4 = vector.load %arg5[%c0_5, %c0_6] : memref<1x128xf32, #tpu.memory_space<vmem>>, vector<1x128xf32>
    %5 = vector.broadcast %3 : vector<1x128xf32> to vector<512x128xf32>
    %6 = arith.mulf %2, %5 : vector<512x128xf32>
    %7 = vector.broadcast %4 : vector<1x128xf32> to vector<512x128xf32>
    %8 = arith.addf %6, %7 : vector<512x128xf32>
    %cst_7 = arith.constant 0.000000e+00 : f32
    %9 = vector.broadcast %cst_7 : f32 to vector<512x128xf32>
    %10 = arith.maximumf %8, %9 : vector<512x128xf32>
    %11 = arith.truncf %10 : vector<512x128xf32> to vector<512x128xbf16>
    %c0_8 = arith.constant 0 : index
    %c0_9 = arith.constant 0 : index
    %12 = vector.load %arg6[%c0_8, %c0_9] : memref<512x128xbf16, #tpu.memory_space<vmem>>, vector<512x128xbf16>
    tpu.vector_store %arg6[%c0_8, %c0_9], %11 {strides = array<i32>} : memref<512x128xbf16, #tpu.memory_space<vmem>>, vector<512x128xbf16>,
    return
  }
  func.func @transform_0(%arg0: i32, %arg1: i32) -> (i32, i32) {
    %c0_i32 = arith.constant 0 : i32
    %c0_i32_0 = arith.constant 0 : i32
    return %arg0, %c0_i32 : i32, i32
  }
  func.func @transform_1(%arg0: i32, %arg1: i32) -> (i32, i32) {
    %c0_i32 = arith.constant 0 : i32
    %c0_i32_0 = arith.constant 0 : i32
    return %c0_i32, %arg1 : i32, i32
  }
  func.func @transform_2(%arg0: i32, %arg1: i32) -> (i32, i32) {
    %c0_i32 = arith.constant 0 : i32
    %c0_i32_0 = arith.constant 0 : i32
    return %c0_i32, %arg1 : i32, i32
  }
  func.func @transform_3(%arg0: i32, %arg1: i32) -> (i32, i32) {
    %c0_i32 = arith.constant 0 : i32
    %c0_i32_0 = arith.constant 0 : i32
    return %c0_i32, %arg1 : i32, i32
  }
  func.func @transform_4(%arg0: i32, %arg1: i32) -> (i32, i32) {
    %c0_i32 = arith.constant 0 : i32
    return %arg0, %arg1 : i32, i32
  }
}

module attributes {stable_mosaic.version = 11 : i64} {
  func.func @mm_fused_kernel_1k(%arg0: i32, %arg1: i32, %arg2: memref<496x640xbf16, #tpu.memory_space<vmem>>, %arg3: memref<640x128xbf16, #tpu.memory_space<vmem>>, %arg4: memref<1x128xf32, #tpu.memory_space<vmem>>, %arg5: memref<1x128xf32, #tpu.memory_space<vmem>>, %arg6: memref<496x128xbf16, #tpu.memory_space<vmem>>) attributes {dimension_semantics = [#tpu.dimension_semantics<parallel>, #tpu.dimension_semantics<parallel>], iteration_bounds = array<i64: 1, 1>, scalar_prefetch = 0 : i64, scratch_operands = 0 : i64, tpu.core_type = #tpu.core_type<tc>, window_params = [{transform_indices = @transform_0, window_bounds = array<i64: 496, 640>}, {transform_indices = @transform_1, window_bounds = array<i64: 640, 128>}, {transform_indices = @transform_2, window_bounds = array<i64: 1, 128>}, {transform_indices = @transform_3, window_bounds = array<i64: 1, 128>}, {transform_indices = @transform_4, window_bounds = array<i64: 496, 128>}]} {
    %c0 = arith.constant 0 : index
    %c0_0 = arith.constant 0 : index
    %0 = vector.load %arg2[%c0, %c0_0] : memref<496x640xbf16, #tpu.memory_space<vmem>>, vector<496x640xbf16>
    %c0_1 = arith.constant 0 : index
    %c0_2 = arith.constant 0 : index
    %1 = vector.load %arg3[%c0_1, %c0_2] : memref<640x128xbf16, #tpu.memory_space<vmem>>, vector<640x128xbf16>
    %cst = arith.constant dense<0.000000e+00> : vector<496x128xf32>
    %2 = tpu.matmul %0, %1, %cst {dimension_numbers = #tpu.dot_dimension_numbers<[1], [0], [0], [1], [0, 0, 1, 1], [], []>} : vector<496x640xbf16>, vector<640x128xbf16>, vector<496x128xf32> -> vector<496x128xf32>
    %c0_3 = arith.constant 0 : index
    %c0_4 = arith.constant 0 : index
    %3 = vector.load %arg4[%c0_3, %c0_4] : memref<1x128xf32, #tpu.memory_space<vmem>>, vector<1x128xf32>
    %c0_5 = arith.constant 0 : index
    %c0_6 = arith.constant 0 : index
    %4 = vector.load %arg5[%c0_5, %c0_6] : memref<1x128xf32, #tpu.memory_space<vmem>>, vector<1x128xf32>
    %5 = vector.broadcast %3 : vector<1x128xf32> to vector<496x128xf32>
    %6 = arith.mulf %2, %5 : vector<496x128xf32>
    %7 = vector.broadcast %4 : vector<1x128xf32> to vector<496x128xf32>
    %8 = arith.addf %6, %7 : vector<496x128xf32>
    %cst_7 = arith.constant 0.000000e+00 : f32
    %9 = vector.broadcast %cst_7 : f32 to vector<496x128xf32>
    %10 = arith.maximumf %8, %9 : vector<496x128xf32>
    %11 = arith.truncf %10 : vector<496x128xf32> to vector<496x128xbf16>
    %c0_8 = arith.constant 0 : index
    %c0_9 = arith.constant 0 : index
    %12 = vector.load %arg6[%c0_8, %c0_9] : memref<496x128xbf16, #tpu.memory_space<vmem>>, vector<496x128xbf16>
    tpu.vector_store %arg6[%c0_8, %c0_9], %11 {strides = array<i32>} : memref<496x128xbf16, #tpu.memory_space<vmem>>, vector<496x128xbf16>,
    return
  }
  func.func @transform_0(%arg0: i32, %arg1: i32) -> (i32, i32) {
    %c0_i32 = arith.constant 0 : i32
    %c0_i32_0 = arith.constant 0 : i32
    return %arg0, %c0_i32 : i32, i32
  }
  func.func @transform_1(%arg0: i32, %arg1: i32) -> (i32, i32) {
    %c0_i32 = arith.constant 0 : i32
    %c0_i32_0 = arith.constant 0 : i32
    return %c0_i32, %arg1 : i32, i32
  }
  func.func @transform_2(%arg0: i32, %arg1: i32) -> (i32, i32) {
    %c0_i32 = arith.constant 0 : i32
    %c0_i32_0 = arith.constant 0 : i32
    return %c0_i32, %arg1 : i32, i32
  }
  func.func @transform_3(%arg0: i32, %arg1: i32) -> (i32, i32) {
    %c0_i32 = arith.constant 0 : i32
    %c0_i32_0 = arith.constant 0 : i32
    return %c0_i32, %arg1 : i32, i32
  }
  func.func @transform_4(%arg0: i32, %arg1: i32) -> (i32, i32) {
    %c0_i32 = arith.constant 0 : i32
    return %arg0, %arg1 : i32, i32
  }
}

module attributes {stable_mosaic.version = 11 : i64} {
  func.func @mm_fused_kernel_acc(%arg0: i32, %arg1: i32, %arg2: i32, %arg3: memref<16x1408xbf16, #tpu.memory_space<vmem>>, %arg4: memref<1408x512xbf16, #tpu.memory_space<vmem>>, %arg5: memref<1x512xf32, #tpu.memory_space<vmem>>, %arg6: memref<1x512xf32, #tpu.memory_space<vmem>>, %arg7: memref<16x512xf32, #tpu.memory_space<vmem>>, %arg8: memref<16x512xf32, #tpu.memory_space<vmem>>) attributes {dimension_semantics = [#tpu.dimension_semantics<parallel>, #tpu.dimension_semantics<parallel>, #tpu.dimension_semantics<arbitrary>], iteration_bounds = array<i64: 1, 2, 11>, scalar_prefetch = 0 : i64, scratch_operands = 1 : i64, tpu.core_type = #tpu.core_type<tc>, window_params = [{transform_indices = @transform_0, window_bounds = array<i64: 16, 1408>}, {transform_indices = @transform_1, window_bounds = array<i64: 1408, 512>}, {transform_indices = @transform_2, window_bounds = array<i64: 1, 512>}, {transform_indices = @transform_3, window_bounds = array<i64: 1, 512>}, {transform_indices = @transform_4, window_bounds = array<i64: 16, 512>}]} {
    %c0_i32 = arith.constant 0 : i32
    %0 = arith.cmpi eq, %arg2, %c0_i32 : i32
    %1 = arith.extui %0 : i1 to i32
    %c0_i32_0 = arith.constant 0 : i32
    %2 = arith.cmpi ne, %1, %c0_i32_0 : i32
    scf.if %2 {
      %cst_9 = arith.constant 0.000000e+00 : f32
      %12 = vector.broadcast %cst_9 : f32 to vector<16x512xf32>
      %c0_10 = arith.constant 0 : index
      %c0_11 = arith.constant 0 : index
      %13 = vector.load %arg8[%c0_10, %c0_11] : memref<16x512xf32, #tpu.memory_space<vmem>>, vector<16x512xf32>
      tpu.vector_store %arg8[%c0_10, %c0_11], %12 {strides = array<i32>} : memref<16x512xf32, #tpu.memory_space<vmem>>, vector<16x512xf32>,
    } else {
    }
    %c0 = arith.constant 0 : index
    %c0_1 = arith.constant 0 : index
    %3 = vector.load %arg8[%c0, %c0_1] : memref<16x512xf32, #tpu.memory_space<vmem>>, vector<16x512xf32>
    %c0_2 = arith.constant 0 : index
    %c0_3 = arith.constant 0 : index
    %4 = vector.load %arg3[%c0_2, %c0_3] : memref<16x1408xbf16, #tpu.memory_space<vmem>>, vector<16x1408xbf16>
    %c0_4 = arith.constant 0 : index
    %c0_5 = arith.constant 0 : index
    %5 = vector.load %arg4[%c0_4, %c0_5] : memref<1408x512xbf16, #tpu.memory_space<vmem>>, vector<1408x512xbf16>
    %cst = arith.constant dense<0.000000e+00> : vector<16x512xf32>
    %6 = tpu.matmul %4, %5, %cst {dimension_numbers = #tpu.dot_dimension_numbers<[1], [0], [0], [1], [0, 0, 1, 1], [], []>} : vector<16x1408xbf16>, vector<1408x512xbf16>, vector<16x512xf32> -> vector<16x512xf32>
    %7 = arith.addf %3, %6 : vector<16x512xf32>
    %c0_6 = arith.constant 0 : index
    %c0_7 = arith.constant 0 : index
    %8 = vector.load %arg8[%c0_6, %c0_7] : memref<16x512xf32, #tpu.memory_space<vmem>>, vector<16x512xf32>
    tpu.vector_store %arg8[%c0_6, %c0_7], %7 {strides = array<i32>} : memref<16x512xf32, #tpu.memory_space<vmem>>, vector<16x512xf32>,
    %c10_i32 = arith.constant 10 : i32
    %9 = arith.cmpi eq, %arg2, %c10_i32 : i32
    %10 = arith.extui %9 : i1 to i32
    %c0_i32_8 = arith.constant 0 : i32
    %11 = arith.cmpi ne, %10, %c0_i32_8 : i32
    scf.if %11 {
      %c0_9 = arith.constant 0 : index
      %c0_10 = arith.constant 0 : index
      %12 = vector.load %arg8[%c0_9, %c0_10] : memref<16x512xf32, #tpu.memory_space<vmem>>, vector<16x512xf32>
      %c0_11 = arith.constant 0 : index
      %c0_12 = arith.constant 0 : index
      %13 = vector.load %arg5[%c0_11, %c0_12] : memref<1x512xf32, #tpu.memory_space<vmem>>, vector<1x512xf32>
      %c0_13 = arith.constant 0 : index
      %c0_14 = arith.constant 0 : index
      %14 = vector.load %arg6[%c0_13, %c0_14] : memref<1x512xf32, #tpu.memory_space<vmem>>, vector<1x512xf32>
      %15 = vector.broadcast %13 : vector<1x512xf32> to vector<16x512xf32>
      %16 = arith.mulf %12, %15 : vector<16x512xf32>
      %17 = vector.broadcast %14 : vector<1x512xf32> to vector<16x512xf32>
      %18 = arith.addf %16, %17 : vector<16x512xf32>
      %19 = arith.negf %18 : vector<16x512xf32>
      %20 = math.exp %19 : vector<16x512xf32>
      %cst_15 = arith.constant 1.000000e+00 : f32
      %21 = vector.broadcast %cst_15 : f32 to vector<16x512xf32>
      %22 = arith.addf %21, %20 : vector<16x512xf32>
      %23 = arith.divf %21, %22 : vector<16x512xf32>
      %c0_16 = arith.constant 0 : index
      %c0_17 = arith.constant 0 : index
      %24 = vector.load %arg7[%c0_16, %c0_17] : memref<16x512xf32, #tpu.memory_space<vmem>>, vector<16x512xf32>
      tpu.vector_store %arg7[%c0_16, %c0_17], %23 {strides = array<i32>} : memref<16x512xf32, #tpu.memory_space<vmem>>, vector<16x512xf32>,
    } else {
    }
    return
  }
  func.func @transform_0(%arg0: i32, %arg1: i32, %arg2: i32) -> (i32, i32) {
    %c0_i32 = arith.constant 0 : i32
    return %arg0, %arg2 : i32, i32
  }
  func.func @transform_1(%arg0: i32, %arg1: i32, %arg2: i32) -> (i32, i32) {
    %c0_i32 = arith.constant 0 : i32
    return %arg2, %arg1 : i32, i32
  }
  func.func @transform_2(%arg0: i32, %arg1: i32, %arg2: i32) -> (i32, i32) {
    %c0_i32 = arith.constant 0 : i32
    %c0_i32_0 = arith.constant 0 : i32
    return %c0_i32, %arg1 : i32, i32
  }
  func.func @transform_3(%arg0: i32, %arg1: i32, %arg2: i32) -> (i32, i32) {
    %c0_i32 = arith.constant 0 : i32
    %c0_i32_0 = arith.constant 0 : i32
    return %c0_i32, %arg1 : i32, i32
  }
  func.func @transform_4(%arg0: i32, %arg1: i32, %arg2: i32) -> (i32, i32) {
    %c0_i32 = arith.constant 0 : i32
    return %arg0, %arg1 : i32, i32
  }
}

</mosaic_0001>

<llo_original>
// kernel: cnn_forward.5
$region0: #{cnn_forward.5}
  #allocation0 [shape = 'u32[]', space=smem, size = 0x4, offset = 0x4, fixed_abs, tag = 'smem constant byte address 0x4 - core index']
  #allocation1 [shape = 'u32[72,128]{1,0:T(1,128)}', space=vmem, size = 0x9000, scoped, tag = 'internal scratch']
  %s0 = inlined_call_operand.vmem [shape: bf16[7168,128], index: 0, kind: input, shape index: {}]
  %s1 = inlined_call_operand.vmem [shape: bf16[128,128], index: 1, kind: input, shape index: {}]
  %s2 = inlined_call_operand.vmem [shape: f32[1,128], index: 2, kind: input, shape index: {}]
  %s3 = inlined_call_operand.vmem [shape: f32[1,128], index: 3, kind: input, shape index: {}]
  %s4 = inlined_call_operand.vmem [shape: bf16[7168,128], index: 4, kind: output, shape index: {}]
  %s5 = sld [smem:[#allocation0]]
  $region49: #{cnn_forward.5} parent=0
    _
  %s7 = ssub.s32 1, %s5
  %s8 = scalar_select 0, %s7, %s5
  loop: start=0, step=1, limit=16
  $region2: #{cnn_forward.5} parent=0 // loop_pre_header
    _
  $region3: #{cnn_forward.5} parent=0 // loop_header
    %s10 = sphi 0, %s14
    %p11 = scmp.ge.s32.totalorder %s10, 16
    %s17 = sphi 0, %s29
    %s18 = sphi 0, %s25
    %s19 = sphi 0, %s17
    %s20 = sphi 0, %s18
    %s21 = sphi 0, %s19
    %s22 = sphi 0, %s20
    %s32 = sphi 0, %s34
    %s35 = sphi 0, %s32
    %s36 = sphi 0, %s35
    %s52 = sphi 0, %s36
    %s58 = sphi 0, %s60
    %s61 = sphi 0, %s58
    %s62 = sphi 0, %s61
    %s78 = sphi 0, %s62
    %s84 = sphi 0, %s86
    %s87 = sphi 0, %s84
    %s88 = sphi 0, %s87
    %s104 = sphi 0, %s88
    %s110 = sphi 0, %s112
    %s113 = sphi 0, %s110
    %s114 = sphi 0, %s113
    %s130 = sphi 0, %s114
    %s138 = sphi 0, %s140
    %s141 = sphi 0, %s138
    %s142 = sphi 0, %s141
    %s158 = sphi 0, %s142
  $region4: #{cnn_forward.5} parent=0 // loop_header_branch
    %13 = sbr.rel (%p11) target = $region8
  $region5: #{cnn_forward.5} parent=0 // loop_body
    %s15 = ssub.s32 %s10, 1
    %s16 = ssub.s32 %s10, 2
    %s23 = sadd.s32 1, %s18
    %p24 = scmp.ge.s32.totalorder %s23, 1
    %s25 = scalar_select %p24, 0, %s23
    %s26 = sadd.s32 1, %s17
    %s27 = scalar_select %p24, %s26, %s17
    %p28 = scmp.ge.s32.totalorder %s27, 14
    %s29 = scalar_select %p28, 0, %s27
    %s30 = ssub.s32 %s17, %s29
    %p31 = scmp.eq.s32.totalorder %s30, 0
    %s33 = sadd.s32 %s32, 1
    %s34 = scalar_select %p31, %s32, %s33
    %p37 = pneg %p31
    %p38 = scmp.eq.s32.totalorder %s10, 13
    %p39 = por %p37, %p38
    %p40 = scmp.ne.s32.totalorder %s32, %s35
    %p41 = scmp.eq.s32.totalorder %s10, 0
    %p42 = por %p40, %p41
    %p43 = scmp.ne.s32.totalorder %s32, %s35
    %p44 = scmp.eq.s32.totalorder %s15, 13
    %p45 = por %p43, %p44
    %p46 = scmp.ne.s32.totalorder %s35, %s36
    %p47 = scmp.eq.s32.totalorder %s15, 0
    %p48 = por %p46, %p47
    %p49 = scmp.ne.s32.totalorder %s35, %s36
    %p50 = scmp.eq.s32.totalorder %s16, 13
    %p51 = por %p49, %p50
    %p53 = scmp.ne.s32.totalorder %s36, %s52
    %p54 = scmp.eq.s32.totalorder %s16, 0
    %p55 = por %p53, %p54
    %s56 = ssub.s32 %s18, %s25
    %p57 = scmp.eq.s32.totalorder %s56, 0
    %s59 = sadd.s32 %s58, 1
    %s60 = scalar_select %p57, %s58, %s59
    %p63 = pneg %p57
    %p64 = scmp.eq.s32.totalorder %s10, 13
    %p65 = por %p63, %p64
    %p66 = scmp.ne.s32.totalorder %s58, %s61
    %p67 = scmp.eq.s32.totalorder %s10, 0
    %p68 = por %p66, %p67
    %p69 = scmp.ne.s32.totalorder %s58, %s61
    %p70 = scmp.eq.s32.totalorder %s15, 13
    %p71 = por %p69, %p70
    %p72 = scmp.ne.s32.totalorder %s61, %s62
    %p73 = scmp.eq.s32.totalorder %s15, 0
    %p74 = por %p72, %p73
    %p75 = scmp.ne.s32.totalorder %s61, %s62
    %p76 = scmp.eq.s32.totalorder %s16, 13
    %p77 = por %p75, %p76
    %p79 = scmp.ne.s32.totalorder %s62, %s78
    %p80 = scmp.eq.s32.totalorder %s16, 0
    %p81 = por %p79, %p80
    %s82 = ssub.s32 %s18, %s25
    %p83 = scmp.eq.s32.totalorder %s82, 0
    %s85 = sadd.s32 %s84, 1
    %s86 = scalar_select %p83, %s84, %s85
    %p89 = pneg %p83
    %p90 = scmp.eq.s32.totalorder %s10, 13
    %p91 = por %p89, %p90
    %p92 = scmp.ne.s32.totalorder %s84, %s87
    %p93 = scmp.eq.s32.totalorder %s10, 0
    %p94 = por %p92, %p93
    %p95 = scmp.ne.s32.totalorder %s84, %s87
    %p96 = scmp.eq.s32.totalorder %s15, 13
    %p97 = por %p95, %p96
    %p98 = scmp.ne.s32.totalorder %s87, %s88
    %p99 = scmp.eq.s32.totalorder %s15, 0
    %p100 = por %p98, %p99
    %p101 = scmp.ne.s32.totalorder %s87, %s88
    %p102 = scmp.eq.s32.totalorder %s16, 13
    %p103 = por %p101, %p102
    %p105 = scmp.ne.s32.totalorder %s88, %s104
    %p106 = scmp.eq.s32.totalorder %s16, 0
    %p107 = por %p105, %p106
    %s108 = ssub.s32 %s18, %s25
    %p109 = scmp.eq.s32.totalorder %s108, 0
    %s111 = sadd.s32 %s110, 1
    %s112 = scalar_select %p109, %s110, %s111
    %p115 = pneg %p109
    %p116 = scmp.eq.s32.totalorder %s10, 13
    %p117 = por %p115, %p116
    %p118 = scmp.ne.s32.totalorder %s110, %s113
    %p119 = scmp.eq.s32.totalorder %s10, 0
    %p120 = por %p118, %p119
    %p121 = scmp.ne.s32.totalorder %s110, %s113
    %p122 = scmp.eq.s32.totalorder %s15, 13
    %p123 = por %p121, %p122
    %p124 = scmp.ne.s32.totalorder %s113, %s114
    %p125 = scmp.eq.s32.totalorder %s15, 0
    %p126 = por %p124, %p125
    %p127 = scmp.ne.s32.totalorder %s113, %s114
    %p128 = scmp.eq.s32.totalorder %s16, 13
    %p129 = por %p127, %p128
    %p131 = scmp.ne.s32.totalorder %s114, %s130
    %p132 = scmp.eq.s32.totalorder %s16, 0
    %p133 = por %p131, %p132
    %s134 = ssub.s32 %s17, %s29
    %s135 = ssub.s32 %s18, %s25
    %s136 = sor.u32 %s134, %s135
    %p137 = scmp.eq.s32.totalorder %s136, 0
    %s139 = sadd.s32 %s138, 1
    %s140 = scalar_select %p137, %s138, %s139
    %p143 = pneg %p137
    %p144 = scmp.eq.s32.totalorder %s10, 13
    %p145 = por %p143, %p144
    %p146 = scmp.ne.s32.totalorder %s138, %s141
    %p147 = scmp.eq.s32.totalorder %s10, 0
    %p148 = por %p146, %p147
    %p149 = scmp.ne.s32.totalorder %s138, %s141
    %p150 = scmp.eq.s32.totalorder %s15, 13
    %p151 = por %p149, %p150
    %p152 = scmp.ne.s32.totalorder %s141, %s142
    %p153 = scmp.eq.s32.totalorder %s15, 0
    %p154 = por %p152, %p153
    %p155 = scmp.ne.s32.totalorder %s141, %s142
    %p156 = scmp.eq.s32.totalorder %s16, 13
    %p157 = por %p155, %p156
    %p159 = scmp.ne.s32.totalorder %s142, %s158
    %p160 = scmp.eq.s32.totalorder %s16, 0
    %p161 = por %p159, %p160
    %p162 = scmp.le.s32.totalorder 1, %s10
    %p163 = scmp.lt.s32.totalorder %s10, 15
    %p164 = pnand %p162, %p163
    %p165 = pneg %p164
    // Predicated region
    $region9: #{cnn_forward.5} parent=5 // pred_check
      _
    $region10: #{cnn_forward.5} parent=5 // pred_check_branch
      %167 = sbr.rel (%p164) target = $region12
    $region11: #{cnn_forward.5} parent=5 // pred_region
      %s168 = ssub.s32 %s10, 1
      // Predicated region
      $region13: #{cnn_forward.5} parent=11 // pred_check
        %p169 = pneg %p74
      $region14: #{cnn_forward.5} parent=11 // pred_check_branch
        %171 = sbr.rel (%p169) target = $region16
      $region15: #{cnn_forward.5} parent=11 // pred_region
        %p172 = scmp.lt.s32.totalorder %s20, 0
        %s173 = scalar_select %p172, %s20, 0
        %s174 = smul.addr %s173, 4
        %s175 = scalar_lea.vmem %s1, %s174
      $region16: #{cnn_forward.5} parent=11 // pred_fallthru
        _
      // Predicated region
      $region17: #{cnn_forward.5} parent=11 // pred_check
        %p176 = pneg %p100
      $region18: #{cnn_forward.5} parent=11 // pred_check_branch
        %178 = sbr.rel (%p176) target = $region20
      $region19: #{cnn_forward.5} parent=11 // pred_region
        %p179 = scmp.lt.s32.totalorder %s20, 0
        %s180 = scalar_select %p179, %s20, 0
        %s181 = scalar_lea.vmem %s2, %s180
      $region20: #{cnn_forward.5} parent=11 // pred_fallthru
        _
      // Predicated region
      $region21: #{cnn_forward.5} parent=11 // pred_check
        %p182 = pneg %p126
      $region22: #{cnn_forward.5} parent=11 // pred_check_branch
        %184 = sbr.rel (%p182) target = $region24
      $region23: #{cnn_forward.5} parent=11 // pred_region
        %p185 = scmp.lt.s32.totalorder %s20, 0
        %s186 = scalar_select %p185, %s20, 0
        %s187 = scalar_lea.vmem %s3, %s186
      $region24: #{cnn_forward.5} parent=11 // pred_fallthru
        _
    $region12: #{cnn_forward.5} parent=5 // pred_fallthru
      _
    %p188 = scmp.lt.s32.totalorder %s10, 14
    // Predicated region
    $region25: #{cnn_forward.5} parent=5 // pred_check
      %p189 = pneg %p188
    $region26: #{cnn_forward.5} parent=5 // pred_check_branch
      %191 = sbr.rel (%p189) target = $region28
    $region27: #{cnn_forward.5} parent=5 // pred_region
      // Predicated region
      $region29: #{cnn_forward.5} parent=27 // pred_check
        %p192 = pneg %p42
      $region30: #{cnn_forward.5} parent=27 // pred_check_branch
        %194 = sbr.rel (%p192) target = $region32
      $region31: #{cnn_forward.5} parent=27 // pred_region
        %s195 = smul.u32 64, %s17
        %p196 = scmp.lt.s32.totalorder %s195, 895
        %s197 = scalar_select %p196, %s195, 895
        %s198 = smul.addr %s197, 4
        %s199 = scalar_lea.vmem %s0, %s198
        %s200 = smul.u32 64, %s17
      $region32: #{cnn_forward.5} parent=27 // pred_fallthru
        _
    $region28: #{cnn_forward.5} parent=5 // pred_fallthru
      _
    %p201 = scmp.le.s32.totalorder 1, %s10
    %p202 = scmp.lt.s32.totalorder %s10, 15
    %p203 = pnand %p201, %p202
    %p204 = pneg %p203
    // Predicated region
    $region33: #{cnn_forward.5} parent=5 // pred_check
      _
    $region34: #{cnn_forward.5} parent=5 // pred_check_branch
      %206 = sbr.rel (%p203) target = $region36
    $region35: #{cnn_forward.5} parent=5 // pred_region
      %s207 = ssub.s32 %s10, 1
      %s208 = smul.u32 64, %s19
      %p209 = scmp.lt.s32.totalorder %s208, 895
      %s210 = scalar_select %p209, %s208, 895
      %s211 = smul.addr %s210, 4
      %s212 = scalar_lea.vmem %s0, %s211
      %p213 = pneg %p48
      %p214 = pneg %p45
      %p215 = scmp.lt.s32.totalorder %s20, 0
      %s216 = scalar_select %p215, %s20, 0
      %s217 = smul.addr %s216, 4
      %s218 = scalar_lea.vmem %s1, %s217
      %p219 = pneg %p74
      %p220 = pneg %p71
      %p221 = scmp.lt.s32.totalorder %s20, 0
      %s222 = scalar_select %p221, %s20, 0
      %s223 = scalar_lea.vmem %s2, %s222
      %p224 = pneg %p100
      %p225 = pneg %p97
      %p226 = scmp.lt.s32.totalorder %s20, 0
      %s227 = scalar_select %p226, %s20, 0
      %s228 = scalar_lea.vmem %s3, %s227
      %p229 = pneg %p126
      %p230 = pneg %p123
      %p231 = pneg %p154
      %p232 = pneg %p151
      %s233 = smul.u32 64, %s19
      %p234 = scmp.lt.s32.totalorder %s233, 895
      %s235 = scalar_select %p234, %s233, 895
      %p236 = scmp.lt.s32.totalorder %s20, 0
      %s237 = scalar_select %p236, %s20, 0
      %s238 = sadd.s32 %s237, %s235
      %s239 = smul.addr %s238, 4
      %s240 = scalar_lea.vmem %s4, %s239
      %s241 = smul.u32 64, %s19
      %p242 = scmp.lt.s32.totalorder %s241, 895
      %s243 = scalar_select %p242, %s241, 895
      %s244 = smul.addr %s243, 4
      %s245 = scalar_lea.vmem %s0, %s244
      %s246 = smul.u32 64, %s19
      %p247 = scmp.lt.s32.totalorder %s20, 0
      %s248 = scalar_select %p247, %s20, 0
      %s249 = smul.addr %s248, 4
      %s250 = scalar_lea.vmem %s1, %s249
      %p251 = scmp.lt.s32.totalorder %s20, 0
      %s252 = scalar_select %p251, %s20, 0
      %s253 = scalar_lea.vmem %s2, %s252
      %p254 = scmp.lt.s32.totalorder %s20, 0
      %s255 = scalar_select %p254, %s20, 0
      %s256 = scalar_lea.vmem %s3, %s255
      %s257 = smul.u32 64, %s19
      %p258 = scmp.lt.s32.totalorder %s257, 895
      %s259 = scalar_select %p258, %s257, 895
      %p260 = scmp.lt.s32.totalorder %s20, 0
      %s261 = scalar_select %p260, %s20, 0
      %s262 = sadd.s32 %s261, %s259
      %s263 = smul.addr %s262, 4
      %s264 = scalar_lea.vmem %s4, %s263
      %s265 = smul.u32 64, %s19
      %v266 = vld [vmem:[%s245] sm:$0xf]
      %v267 = vld [vmem:[%s245 + $0x4] sm:$0xf]
      %v268 = vld [vmem:[%s245 + $0x8] sm:$0xf]
      %v269 = vld [vmem:[%s245 + $0xc] sm:$0xf]
      %v270 = vld [vmem:[%s245 + $0x10] sm:$0xf]
      %v271 = vld [vmem:[%s245 + $0x14] sm:$0xf]
      %v272 = vld [vmem:[%s245 + $0x18] sm:$0xf]
      %v273 = vld [vmem:[%s245 + $0x1c] sm:$0xf]
      %v274 = vld [vmem:[%s245 + $0x20] sm:$0xf]
      %v275 = vld [vmem:[%s245 + $0x24] sm:$0xf]
      %v276 = vld [vmem:[%s245 + $0x28] sm:$0xf]
      %v277 = vld [vmem:[%s245 + $0x2c] sm:$0xf]
      %v278 = vld [vmem:[%s245 + $0x30] sm:$0xf]
      %v279 = vld [vmem:[%s245 + $0x34] sm:$0xf]
      %v280 = vld [vmem:[%s245 + $0x38] sm:$0xf]
      %v281 = vld [vmem:[%s245 + $0x3c] sm:$0xf]
      %v282 = vld [vmem:[%s245 + $0x40] sm:$0xf]
      %v283 = vld [vmem:[%s245 + $0x44] sm:$0xf]
      %v284 = vld [vmem:[%s245 + $0x48] sm:$0xf]
      %v285 = vld [vmem:[%s245 + $0x4c] sm:$0xf]
      %v286 = vld [vmem:[%s245 + $0x50] sm:$0xf]
      %v287 = vld [vmem:[%s245 + $0x54] sm:$0xf]
      %v288 = vld [vmem:[%s245 + $0x58] sm:$0xf]
      %v289 = vld [vmem:[%s245 + $0x5c] sm:$0xf]
      %v290 = vld [vmem:[%s245 + $0x60] sm:$0xf]
      %v291 = vld [vmem:[%s245 + $0x64] sm:$0xf]
      %v292 = vld [vmem:[%s245 + $0x68] sm:$0xf]
      %v293 = vld [vmem:[%s245 + $0x6c] sm:$0xf]
      %v294 = vld [vmem:[%s245 + $0x70] sm:$0xf]
      %v295 = vld [vmem:[%s245 + $0x74] sm:$0xf]
      %v296 = vld [vmem:[%s245 + $0x78] sm:$0xf]
      %v297 = vld [vmem:[%s245 + $0x7c] sm:$0xf]
      %v298 = vld [vmem:[%s245 + $0x80] sm:$0xf]
      %v299 = vld [vmem:[%s245 + $0x84] sm:$0xf]
      %v300 = vld [vmem:[%s245 + $0x88] sm:$0xf]
      %v301 = vld [vmem:[%s245 + $0x8c] sm:$0xf]
      %v302 = vld [vmem:[%s245 + $0x90] sm:$0xf]
      %v303 = vld [vmem:[%s245 + $0x94] sm:$0xf]
      %v304 = vld [vmem:[%s245 + $0x98] sm:$0xf]
      %v305 = vld [vmem:[%s245 + $0x9c] sm:$0xf]
      %v306 = vld [vmem:[%s245 + $0xa0] sm:$0xf]
      %v307 = vld [vmem:[%s245 + $0xa4] sm:$0xf]
      %v308 = vld [vmem:[%s245 + $0xa8] sm:$0xf]
      %v309 = vld [vmem:[%s245 + $0xac] sm:$0xf]
      %v310 = vld [vmem:[%s245 + $0xb0] sm:$0xf]
      %v311 = vld [vmem:[%s245 + $0xb4] sm:$0xf]
      %v312 = vld [vmem:[%s245 + $0xb8] sm:$0xf]
      %v313 = vld [vmem:[%s245 + $0xbc] sm:$0xf]
      %v314 = vld [vmem:[%s245 + $0xc0] sm:$0xf]
      %v315 = vld [vmem:[%s245 + $0xc4] sm:$0xf]
      %v316 = vld [vmem:[%s245 + $0xc8] sm:$0xf]
      %v317 = vld [vmem:[%s245 + $0xcc] sm:$0xf]
      %v318 = vld [vmem:[%s245 + $0xd0] sm:$0xf]
      %v319 = vld [vmem:[%s245 + $0xd4] sm:$0xf]
      %v320 = vld [vmem:[%s245 + $0xd8] sm:$0xf]
      %v321 = vld [vmem:[%s245 + $0xdc] sm:$0xf]
      %v322 = vld [vmem:[%s245 + $0xe0] sm:$0xf]
      %v323 = vld [vmem:[%s245 + $0xe4] sm:$0xf]
      %v324 = vld [vmem:[%s245 + $0xe8] sm:$0xf]
      %v325 = vld [vmem:[%s245 + $0xec] sm:$0xf]
      %v326 = vld [vmem:[%s245 + $0xf0] sm:$0xf]
      %v327 = vld [vmem:[%s245 + $0xf4] sm:$0xf]
      %v328 = vld [vmem:[%s245 + $0xf8] sm:$0xf]
      %v329 = vld [vmem:[%s245 + $0xfc] sm:$0xf]
      %v330 = vld [vmem:[%s250] sm:$0xf]
      %v331 = vld [vmem:[%s250 + $0x4] sm:$0xf]
      %v332 = vld [vmem:[%s250 + $0x8] sm:$0xf]
      %v333 = vld [vmem:[%s250 + $0xc] sm:$0xf]
      %v334 = vld [vmem:[%s250 + $0x10] sm:$0xf]
      %v335 = vld [vmem:[%s250 + $0x14] sm:$0xf]
      %v336 = vld [vmem:[%s250 + $0x18] sm:$0xf]
      %v337 = vld [vmem:[%s250 + $0x1c] sm:$0xf]
      %v338 = vld [vmem:[%s250 + $0x20] sm:$0xf]
      %v339 = vld [vmem:[%s250 + $0x24] sm:$0xf]
      %v340 = vld [vmem:[%s250 + $0x28] sm:$0xf]
      %v341 = vld [vmem:[%s250 + $0x2c] sm:$0xf]
      %v342 = vld [vmem:[%s250 + $0x30] sm:$0xf]
      %v343 = vld [vmem:[%s250 + $0x34] sm:$0xf]
      %v344 = vld [vmem:[%s250 + $0x38] sm:$0xf]
      %v345 = vld [vmem:[%s250 + $0x3c] sm:$0xf]
      %v410 = vunpack.c.l.b16 %v266
      %v411 = vunpack.c.l.b16 %v267
      %v412 = vunpack.c.l.b16 %v268
      %v413 = vunpack.c.l.b16 %v269
      %v414 = vunpack.c.l.b16 %v270
      %v415 = vunpack.c.l.b16 %v271
      %v416 = vunpack.c.l.b16 %v272
      %v417 = vunpack.c.l.b16 %v273
      %v418 = vunpack.c.l.b16 %v274
      %v419 = vunpack.c.l.b16 %v275
      %v420 = vunpack.c.l.b16 %v276
      %v421 = vunpack.c.l.b16 %v277
      %v422 = vunpack.c.l.b16 %v278
      %v423 = vunpack.c.l.b16 %v279
      %v424 = vunpack.c.l.b16 %v280
      %v425 = vunpack.c.l.b16 %v281
      %v426 = vunpack.c.l.b16 %v282
      %v427 = vunpack.c.l.b16 %v283
      %v428 = vunpack.c.l.b16 %v284
      %v429 = vunpack.c.l.b16 %v285
      %v430 = vunpack.c.l.b16 %v286
      %v431 = vunpack.c.l.b16 %v287
      %v432 = vunpack.c.l.b16 %v288
      %v433 = vunpack.c.l.b16 %v289
      %v434 = vunpack.c.l.b16 %v290
      %v435 = vunpack.c.l.b16 %v291
      %v436 = vunpack.c.l.b16 %v292
      %v437 = vunpack.c.l.b16 %v293
      %v438 = vunpack.c.l.b16 %v294
      %v439 = vunpack.c.l.b16 %v295
      %v440 = vunpack.c.l.b16 %v296
      %v441 = vunpack.c.l.b16 %v297
      %v442 = vunpack.c.l.b16 %v298
      %v443 = vunpack.c.l.b16 %v299
      %v444 = vunpack.c.l.b16 %v300
      %v445 = vunpack.c.l.b16 %v301
      %v446 = vunpack.c.l.b16 %v302
      %v447 = vunpack.c.l.b16 %v303
      %v448 = vunpack.c.l.b16 %v304
      %v449 = vunpack.c.l.b16 %v305
      %v450 = vunpack.c.l.b16 %v306
      %v451 = vunpack.c.l.b16 %v307
      %v452 = vunpack.c.l.b16 %v308
      %v453 = vunpack.c.l.b16 %v309
      %v454 = vunpack.c.l.b16 %v310
      %v455 = vunpack.c.l.b16 %v311
      %v456 = vunpack.c.l.b16 %v312
      %v457 = vunpack.c.l.b16 %v313
      %v458 = vunpack.c.l.b16 %v314
      %v459 = vunpack.c.l.b16 %v315
      %v460 = vunpack.c.l.b16 %v316
      %v461 = vunpack.c.l.b16 %v317
      %v462 = vunpack.c.l.b16 %v318
      %v463 = vunpack.c.l.b16 %v319
      %v464 = vunpack.c.l.b16 %v320
      %v465 = vunpack.c.l.b16 %v321
      %v466 = vunpack.c.l.b16 %v322
      %v467 = vunpack.c.l.b16 %v323
      %v468 = vunpack.c.l.b16 %v324
      %v469 = vunpack.c.l.b16 %v325
      %v470 = vunpack.c.l.b16 %v326
      %v471 = vunpack.c.l.b16 %v327
      %v472 = vunpack.c.l.b16 %v328
      %v473 = vunpack.c.l.b16 %v329
      %v474 = vpack.c.b16 %v411, %v410
      %v475 = vpack.c.b16 %v413, %v412
      %v476 = vpack.c.b16 %v415, %v414
      %v477 = vpack.c.b16 %v417, %v416
      %v478 = vpack.c.b16 %v419, %v418
      %v479 = vpack.c.b16 %v421, %v420
      %v480 = vpack.c.b16 %v423, %v422
      %v481 = vpack.c.b16 %v425, %v424
      %v482 = vpack.c.b16 %v427, %v426
      %v483 = vpack.c.b16 %v429, %v428
      %v484 = vpack.c.b16 %v431, %v430
      %v485 = vpack.c.b16 %v433, %v432
      %v486 = vpack.c.b16 %v435, %v434
      %v487 = vpack.c.b16 %v437, %v436
      %v488 = vpack.c.b16 %v439, %v438
      %v489 = vpack.c.b16 %v441, %v440
      %v490 = vpack.c.b16 %v443, %v442
      %v491 = vpack.c.b16 %v445, %v444
      %v492 = vpack.c.b16 %v447, %v446
      %v493 = vpack.c.b16 %v449, %v448
      %v494 = vpack.c.b16 %v451, %v450
      %v495 = vpack.c.b16 %v453, %v452
      %v496 = vpack.c.b16 %v455, %v454
      %v497 = vpack.c.b16 %v457, %v456
      %v498 = vpack.c.b16 %v459, %v458
      %v499 = vpack.c.b16 %v461, %v460
      %v500 = vpack.c.b16 %v463, %v462
      %v501 = vpack.c.b16 %v465, %v464
      %v502 = vpack.c.b16 %v467, %v466
      %v503 = vpack.c.b16 %v469, %v468
      %v504 = vpack.c.b16 %v471, %v470
      %v505 = vpack.c.b16 %v473, %v472
      %v554 = vunpack.c.l.b16 %v330
      %v555 = vunpack.c.l.b16 %v331
      %v556 = vunpack.c.l.b16 %v332
      %v557 = vunpack.c.l.b16 %v333
      %v558 = vunpack.c.l.b16 %v334
      %v559 = vunpack.c.l.b16 %v335
      %v560 = vunpack.c.l.b16 %v336
      %v561 = vunpack.c.l.b16 %v337
      %v562 = vunpack.c.l.b16 %v338
      %v563 = vunpack.c.l.b16 %v339
      %v564 = vunpack.c.l.b16 %v340
      %v565 = vunpack.c.l.b16 %v341
      %v566 = vunpack.c.l.b16 %v342
      %v567 = vunpack.c.l.b16 %v343
      %v568 = vunpack.c.l.b16 %v344
      %v569 = vunpack.c.l.b16 %v345
      %v570 = vpack.c.b16 %v555, %v554
      %v571 = vpack.c.b16 %v557, %v556
      %v572 = vpack.c.b16 %v559, %v558
      %v573 = vpack.c.b16 %v561, %v560
      %v574 = vpack.c.b16 %v563, %v562
      %v575 = vpack.c.b16 %v565, %v564
      %v576 = vpack.c.b16 %v567, %v566
      %v577 = vpack.c.b16 %v569, %v568
      %586 = vmatpush.bf16.msra.mxu0 %v577
      %587 = vmatpush.bf16.msra.mxu0 %v576
      %588 = vmatpush.bf16.msra.mxu0 %v575
      %589 = vmatpush.bf16.msra.mxu0 %v574
      %590 = vmatpush.bf16.msra.mxu0 %v573
      %591 = vmatpush.bf16.msra.mxu0 %v572
      %592 = vmatpush.bf16.msra.mxu0 %v571
      %593 = vmatpush.bf16.msra.mxu0 %v570
      %594 = vmatmul.bf16.gmra.mxu0 %v474
      %v595 = vpop.f32.mrf.mxu0
      %v596 = vadd.f32 0.0, %v595
      %v597 = vpop.f32.mrf.mxu0
      %v598 = vadd.f32 0.0, %v597
      %599 = vmatmul.bf16.gmra.mxu0 %v475
      %v600 = vpop.f32.mrf.mxu0
      %v601 = vadd.f32 0.0, %v600
      %v602 = vpop.f32.mrf.mxu0
      %v603 = vadd.f32 0.0, %v602
      %604 = vmatmul.bf16.gmra.mxu0 %v476
      %v605 = vpop.f32.mrf.mxu0
      %v606 = vadd.f32 0.0, %v605
      %v607 = vpop.f32.mrf.mxu0
      %v608 = vadd.f32 0.0, %v607
      %609 = vmatmul.bf16.gmra.mxu0 %v477
      %v610 = vpop.f32.mrf.mxu0
      %v611 = vadd.f32 0.0, %v610
      %v612 = vpop.f32.mrf.mxu0
      %v613 = vadd.f32 0.0, %v612
      %614 = vmatmul.bf16.gmra.mxu0 %v478
      %v615 = vpop.f32.mrf.mxu0
      %v616 = vadd.f32 0.0, %v615
      %v617 = vpop.f32.mrf.mxu0
      %v618 = vadd.f32 0.0, %v617
      %619 = vmatmul.bf16.gmra.mxu0 %v479
      %v620 = vpop.f32.mrf.mxu0
      %v621 = vadd.f32 0.0, %v620
      %v622 = vpop.f32.mrf.mxu0
      %v623 = vadd.f32 0.0, %v622
      %624 = vmatmul.bf16.gmra.mxu0 %v480
      %v625 = vpop.f32.mrf.mxu0
      %v626 = vadd.f32 0.0, %v625
      %v627 = vpop.f32.mrf.mxu0
      %v628 = vadd.f32 0.0, %v627
      %629 = vmatmul.bf16.gmra.mxu0 %v481
      %v630 = vpop.f32.mrf.mxu0
      %v631 = vadd.f32 0.0, %v630
      %v632 = vpop.f32.mrf.mxu0
      %v633 = vadd.f32 0.0, %v632
      %634 = vmatmul.bf16.gmra.mxu0 %v482
      %v635 = vpop.f32.mrf.mxu0
      %v636 = vadd.f32 0.0, %v635
      %v637 = vpop.f32.mrf.mxu0
      %v638 = vadd.f32 0.0, %v637
      %639 = vmatmul.bf16.gmra.mxu0 %v483
      %v640 = vpop.f32.mrf.mxu0
      %v641 = vadd.f32 0.0, %v640
      %v642 = vpop.f32.mrf.mxu0
      %v643 = vadd.f32 0.0, %v642
      %644 = vmatmul.bf16.gmra.mxu0 %v484
      %v645 = vpop.f32.mrf.mxu0
      %v646 = vadd.f32 0.0, %v645
      %v647 = vpop.f32.mrf.mxu0
      %v648 = vadd.f32 0.0, %v647
      %649 = vmatmul.bf16.gmra.mxu0 %v485
      %v650 = vpop.f32.mrf.mxu0
      %v651 = vadd.f32 0.0, %v650
      %v652 = vpop.f32.mrf.mxu0
      %v653 = vadd.f32 0.0, %v652
      %654 = vmatmul.bf16.gmra.mxu0 %v486
      %v655 = vpop.f32.mrf.mxu0
      %v656 = vadd.f32 0.0, %v655
      %v657 = vpop.f32.mrf.mxu0
      %v658 = vadd.f32 0.0, %v657
      %659 = vmatmul.bf16.gmra.mxu0 %v487
      %v660 = vpop.f32.mrf.mxu0
      %v661 = vadd.f32 0.0, %v660
      %v662 = vpop.f32.mrf.mxu0
      %v663 = vadd.f32 0.0, %v662
      %664 = vmatmul.bf16.gmra.mxu0 %v488
      %v665 = vpop.f32.mrf.mxu0
      %v666 = vadd.f32 0.0, %v665
      %v667 = vpop.f32.mrf.mxu0
      %v668 = vadd.f32 0.0, %v667
      %669 = vmatmul.bf16.gmra.mxu0 %v489
      %v670 = vpop.f32.mrf.mxu0
      %v671 = vadd.f32 0.0, %v670
      %v672 = vpop.f32.mrf.mxu0
      %v673 = vadd.f32 0.0, %v672
      %674 = vmatmul.bf16.gmra.mxu0 %v490
      %v675 = vpop.f32.mrf.mxu0
      %v676 = vadd.f32 0.0, %v675
      %v677 = vpop.f32.mrf.mxu0
      %v678 = vadd.f32 0.0, %v677
      %679 = vmatmul.bf16.gmra.mxu0 %v491
      %v680 = vpop.f32.mrf.mxu0
      %v681 = vadd.f32 0.0, %v680
      %v682 = vpop.f32.mrf.mxu0
      %v683 = vadd.f32 0.0, %v682
      %684 = vmatmul.bf16.gmra.mxu0 %v492
      %v685 = vpop.f32.mrf.mxu0
      %v686 = vadd.f32 0.0, %v685
      %v687 = vpop.f32.mrf.mxu0
      %v688 = vadd.f32 0.0, %v687
      %689 = vmatmul.bf16.gmra.mxu0 %v493
      %v690 = vpop.f32.mrf.mxu0
      %v691 = vadd.f32 0.0, %v690
      %v692 = vpop.f32.mrf.mxu0
      %v693 = vadd.f32 0.0, %v692
      %694 = vmatmul.bf16.gmra.mxu0 %v494
      %v695 = vpop.f32.mrf.mxu0
      %v696 = vadd.f32 0.0, %v695
      %v697 = vpop.f32.mrf.mxu0
      %v698 = vadd.f32 0.0, %v697
      %699 = vmatmul.bf16.gmra.mxu0 %v495
      %v700 = vpop.f32.mrf.mxu0
      %v701 = vadd.f32 0.0, %v700
      %v702 = vpop.f32.mrf.mxu0
      %v703 = vadd.f32 0.0, %v702
      %704 = vmatmul.bf16.gmra.mxu0 %v496
      %v705 = vpop.f32.mrf.mxu0
      %v706 = vadd.f32 0.0, %v705
      %v707 = vpop.f32.mrf.mxu0
      %v708 = vadd.f32 0.0, %v707
      %709 = vmatmul.bf16.gmra.mxu0 %v497
      %v710 = vpop.f32.mrf.mxu0
      %v711 = vadd.f32 0.0, %v710
      %v712 = vpop.f32.mrf.mxu0
      %v713 = vadd.f32 0.0, %v712
      %714 = vmatmul.bf16.gmra.mxu0 %v498
      %v715 = vpop.f32.mrf.mxu0
      %v716 = vadd.f32 0.0, %v715
      %v717 = vpop.f32.mrf.mxu0
      %v718 = vadd.f32 0.0, %v717
      %719 = vmatmul.bf16.gmra.mxu0 %v499
      %v720 = vpop.f32.mrf.mxu0
      %v721 = vadd.f32 0.0, %v720
      %v722 = vpop.f32.mrf.mxu0
      %v723 = vadd.f32 0.0, %v722
      %724 = vmatmul.bf16.gmra.mxu0 %v500
      %v725 = vpop.f32.mrf.mxu0
      %v726 = vadd.f32 0.0, %v725
      %v727 = vpop.f32.mrf.mxu0
      %v728 = vadd.f32 0.0, %v727
      %729 = vmatmul.bf16.gmra.mxu0 %v501
      %v730 = vpop.f32.mrf.mxu0
      %v731 = vadd.f32 0.0, %v730
      %v732 = vpop.f32.mrf.mxu0
      %v733 = vadd.f32 0.0, %v732
      %734 = vmatmul.bf16.gmra.mxu0 %v502
      %v735 = vpop.f32.mrf.mxu0
      %v736 = vadd.f32 0.0, %v735
      %v737 = vpop.f32.mrf.mxu0
      %v738 = vadd.f32 0.0, %v737
      %739 = vmatmul.bf16.gmra.mxu0 %v503
      %v740 = vpop.f32.mrf.mxu0
      %v741 = vadd.f32 0.0, %v740
      %v742 = vpop.f32.mrf.mxu0
      %v743 = vadd.f32 0.0, %v742
      %744 = vmatmul.bf16.gmra.mxu0 %v504
      %v745 = vpop.f32.mrf.mxu0
      %v746 = vadd.f32 0.0, %v745
      %v747 = vpop.f32.mrf.mxu0
      %v748 = vadd.f32 0.0, %v747
      %749 = vmatmul.bf16.gmra.mxu0 %v505
      %v750 = vpop.f32.mrf.mxu0
      %v751 = vadd.f32 0.0, %v750
      %v752 = vpop.f32.mrf.mxu0
      %v753 = vadd.f32 0.0, %v752
      %754 = vdwg.mxu0
      %v755 = vld [vmem:[%s253] sm:$0x1]
      %v756 = vld [vmem:[%s256] sm:$0x1]
      %v758 = vperm.slane %v755, 0
      %v760 = vmul.f32 %v596, %v758
      %v761 = vmul.f32 %v598, %v758
      %v762 = vmul.f32 %v601, %v758
      %v763 = vmul.f32 %v603, %v758
      %v764 = vmul.f32 %v606, %v758
      %v765 = vmul.f32 %v608, %v758
      %v766 = vmul.f32 %v611, %v758
      %v767 = vmul.f32 %v613, %v758
      %v768 = vmul.f32 %v616, %v758
      %v769 = vmul.f32 %v618, %v758
      %v770 = vmul.f32 %v621, %v758
      %v771 = vmul.f32 %v623, %v758
      %v772 = vmul.f32 %v626, %v758
      %v773 = vmul.f32 %v628, %v758
      %v774 = vmul.f32 %v631, %v758
      %v775 = vmul.f32 %v633, %v758
      %v776 = vmul.f32 %v636, %v758
      %v777 = vmul.f32 %v638, %v758
      %v778 = vmul.f32 %v641, %v758
      %v779 = vmul.f32 %v643, %v758
      %v780 = vmul.f32 %v646, %v758
      %v781 = vmul.f32 %v648, %v758
      %v782 = vmul.f32 %v651, %v758
      %v783 = vmul.f32 %v653, %v758
      %v784 = vmul.f32 %v656, %v758
      %v785 = vmul.f32 %v658, %v758
      %v786 = vmul.f32 %v661, %v758
      %v787 = vmul.f32 %v663, %v758
      %v788 = vmul.f32 %v666, %v758
      %v789 = vmul.f32 %v668, %v758
      %v790 = vmul.f32 %v671, %v758
      %v791 = vmul.f32 %v673, %v758
      %v792 = vmul.f32 %v676, %v758
      %v793 = vmul.f32 %v678, %v758
      %v794 = vmul.f32 %v681, %v758
      %v795 = vmul.f32 %v683, %v758
      %v796 = vmul.f32 %v686, %v758
      %v797 = vmul.f32 %v688, %v758
      %v798 = vmul.f32 %v691, %v758
      %v799 = vmul.f32 %v693, %v758
      %v800 = vmul.f32 %v696, %v758
      %v801 = vmul.f32 %v698, %v758
      %v802 = vmul.f32 %v701, %v758
      %v803 = vmul.f32 %v703, %v758
      %v804 = vmul.f32 %v706, %v758
      %v805 = vmul.f32 %v708, %v758
      %v806 = vmul.f32 %v711, %v758
      %v807 = vmul.f32 %v713, %v758
      %v808 = vmul.f32 %v716, %v758
      %v809 = vmul.f32 %v718, %v758
      %v810 = vmul.f32 %v721, %v758
      %v811 = vmul.f32 %v723, %v758
      %v812 = vmul.f32 %v726, %v758
      %v813 = vmul.f32 %v728, %v758
      %v814 = vmul.f32 %v731, %v758
      %v815 = vmul.f32 %v733, %v758
      %v816 = vmul.f32 %v736, %v758
      %v817 = vmul.f32 %v738, %v758
      %v818 = vmul.f32 %v741, %v758
      %v819 = vmul.f32 %v743, %v758
      %v820 = vmul.f32 %v746, %v758
      %v821 = vmul.f32 %v748, %v758
      %v822 = vmul.f32 %v751, %v758
      %v823 = vmul.f32 %v753, %v758
      %v825 = vperm.slane %v756, 0
      %v827 = vadd.f32 %v760, %v825
      %v828 = vadd.f32 %v761, %v825
      %v829 = vadd.f32 %v762, %v825
      %v830 = vadd.f32 %v763, %v825
      %v831 = vadd.f32 %v764, %v825
      %v832 = vadd.f32 %v765, %v825
      %v833 = vadd.f32 %v766, %v825
      %v834 = vadd.f32 %v767, %v825
      %v835 = vadd.f32 %v768, %v825
      %v836 = vadd.f32 %v769, %v825
      %v837 = vadd.f32 %v770, %v825
      %v838 = vadd.f32 %v771, %v825
      %v839 = vadd.f32 %v772, %v825
      %v840 = vadd.f32 %v773, %v825
      %v841 = vadd.f32 %v774, %v825
      %v842 = vadd.f32 %v775, %v825
      %v843 = vadd.f32 %v776, %v825
      %v844 = vadd.f32 %v777, %v825
      %v845 = vadd.f32 %v778, %v825
      %v846 = vadd.f32 %v779, %v825
      %v847 = vadd.f32 %v780, %v825
      %v848 = vadd.f32 %v781, %v825
      %v849 = vadd.f32 %v782, %v825
      %v850 = vadd.f32 %v783, %v825
      %v851 = vadd.f32 %v784, %v825
      %v852 = vadd.f32 %v785, %v825
      %v853 = vadd.f32 %v786, %v825
      %v854 = vadd.f32 %v787, %v825
      %v855 = vadd.f32 %v788, %v825
      %v856 = vadd.f32 %v789, %v825
      %v857 = vadd.f32 %v790, %v825
      %v858 = vadd.f32 %v791, %v825
      %v859 = vadd.f32 %v792, %v825
      %v860 = vadd.f32 %v793, %v825
      %v861 = vadd.f32 %v794, %v825
      %v862 = vadd.f32 %v795, %v825
      %v863 = vadd.f32 %v796, %v825
      %v864 = vadd.f32 %v797, %v825
      %v865 = vadd.f32 %v798, %v825
      %v866 = vadd.f32 %v799, %v825
      %v867 = vadd.f32 %v800, %v825
      %v868 = vadd.f32 %v801, %v825
      %v869 = vadd.f32 %v802, %v825
      %v870 = vadd.f32 %v803, %v825
      %v871 = vadd.f32 %v804, %v825
      %v872 = vadd.f32 %v805, %v825
      %v873 = vadd.f32 %v806, %v825
      %v874 = vadd.f32 %v807, %v825
      %v875 = vadd.f32 %v808, %v825
      %v876 = vadd.f32 %v809, %v825
      %v877 = vadd.f32 %v810, %v825
      %v878 = vadd.f32 %v811, %v825
      %v879 = vadd.f32 %v812, %v825
      %v880 = vadd.f32 %v813, %v825
      %v881 = vadd.f32 %v814, %v825
      %v882 = vadd.f32 %v815, %v825
      %v883 = vadd.f32 %v816, %v825
      %v884 = vadd.f32 %v817, %v825
      %v885 = vadd.f32 %v818, %v825
      %v886 = vadd.f32 %v819, %v825
      %v887 = vadd.f32 %v820, %v825
      %v888 = vadd.f32 %v821, %v825
      %v889 = vadd.f32 %v822, %v825
      %v890 = vadd.f32 %v823, %v825
      %v891 = vmax.f32 %v827, 0.0
      %v892 = vmax.f32 %v828, 0.0
      %v893 = vmax.f32 %v829, 0.0
      %v894 = vmax.f32 %v830, 0.0
      %v895 = vmax.f32 %v831, 0.0
      %v896 = vmax.f32 %v832, 0.0
      %v897 = vmax.f32 %v833, 0.0
      %v898 = vmax.f32 %v834, 0.0
      %v899 = vmax.f32 %v835, 0.0
      %v900 = vmax.f32 %v836, 0.0
      %v901 = vmax.f32 %v837, 0.0
      %v902 = vmax.f32 %v838, 0.0
      %v903 = vmax.f32 %v839, 0.0
      %v904 = vmax.f32 %v840, 0.0
      %v905 = vmax.f32 %v841, 0.0
      %v906 = vmax.f32 %v842, 0.0
      %v907 = vmax.f32 %v843, 0.0
      %v908 = vmax.f32 %v844, 0.0
      %v909 = vmax.f32 %v845, 0.0
      %v910 = vmax.f32 %v846, 0.0
      %v911 = vmax.f32 %v847, 0.0
      %v912 = vmax.f32 %v848, 0.0
      %v913 = vmax.f32 %v849, 0.0
      %v914 = vmax.f32 %v850, 0.0
      %v915 = vmax.f32 %v851, 0.0
      %v916 = vmax.f32 %v852, 0.0
      %v917 = vmax.f32 %v853, 0.0
      %v918 = vmax.f32 %v854, 0.0
      %v919 = vmax.f32 %v855, 0.0
      %v920 = vmax.f32 %v856, 0.0
      %v921 = vmax.f32 %v857, 0.0
      %v922 = vmax.f32 %v858, 0.0
      %v923 = vmax.f32 %v859, 0.0
      %v924 = vmax.f32 %v860, 0.0
      %v925 = vmax.f32 %v861, 0.0
      %v926 = vmax.f32 %v862, 0.0
      %v927 = vmax.f32 %v863, 0.0
      %v928 = vmax.f32 %v864, 0.0
      %v929 = vmax.f32 %v865, 0.0
      %v930 = vmax.f32 %v866, 0.0
      %v931 = vmax.f32 %v867, 0.0
      %v932 = vmax.f32 %v868, 0.0
      %v933 = vmax.f32 %v869, 0.0
      %v934 = vmax.f32 %v870, 0.0
      %v935 = vmax.f32 %v871, 0.0
      %v936 = vmax.f32 %v872, 0.0
      %v937 = vmax.f32 %v873, 0.0
      %v938 = vmax.f32 %v874, 0.0
      %v939 = vmax.f32 %v875, 0.0
      %v940 = vmax.f32 %v876, 0.0
      %v941 = vmax.f32 %v877, 0.0
      %v942 = vmax.f32 %v878, 0.0
      %v943 = vmax.f32 %v879, 0.0
      %v944 = vmax.f32 %v880, 0.0
      %v945 = vmax.f32 %v881, 0.0
      %v946 = vmax.f32 %v882, 0.0
      %v947 = vmax.f32 %v883, 0.0
      %v948 = vmax.f32 %v884, 0.0
      %v949 = vmax.f32 %v885, 0.0
      %v950 = vmax.f32 %v886, 0.0
      %v951 = vmax.f32 %v887, 0.0
      %v952 = vmax.f32 %v888, 0.0
      %v953 = vmax.f32 %v889, 0.0
      %v954 = vmax.f32 %v890, 0.0
      %v955 = vpack.c.bf16 %v891, %v891
      %v956 = vpack.c.bf16 %v892, %v892
      %v957 = vpack.c.bf16 %v893, %v893
      %v958 = vpack.c.bf16 %v894, %v894
      %v959 = vpack.c.bf16 %v895, %v895
      %v960 = vpack.c.bf16 %v896, %v896
      %v961 = vpack.c.bf16 %v897, %v897
      %v962 = vpack.c.bf16 %v898, %v898
      %v963 = vpack.c.bf16 %v899, %v899
      %v964 = vpack.c.bf16 %v900, %v900
      %v965 = vpack.c.bf16 %v901, %v901
      %v966 = vpack.c.bf16 %v902, %v902
      %v967 = vpack.c.bf16 %v903, %v903
      %v968 = vpack.c.bf16 %v904, %v904
      %v969 = vpack.c.bf16 %v905, %v905
      %v970 = vpack.c.bf16 %v906, %v906
      %v971 = vpack.c.bf16 %v907, %v907
      %v972 = vpack.c.bf16 %v908, %v908
      %v973 = vpack.c.bf16 %v909, %v909
      %v974 = vpack.c.bf16 %v910, %v910
      %v975 = vpack.c.bf16 %v911, %v911
      %v976 = vpack.c.bf16 %v912, %v912
      %v977 = vpack.c.bf16 %v913, %v913
      %v978 = vpack.c.bf16 %v914, %v914
      %v979 = vpack.c.bf16 %v915, %v915
      %v980 = vpack.c.bf16 %v916, %v916
      %v981 = vpack.c.bf16 %v917, %v917
      %v982 = vpack.c.bf16 %v918, %v918
      %v983 = vpack.c.bf16 %v919, %v919
      %v984 = vpack.c.bf16 %v920, %v920
      %v985 = vpack.c.bf16 %v921, %v921
      %v986 = vpack.c.bf16 %v922, %v922
      %v987 = vpack.c.bf16 %v923, %v923
      %v988 = vpack.c.bf16 %v924, %v924
      %v989 = vpack.c.bf16 %v925, %v925
      %v990 = vpack.c.bf16 %v926, %v926
      %v991 = vpack.c.bf16 %v927, %v927
      %v992 = vpack.c.bf16 %v928, %v928
      %v993 = vpack.c.bf16 %v929, %v929
      %v994 = vpack.c.bf16 %v930, %v930
      %v995 = vpack.c.bf16 %v931, %v931
      %v996 = vpack.c.bf16 %v932, %v932
      %v997 = vpack.c.bf16 %v933, %v933
      %v998 = vpack.c.bf16 %v934, %v934
      %v999 = vpack.c.bf16 %v935, %v935
      %v1000 = vpack.c.bf16 %v936, %v936
      %v1001 = vpack.c.bf16 %v937, %v937
      %v1002 = vpack.c.bf16 %v938, %v938
      %v1003 = vpack.c.bf16 %v939, %v939
      %v1004 = vpack.c.bf16 %v940, %v940
      %v1005 = vpack.c.bf16 %v941, %v941
      %v1006 = vpack.c.bf16 %v942, %v942
      %v1007 = vpack.c.bf16 %v943, %v943
      %v1008 = vpack.c.bf16 %v944, %v944
      %v1009 = vpack.c.bf16 %v945, %v945
      %v1010 = vpack.c.bf16 %v946, %v946
      %v1011 = vpack.c.bf16 %v947, %v947
      %v1012 = vpack.c.bf16 %v948, %v948
      %v1013 = vpack.c.bf16 %v949, %v949
      %v1014 = vpack.c.bf16 %v950, %v950
      %v1015 = vpack.c.bf16 %v951, %v951
      %v1016 = vpack.c.bf16 %v952, %v952
      %v1017 = vpack.c.bf16 %v953, %v953
      %v1018 = vpack.c.bf16 %v954, %v954
      %1019 = vst [vmem:[%s264] sm:$0xf] %v955
      %1020 = vst [vmem:[%s264 + $0x4] sm:$0xf] %v956
      %1021 = vst [vmem:[%s264 + $0x8] sm:$0xf] %v957
      %1022 = vst [vmem:[%s264 + $0xc] sm:$0xf] %v958
      %1023 = vst [vmem:[%s264 + $0x10] sm:$0xf] %v959
      %1024 = vst [vmem:[%s264 + $0x14] sm:$0xf] %v960
      %1025 = vst [vmem:[%s264 + $0x18] sm:$0xf] %v961
      %1026 = vst [vmem:[%s264 + $0x1c] sm:$0xf] %v962
      %1027 = vst [vmem:[%s264 + $0x20] sm:$0xf] %v963
      %1028 = vst [vmem:[%s264 + $0x24] sm:$0xf] %v964
      %1029 = vst [vmem:[%s264 + $0x28] sm:$0xf] %v965
      %1030 = vst [vmem:[%s264 + $0x2c] sm:$0xf] %v966
      %1031 = vst [vmem:[%s264 + $0x30] sm:$0xf] %v967
      %1032 = vst [vmem:[%s264 + $0x34] sm:$0xf] %v968
      %1033 = vst [vmem:[%s264 + $0x38] sm:$0xf] %v969
      %1034 = vst [vmem:[%s264 + $0x3c] sm:$0xf] %v970
      %1035 = vst [vmem:[%s264 + $0x40] sm:$0xf] %v971
      %1036 = vst [vmem:[%s264 + $0x44] sm:$0xf] %v972
      %1037 = vst [vmem:[%s264 + $0x48] sm:$0xf] %v973
      %1038 = vst [vmem:[%s264 + $0x4c] sm:$0xf] %v974
      %1039 = vst [vmem:[%s264 + $0x50] sm:$0xf] %v975
      %1040 = vst [vmem:[%s264 + $0x54] sm:$0xf] %v976
      %1041 = vst [vmem:[%s264 + $0x58] sm:$0xf] %v977
      %1042 = vst [vmem:[%s264 + $0x5c] sm:$0xf] %v978
      %1043 = vst [vmem:[%s264 + $0x60] sm:$0xf] %v979
      %1044 = vst [vmem:[%s264 + $0x64] sm:$0xf] %v980
      %1045 = vst [vmem:[%s264 + $0x68] sm:$0xf] %v981
      %1046 = vst [vmem:[%s264 + $0x6c] sm:$0xf] %v982
      %1047 = vst [vmem:[%s264 + $0x70] sm:$0xf] %v983
      %1048 = vst [vmem:[%s264 + $0x74] sm:$0xf] %v984
      %1049 = vst [vmem:[%s264 + $0x78] sm:$0xf] %v985
      %1050 = vst [vmem:[%s264 + $0x7c] sm:$0xf] %v986
      %1051 = vst [vmem:[%s264 + $0x80] sm:$0xf] %v987
      %1052 = vst [vmem:[%s264 + $0x84] sm:$0xf] %v988
      %1053 = vst [vmem:[%s264 + $0x88] sm:$0xf] %v989
      %1054 = vst [vmem:[%s264 + $0x8c] sm:$0xf] %v990
      %1055 = vst [vmem:[%s264 + $0x90] sm:$0xf] %v991
      %1056 = vst [vmem:[%s264 + $0x94] sm:$0xf] %v992
      %1057 = vst [vmem:[%s264 + $0x98] sm:$0xf] %v993
      %1058 = vst [vmem:[%s264 + $0x9c] sm:$0xf] %v994
      %1059 = vst [vmem:[%s264 + $0xa0] sm:$0xf] %v995
      %1060 = vst [vmem:[%s264 + $0xa4] sm:$0xf] %v996
      %1061 = vst [vmem:[%s264 + $0xa8] sm:$0xf] %v997
      %1062 = vst [vmem:[%s264 + $0xac] sm:$0xf] %v998
      %1063 = vst [vmem:[%s264 + $0xb0] sm:$0xf] %v999
      %1064 = vst [vmem:[%s264 + $0xb4] sm:$0xf] %v1000
      %1065 = vst [vmem:[%s264 + $0xb8] sm:$0xf] %v1001
      %1066 = vst [vmem:[%s264 + $0xbc] sm:$0xf] %v1002
      %1067 = vst [vmem:[%s264 + $0xc0] sm:$0xf] %v1003
      %1068 = vst [vmem:[%s264 + $0xc4] sm:$0xf] %v1004
      %1069 = vst [vmem:[%s264 + $0xc8] sm:$0xf] %v1005
      %1070 = vst [vmem:[%s264 + $0xcc] sm:$0xf] %v1006
      %1071 = vst [vmem:[%s264 + $0xd0] sm:$0xf] %v1007
      %1072 = vst [vmem:[%s264 + $0xd4] sm:$0xf] %v1008
      %1073 = vst [vmem:[%s264 + $0xd8] sm:$0xf] %v1009
      %1074 = vst [vmem:[%s264 + $0xdc] sm:$0xf] %v1010
      %1075 = vst [vmem:[%s264 + $0xe0] sm:$0xf] %v1011
      %1076 = vst [vmem:[%s264 + $0xe4] sm:$0xf] %v1012
      %1077 = vst [vmem:[%s264 + $0xe8] sm:$0xf] %v1013
      %1078 = vst [vmem:[%s264 + $0xec] sm:$0xf] %v1014
      %1079 = vst [vmem:[%s264 + $0xf0] sm:$0xf] %v1015
      %1080 = vst [vmem:[%s264 + $0xf4] sm:$0xf] %v1016
      %1081 = vst [vmem:[%s264 + $0xf8] sm:$0xf] %v1017
      %1082 = vst [vmem:[%s264 + $0xfc] sm:$0xf] %v1018
      %s1083 = smul.u32 64, %s19
      %p1084 = scmp.lt.s32.totalorder %s1083, 895
      %s1085 = scalar_select %p1084, %s1083, 895
      %p1086 = scmp.lt.s32.totalorder %s20, 0
      %s1087 = scalar_select %p1086, %s20, 0
      %s1088 = sadd.s32 %s1087, %s1085
      %s1089 = smul.addr %s1088, 4
      %s1090 = scalar_lea.vmem %s4, %s1089
      // Predicated region
      $region37: #{cnn_forward.5} parent=35 // pred_check
        %p1091 = pneg %p151
      $region38: #{cnn_forward.5} parent=35 // pred_check_branch
        %1093 = sbr.rel (%p1091) target = $region40
      $region39: #{cnn_forward.5} parent=35 // pred_region
        %s1094 = smul.u32 64, %s19
      $region40: #{cnn_forward.5} parent=35 // pred_fallthru
        _
    $region36: #{cnn_forward.5} parent=5 // pred_fallthru
      _
    %p1095 = scmp.le.s32.totalorder 2, %s10
    // Predicated region
    $region41: #{cnn_forward.5} parent=5 // pred_check
      %p1096 = pneg %p1095
    $region42: #{cnn_forward.5} parent=5 // pred_check_branch
      %1098 = sbr.rel (%p1096) target = $region44
    $region43: #{cnn_forward.5} parent=5 // pred_region
      %s1099 = ssub.s32 %s10, 2
      // Predicated region
      $region45: #{cnn_forward.5} parent=43 // pred_check
        %p1100 = pneg %p157
      $region46: #{cnn_forward.5} parent=43 // pred_check_branch
        %1102 = sbr.rel (%p1100) target = $region48
      $region47: #{cnn_forward.5} parent=43 // pred_region
        %s1103 = smul.u32 64, %s21
        %p1104 = scmp.lt.s32.totalorder %s1103, 895
        %s1105 = scalar_select %p1104, %s1103, 895
        %p1106 = scmp.lt.s32.totalorder %s22, 0
        %s1107 = scalar_select %p1106, %s22, 0
        %s1108 = sadd.s32 %s1107, %s1105
        %s1109 = smul.addr %s1108, 4
        %s1110 = scalar_lea.vmem %s4, %s1109
      $region48: #{cnn_forward.5} parent=43 // pred_fallthru
        _
    $region44: #{cnn_forward.5} parent=5 // pred_fallthru
      _
  $region6: #{cnn_forward.5} parent=0 // loop_footer
    %s14 = sadd.s32 1, %s10
  $region7: #{cnn_forward.5} parent=0 // loop_footer_branch
    %9 = sbr.rel target = $region3
  $region8: #{cnn_forward.5} parent=0 // loop_exit
    _

// kernel: cnn_forward.6
$region0: #{cnn_forward.6}
  #allocation0 [shape = 'u32[]', space=smem, size = 0x4, offset = 0x4, fixed_abs, tag = 'smem constant byte address 0x4 - core index']
  #allocation1 [shape = 'u32[72,128]{1,0:T(1,128)}', space=vmem, size = 0x9000, scoped, tag = 'internal scratch']
  %s0 = inlined_call_operand.vmem [shape: bf16[7168,384], index: 0, kind: input, shape index: {}]
  %s1 = inlined_call_operand.vmem [shape: bf16[384,128], index: 1, kind: input, shape index: {}]
  %s2 = inlined_call_operand.vmem [shape: f32[1,128], index: 2, kind: input, shape index: {}]
  %s3 = inlined_call_operand.vmem [shape: f32[1,128], index: 3, kind: input, shape index: {}]
  %s4 = inlined_call_operand.vmem [shape: bf16[7168,128], index: 4, kind: output, shape index: {}]
  %s5 = sld [smem:[#allocation0]]
  $region49: #{cnn_forward.6} parent=0
    _
  %s7 = ssub.s32 1, %s5
  %s8 = scalar_select 0, %s7, %s5
  loop: start=0, step=1, limit=16
  $region2: #{cnn_forward.6} parent=0 // loop_pre_header
    _
  $region3: #{cnn_forward.6} parent=0 // loop_header
    %s10 = sphi 0, %s14
    %p11 = scmp.ge.s32.totalorder %s10, 16
    %s17 = sphi 0, %s29
    %s18 = sphi 0, %s25
    %s19 = sphi 0, %s17
    %s20 = sphi 0, %s18
    %s21 = sphi 0, %s19
    %s22 = sphi 0, %s20
    %s32 = sphi 0, %s34
    %s35 = sphi 0, %s32
    %s36 = sphi 0, %s35
    %s52 = sphi 0, %s36
    %s58 = sphi 0, %s60
    %s61 = sphi 0, %s58
    %s62 = sphi 0, %s61
    %s78 = sphi 0, %s62
    %s84 = sphi 0, %s86
    %s87 = sphi 0, %s84
    %s88 = sphi 0, %s87
    %s104 = sphi 0, %s88
    %s110 = sphi 0, %s112
    %s113 = sphi 0, %s110
    %s114 = sphi 0, %s113
    %s130 = sphi 0, %s114
    %s138 = sphi 0, %s140
    %s141 = sphi 0, %s138
    %s142 = sphi 0, %s141
    %s158 = sphi 0, %s142
  $region4: #{cnn_forward.6} parent=0 // loop_header_branch
    %13 = sbr.rel (%p11) target = $region8
  $region5: #{cnn_forward.6} parent=0 // loop_body
    %s15 = ssub.s32 %s10, 1
    %s16 = ssub.s32 %s10, 2
    %s23 = sadd.s32 1, %s18
    %p24 = scmp.ge.s32.totalorder %s23, 1
    %s25 = scalar_select %p24, 0, %s23
    %s26 = sadd.s32 1, %s17
    %s27 = scalar_select %p24, %s26, %s17
    %p28 = scmp.ge.s32.totalorder %s27, 14
    %s29 = scalar_select %p28, 0, %s27
    %s30 = ssub.s32 %s17, %s29
    %p31 = scmp.eq.s32.totalorder %s30, 0
    %s33 = sadd.s32 %s32, 1
    %s34 = scalar_select %p31, %s32, %s33
    %p37 = pneg %p31
    %p38 = scmp.eq.s32.totalorder %s10, 13
    %p39 = por %p37, %p38
    %p40 = scmp.ne.s32.totalorder %s32, %s35
    %p41 = scmp.eq.s32.totalorder %s10, 0
    %p42 = por %p40, %p41
    %p43 = scmp.ne.s32.totalorder %s32, %s35
    %p44 = scmp.eq.s32.totalorder %s15, 13
    %p45 = por %p43, %p44
    %p46 = scmp.ne.s32.totalorder %s35, %s36
    %p47 = scmp.eq.s32.totalorder %s15, 0
    %p48 = por %p46, %p47
    %p49 = scmp.ne.s32.totalorder %s35, %s36
    %p50 = scmp.eq.s32.totalorder %s16, 13
    %p51 = por %p49, %p50
    %p53 = scmp.ne.s32.totalorder %s36, %s52
    %p54 = scmp.eq.s32.totalorder %s16, 0
    %p55 = por %p53, %p54
    %s56 = ssub.s32 %s18, %s25
    %p57 = scmp.eq.s32.totalorder %s56, 0
    %s59 = sadd.s32 %s58, 1
    %s60 = scalar_select %p57, %s58, %s59
    %p63 = pneg %p57
    %p64 = scmp.eq.s32.totalorder %s10, 13
    %p65 = por %p63, %p64
    %p66 = scmp.ne.s32.totalorder %s58, %s61
    %p67 = scmp.eq.s32.totalorder %s10, 0
    %p68 = por %p66, %p67
    %p69 = scmp.ne.s32.totalorder %s58, %s61
    %p70 = scmp.eq.s32.totalorder %s15, 13
    %p71 = por %p69, %p70
    %p72 = scmp.ne.s32.totalorder %s61, %s62
    %p73 = scmp.eq.s32.totalorder %s15, 0
    %p74 = por %p72, %p73
    %p75 = scmp.ne.s32.totalorder %s61, %s62
    %p76 = scmp.eq.s32.totalorder %s16, 13
    %p77 = por %p75, %p76
    %p79 = scmp.ne.s32.totalorder %s62, %s78
    %p80 = scmp.eq.s32.totalorder %s16, 0
    %p81 = por %p79, %p80
    %s82 = ssub.s32 %s18, %s25
    %p83 = scmp.eq.s32.totalorder %s82, 0
    %s85 = sadd.s32 %s84, 1
    %s86 = scalar_select %p83, %s84, %s85
    %p89 = pneg %p83
    %p90 = scmp.eq.s32.totalorder %s10, 13
    %p91 = por %p89, %p90
    %p92 = scmp.ne.s32.totalorder %s84, %s87
    %p93 = scmp.eq.s32.totalorder %s10, 0
    %p94 = por %p92, %p93
    %p95 = scmp.ne.s32.totalorder %s84, %s87
    %p96 = scmp.eq.s32.totalorder %s15, 13
    %p97 = por %p95, %p96
    %p98 = scmp.ne.s32.totalorder %s87, %s88
    %p99 = scmp.eq.s32.totalorder %s15, 0
    %p100 = por %p98, %p99
    %p101 = scmp.ne.s32.totalorder %s87, %s88
    %p102 = scmp.eq.s32.totalorder %s16, 13
    %p103 = por %p101, %p102
    %p105 = scmp.ne.s32.totalorder %s88, %s104
    %p106 = scmp.eq.s32.totalorder %s16, 0
    %p107 = por %p105, %p106
    %s108 = ssub.s32 %s18, %s25
    %p109 = scmp.eq.s32.totalorder %s108, 0
    %s111 = sadd.s32 %s110, 1
    %s112 = scalar_select %p109, %s110, %s111
    %p115 = pneg %p109
    %p116 = scmp.eq.s32.totalorder %s10, 13
    %p117 = por %p115, %p116
    %p118 = scmp.ne.s32.totalorder %s110, %s113
    %p119 = scmp.eq.s32.totalorder %s10, 0
    %p120 = por %p118, %p119
    %p121 = scmp.ne.s32.totalorder %s110, %s113
    %p122 = scmp.eq.s32.totalorder %s15, 13
    %p123 = por %p121, %p122
    %p124 = scmp.ne.s32.totalorder %s113, %s114
    %p125 = scmp.eq.s32.totalorder %s15, 0
    %p126 = por %p124, %p125
    %p127 = scmp.ne.s32.totalorder %s113, %s114
    %p128 = scmp.eq.s32.totalorder %s16, 13
    %p129 = por %p127, %p128
    %p131 = scmp.ne.s32.totalorder %s114, %s130
    %p132 = scmp.eq.s32.totalorder %s16, 0
    %p133 = por %p131, %p132
    %s134 = ssub.s32 %s17, %s29
    %s135 = ssub.s32 %s18, %s25
    %s136 = sor.u32 %s134, %s135
    %p137 = scmp.eq.s32.totalorder %s136, 0
    %s139 = sadd.s32 %s138, 1
    %s140 = scalar_select %p137, %s138, %s139
    %p143 = pneg %p137
    %p144 = scmp.eq.s32.totalorder %s10, 13
    %p145 = por %p143, %p144
    %p146 = scmp.ne.s32.totalorder %s138, %s141
    %p147 = scmp.eq.s32.totalorder %s10, 0
    %p148 = por %p146, %p147
    %p149 = scmp.ne.s32.totalorder %s138, %s141
    %p150 = scmp.eq.s32.totalorder %s15, 13
    %p151 = por %p149, %p150
    %p152 = scmp.ne.s32.totalorder %s141, %s142
    %p153 = scmp.eq.s32.totalorder %s15, 0
    %p154 = por %p152, %p153
    %p155 = scmp.ne.s32.totalorder %s141, %s142
    %p156 = scmp.eq.s32.totalorder %s16, 13
    %p157 = por %p155, %p156
    %p159 = scmp.ne.s32.totalorder %s142, %s158
    %p160 = scmp.eq.s32.totalorder %s16, 0
    %p161 = por %p159, %p160
    %p162 = scmp.le.s32.totalorder 1, %s10
    %p163 = scmp.lt.s32.totalorder %s10, 15
    %p164 = pnand %p162, %p163
    %p165 = pneg %p164
    // Predicated region
    $region9: #{cnn_forward.6} parent=5 // pred_check
      _
    $region10: #{cnn_forward.6} parent=5 // pred_check_branch
      %167 = sbr.rel (%p164) target = $region12
    $region11: #{cnn_forward.6} parent=5 // pred_region
      %s168 = ssub.s32 %s10, 1
      // Predicated region
      $region13: #{cnn_forward.6} parent=11 // pred_check
        %p169 = pneg %p74
      $region14: #{cnn_forward.6} parent=11 // pred_check_branch
        %171 = sbr.rel (%p169) target = $region16
      $region15: #{cnn_forward.6} parent=11 // pred_region
        %p172 = scmp.lt.s32.totalorder %s20, 0
        %s173 = scalar_select %p172, %s20, 0
        %s174 = smul.addr %s173, 4
        %s175 = scalar_lea.vmem %s1, %s174
      $region16: #{cnn_forward.6} parent=11 // pred_fallthru
        _
      // Predicated region
      $region17: #{cnn_forward.6} parent=11 // pred_check
        %p176 = pneg %p100
      $region18: #{cnn_forward.6} parent=11 // pred_check_branch
        %178 = sbr.rel (%p176) target = $region20
      $region19: #{cnn_forward.6} parent=11 // pred_region
        %p179 = scmp.lt.s32.totalorder %s20, 0
        %s180 = scalar_select %p179, %s20, 0
        %s181 = scalar_lea.vmem %s2, %s180
      $region20: #{cnn_forward.6} parent=11 // pred_fallthru
        _
      // Predicated region
      $region21: #{cnn_forward.6} parent=11 // pred_check
        %p182 = pneg %p126
      $region22: #{cnn_forward.6} parent=11 // pred_check_branch
        %184 = sbr.rel (%p182) target = $region24
      $region23: #{cnn_forward.6} parent=11 // pred_region
        %p185 = scmp.lt.s32.totalorder %s20, 0
        %s186 = scalar_select %p185, %s20, 0
        %s187 = scalar_lea.vmem %s3, %s186
      $region24: #{cnn_forward.6} parent=11 // pred_fallthru
        _
    $region12: #{cnn_forward.6} parent=5 // pred_fallthru
      _
    %p188 = scmp.lt.s32.totalorder %s10, 14
    // Predicated region
    $region25: #{cnn_forward.6} parent=5 // pred_check
      %p189 = pneg %p188
    $region26: #{cnn_forward.6} parent=5 // pred_check_branch
      %191 = sbr.rel (%p189) target = $region28
    $region27: #{cnn_forward.6} parent=5 // pred_region
      // Predicated region
      $region29: #{cnn_forward.6} parent=27 // pred_check
        %p192 = pneg %p42
      $region30: #{cnn_forward.6} parent=27 // pred_check_branch
        %194 = sbr.rel (%p192) target = $region32
      $region31: #{cnn_forward.6} parent=27 // pred_region
        %s195 = smul.u32 64, %s17
        %p196 = scmp.lt.s32.totalorder %s195, 895
        %s197 = scalar_select %p196, %s195, 895
        %s198 = smul.addr %s197, 3
        %s199 = smul.addr %s198, 4
        %s200 = scalar_lea.vmem %s0, %s199
        %s201 = smul.u32 64, %s17
      $region32: #{cnn_forward.6} parent=27 // pred_fallthru
        _
    $region28: #{cnn_forward.6} parent=5 // pred_fallthru
      _
    %p202 = scmp.le.s32.totalorder 1, %s10
    %p203 = scmp.lt.s32.totalorder %s10, 15
    %p204 = pnand %p202, %p203
    %p205 = pneg %p204
    // Predicated region
    $region33: #{cnn_forward.6} parent=5 // pred_check
      _
    $region34: #{cnn_forward.6} parent=5 // pred_check_branch
      %207 = sbr.rel (%p204) target = $region36
    $region35: #{cnn_forward.6} parent=5 // pred_region
      %s208 = ssub.s32 %s10, 1
      %s209 = smul.u32 64, %s19
      %p210 = scmp.lt.s32.totalorder %s209, 895
      %s211 = scalar_select %p210, %s209, 895
      %s212 = smul.addr %s211, 3
      %s213 = smul.addr %s212, 4
      %s214 = scalar_lea.vmem %s0, %s213
      %p215 = pneg %p48
      %p216 = pneg %p45
      %p217 = scmp.lt.s32.totalorder %s20, 0
      %s218 = scalar_select %p217, %s20, 0
      %s219 = smul.addr %s218, 4
      %s220 = scalar_lea.vmem %s1, %s219
      %p221 = pneg %p74
      %p222 = pneg %p71
      %p223 = scmp.lt.s32.totalorder %s20, 0
      %s224 = scalar_select %p223, %s20, 0
      %s225 = scalar_lea.vmem %s2, %s224
      %p226 = pneg %p100
      %p227 = pneg %p97
      %p228 = scmp.lt.s32.totalorder %s20, 0
      %s229 = scalar_select %p228, %s20, 0
      %s230 = scalar_lea.vmem %s3, %s229
      %p231 = pneg %p126
      %p232 = pneg %p123
      %p233 = pneg %p154
      %p234 = pneg %p151
      %s235 = smul.u32 64, %s19
      %p236 = scmp.lt.s32.totalorder %s235, 895
      %s237 = scalar_select %p236, %s235, 895
      %p238 = scmp.lt.s32.totalorder %s20, 0
      %s239 = scalar_select %p238, %s20, 0
      %s240 = sadd.s32 %s239, %s237
      %s241 = smul.addr %s240, 4
      %s242 = scalar_lea.vmem %s4, %s241
      %s243 = smul.u32 64, %s19
      %p244 = scmp.lt.s32.totalorder %s243, 895
      %s245 = scalar_select %p244, %s243, 895
      %s246 = smul.addr %s245, 3
      %s247 = smul.addr %s246, 4
      %s248 = scalar_lea.vmem %s0, %s247
      %s249 = smul.u32 64, %s19
      %p250 = scmp.lt.s32.totalorder %s20, 0
      %s251 = scalar_select %p250, %s20, 0
      %s252 = smul.addr %s251, 4
      %s253 = scalar_lea.vmem %s1, %s252
      %p254 = scmp.lt.s32.totalorder %s20, 0
      %s255 = scalar_select %p254, %s20, 0
      %s256 = scalar_lea.vmem %s2, %s255
      %p257 = scmp.lt.s32.totalorder %s20, 0
      %s258 = scalar_select %p257, %s20, 0
      %s259 = scalar_lea.vmem %s3, %s258
      %s260 = smul.u32 64, %s19
      %p261 = scmp.lt.s32.totalorder %s260, 895
      %s262 = scalar_select %p261, %s260, 895
      %p263 = scmp.lt.s32.totalorder %s20, 0
      %s264 = scalar_select %p263, %s20, 0
      %s265 = sadd.s32 %s264, %s262
      %s266 = smul.addr %s265, 4
      %s267 = scalar_lea.vmem %s4, %s266
      %s268 = smul.u32 64, %s19
      %v269 = vld [vmem:[%s248] sm:$0xff]
      %v270 = vld [vmem:[%s248 + $0x8] sm:$0xf]
      %v271 = vld [vmem:[%s248 + $0xc] sm:$0xff]
      %v272 = vld [vmem:[%s248 + $0x14] sm:$0xf]
      %v273 = vld [vmem:[%s248 + $0x18] sm:$0xff]
      %v274 = vld [vmem:[%s248 + $0x20] sm:$0xf]
      %v275 = vld [vmem:[%s248 + $0x24] sm:$0xff]
      %v276 = vld [vmem:[%s248 + $0x2c] sm:$0xf]
      %v277 = vld [vmem:[%s248 + $0x30] sm:$0xff]
      %v278 = vld [vmem:[%s248 + $0x38] sm:$0xf]
      %v279 = vld [vmem:[%s248 + $0x3c] sm:$0xff]
      %v280 = vld [vmem:[%s248 + $0x44] sm:$0xf]
      %v281 = vld [vmem:[%s248 + $0x48] sm:$0xff]
      %v282 = vld [vmem:[%s248 + $0x50] sm:$0xf]
      %v283 = vld [vmem:[%s248 + $0x54] sm:$0xff]
      %v284 = vld [vmem:[%s248 + $0x5c] sm:$0xf]
      %v285 = vld [vmem:[%s248 + $0x60] sm:$0xff]
      %v286 = vld [vmem:[%s248 + $0x68] sm:$0xf]
      %v287 = vld [vmem:[%s248 + $0x6c] sm:$0xff]
      %v288 = vld [vmem:[%s248 + $0x74] sm:$0xf]
      %v289 = vld [vmem:[%s248 + $0x78] sm:$0xff]
      %v290 = vld [vmem:[%s248 + $0x80] sm:$0xf]
      %v291 = vld [vmem:[%s248 + $0x84] sm:$0xff]
      %v292 = vld [vmem:[%s248 + $0x8c] sm:$0xf]
      %v293 = vld [vmem:[%s248 + $0x90] sm:$0xff]
      %v294 = vld [vmem:[%s248 + $0x98] sm:$0xf]
      %v295 = vld [vmem:[%s248 + $0x9c] sm:$0xff]
      %v296 = vld [vmem:[%s248 + $0xa4] sm:$0xf]
      %v297 = vld [vmem:[%s248 + $0xa8] sm:$0xff]
      %v298 = vld [vmem:[%s248 + $0xb0] sm:$0xf]
      %v299 = vld [vmem:[%s248 + $0xb4] sm:$0xff]
      %v300 = vld [vmem:[%s248 + $0xbc] sm:$0xf]
      %v301 = vld [vmem:[%s248 + $0xc0] sm:$0xff]
      %v302 = vld [vmem:[%s248 + $0xc8] sm:$0xf]
      %v303 = vld [vmem:[%s248 + $0xcc] sm:$0xff]
      %v304 = vld [vmem:[%s248 + $0xd4] sm:$0xf]
      %v305 = vld [vmem:[%s248 + $0xd8] sm:$0xff]
      %v306 = vld [vmem:[%s248 + $0xe0] sm:$0xf]
      %v307 = vld [vmem:[%s248 + $0xe4] sm:$0xff]
      %v308 = vld [vmem:[%s248 + $0xec] sm:$0xf]
      %v309 = vld [vmem:[%s248 + $0xf0] sm:$0xff]
      %v310 = vld [vmem:[%s248 + $0xf8] sm:$0xf]
      %v311 = vld [vmem:[%s248 + $0xfc] sm:$0xff]
      %v312 = vld [vmem:[%s248 + $0x104] sm:$0xf]
      %v313 = vld [vmem:[%s248 + $0x108] sm:$0xff]
      %v314 = vld [vmem:[%s248 + $0x110] sm:$0xf]
      %v315 = vld [vmem:[%s248 + $0x114] sm:$0xff]
      %v316 = vld [vmem:[%s248 + $0x11c] sm:$0xf]
      %v317 = vld [vmem:[%s248 + $0x120] sm:$0xff]
      %v318 = vld [vmem:[%s248 + $0x128] sm:$0xf]
      %v319 = vld [vmem:[%s248 + $0x12c] sm:$0xff]
      %v320 = vld [vmem:[%s248 + $0x134] sm:$0xf]
      %v321 = vld [vmem:[%s248 + $0x138] sm:$0xff]
      %v322 = vld [vmem:[%s248 + $0x140] sm:$0xf]
      %v323 = vld [vmem:[%s248 + $0x144] sm:$0xff]
      %v324 = vld [vmem:[%s248 + $0x14c] sm:$0xf]
      %v325 = vld [vmem:[%s248 + $0x150] sm:$0xff]
      %v326 = vld [vmem:[%s248 + $0x158] sm:$0xf]
      %v327 = vld [vmem:[%s248 + $0x15c] sm:$0xff]
      %v328 = vld [vmem:[%s248 + $0x164] sm:$0xf]
      %v329 = vld [vmem:[%s248 + $0x168] sm:$0xff]
      %v330 = vld [vmem:[%s248 + $0x170] sm:$0xf]
      %v331 = vld [vmem:[%s248 + $0x174] sm:$0xff]
      %v332 = vld [vmem:[%s248 + $0x17c] sm:$0xf]
      %v333 = vld [vmem:[%s248 + $0x180] sm:$0xff]
      %v334 = vld [vmem:[%s248 + $0x188] sm:$0xf]
      %v335 = vld [vmem:[%s248 + $0x18c] sm:$0xff]
      %v336 = vld [vmem:[%s248 + $0x194] sm:$0xf]
      %v337 = vld [vmem:[%s248 + $0x198] sm:$0xff]
      %v338 = vld [vmem:[%s248 + $0x1a0] sm:$0xf]
      %v339 = vld [vmem:[%s248 + $0x1a4] sm:$0xff]
      %v340 = vld [vmem:[%s248 + $0x1ac] sm:$0xf]
      %v341 = vld [vmem:[%s248 + $0x1b0] sm:$0xff]
      %v342 = vld [vmem:[%s248 + $0x1b8] sm:$0xf]
      %v343 = vld [vmem:[%s248 + $0x1bc] sm:$0xff]
      %v344 = vld [vmem:[%s248 + $0x1c4] sm:$0xf]
      %v345 = vld [vmem:[%s248 + $0x1c8] sm:$0xff]
      %v346 = vld [vmem:[%s248 + $0x1d0] sm:$0xf]
      %v347 = vld [vmem:[%s248 + $0x1d4] sm:$0xff]
      %v348 = vld [vmem:[%s248 + $0x1dc] sm:$0xf]
      %v349 = vld [vmem:[%s248 + $0x1e0] sm:$0xff]
      %v350 = vld [vmem:[%s248 + $0x1e8] sm:$0xf]
      %v351 = vld [vmem:[%s248 + $0x1ec] sm:$0xff]
      %v352 = vld [vmem:[%s248 + $0x1f4] sm:$0xf]
      %v353 = vld [vmem:[%s248 + $0x1f8] sm:$0xff]
      %v354 = vld [vmem:[%s248 + $0x200] sm:$0xf]
      %v355 = vld [vmem:[%s248 + $0x204] sm:$0xff]
      %v356 = vld [vmem:[%s248 + $0x20c] sm:$0xf]
      %v357 = vld [vmem:[%s248 + $0x210] sm:$0xff]
      %v358 = vld [vmem:[%s248 + $0x218] sm:$0xf]
      %v359 = vld [vmem:[%s248 + $0x21c] sm:$0xff]
      %v360 = vld [vmem:[%s248 + $0x224] sm:$0xf]
      %v361 = vld [vmem:[%s248 + $0x228] sm:$0xff]
      %v362 = vld [vmem:[%s248 + $0x230] sm:$0xf]
      %v363 = vld [vmem:[%s248 + $0x234] sm:$0xff]
      %v364 = vld [vmem:[%s248 + $0x23c] sm:$0xf]
      %v365 = vld [vmem:[%s248 + $0x240] sm:$0xff]
      %v366 = vld [vmem:[%s248 + $0x248] sm:$0xf]
      %v367 = vld [vmem:[%s248 + $0x24c] sm:$0xff]
      %v368 = vld [vmem:[%s248 + $0x254] sm:$0xf]
      %v369 = vld [vmem:[%s248 + $0x258] sm:$0xff]
      %v370 = vld [vmem:[%s248 + $0x260] sm:$0xf]
      %v371 = vld [vmem:[%s248 + $0x264] sm:$0xff]
      %v372 = vld [vmem:[%s248 + $0x26c] sm:$0xf]
      %v373 = vld [vmem:[%s248 + $0x270] sm:$0xff]
      %v374 = vld [vmem:[%s248 + $0x278] sm:$0xf]
      %v375 = vld [vmem:[%s248 + $0x27c] sm:$0xff]
      %v376 = vld [vmem:[%s248 + $0x284] sm:$0xf]
      %v377 = vld [vmem:[%s248 + $0x288] sm:$0xff]
      %v378 = vld [vmem:[%s248 + $0x290] sm:$0xf]
      %v379 = vld [vmem:[%s248 + $0x294] sm:$0xff]
      %v380 = vld [vmem:[%s248 + $0x29c] sm:$0xf]
      %v381 = vld [vmem:[%s248 + $0x2a0] sm:$0xff]
      %v382 = vld [vmem:[%s248 + $0x2a8] sm:$0xf]
      %v383 = vld [vmem:[%s248 + $0x2ac] sm:$0xff]
      %v384 = vld [vmem:[%s248 + $0x2b4] sm:$0xf]
      %v385 = vld [vmem:[%s248 + $0x2b8] sm:$0xff]
      %v386 = vld [vmem:[%s248 + $0x2c0] sm:$0xf]
      %v387 = vld [vmem:[%s248 + $0x2c4] sm:$0xff]
      %v388 = vld [vmem:[%s248 + $0x2cc] sm:$0xf]
      %v389 = vld [vmem:[%s248 + $0x2d0] sm:$0xff]
      %v390 = vld [vmem:[%s248 + $0x2d8] sm:$0xf]
      %v391 = vld [vmem:[%s248 + $0x2dc] sm:$0xff]
      %v392 = vld [vmem:[%s248 + $0x2e4] sm:$0xf]
      %v393 = vld [vmem:[%s248 + $0x2e8] sm:$0xff]
      %v394 = vld [vmem:[%s248 + $0x2f0] sm:$0xf]
      %v395 = vld [vmem:[%s248 + $0x2f4] sm:$0xff]
      %v396 = vld [vmem:[%s248 + $0x2fc] sm:$0xf]
      %v397 = vld [vmem:[%s253] sm:$0xf]
      %v398 = vld [vmem:[%s253 + $0x4] sm:$0xf]
      %v399 = vld [vmem:[%s253 + $0x8] sm:$0xf]
      %v400 = vld [vmem:[%s253 + $0xc] sm:$0xf]
      %v401 = vld [vmem:[%s253 + $0x10] sm:$0xf]
      %v402 = vld [vmem:[%s253 + $0x14] sm:$0xf]
      %v403 = vld [vmem:[%s253 + $0x18] sm:$0xf]
      %v404 = vld [vmem:[%s253 + $0x1c] sm:$0xf]
      %v405 = vld [vmem:[%s253 + $0x20] sm:$0xf]
      %v406 = vld [vmem:[%s253 + $0x24] sm:$0xf]
      %v407 = vld [vmem:[%s253 + $0x28] sm:$0xf]
      %v408 = vld [vmem:[%s253 + $0x2c] sm:$0xf]
      %v409 = vld [vmem:[%s253 + $0x30] sm:$0xf]
      %v410 = vld [vmem:[%s253 + $0x34] sm:$0xf]
      %v411 = vld [vmem:[%s253 + $0x38] sm:$0xf]
      %v412 = vld [vmem:[%s253 + $0x3c] sm:$0xf]
      %v413 = vld [vmem:[%s253 + $0x40] sm:$0xf]
      %v414 = vld [vmem:[%s253 + $0x44] sm:$0xf]
      %v415 = vld [vmem:[%s253 + $0x48] sm:$0xf]
      %v416 = vld [vmem:[%s253 + $0x4c] sm:$0xf]
      %v417 = vld [vmem:[%s253 + $0x50] sm:$0xf]
      %v418 = vld [vmem:[%s253 + $0x54] sm:$0xf]
      %v419 = vld [vmem:[%s253 + $0x58] sm:$0xf]
      %v420 = vld [vmem:[%s253 + $0x5c] sm:$0xf]
      %v421 = vld [vmem:[%s253 + $0x60] sm:$0xf]
      %v422 = vld [vmem:[%s253 + $0x64] sm:$0xf]
      %v423 = vld [vmem:[%s253 + $0x68] sm:$0xf]
      %v424 = vld [vmem:[%s253 + $0x6c] sm:$0xf]
      %v425 = vld [vmem:[%s253 + $0x70] sm:$0xf]
      %v426 = vld [vmem:[%s253 + $0x74] sm:$0xf]
      %v427 = vld [vmem:[%s253 + $0x78] sm:$0xf]
      %v428 = vld [vmem:[%s253 + $0x7c] sm:$0xf]
      %v429 = vld [vmem:[%s253 + $0x80] sm:$0xf]
      %v430 = vld [vmem:[%s253 + $0x84] sm:$0xf]
      %v431 = vld [vmem:[%s253 + $0x88] sm:$0xf]
      %v432 = vld [vmem:[%s253 + $0x8c] sm:$0xf]
      %v433 = vld [vmem:[%s253 + $0x90] sm:$0xf]
      %v434 = vld [vmem:[%s253 + $0x94] sm:$0xf]
      %v435 = vld [vmem:[%s253 + $0x98] sm:$0xf]
      %v436 = vld [vmem:[%s253 + $0x9c] sm:$0xf]
      %v437 = vld [vmem:[%s253 + $0xa0] sm:$0xf]
      %v438 = vld [vmem:[%s253 + $0xa4] sm:$0xf]
      %v439 = vld [vmem:[%s253 + $0xa8] sm:$0xf]
      %v440 = vld [vmem:[%s253 + $0xac] sm:$0xf]
      %v441 = vld [vmem:[%s253 + $0xb0] sm:$0xf]
      %v442 = vld [vmem:[%s253 + $0xb4] sm:$0xf]
      %v443 = vld [vmem:[%s253 + $0xb8] sm:$0xf]
      %v444 = vld [vmem:[%s253 + $0xbc] sm:$0xf]
      %v573 = vunpack.c.l.b16 %v269
      %v574 = vunpack.c.h.b16 %v269
      %v575 = vunpack.c.l.b16 %v270
      %v576 = vunpack.c.l.b16 %v271
      %v577 = vunpack.c.h.b16 %v271
      %v578 = vunpack.c.l.b16 %v272
      %v579 = vunpack.c.l.b16 %v273
      %v580 = vunpack.c.h.b16 %v273
      %v581 = vunpack.c.l.b16 %v274
      %v582 = vunpack.c.l.b16 %v275
      %v583 = vunpack.c.h.b16 %v275
      %v584 = vunpack.c.l.b16 %v276
      %v585 = vunpack.c.l.b16 %v277
      %v586 = vunpack.c.h.b16 %v277
      %v587 = vunpack.c.l.b16 %v278
      %v588 = vunpack.c.l.b16 %v279
      %v589 = vunpack.c.h.b16 %v279
      %v590 = vunpack.c.l.b16 %v280
      %v591 = vunpack.c.l.b16 %v281
      %v592 = vunpack.c.h.b16 %v281
      %v593 = vunpack.c.l.b16 %v282
      %v594 = vunpack.c.l.b16 %v283
      %v595 = vunpack.c.h.b16 %v283
      %v596 = vunpack.c.l.b16 %v284
      %v597 = vunpack.c.l.b16 %v285
      %v598 = vunpack.c.h.b16 %v285
      %v599 = vunpack.c.l.b16 %v286
      %v600 = vunpack.c.l.b16 %v287
      %v601 = vunpack.c.h.b16 %v287
      %v602 = vunpack.c.l.b16 %v288
      %v603 = vunpack.c.l.b16 %v289
      %v604 = vunpack.c.h.b16 %v289
      %v605 = vunpack.c.l.b16 %v290
      %v606 = vunpack.c.l.b16 %v291
      %v607 = vunpack.c.h.b16 %v291
      %v608 = vunpack.c.l.b16 %v292
      %v609 = vunpack.c.l.b16 %v293
      %v610 = vunpack.c.h.b16 %v293
      %v611 = vunpack.c.l.b16 %v294
      %v612 = vunpack.c.l.b16 %v295
      %v613 = vunpack.c.h.b16 %v295
      %v614 = vunpack.c.l.b16 %v296
      %v615 = vunpack.c.l.b16 %v297
      %v616 = vunpack.c.h.b16 %v297
      %v617 = vunpack.c.l.b16 %v298
      %v618 = vunpack.c.l.b16 %v299
      %v619 = vunpack.c.h.b16 %v299
      %v620 = vunpack.c.l.b16 %v300
      %v621 = vunpack.c.l.b16 %v301
      %v622 = vunpack.c.h.b16 %v301
      %v623 = vunpack.c.l.b16 %v302
      %v624 = vunpack.c.l.b16 %v303
      %v625 = vunpack.c.h.b16 %v303
      %v626 = vunpack.c.l.b16 %v304
      %v627 = vunpack.c.l.b16 %v305
      %v628 = vunpack.c.h.b16 %v305
      %v629 = vunpack.c.l.b16 %v306
      %v630 = vunpack.c.l.b16 %v307
      %v631 = vunpack.c.h.b16 %v307
      %v632 = vunpack.c.l.b16 %v308
      %v633 = vunpack.c.l.b16 %v309
      %v634 = vunpack.c.h.b16 %v309
      %v635 = vunpack.c.l.b16 %v310
      %v636 = vunpack.c.l.b16 %v311
      %v637 = vunpack.c.h.b16 %v311
      %v638 = vunpack.c.l.b16 %v312
      %v639 = vunpack.c.l.b16 %v313
      %v640 = vunpack.c.h.b16 %v313
      %v641 = vunpack.c.l.b16 %v314
      %v642 = vunpack.c.l.b16 %v315
      %v643 = vunpack.c.h.b16 %v315
      %v644 = vunpack.c.l.b16 %v316
      %v645 = vunpack.c.l.b16 %v317
      %v646 = vunpack.c.h.b16 %v317
      %v647 = vunpack.c.l.b16 %v318
      %v648 = vunpack.c.l.b16 %v319
      %v649 = vunpack.c.h.b16 %v319
      %v650 = vunpack.c.l.b16 %v320
      %v651 = vunpack.c.l.b16 %v321
      %v652 = vunpack.c.h.b16 %v321
      %v653 = vunpack.c.l.b16 %v322
      %v654 = vunpack.c.l.b16 %v323
      %v655 = vunpack.c.h.b16 %v323
      %v656 = vunpack.c.l.b16 %v324
      %v657 = vunpack.c.l.b16 %v325
      %v658 = vunpack.c.h.b16 %v325
      %v659 = vunpack.c.l.b16 %v326
      %v660 = vunpack.c.l.b16 %v327
      %v661 = vunpack.c.h.b16 %v327
      %v662 = vunpack.c.l.b16 %v328
      %v663 = vunpack.c.l.b16 %v329
      %v664 = vunpack.c.h.b16 %v329
      %v665 = vunpack.c.l.b16 %v330
      %v666 = vunpack.c.l.b16 %v331
      %v667 = vunpack.c.h.b16 %v331
      %v668 = vunpack.c.l.b16 %v332
      %v669 = vunpack.c.l.b16 %v333
      %v670 = vunpack.c.h.b16 %v333
      %v671 = vunpack.c.l.b16 %v334
      %v672 = vunpack.c.l.b16 %v335
      %v673 = vunpack.c.h.b16 %v335
      %v674 = vunpack.c.l.b16 %v336
      %v675 = vunpack.c.l.b16 %v337
      %v676 = vunpack.c.h.b16 %v337
      %v677 = vunpack.c.l.b16 %v338
      %v678 = vunpack.c.l.b16 %v339
      %v679 = vunpack.c.h.b16 %v339
      %v680 = vunpack.c.l.b16 %v340
      %v681 = vunpack.c.l.b16 %v341
      %v682 = vunpack.c.h.b16 %v341
      %v683 = vunpack.c.l.b16 %v342
      %v684 = vunpack.c.l.b16 %v343
      %v685 = vunpack.c.h.b16 %v343
      %v686 = vunpack.c.l.b16 %v344
      %v687 = vunpack.c.l.b16 %v345
      %v688 = vunpack.c.h.b16 %v345
      %v689 = vunpack.c.l.b16 %v346
      %v690 = vunpack.c.l.b16 %v347
      %v691 = vunpack.c.h.b16 %v347
      %v692 = vunpack.c.l.b16 %v348
      %v693 = vunpack.c.l.b16 %v349
      %v694 = vunpack.c.h.b16 %v349
      %v695 = vunpack.c.l.b16 %v350
      %v696 = vunpack.c.l.b16 %v351
      %v697 = vunpack.c.h.b16 %v351
      %v698 = vunpack.c.l.b16 %v352
      %v699 = vunpack.c.l.b16 %v353
      %v700 = vunpack.c.h.b16 %v353
      %v701 = vunpack.c.l.b16 %v354
      %v702 = vunpack.c.l.b16 %v355
      %v703 = vunpack.c.h.b16 %v355
      %v704 = vunpack.c.l.b16 %v356
      %v705 = vunpack.c.l.b16 %v357
      %v706 = vunpack.c.h.b16 %v357
      %v707 = vunpack.c.l.b16 %v358
      %v708 = vunpack.c.l.b16 %v359
      %v709 = vunpack.c.h.b16 %v359
      %v710 = vunpack.c.l.b16 %v360
      %v711 = vunpack.c.l.b16 %v361
      %v712 = vunpack.c.h.b16 %v361
      %v713 = vunpack.c.l.b16 %v362
      %v714 = vunpack.c.l.b16 %v363
      %v715 = vunpack.c.h.b16 %v363
      %v716 = vunpack.c.l.b16 %v364
      %v717 = vunpack.c.l.b16 %v365
      %v718 = vunpack.c.h.b16 %v365
      %v719 = vunpack.c.l.b16 %v366
      %v720 = vunpack.c.l.b16 %v367
      %v721 = vunpack.c.h.b16 %v367
      %v722 = vunpack.c.l.b16 %v368
      %v723 = vunpack.c.l.b16 %v369
      %v724 = vunpack.c.h.b16 %v369
      %v725 = vunpack.c.l.b16 %v370
      %v726 = vunpack.c.l.b16 %v371
      %v727 = vunpack.c.h.b16 %v371
      %v728 = vunpack.c.l.b16 %v372
      %v729 = vunpack.c.l.b16 %v373
      %v730 = vunpack.c.h.b16 %v373
      %v731 = vunpack.c.l.b16 %v374
      %v732 = vunpack.c.l.b16 %v375
      %v733 = vunpack.c.h.b16 %v375
      %v734 = vunpack.c.l.b16 %v376
      %v735 = vunpack.c.l.b16 %v377
      %v736 = vunpack.c.h.b16 %v377
      %v737 = vunpack.c.l.b16 %v378
      %v738 = vunpack.c.l.b16 %v379
      %v739 = vunpack.c.h.b16 %v379
      %v740 = vunpack.c.l.b16 %v380
      %v741 = vunpack.c.l.b16 %v381
      %v742 = vunpack.c.h.b16 %v381
      %v743 = vunpack.c.l.b16 %v382
      %v744 = vunpack.c.l.b16 %v383
      %v745 = vunpack.c.h.b16 %v383
      %v746 = vunpack.c.l.b16 %v384
      %v747 = vunpack.c.l.b16 %v385
      %v748 = vunpack.c.h.b16 %v385
      %v749 = vunpack.c.l.b16 %v386
      %v750 = vunpack.c.l.b16 %v387
      %v751 = vunpack.c.h.b16 %v387
      %v752 = vunpack.c.l.b16 %v388
      %v753 = vunpack.c.l.b16 %v389
      %v754 = vunpack.c.h.b16 %v389
      %v755 = vunpack.c.l.b16 %v390
      %v756 = vunpack.c.l.b16 %v391
      %v757 = vunpack.c.h.b16 %v391
      %v758 = vunpack.c.l.b16 %v392
      %v759 = vunpack.c.l.b16 %v393
      %v760 = vunpack.c.h.b16 %v393
      %v761 = vunpack.c.l.b16 %v394
      %v762 = vunpack.c.l.b16 %v395
      %v763 = vunpack.c.h.b16 %v395
      %v764 = vunpack.c.l.b16 %v396
      %v765 = vpack.c.b16 %v576, %v573
      %v766 = vpack.c.b16 %v577, %v574
      %v767 = vpack.c.b16 %v578, %v575
      %v768 = vpack.c.b16 %v582, %v579
      %v769 = vpack.c.b16 %v583, %v580
      %v770 = vpack.c.b16 %v584, %v581
      %v771 = vpack.c.b16 %v588, %v585
      %v772 = vpack.c.b16 %v589, %v586
      %v773 = vpack.c.b16 %v590, %v587
      %v774 = vpack.c.b16 %v594, %v591
      %v775 = vpack.c.b16 %v595, %v592
      %v776 = vpack.c.b16 %v596, %v593
      %v777 = vpack.c.b16 %v600, %v597
      %v778 = vpack.c.b16 %v601, %v598
      %v779 = vpack.c.b16 %v602, %v599
      %v780 = vpack.c.b16 %v606, %v603
      %v781 = vpack.c.b16 %v607, %v604
      %v782 = vpack.c.b16 %v608, %v605
      %v783 = vpack.c.b16 %v612, %v609
      %v784 = vpack.c.b16 %v613, %v610
      %v785 = vpack.c.b16 %v614, %v611
      %v786 = vpack.c.b16 %v618, %v615
      %v787 = vpack.c.b16 %v619, %v616
      %v788 = vpack.c.b16 %v620, %v617
      %v789 = vpack.c.b16 %v624, %v621
      %v790 = vpack.c.b16 %v625, %v622
      %v791 = vpack.c.b16 %v626, %v623
      %v792 = vpack.c.b16 %v630, %v627
      %v793 = vpack.c.b16 %v631, %v628
      %v794 = vpack.c.b16 %v632, %v629
      %v795 = vpack.c.b16 %v636, %v633
      %v796 = vpack.c.b16 %v637, %v634
      %v797 = vpack.c.b16 %v638, %v635
      %v798 = vpack.c.b16 %v642, %v639
      %v799 = vpack.c.b16 %v643, %v640
      %v800 = vpack.c.b16 %v644, %v641
      %v801 = vpack.c.b16 %v648, %v645
      %v802 = vpack.c.b16 %v649, %v646
      %v803 = vpack.c.b16 %v650, %v647
      %v804 = vpack.c.b16 %v654, %v651
      %v805 = vpack.c.b16 %v655, %v652
      %v806 = vpack.c.b16 %v656, %v653
      %v807 = vpack.c.b16 %v660, %v657
      %v808 = vpack.c.b16 %v661, %v658
      %v809 = vpack.c.b16 %v662, %v659
      %v810 = vpack.c.b16 %v666, %v663
      %v811 = vpack.c.b16 %v667, %v664
      %v812 = vpack.c.b16 %v668, %v665
      %v813 = vpack.c.b16 %v672, %v669
      %v814 = vpack.c.b16 %v673, %v670
      %v815 = vpack.c.b16 %v674, %v671
      %v816 = vpack.c.b16 %v678, %v675
      %v817 = vpack.c.b16 %v679, %v676
      %v818 = vpack.c.b16 %v680, %v677
      %v819 = vpack.c.b16 %v684, %v681
      %v820 = vpack.c.b16 %v685, %v682
      %v821 = vpack.c.b16 %v686, %v683
      %v822 = vpack.c.b16 %v690, %v687
      %v823 = vpack.c.b16 %v691, %v688
      %v824 = vpack.c.b16 %v692, %v689
      %v825 = vpack.c.b16 %v696, %v693
      %v826 = vpack.c.b16 %v697, %v694
      %v827 = vpack.c.b16 %v698, %v695
      %v828 = vpack.c.b16 %v702, %v699
      %v829 = vpack.c.b16 %v703, %v700
      %v830 = vpack.c.b16 %v704, %v701
      %v831 = vpack.c.b16 %v708, %v705
      %v832 = vpack.c.b16 %v709, %v706
      %v833 = vpack.c.b16 %v710, %v707
      %v834 = vpack.c.b16 %v714, %v711
      %v835 = vpack.c.b16 %v715, %v712
      %v836 = vpack.c.b16 %v716, %v713
      %v837 = vpack.c.b16 %v720, %v717
      %v838 = vpack.c.b16 %v721, %v718
      %v839 = vpack.c.b16 %v722, %v719
      %v840 = vpack.c.b16 %v726, %v723
      %v841 = vpack.c.b16 %v727, %v724
      %v842 = vpack.c.b16 %v728, %v725
      %v843 = vpack.c.b16 %v732, %v729
      %v844 = vpack.c.b16 %v733, %v730
      %v845 = vpack.c.b16 %v734, %v731
      %v846 = vpack.c.b16 %v738, %v735
      %v847 = vpack.c.b16 %v739, %v736
      %v848 = vpack.c.b16 %v740, %v737
      %v849 = vpack.c.b16 %v744, %v741
      %v850 = vpack.c.b16 %v745, %v742
      %v851 = vpack.c.b16 %v746, %v743
      %v852 = vpack.c.b16 %v750, %v747
      %v853 = vpack.c.b16 %v751, %v748
      %v854 = vpack.c.b16 %v752, %v749
      %v855 = vpack.c.b16 %v756, %v753
      %v856 = vpack.c.b16 %v757, %v754
      %v857 = vpack.c.b16 %v758, %v755
      %v858 = vpack.c.b16 %v762, %v759
      %v859 = vpack.c.b16 %v763, %v760
      %v860 = vpack.c.b16 %v764, %v761
      %v1005 = vunpack.c.l.b16 %v397
      %v1006 = vunpack.c.l.b16 %v398
      %v1007 = vunpack.c.l.b16 %v399
      %v1008 = vunpack.c.l.b16 %v400
      %v1009 = vunpack.c.l.b16 %v401
      %v1010 = vunpack.c.l.b16 %v402
      %v1011 = vunpack.c.l.b16 %v403
      %v1012 = vunpack.c.l.b16 %v404
      %v1013 = vunpack.c.l.b16 %v405
      %v1014 = vunpack.c.l.b16 %v406
      %v1015 = vunpack.c.l.b16 %v407
      %v1016 = vunpack.c.l.b16 %v408
      %v1017 = vunpack.c.l.b16 %v409
      %v1018 = vunpack.c.l.b16 %v410
      %v1019 = vunpack.c.l.b16 %v411
      %v1020 = vunpack.c.l.b16 %v412
      %v1021 = vunpack.c.l.b16 %v413
      %v1022 = vunpack.c.l.b16 %v414
      %v1023 = vunpack.c.l.b16 %v415
      %v1024 = vunpack.c.l.b16 %v416
      %v1025 = vunpack.c.l.b16 %v417
      %v1026 = vunpack.c.l.b16 %v418
      %v1027 = vunpack.c.l.b16 %v419
      %v1028 = vunpack.c.l.b16 %v420
      %v1029 = vunpack.c.l.b16 %v421
      %v1030 = vunpack.c.l.b16 %v422
      %v1031 = vunpack.c.l.b16 %v423
      %v1032 = vunpack.c.l.b16 %v424
      %v1033 = vunpack.c.l.b16 %v425
      %v1034 = vunpack.c.l.b16 %v426
      %v1035 = vunpack.c.l.b16 %v427
      %v1036 = vunpack.c.l.b16 %v428
      %v1037 = vunpack.c.l.b16 %v429
      %v1038 = vunpack.c.l.b16 %v430
      %v1039 = vunpack.c.l.b16 %v431
      %v1040 = vunpack.c.l.b16 %v432
      %v1041 = vunpack.c.l.b16 %v433
      %v1042 = vunpack.c.l.b16 %v434
      %v1043 = vunpack.c.l.b16 %v435
      %v1044 = vunpack.c.l.b16 %v436
      %v1045 = vunpack.c.l.b16 %v437
      %v1046 = vunpack.c.l.b16 %v438
      %v1047 = vunpack.c.l.b16 %v439
      %v1048 = vunpack.c.l.b16 %v440
      %v1049 = vunpack.c.l.b16 %v441
      %v1050 = vunpack.c.l.b16 %v442
      %v1051 = vunpack.c.l.b16 %v443
      %v1052 = vunpack.c.l.b16 %v444
      %v1053 = vpack.c.b16 %v1006, %v1005
      %v1054 = vpack.c.b16 %v1008, %v1007
      %v1055 = vpack.c.b16 %v1010, %v1009
      %v1056 = vpack.c.b16 %v1012, %v1011
      %v1057 = vpack.c.b16 %v1014, %v1013
      %v1058 = vpack.c.b16 %v1016, %v1015
      %v1059 = vpack.c.b16 %v1018, %v1017
      %v1060 = vpack.c.b16 %v1020, %v1019
      %v1061 = vpack.c.b16 %v1022, %v1021
      %v1062 = vpack.c.b16 %v1024, %v1023
      %v1063 = vpack.c.b16 %v1026, %v1025
      %v1064 = vpack.c.b16 %v1028, %v1027
      %v1065 = vpack.c.b16 %v1030, %v1029
      %v1066 = vpack.c.b16 %v1032, %v1031
      %v1067 = vpack.c.b16 %v1034, %v1033
      %v1068 = vpack.c.b16 %v1036, %v1035
      %v1069 = vpack.c.b16 %v1038, %v1037
      %v1070 = vpack.c.b16 %v1040, %v1039
      %v1071 = vpack.c.b16 %v1042, %v1041
      %v1072 = vpack.c.b16 %v1044, %v1043
      %v1073 = vpack.c.b16 %v1046, %v1045
      %v1074 = vpack.c.b16 %v1048, %v1047
      %v1075 = vpack.c.b16 %v1050, %v1049
      %v1076 = vpack.c.b16 %v1052, %v1051
      %1101 = vmatpush.bf16.msra.mxu0 %v1060
      %1102 = vmatpush.bf16.msra.mxu0 %v1059
      %1103 = vmatpush.bf16.msra.mxu0 %v1058
      %1104 = vmatpush.bf16.msra.mxu0 %v1057
      %1105 = vmatpush.bf16.msra.mxu0 %v1056
      %1106 = vmatpush.bf16.msra.mxu0 %v1055
      %1107 = vmatpush.bf16.msra.mxu0 %v1054
      %1108 = vmatpush.bf16.msra.mxu0 %v1053
      %1109 = vmatmul.bf16.gmra.mxu0 %v765
      %v1110 = vpop.f32.mrf.mxu0
      %v1111 = vadd.f32 0.0, %v1110
      %v1112 = vpop.f32.mrf.mxu0
      %v1113 = vadd.f32 0.0, %v1112
      %1114 = vmatmul.bf16.gmra.mxu0 %v768
      %v1115 = vpop.f32.mrf.mxu0
      %v1116 = vadd.f32 0.0, %v1115
      %v1117 = vpop.f32.mrf.mxu0
      %v1118 = vadd.f32 0.0, %v1117
      %1119 = vmatmul.bf16.gmra.mxu0 %v771
      %v1120 = vpop.f32.mrf.mxu0
      %v1121 = vadd.f32 0.0, %v1120
      %v1122 = vpop.f32.mrf.mxu0
      %v1123 = vadd.f32 0.0, %v1122
      %1124 = vmatmul.bf16.gmra.mxu0 %v774
      %v1125 = vpop.f32.mrf.mxu0
      %v1126 = vadd.f32 0.0, %v1125
      %v1127 = vpop.f32.mrf.mxu0
      %v1128 = vadd.f32 0.0, %v1127
      %1129 = vmatmul.bf16.gmra.mxu0 %v777
      %v1130 = vpop.f32.mrf.mxu0
      %v1131 = vadd.f32 0.0, %v1130
      %v1132 = vpop.f32.mrf.mxu0
      %v1133 = vadd.f32 0.0, %v1132
      %1134 = vmatmul.bf16.gmra.mxu0 %v780
      %v1135 = vpop.f32.mrf.mxu0
      %v1136 = vadd.f32 0.0, %v1135
      %v1137 = vpop.f32.mrf.mxu0
      %v1138 = vadd.f32 0.0, %v1137
      %1139 = vmatmul.bf16.gmra.mxu0 %v783
      %v1140 = vpop.f32.mrf.mxu0
      %v1141 = vadd.f32 0.0, %v1140
      %v1142 = vpop.f32.mrf.mxu0
      %v1143 = vadd.f32 0.0, %v1142
      %1144 = vmatmul.bf16.gmra.mxu0 %v786
      %v1145 = vpop.f32.mrf.mxu0
      %v1146 = vadd.f32 0.0, %v1145
      %v1147 = vpop.f32.mrf.mxu0
      %v1148 = vadd.f32 0.0, %v1147
      %1149 = vmatmul.bf16.gmra.mxu0 %v789
      %v1150 = vpop.f32.mrf.mxu0
      %v1151 = vadd.f32 0.0, %v1150
      %v1152 = vpop.f32.mrf.mxu0
      %v1153 = vadd.f32 0.0, %v1152
      %1154 = vmatmul.bf16.gmra.mxu0 %v792
      %v1155 = vpop.f32.mrf.mxu0
      %v1156 = vadd.f32 0.0, %v1155
      %v1157 = vpop.f32.mrf.mxu0
      %v1158 = vadd.f32 0.0, %v1157
      %1159 = vmatmul.bf16.gmra.mxu0 %v795
      %v1160 = vpop.f32.mrf.mxu0
      %v1161 = vadd.f32 0.0, %v1160
      %v1162 = vpop.f32.mrf.mxu0
      %v1163 = vadd.f32 0.0, %v1162
      %1164 = vmatmul.bf16.gmra.mxu0 %v798
      %v1165 = vpop.f32.mrf.mxu0
      %v1166 = vadd.f32 0.0, %v1165
      %v1167 = vpop.f32.mrf.mxu0
      %v1168 = vadd.f32 0.0, %v1167
      %1169 = vmatmul.bf16.gmra.mxu0 %v801
      %v1170 = vpop.f32.mrf.mxu0
      %v1171 = vadd.f32 0.0, %v1170
      %v1172 = vpop.f32.mrf.mxu0
      %v1173 = vadd.f32 0.0, %v1172
      %1174 = vmatmul.bf16.gmra.mxu0 %v804
      %v1175 = vpop.f32.mrf.mxu0
      %v1176 = vadd.f32 0.0, %v1175
      %v1177 = vpop.f32.mrf.mxu0
      %v1178 = vadd.f32 0.0, %v1177
      %1179 = vmatmul.bf16.gmra.mxu0 %v807
      %v1180 = vpop.f32.mrf.mxu0
      %v1181 = vadd.f32 0.0, %v1180
      %v1182 = vpop.f32.mrf.mxu0
      %v1183 = vadd.f32 0.0, %v1182
      %1184 = vmatmul.bf16.gmra.mxu0 %v810
      %v1185 = vpop.f32.mrf.mxu0
      %v1186 = vadd.f32 0.0, %v1185
      %v1187 = vpop.f32.mrf.mxu0
      %v1188 = vadd.f32 0.0, %v1187
      %1189 = vmatmul.bf16.gmra.mxu0 %v813
      %v1190 = vpop.f32.mrf.mxu0
      %v1191 = vadd.f32 0.0, %v1190
      %v1192 = vpop.f32.mrf.mxu0
      %v1193 = vadd.f32 0.0, %v1192
      %1194 = vmatmul.bf16.gmra.mxu0 %v816
      %v1195 = vpop.f32.mrf.mxu0
      %v1196 = vadd.f32 0.0, %v1195
      %v1197 = vpop.f32.mrf.mxu0
      %v1198 = vadd.f32 0.0, %v1197
      %1199 = vmatmul.bf16.gmra.mxu0 %v819
      %v1200 = vpop.f32.mrf.mxu0
      %v1201 = vadd.f32 0.0, %v1200
      %v1202 = vpop.f32.mrf.mxu0
      %v1203 = vadd.f32 0.0, %v1202
      %1204 = vmatmul.bf16.gmra.mxu0 %v822
      %v1205 = vpop.f32.mrf.mxu0
      %v1206 = vadd.f32 0.0, %v1205
      %v1207 = vpop.f32.mrf.mxu0
      %v1208 = vadd.f32 0.0, %v1207
      %1209 = vmatmul.bf16.gmra.mxu0 %v825
      %v1210 = vpop.f32.mrf.mxu0
      %v1211 = vadd.f32 0.0, %v1210
      %v1212 = vpop.f32.mrf.mxu0
      %v1213 = vadd.f32 0.0, %v1212
      %1214 = vmatmul.bf16.gmra.mxu0 %v828
      %v1215 = vpop.f32.mrf.mxu0
      %v1216 = vadd.f32 0.0, %v1215
      %v1217 = vpop.f32.mrf.mxu0
      %v1218 = vadd.f32 0.0, %v1217
      %1219 = vmatmul.bf16.gmra.mxu0 %v831
      %v1220 = vpop.f32.mrf.mxu0
      %v1221 = vadd.f32 0.0, %v1220
      %v1222 = vpop.f32.mrf.mxu0
      %v1223 = vadd.f32 0.0, %v1222
      %1224 = vmatmul.bf16.gmra.mxu0 %v834
      %v1225 = vpop.f32.mrf.mxu0
      %v1226 = vadd.f32 0.0, %v1225
      %v1227 = vpop.f32.mrf.mxu0
      %v1228 = vadd.f32 0.0, %v1227
      %1229 = vmatmul.bf16.gmra.mxu0 %v837
      %v1230 = vpop.f32.mrf.mxu0
      %v1231 = vadd.f32 0.0, %v1230
      %v1232 = vpop.f32.mrf.mxu0
      %v1233 = vadd.f32 0.0, %v1232
      %1234 = vmatmul.bf16.gmra.mxu0 %v840
      %v1235 = vpop.f32.mrf.mxu0
      %v1236 = vadd.f32 0.0, %v1235
      %v1237 = vpop.f32.mrf.mxu0
      %v1238 = vadd.f32 0.0, %v1237
      %1239 = vmatmul.bf16.gmra.mxu0 %v843
      %v1240 = vpop.f32.mrf.mxu0
      %v1241 = vadd.f32 0.0, %v1240
      %v1242 = vpop.f32.mrf.mxu0
      %v1243 = vadd.f32 0.0, %v1242
      %1244 = vmatmul.bf16.gmra.mxu0 %v846
      %v1245 = vpop.f32.mrf.mxu0
      %v1246 = vadd.f32 0.0, %v1245
      %v1247 = vpop.f32.mrf.mxu0
      %v1248 = vadd.f32 0.0, %v1247
      %1249 = vmatmul.bf16.gmra.mxu0 %v849
      %v1250 = vpop.f32.mrf.mxu0
      %v1251 = vadd.f32 0.0, %v1250
      %v1252 = vpop.f32.mrf.mxu0
      %v1253 = vadd.f32 0.0, %v1252
      %1254 = vmatmul.bf16.gmra.mxu0 %v852
      %v1255 = vpop.f32.mrf.mxu0
      %v1256 = vadd.f32 0.0, %v1255
      %v1257 = vpop.f32.mrf.mxu0
      %v1258 = vadd.f32 0.0, %v1257
      %1259 = vmatmul.bf16.gmra.mxu0 %v855
      %v1260 = vpop.f32.mrf.mxu0
      %v1261 = vadd.f32 0.0, %v1260
      %v1262 = vpop.f32.mrf.mxu0
      %v1263 = vadd.f32 0.0, %v1262
      %1264 = vmatmul.bf16.gmra.mxu0 %v858
      %v1265 = vpop.f32.mrf.mxu0
      %v1266 = vadd.f32 0.0, %v1265
      %v1267 = vpop.f32.mrf.mxu0
      %v1268 = vadd.f32 0.0, %v1267
      %1269 = vdwg.mxu0
      %1270 = vmatpush.bf16.msra.mxu0 %v1068
      %1271 = vmatpush.bf16.msra.mxu0 %v1067
      %1272 = vmatpush.bf16.msra.mxu0 %v1066
      %1273 = vmatpush.bf16.msra.mxu0 %v1065
      %1274 = vmatpush.bf16.msra.mxu0 %v1064
      %1275 = vmatpush.bf16.msra.mxu0 %v1063
      %1276 = vmatpush.bf16.msra.mxu0 %v1062
      %1277 = vmatpush.bf16.msra.mxu0 %v1061
      %1278 = vmatmul.bf16.gmra.mxu0 %v766
      %v1279 = vpop.f32.mrf.mxu0
      %v1280 = vadd.f32 %v1111, %v1279
      %v1281 = vpop.f32.mrf.mxu0
      %v1282 = vadd.f32 %v1113, %v1281
      %1283 = vmatmul.bf16.gmra.mxu0 %v769
      %v1284 = vpop.f32.mrf.mxu0
      %v1285 = vadd.f32 %v1116, %v1284
      %v1286 = vpop.f32.mrf.mxu0
      %v1287 = vadd.f32 %v1118, %v1286
      %1288 = vmatmul.bf16.gmra.mxu0 %v772
      %v1289 = vpop.f32.mrf.mxu0
      %v1290 = vadd.f32 %v1121, %v1289
      %v1291 = vpop.f32.mrf.mxu0
      %v1292 = vadd.f32 %v1123, %v1291
      %1293 = vmatmul.bf16.gmra.mxu0 %v775
      %v1294 = vpop.f32.mrf.mxu0
      %v1295 = vadd.f32 %v1126, %v1294
      %v1296 = vpop.f32.mrf.mxu0
      %v1297 = vadd.f32 %v1128, %v1296
      %1298 = vmatmul.bf16.gmra.mxu0 %v778
      %v1299 = vpop.f32.mrf.mxu0
      %v1300 = vadd.f32 %v1131, %v1299
      %v1301 = vpop.f32.mrf.mxu0
      %v1302 = vadd.f32 %v1133, %v1301
      %1303 = vmatmul.bf16.gmra.mxu0 %v781
      %v1304 = vpop.f32.mrf.mxu0
      %v1305 = vadd.f32 %v1136, %v1304
      %v1306 = vpop.f32.mrf.mxu0
      %v1307 = vadd.f32 %v1138, %v1306
      %1308 = vmatmul.bf16.gmra.mxu0 %v784
      %v1309 = vpop.f32.mrf.mxu0
      %v1310 = vadd.f32 %v1141, %v1309
      %v1311 = vpop.f32.mrf.mxu0
      %v1312 = vadd.f32 %v1143, %v1311
      %1313 = vmatmul.bf16.gmra.mxu0 %v787
      %v1314 = vpop.f32.mrf.mxu0
      %v1315 = vadd.f32 %v1146, %v1314
      %v1316 = vpop.f32.mrf.mxu0
      %v1317 = vadd.f32 %v1148, %v1316
      %1318 = vmatmul.bf16.gmra.mxu0 %v790
      %v1319 = vpop.f32.mrf.mxu0
      %v1320 = vadd.f32 %v1151, %v1319
      %v1321 = vpop.f32.mrf.mxu0
      %v1322 = vadd.f32 %v1153, %v1321
      %1323 = vmatmul.bf16.gmra.mxu0 %v793
      %v1324 = vpop.f32.mrf.mxu0
      %v1325 = vadd.f32 %v1156, %v1324
      %v1326 = vpop.f32.mrf.mxu0
      %v1327 = vadd.f32 %v1158, %v1326
      %1328 = vmatmul.bf16.gmra.mxu0 %v796
      %v1329 = vpop.f32.mrf.mxu0
      %v1330 = vadd.f32 %v1161, %v1329
      %v1331 = vpop.f32.mrf.mxu0
      %v1332 = vadd.f32 %v1163, %v1331
      %1333 = vmatmul.bf16.gmra.mxu0 %v799
      %v1334 = vpop.f32.mrf.mxu0
      %v1335 = vadd.f32 %v1166, %v1334
      %v1336 = vpop.f32.mrf.mxu0
      %v1337 = vadd.f32 %v1168, %v1336
      %1338 = vmatmul.bf16.gmra.mxu0 %v802
      %v1339 = vpop.f32.mrf.mxu0
      %v1340 = vadd.f32 %v1171, %v1339
      %v1341 = vpop.f32.mrf.mxu0
      %v1342 = vadd.f32 %v1173, %v1341
      %1343 = vmatmul.bf16.gmra.mxu0 %v805
      %v1344 = vpop.f32.mrf.mxu0
      %v1345 = vadd.f32 %v1176, %v1344
      %v1346 = vpop.f32.mrf.mxu0
      %v1347 = vadd.f32 %v1178, %v1346
      %1348 = vmatmul.bf16.gmra.mxu0 %v808
      %v1349 = vpop.f32.mrf.mxu0
      %v1350 = vadd.f32 %v1181, %v1349
      %v1351 = vpop.f32.mrf.mxu0
      %v1352 = vadd.f32 %v1183, %v1351
      %1353 = vmatmul.bf16.gmra.mxu0 %v811
      %v1354 = vpop.f32.mrf.mxu0
      %v1355 = vadd.f32 %v1186, %v1354
      %v1356 = vpop.f32.mrf.mxu0
      %v1357 = vadd.f32 %v1188, %v1356
      %1358 = vmatmul.bf16.gmra.mxu0 %v814
      %v1359 = vpop.f32.mrf.mxu0
      %v1360 = vadd.f32 %v1191, %v1359
      %v1361 = vpop.f32.mrf.mxu0
      %v1362 = vadd.f32 %v1193, %v1361
      %1363 = vmatmul.bf16.gmra.mxu0 %v817
      %v1364 = vpop.f32.mrf.mxu0
      %v1365 = vadd.f32 %v1196, %v1364
      %v1366 = vpop.f32.mrf.mxu0
      %v1367 = vadd.f32 %v1198, %v1366
      %1368 = vmatmul.bf16.gmra.mxu0 %v820
      %v1369 = vpop.f32.mrf.mxu0
      %v1370 = vadd.f32 %v1201, %v1369
      %v1371 = vpop.f32.mrf.mxu0
      %v1372 = vadd.f32 %v1203, %v1371
      %1373 = vmatmul.bf16.gmra.mxu0 %v823
      %v1374 = vpop.f32.mrf.mxu0
      %v1375 = vadd.f32 %v1206, %v1374
      %v1376 = vpop.f32.mrf.mxu0
      %v1377 = vadd.f32 %v1208, %v1376
      %1378 = vmatmul.bf16.gmra.mxu0 %v826
      %v1379 = vpop.f32.mrf.mxu0
      %v1380 = vadd.f32 %v1211, %v1379
      %v1381 = vpop.f32.mrf.mxu0
      %v1382 = vadd.f32 %v1213, %v1381
      %1383 = vmatmul.bf16.gmra.mxu0 %v829
      %v1384 = vpop.f32.mrf.mxu0
      %v1385 = vadd.f32 %v1216, %v1384
      %v1386 = vpop.f32.mrf.mxu0
      %v1387 = vadd.f32 %v1218, %v1386
      %1388 = vmatmul.bf16.gmra.mxu0 %v832
      %v1389 = vpop.f32.mrf.mxu0
      %v1390 = vadd.f32 %v1221, %v1389
      %v1391 = vpop.f32.mrf.mxu0
      %v1392 = vadd.f32 %v1223, %v1391
      %1393 = vmatmul.bf16.gmra.mxu0 %v835
      %v1394 = vpop.f32.mrf.mxu0
      %v1395 = vadd.f32 %v1226, %v1394
      %v1396 = vpop.f32.mrf.mxu0
      %v1397 = vadd.f32 %v1228, %v1396
      %1398 = vmatmul.bf16.gmra.mxu0 %v838
      %v1399 = vpop.f32.mrf.mxu0
      %v1400 = vadd.f32 %v1231, %v1399
      %v1401 = vpop.f32.mrf.mxu0
      %v1402 = vadd.f32 %v1233, %v1401
      %1403 = vmatmul.bf16.gmra.mxu0 %v841
      %v1404 = vpop.f32.mrf.mxu0
      %v1405 = vadd.f32 %v1236, %v1404
      %v1406 = vpop.f32.mrf.mxu0
      %v1407 = vadd.f32 %v1238, %v1406
      %1408 = vmatmul.bf16.gmra.mxu0 %v844
      %v1409 = vpop.f32.mrf.mxu0
      %v1410 = vadd.f32 %v1241, %v1409
      %v1411 = vpop.f32.mrf.mxu0
      %v1412 = vadd.f32 %v1243, %v1411
      %1413 = vmatmul.bf16.gmra.mxu0 %v847
      %v1414 = vpop.f32.mrf.mxu0
      %v1415 = vadd.f32 %v1246, %v1414
      %v1416 = vpop.f32.mrf.mxu0
      %v1417 = vadd.f32 %v1248, %v1416
      %1418 = vmatmul.bf16.gmra.mxu0 %v850
      %v1419 = vpop.f32.mrf.mxu0
      %v1420 = vadd.f32 %v1251, %v1419
      %v1421 = vpop.f32.mrf.mxu0
      %v1422 = vadd.f32 %v1253, %v1421
      %1423 = vmatmul.bf16.gmra.mxu0 %v853
      %v1424 = vpop.f32.mrf.mxu0
      %v1425 = vadd.f32 %v1256, %v1424
      %v1426 = vpop.f32.mrf.mxu0
      %v1427 = vadd.f32 %v1258, %v1426
      %1428 = vmatmul.bf16.gmra.mxu0 %v856
      %v1429 = vpop.f32.mrf.mxu0
      %v1430 = vadd.f32 %v1261, %v1429
      %v1431 = vpop.f32.mrf.mxu0
      %v1432 = vadd.f32 %v1263, %v1431
      %1433 = vmatmul.bf16.gmra.mxu0 %v859
      %v1434 = vpop.f32.mrf.mxu0
      %v1435 = vadd.f32 %v1266, %v1434
      %v1436 = vpop.f32.mrf.mxu0
      %v1437 = vadd.f32 %v1268, %v1436
      %1438 = vdwg.mxu0
      %1439 = vmatpush.bf16.msra.mxu0 %v1076
      %1440 = vmatpush.bf16.msra.mxu0 %v1075
      %1441 = vmatpush.bf16.msra.mxu0 %v1074
      %1442 = vmatpush.bf16.msra.mxu0 %v1073
      %1443 = vmatpush.bf16.msra.mxu0 %v1072
      %1444 = vmatpush.bf16.msra.mxu0 %v1071
      %1445 = vmatpush.bf16.msra.mxu0 %v1070
      %1446 = vmatpush.bf16.msra.mxu0 %v1069
      %1447 = vmatmul.bf16.gmra.mxu0 %v767
      %v1448 = vpop.f32.mrf.mxu0
      %v1449 = vadd.f32 %v1280, %v1448
      %v1450 = vpop.f32.mrf.mxu0
      %v1451 = vadd.f32 %v1282, %v1450
      %1452 = vmatmul.bf16.gmra.mxu0 %v770
      %v1453 = vpop.f32.mrf.mxu0
      %v1454 = vadd.f32 %v1285, %v1453
      %v1455 = vpop.f32.mrf.mxu0
      %v1456 = vadd.f32 %v1287, %v1455
      %1457 = vmatmul.bf16.gmra.mxu0 %v773
      %v1458 = vpop.f32.mrf.mxu0
      %v1459 = vadd.f32 %v1290, %v1458
      %v1460 = vpop.f32.mrf.mxu0
      %v1461 = vadd.f32 %v1292, %v1460
      %1462 = vmatmul.bf16.gmra.mxu0 %v776
      %v1463 = vpop.f32.mrf.mxu0
      %v1464 = vadd.f32 %v1295, %v1463
      %v1465 = vpop.f32.mrf.mxu0
      %v1466 = vadd.f32 %v1297, %v1465
      %1467 = vmatmul.bf16.gmra.mxu0 %v779
      %v1468 = vpop.f32.mrf.mxu0
      %v1469 = vadd.f32 %v1300, %v1468
      %v1470 = vpop.f32.mrf.mxu0
      %v1471 = vadd.f32 %v1302, %v1470
      %1472 = vmatmul.bf16.gmra.mxu0 %v782
      %v1473 = vpop.f32.mrf.mxu0
      %v1474 = vadd.f32 %v1305, %v1473
      %v1475 = vpop.f32.mrf.mxu0
      %v1476 = vadd.f32 %v1307, %v1475
      %1477 = vmatmul.bf16.gmra.mxu0 %v785
      %v1478 = vpop.f32.mrf.mxu0
      %v1479 = vadd.f32 %v1310, %v1478
      %v1480 = vpop.f32.mrf.mxu0
      %v1481 = vadd.f32 %v1312, %v1480
      %1482 = vmatmul.bf16.gmra.mxu0 %v788
      %v1483 = vpop.f32.mrf.mxu0
      %v1484 = vadd.f32 %v1315, %v1483
      %v1485 = vpop.f32.mrf.mxu0
      %v1486 = vadd.f32 %v1317, %v1485
      %1487 = vmatmul.bf16.gmra.mxu0 %v791
      %v1488 = vpop.f32.mrf.mxu0
      %v1489 = vadd.f32 %v1320, %v1488
      %v1490 = vpop.f32.mrf.mxu0
      %v1491 = vadd.f32 %v1322, %v1490
      %1492 = vmatmul.bf16.gmra.mxu0 %v794
      %v1493 = vpop.f32.mrf.mxu0
      %v1494 = vadd.f32 %v1325, %v1493
      %v1495 = vpop.f32.mrf.mxu0
      %v1496 = vadd.f32 %v1327, %v1495
      %1497 = vmatmul.bf16.gmra.mxu0 %v797
      %v1498 = vpop.f32.mrf.mxu0
      %v1499 = vadd.f32 %v1330, %v1498
      %v1500 = vpop.f32.mrf.mxu0
      %v1501 = vadd.f32 %v1332, %v1500
      %1502 = vmatmul.bf16.gmra.mxu0 %v800
      %v1503 = vpop.f32.mrf.mxu0
      %v1504 = vadd.f32 %v1335, %v1503
      %v1505 = vpop.f32.mrf.mxu0
      %v1506 = vadd.f32 %v1337, %v1505
      %1507 = vmatmul.bf16.gmra.mxu0 %v803
      %v1508 = vpop.f32.mrf.mxu0
      %v1509 = vadd.f32 %v1340, %v1508
      %v1510 = vpop.f32.mrf.mxu0
      %v1511 = vadd.f32 %v1342, %v1510
      %1512 = vmatmul.bf16.gmra.mxu0 %v806
      %v1513 = vpop.f32.mrf.mxu0
      %v1514 = vadd.f32 %v1345, %v1513
      %v1515 = vpop.f32.mrf.mxu0
      %v1516 = vadd.f32 %v1347, %v1515
      %1517 = vmatmul.bf16.gmra.mxu0 %v809
      %v1518 = vpop.f32.mrf.mxu0
      %v1519 = vadd.f32 %v1350, %v1518
      %v1520 = vpop.f32.mrf.mxu0
      %v1521 = vadd.f32 %v1352, %v1520
      %1522 = vmatmul.bf16.gmra.mxu0 %v812
      %v1523 = vpop.f32.mrf.mxu0
      %v1524 = vadd.f32 %v1355, %v1523
      %v1525 = vpop.f32.mrf.mxu0
      %v1526 = vadd.f32 %v1357, %v1525
      %1527 = vmatmul.bf16.gmra.mxu0 %v815
      %v1528 = vpop.f32.mrf.mxu0
      %v1529 = vadd.f32 %v1360, %v1528
      %v1530 = vpop.f32.mrf.mxu0
      %v1531 = vadd.f32 %v1362, %v1530
      %1532 = vmatmul.bf16.gmra.mxu0 %v818
      %v1533 = vpop.f32.mrf.mxu0
      %v1534 = vadd.f32 %v1365, %v1533
      %v1535 = vpop.f32.mrf.mxu0
      %v1536 = vadd.f32 %v1367, %v1535
      %1537 = vmatmul.bf16.gmra.mxu0 %v821
      %v1538 = vpop.f32.mrf.mxu0
      %v1539 = vadd.f32 %v1370, %v1538
      %v1540 = vpop.f32.mrf.mxu0
      %v1541 = vadd.f32 %v1372, %v1540
      %1542 = vmatmul.bf16.gmra.mxu0 %v824
      %v1543 = vpop.f32.mrf.mxu0
      %v1544 = vadd.f32 %v1375, %v1543
      %v1545 = vpop.f32.mrf.mxu0
      %v1546 = vadd.f32 %v1377, %v1545
      %1547 = vmatmul.bf16.gmra.mxu0 %v827
      %v1548 = vpop.f32.mrf.mxu0
      %v1549 = vadd.f32 %v1380, %v1548
      %v1550 = vpop.f32.mrf.mxu0
      %v1551 = vadd.f32 %v1382, %v1550
      %1552 = vmatmul.bf16.gmra.mxu0 %v830
      %v1553 = vpop.f32.mrf.mxu0
      %v1554 = vadd.f32 %v1385, %v1553
      %v1555 = vpop.f32.mrf.mxu0
      %v1556 = vadd.f32 %v1387, %v1555
      %1557 = vmatmul.bf16.gmra.mxu0 %v833
      %v1558 = vpop.f32.mrf.mxu0
      %v1559 = vadd.f32 %v1390, %v1558
      %v1560 = vpop.f32.mrf.mxu0
      %v1561 = vadd.f32 %v1392, %v1560
      %1562 = vmatmul.bf16.gmra.mxu0 %v836
      %v1563 = vpop.f32.mrf.mxu0
      %v1564 = vadd.f32 %v1395, %v1563
      %v1565 = vpop.f32.mrf.mxu0
      %v1566 = vadd.f32 %v1397, %v1565
      %1567 = vmatmul.bf16.gmra.mxu0 %v839
      %v1568 = vpop.f32.mrf.mxu0
      %v1569 = vadd.f32 %v1400, %v1568
      %v1570 = vpop.f32.mrf.mxu0
      %v1571 = vadd.f32 %v1402, %v1570
      %1572 = vmatmul.bf16.gmra.mxu0 %v842
      %v1573 = vpop.f32.mrf.mxu0
      %v1574 = vadd.f32 %v1405, %v1573
      %v1575 = vpop.f32.mrf.mxu0
      %v1576 = vadd.f32 %v1407, %v1575
      %1577 = vmatmul.bf16.gmra.mxu0 %v845
      %v1578 = vpop.f32.mrf.mxu0
      %v1579 = vadd.f32 %v1410, %v1578
      %v1580 = vpop.f32.mrf.mxu0
      %v1581 = vadd.f32 %v1412, %v1580
      %1582 = vmatmul.bf16.gmra.mxu0 %v848
      %v1583 = vpop.f32.mrf.mxu0
      %v1584 = vadd.f32 %v1415, %v1583
      %v1585 = vpop.f32.mrf.mxu0
      %v1586 = vadd.f32 %v1417, %v1585
      %1587 = vmatmul.bf16.gmra.mxu0 %v851
      %v1588 = vpop.f32.mrf.mxu0
      %v1589 = vadd.f32 %v1420, %v1588
      %v1590 = vpop.f32.mrf.mxu0
      %v1591 = vadd.f32 %v1422, %v1590
      %1592 = vmatmul.bf16.gmra.mxu0 %v854
      %v1593 = vpop.f32.mrf.mxu0
      %v1594 = vadd.f32 %v1425, %v1593
      %v1595 = vpop.f32.mrf.mxu0
      %v1596 = vadd.f32 %v1427, %v1595
      %1597 = vmatmul.bf16.gmra.mxu0 %v857
      %v1598 = vpop.f32.mrf.mxu0
      %v1599 = vadd.f32 %v1430, %v1598
      %v1600 = vpop.f32.mrf.mxu0
      %v1601 = vadd.f32 %v1432, %v1600
      %1602 = vmatmul.bf16.gmra.mxu0 %v860
      %v1603 = vpop.f32.mrf.mxu0
      %v1604 = vadd.f32 %v1435, %v1603
      %v1605 = vpop.f32.mrf.mxu0
      %v1606 = vadd.f32 %v1437, %v1605
      %1607 = vdwg.mxu0
      %v1608 = vld [vmem:[%s256] sm:$0x1]
      %v1609 = vld [vmem:[%s259] sm:$0x1]
      %v1611 = vperm.slane %v1608, 0
      %v1613 = vmul.f32 %v1449, %v1611
      %v1614 = vmul.f32 %v1451, %v1611
      %v1615 = vmul.f32 %v1454, %v1611
      %v1616 = vmul.f32 %v1456, %v1611
      %v1617 = vmul.f32 %v1459, %v1611
      %v1618 = vmul.f32 %v1461, %v1611
      %v1619 = vmul.f32 %v1464, %v1611
      %v1620 = vmul.f32 %v1466, %v1611
      %v1621 = vmul.f32 %v1469, %v1611
      %v1622 = vmul.f32 %v1471, %v1611
      %v1623 = vmul.f32 %v1474, %v1611
      %v1624 = vmul.f32 %v1476, %v1611
      %v1625 = vmul.f32 %v1479, %v1611
      %v1626 = vmul.f32 %v1481, %v1611
      %v1627 = vmul.f32 %v1484, %v1611
      %v1628 = vmul.f32 %v1486, %v1611
      %v1629 = vmul.f32 %v1489, %v1611
      %v1630 = vmul.f32 %v1491, %v1611
      %v1631 = vmul.f32 %v1494, %v1611
      %v1632 = vmul.f32 %v1496, %v1611
      %v1633 = vmul.f32 %v1499, %v1611
      %v1634 = vmul.f32 %v1501, %v1611
      %v1635 = vmul.f32 %v1504, %v1611
      %v1636 = vmul.f32 %v1506, %v1611
      %v1637 = vmul.f32 %v1509, %v1611
      %v1638 = vmul.f32 %v1511, %v1611
      %v1639 = vmul.f32 %v1514, %v1611
      %v1640 = vmul.f32 %v1516, %v1611
      %v1641 = vmul.f32 %v1519, %v1611
      %v1642 = vmul.f32 %v1521, %v1611
      %v1643 = vmul.f32 %v1524, %v1611
      %v1644 = vmul.f32 %v1526, %v1611
      %v1645 = vmul.f32 %v1529, %v1611
      %v1646 = vmul.f32 %v1531, %v1611
      %v1647 = vmul.f32 %v1534, %v1611
      %v1648 = vmul.f32 %v1536, %v1611
      %v1649 = vmul.f32 %v1539, %v1611
      %v1650 = vmul.f32 %v1541, %v1611
      %v1651 = vmul.f32 %v1544, %v1611
      %v1652 = vmul.f32 %v1546, %v1611
      %v1653 = vmul.f32 %v1549, %v1611
      %v1654 = vmul.f32 %v1551, %v1611
      %v1655 = vmul.f32 %v1554, %v1611
      %v1656 = vmul.f32 %v1556, %v1611
      %v1657 = vmul.f32 %v1559, %v1611
      %v1658 = vmul.f32 %v1561, %v1611
      %v1659 = vmul.f32 %v1564, %v1611
      %v1660 = vmul.f32 %v1566, %v1611
      %v1661 = vmul.f32 %v1569, %v1611
      %v1662 = vmul.f32 %v1571, %v1611
      %v1663 = vmul.f32 %v1574, %v1611
      %v1664 = vmul.f32 %v1576, %v1611
      %v1665 = vmul.f32 %v1579, %v1611
      %v1666 = vmul.f32 %v1581, %v1611
      %v1667 = vmul.f32 %v1584, %v1611
      %v1668 = vmul.f32 %v1586, %v1611
      %v1669 = vmul.f32 %v1589, %v1611
      %v1670 = vmul.f32 %v1591, %v1611
      %v1671 = vmul.f32 %v1594, %v1611
      %v1672 = vmul.f32 %v1596, %v1611
      %v1673 = vmul.f32 %v1599, %v1611
      %v1674 = vmul.f32 %v1601, %v1611
      %v1675 = vmul.f32 %v1604, %v1611
      %v1676 = vmul.f32 %v1606, %v1611
      %v1678 = vperm.slane %v1609, 0
      %v1680 = vadd.f32 %v1613, %v1678
      %v1681 = vadd.f32 %v1614, %v1678
      %v1682 = vadd.f32 %v1615, %v1678
      %v1683 = vadd.f32 %v1616, %v1678
      %v1684 = vadd.f32 %v1617, %v1678
      %v1685 = vadd.f32 %v1618, %v1678
      %v1686 = vadd.f32 %v1619, %v1678
      %v1687 = vadd.f32 %v1620, %v1678
      %v1688 = vadd.f32 %v1621, %v1678
      %v1689 = vadd.f32 %v1622, %v1678
      %v1690 = vadd.f32 %v1623, %v1678
      %v1691 = vadd.f32 %v1624, %v1678
      %v1692 = vadd.f32 %v1625, %v1678
      %v1693 = vadd.f32 %v1626, %v1678
      %v1694 = vadd.f32 %v1627, %v1678
      %v1695 = vadd.f32 %v1628, %v1678
      %v1696 = vadd.f32 %v1629, %v1678
      %v1697 = vadd.f32 %v1630, %v1678
      %v1698 = vadd.f32 %v1631, %v1678
      %v1699 = vadd.f32 %v1632, %v1678
      %v1700 = vadd.f32 %v1633, %v1678
      %v1701 = vadd.f32 %v1634, %v1678
      %v1702 = vadd.f32 %v1635, %v1678
      %v1703 = vadd.f32 %v1636, %v1678
      %v1704 = vadd.f32 %v1637, %v1678
      %v1705 = vadd.f32 %v1638, %v1678
      %v1706 = vadd.f32 %v1639, %v1678
      %v1707 = vadd.f32 %v1640, %v1678
      %v1708 = vadd.f32 %v1641, %v1678
      %v1709 = vadd.f32 %v1642, %v1678
      %v1710 = vadd.f32 %v1643, %v1678
      %v1711 = vadd.f32 %v1644, %v1678
      %v1712 = vadd.f32 %v1645, %v1678
      %v1713 = vadd.f32 %v1646, %v1678
      %v1714 = vadd.f32 %v1647, %v1678
      %v1715 = vadd.f32 %v1648, %v1678
      %v1716 = vadd.f32 %v1649, %v1678
      %v1717 = vadd.f32 %v1650, %v1678
      %v1718 = vadd.f32 %v1651, %v1678
      %v1719 = vadd.f32 %v1652, %v1678
      %v1720 = vadd.f32 %v1653, %v1678
      %v1721 = vadd.f32 %v1654, %v1678
      %v1722 = vadd.f32 %v1655, %v1678
      %v1723 = vadd.f32 %v1656, %v1678
      %v1724 = vadd.f32 %v1657, %v1678
      %v1725 = vadd.f32 %v1658, %v1678
      %v1726 = vadd.f32 %v1659, %v1678
      %v1727 = vadd.f32 %v1660, %v1678
      %v1728 = vadd.f32 %v1661, %v1678
      %v1729 = vadd.f32 %v1662, %v1678
      %v1730 = vadd.f32 %v1663, %v1678
      %v1731 = vadd.f32 %v1664, %v1678
      %v1732 = vadd.f32 %v1665, %v1678
      %v1733 = vadd.f32 %v1666, %v1678
      %v1734 = vadd.f32 %v1667, %v1678
      %v1735 = vadd.f32 %v1668, %v1678
      %v1736 = vadd.f32 %v1669, %v1678
      %v1737 = vadd.f32 %v1670, %v1678
      %v1738 = vadd.f32 %v1671, %v1678
      %v1739 = vadd.f32 %v1672, %v1678
      %v1740 = vadd.f32 %v1673, %v1678
      %v1741 = vadd.f32 %v1674, %v1678
      %v1742 = vadd.f32 %v1675, %v1678
      %v1743 = vadd.f32 %v1676, %v1678
      %v1744 = vmax.f32 %v1680, 0.0
      %v1745 = vmax.f32 %v1681, 0.0
      %v1746 = vmax.f32 %v1682, 0.0
      %v1747 = vmax.f32 %v1683, 0.0
      %v1748 = vmax.f32 %v1684, 0.0
      %v1749 = vmax.f32 %v1685, 0.0
      %v1750 = vmax.f32 %v1686, 0.0
      %v1751 = vmax.f32 %v1687, 0.0
      %v1752 = vmax.f32 %v1688, 0.0
      %v1753 = vmax.f32 %v1689, 0.0
      %v1754 = vmax.f32 %v1690, 0.0
      %v1755 = vmax.f32 %v1691, 0.0
      %v1756 = vmax.f32 %v1692, 0.0
      %v1757 = vmax.f32 %v1693, 0.0
      %v1758 = vmax.f32 %v1694, 0.0
      %v1759 = vmax.f32 %v1695, 0.0
      %v1760 = vmax.f32 %v1696, 0.0
      %v1761 = vmax.f32 %v1697, 0.0
      %v1762 = vmax.f32 %v1698, 0.0
      %v1763 = vmax.f32 %v1699, 0.0
      %v1764 = vmax.f32 %v1700, 0.0
      %v1765 = vmax.f32 %v1701, 0.0
      %v1766 = vmax.f32 %v1702, 0.0
      %v1767 = vmax.f32 %v1703, 0.0
      %v1768 = vmax.f32 %v1704, 0.0
      %v1769 = vmax.f32 %v1705, 0.0
      %v1770 = vmax.f32 %v1706, 0.0
      %v1771 = vmax.f32 %v1707, 0.0
      %v1772 = vmax.f32 %v1708, 0.0
      %v1773 = vmax.f32 %v1709, 0.0
      %v1774 = vmax.f32 %v1710, 0.0
      %v1775 = vmax.f32 %v1711, 0.0
      %v1776 = vmax.f32 %v1712, 0.0
      %v1777 = vmax.f32 %v1713, 0.0
      %v1778 = vmax.f32 %v1714, 0.0
      %v1779 = vmax.f32 %v1715, 0.0
      %v1780 = vmax.f32 %v1716, 0.0
      %v1781 = vmax.f32 %v1717, 0.0
      %v1782 = vmax.f32 %v1718, 0.0
      %v1783 = vmax.f32 %v1719, 0.0
      %v1784 = vmax.f32 %v1720, 0.0
      %v1785 = vmax.f32 %v1721, 0.0
      %v1786 = vmax.f32 %v1722, 0.0
      %v1787 = vmax.f32 %v1723, 0.0
      %v1788 = vmax.f32 %v1724, 0.0
      %v1789 = vmax.f32 %v1725, 0.0
      %v1790 = vmax.f32 %v1726, 0.0
      %v1791 = vmax.f32 %v1727, 0.0
      %v1792 = vmax.f32 %v1728, 0.0
      %v1793 = vmax.f32 %v1729, 0.0
      %v1794 = vmax.f32 %v1730, 0.0
      %v1795 = vmax.f32 %v1731, 0.0
      %v1796 = vmax.f32 %v1732, 0.0
      %v1797 = vmax.f32 %v1733, 0.0
      %v1798 = vmax.f32 %v1734, 0.0
      %v1799 = vmax.f32 %v1735, 0.0
      %v1800 = vmax.f32 %v1736, 0.0
      %v1801 = vmax.f32 %v1737, 0.0
      %v1802 = vmax.f32 %v1738, 0.0
      %v1803 = vmax.f32 %v1739, 0.0
      %v1804 = vmax.f32 %v1740, 0.0
      %v1805 = vmax.f32 %v1741, 0.0
      %v1806 = vmax.f32 %v1742, 0.0
      %v1807 = vmax.f32 %v1743, 0.0
      %v1808 = vpack.c.bf16 %v1744, %v1744
      %v1809 = vpack.c.bf16 %v1745, %v1745
      %v1810 = vpack.c.bf16 %v1746, %v1746
      %v1811 = vpack.c.bf16 %v1747, %v1747
      %v1812 = vpack.c.bf16 %v1748, %v1748
      %v1813 = vpack.c.bf16 %v1749, %v1749
      %v1814 = vpack.c.bf16 %v1750, %v1750
      %v1815 = vpack.c.bf16 %v1751, %v1751
      %v1816 = vpack.c.bf16 %v1752, %v1752
      %v1817 = vpack.c.bf16 %v1753, %v1753
      %v1818 = vpack.c.bf16 %v1754, %v1754
      %v1819 = vpack.c.bf16 %v1755, %v1755
      %v1820 = vpack.c.bf16 %v1756, %v1756
      %v1821 = vpack.c.bf16 %v1757, %v1757
      %v1822 = vpack.c.bf16 %v1758, %v1758
      %v1823 = vpack.c.bf16 %v1759, %v1759
      %v1824 = vpack.c.bf16 %v1760, %v1760
      %v1825 = vpack.c.bf16 %v1761, %v1761
      %v1826 = vpack.c.bf16 %v1762, %v1762
      %v1827 = vpack.c.bf16 %v1763, %v1763
      %v1828 = vpack.c.bf16 %v1764, %v1764
      %v1829 = vpack.c.bf16 %v1765, %v1765
      %v1830 = vpack.c.bf16 %v1766, %v1766
      %v1831 = vpack.c.bf16 %v1767, %v1767
      %v1832 = vpack.c.bf16 %v1768, %v1768
      %v1833 = vpack.c.bf16 %v1769, %v1769
      %v1834 = vpack.c.bf16 %v1770, %v1770
      %v1835 = vpack.c.bf16 %v1771, %v1771
      %v1836 = vpack.c.bf16 %v1772, %v1772
      %v1837 = vpack.c.bf16 %v1773, %v1773
      %v1838 = vpack.c.bf16 %v1774, %v1774
      %v1839 = vpack.c.bf16 %v1775, %v1775
      %v1840 = vpack.c.bf16 %v1776, %v1776
      %v1841 = vpack.c.bf16 %v1777, %v1777
      %v1842 = vpack.c.bf16 %v1778, %v1778
      %v1843 = vpack.c.bf16 %v1779, %v1779
      %v1844 = vpack.c.bf16 %v1780, %v1780
      %v1845 = vpack.c.bf16 %v1781, %v1781
      %v1846 = vpack.c.bf16 %v1782, %v1782
      %v1847 = vpack.c.bf16 %v1783, %v1783
      %v1848 = vpack.c.bf16 %v1784, %v1784
      %v1849 = vpack.c.bf16 %v1785, %v1785
      %v1850 = vpack.c.bf16 %v1786, %v1786
      %v1851 = vpack.c.bf16 %v1787, %v1787
      %v1852 = vpack.c.bf16 %v1788, %v1788
      %v1853 = vpack.c.bf16 %v1789, %v1789
      %v1854 = vpack.c.bf16 %v1790, %v1790
      %v1855 = vpack.c.bf16 %v1791, %v1791
      %v1856 = vpack.c.bf16 %v1792, %v1792
      %v1857 = vpack.c.bf16 %v1793, %v1793
      %v1858 = vpack.c.bf16 %v1794, %v1794
      %v1859 = vpack.c.bf16 %v1795, %v1795
      %v1860 = vpack.c.bf16 %v1796, %v1796
      %v1861 = vpack.c.bf16 %v1797, %v1797
      %v1862 = vpack.c.bf16 %v1798, %v1798
      %v1863 = vpack.c.bf16 %v1799, %v1799
      %v1864 = vpack.c.bf16 %v1800, %v1800
      %v1865 = vpack.c.bf16 %v1801, %v1801
      %v1866 = vpack.c.bf16 %v1802, %v1802
      %v1867 = vpack.c.bf16 %v1803, %v1803
      %v1868 = vpack.c.bf16 %v1804, %v1804
      %v1869 = vpack.c.bf16 %v1805, %v1805
      %v1870 = vpack.c.bf16 %v1806, %v1806
      %v1871 = vpack.c.bf16 %v1807, %v1807
      %1872 = vst [vmem:[%s267] sm:$0xf] %v1808
      %1873 = vst [vmem:[%s267 + $0x4] sm:$0xf] %v1809
      %1874 = vst [vmem:[%s267 + $0x8] sm:$0xf] %v1810
      %1875 = vst [vmem:[%s267 + $0xc] sm:$0xf] %v1811
      %1876 = vst [vmem:[%s267 + $0x10] sm:$0xf] %v1812
      %1877 = vst [vmem:[%s267 + $0x14] sm:$0xf] %v1813
      %1878 = vst [vmem:[%s267 + $0x18] sm:$0xf] %v1814
      %1879 = vst [vmem:[%s267 + $0x1c] sm:$0xf] %v1815
      %1880 = vst [vmem:[%s267 + $0x20] sm:$0xf] %v1816
      %1881 = vst [vmem:[%s267 + $0x24] sm:$0xf] %v1817
      %1882 = vst [vmem:[%s267 + $0x28] sm:$0xf] %v1818
      %1883 = vst [vmem:[%s267 + $0x2c] sm:$0xf] %v1819
      %1884 = vst [vmem:[%s267 + $0x30] sm:$0xf] %v1820
      %1885 = vst [vmem:[%s267 + $0x34] sm:$0xf] %v1821
      %1886 = vst [vmem:[%s267 + $0x38] sm:$0xf] %v1822
      %1887 = vst [vmem:[%s267 + $0x3c] sm:$0xf] %v1823
      %1888 = vst [vmem:[%s267 + $0x40] sm:$0xf] %v1824
      %1889 = vst [vmem:[%s267 + $0x44] sm:$0xf] %v1825
      %1890 = vst [vmem:[%s267 + $0x48] sm:$0xf] %v1826
      %1891 = vst [vmem:[%s267 + $0x4c] sm:$0xf] %v1827
      %1892 = vst [vmem:[%s267 + $0x50] sm:$0xf] %v1828
      %1893 = vst [vmem:[%s267 + $0x54] sm:$0xf] %v1829
      %1894 = vst [vmem:[%s267 + $0x58] sm:$0xf] %v1830
      %1895 = vst [vmem:[%s267 + $0x5c] sm:$0xf] %v1831
      %1896 = vst [vmem:[%s267 + $0x60] sm:$0xf] %v1832
      %1897 = vst [vmem:[%s267 + $0x64] sm:$0xf] %v1833
      %1898 = vst [vmem:[%s267 + $0x68] sm:$0xf] %v1834
      %1899 = vst [vmem:[%s267 + $0x6c] sm:$0xf] %v1835
      %1900 = vst [vmem:[%s267 + $0x70] sm:$0xf] %v1836
      %1901 = vst [vmem:[%s267 + $0x74] sm:$0xf] %v1837
      %1902 = vst [vmem:[%s267 + $0x78] sm:$0xf] %v1838
      %1903 = vst [vmem:[%s267 + $0x7c] sm:$0xf] %v1839
      %1904 = vst [vmem:[%s267 + $0x80] sm:$0xf] %v1840
      %1905 = vst [vmem:[%s267 + $0x84] sm:$0xf] %v1841
      %1906 = vst [vmem:[%s267 + $0x88] sm:$0xf] %v1842
      %1907 = vst [vmem:[%s267 + $0x8c] sm:$0xf] %v1843
      %1908 = vst [vmem:[%s267 + $0x90] sm:$0xf] %v1844
      %1909 = vst [vmem:[%s267 + $0x94] sm:$0xf] %v1845
      %1910 = vst [vmem:[%s267 + $0x98] sm:$0xf] %v1846
      %1911 = vst [vmem:[%s267 + $0x9c] sm:$0xf] %v1847
      %1912 = vst [vmem:[%s267 + $0xa0] sm:$0xf] %v1848
      %1913 = vst [vmem:[%s267 + $0xa4] sm:$0xf] %v1849
      %1914 = vst [vmem:[%s267 + $0xa8] sm:$0xf] %v1850
      %1915 = vst [vmem:[%s267 + $0xac] sm:$0xf] %v1851
      %1916 = vst [vmem:[%s267 + $0xb0] sm:$0xf] %v1852
      %1917 = vst [vmem:[%s267 + $0xb4] sm:$0xf] %v1853
      %1918 = vst [vmem:[%s267 + $0xb8] sm:$0xf] %v1854
      %1919 = vst [vmem:[%s267 + $0xbc] sm:$0xf] %v1855
      %1920 = vst [vmem:[%s267 + $0xc0] sm:$0xf] %v1856
      %1921 = vst [vmem:[%s267 + $0xc4] sm:$0xf] %v1857
      %1922 = vst [vmem:[%s267 + $0xc8] sm:$0xf] %v1858
      %1923 = vst [vmem:[%s267 + $0xcc] sm:$0xf] %v1859
      %1924 = vst [vmem:[%s267 + $0xd0] sm:$0xf] %v1860
      %1925 = vst [vmem:[%s267 + $0xd4] sm:$0xf] %v1861
      %1926 = vst [vmem:[%s267 + $0xd8] sm:$0xf] %v1862
      %1927 = vst [vmem:[%s267 + $0xdc] sm:$0xf] %v1863
      %1928 = vst [vmem:[%s267 + $0xe0] sm:$0xf] %v1864
      %1929 = vst [vmem:[%s267 + $0xe4] sm:$0xf] %v1865
      %1930 = vst [vmem:[%s267 + $0xe8] sm:$0xf] %v1866
      %1931 = vst [vmem:[%s267 + $0xec] sm:$0xf] %v1867
      %1932 = vst [vmem:[%s267 + $0xf0] sm:$0xf] %v1868
      %1933 = vst [vmem:[%s267 + $0xf4] sm:$0xf] %v1869
      %1934 = vst [vmem:[%s267 + $0xf8] sm:$0xf] %v1870
      %1935 = vst [vmem:[%s267 + $0xfc] sm:$0xf] %v1871
      %s1936 = smul.u32 64, %s19
      %p1937 = scmp.lt.s32.totalorder %s1936, 895
      %s1938 = scalar_select %p1937, %s1936, 895
      %p1939 = scmp.lt.s32.totalorder %s20, 0
      %s1940 = scalar_select %p1939, %s20, 0
      %s1941 = sadd.s32 %s1940, %s1938
      %s1942 = smul.addr %s1941, 4
      %s1943 = scalar_lea.vmem %s4, %s1942
      // Predicated region
      $region37: #{cnn_forward.6} parent=35 // pred_check
        %p1944 = pneg %p151
      $region38: #{cnn_forward.6} parent=35 // pred_check_branch
        %1946 = sbr.rel (%p1944) target = $region40
      $region39: #{cnn_forward.6} parent=35 // pred_region
        %s1947 = smul.u32 64, %s19
      $region40: #{cnn_forward.6} parent=35 // pred_fallthru
        _
    $region36: #{cnn_forward.6} parent=5 // pred_fallthru
      _
    %p1948 = scmp.le.s32.totalorder 2, %s10
    // Predicated region
    $region41: #{cnn_forward.6} parent=5 // pred_check
      %p1949 = pneg %p1948
    $region42: #{cnn_forward.6} parent=5 // pred_check_branch
      %1951 = sbr.rel (%p1949) target = $region44
    $region43: #{cnn_forward.6} parent=5 // pred_region
      %s1952 = ssub.s32 %s10, 2
      // Predicated region
      $region45: #{cnn_forward.6} parent=43 // pred_check
        %p1953 = pneg %p157
      $region46: #{cnn_forward.6} parent=43 // pred_check_branch
        %1955 = sbr.rel (%p1953) target = $region48
      $region47: #{cnn_forward.6} parent=43 // pred_region
        %s1956 = smul.u32 64, %s21
        %p1957 = scmp.lt.s32.totalorder %s1956, 895
        %s1958 = scalar_select %p1957, %s1956, 895
        %p1959 = scmp.lt.s32.totalorder %s22, 0
        %s1960 = scalar_select %p1959, %s22, 0
        %s1961 = sadd.s32 %s1960, %s1958
        %s1962 = smul.addr %s1961, 4
        %s1963 = scalar_lea.vmem %s4, %s1962
      $region48: #{cnn_forward.6} parent=43 // pred_fallthru
        _
    $region44: #{cnn_forward.6} parent=5 // pred_fallthru
      _
  $region6: #{cnn_forward.6} parent=0 // loop_footer
    %s14 = sadd.s32 1, %s10
  $region7: #{cnn_forward.6} parent=0 // loop_footer_branch
    %9 = sbr.rel target = $region3
  $region8: #{cnn_forward.6} parent=0 // loop_exit
    _

// kernel: cnn_forward.7
$region0: #{cnn_forward.7}
  #allocation0 [shape = 'u32[]', space=smem, size = 0x4, offset = 0x4, fixed_abs, tag = 'smem constant byte address 0x4 - core index']
  #allocation1 [shape = 'u32[72,128]{1,0:T(1,128)}', space=vmem, size = 0x9000, scoped, tag = 'internal scratch']
  %s0 = inlined_call_operand.vmem [shape: bf16[2048,384], index: 0, kind: input, shape index: {}]
  %s1 = inlined_call_operand.vmem [shape: bf16[384,128], index: 1, kind: input, shape index: {}]
  %s2 = inlined_call_operand.vmem [shape: f32[1,128], index: 2, kind: input, shape index: {}]
  %s3 = inlined_call_operand.vmem [shape: f32[1,128], index: 3, kind: input, shape index: {}]
  %s4 = inlined_call_operand.vmem [shape: bf16[2048,128], index: 4, kind: output, shape index: {}]
  %s5 = sld [smem:[#allocation0]]
  $region49: #{cnn_forward.7} parent=0
    _
  %s7 = ssub.s32 1, %s5
  %s8 = scalar_select 0, %s7, %s5
  loop: start=0, step=1, limit=6
  $region2: #{cnn_forward.7} parent=0 // loop_pre_header
    _
  $region3: #{cnn_forward.7} parent=0 // loop_header
    %s10 = sphi 0, %s14
    %p11 = scmp.ge.s32.totalorder %s10, 6
    %s17 = sphi 0, %s29
    %s18 = sphi 0, %s25
    %s19 = sphi 0, %s17
    %s20 = sphi 0, %s18
    %s21 = sphi 0, %s19
    %s22 = sphi 0, %s20
    %s32 = sphi 0, %s34
    %s35 = sphi 0, %s32
    %s36 = sphi 0, %s35
    %s52 = sphi 0, %s36
    %s58 = sphi 0, %s60
    %s61 = sphi 0, %s58
    %s62 = sphi 0, %s61
    %s78 = sphi 0, %s62
    %s84 = sphi 0, %s86
    %s87 = sphi 0, %s84
    %s88 = sphi 0, %s87
    %s104 = sphi 0, %s88
    %s110 = sphi 0, %s112
    %s113 = sphi 0, %s110
    %s114 = sphi 0, %s113
    %s130 = sphi 0, %s114
    %s138 = sphi 0, %s140
    %s141 = sphi 0, %s138
    %s142 = sphi 0, %s141
    %s158 = sphi 0, %s142
  $region4: #{cnn_forward.7} parent=0 // loop_header_branch
    %13 = sbr.rel (%p11) target = $region8
  $region5: #{cnn_forward.7} parent=0 // loop_body
    %s15 = ssub.s32 %s10, 1
    %s16 = ssub.s32 %s10, 2
    %s23 = sadd.s32 1, %s18
    %p24 = scmp.ge.s32.totalorder %s23, 1
    %s25 = scalar_select %p24, 0, %s23
    %s26 = sadd.s32 1, %s17
    %s27 = scalar_select %p24, %s26, %s17
    %p28 = scmp.ge.s32.totalorder %s27, 4
    %s29 = scalar_select %p28, 0, %s27
    %s30 = ssub.s32 %s17, %s29
    %p31 = scmp.eq.s32.totalorder %s30, 0
    %s33 = sadd.s32 %s32, 1
    %s34 = scalar_select %p31, %s32, %s33
    %p37 = pneg %p31
    %p38 = scmp.eq.s32.totalorder %s10, 3
    %p39 = por %p37, %p38
    %p40 = scmp.ne.s32.totalorder %s32, %s35
    %p41 = scmp.eq.s32.totalorder %s10, 0
    %p42 = por %p40, %p41
    %p43 = scmp.ne.s32.totalorder %s32, %s35
    %p44 = scmp.eq.s32.totalorder %s15, 3
    %p45 = por %p43, %p44
    %p46 = scmp.ne.s32.totalorder %s35, %s36
    %p47 = scmp.eq.s32.totalorder %s15, 0
    %p48 = por %p46, %p47
    %p49 = scmp.ne.s32.totalorder %s35, %s36
    %p50 = scmp.eq.s32.totalorder %s16, 3
    %p51 = por %p49, %p50
    %p53 = scmp.ne.s32.totalorder %s36, %s52
    %p54 = scmp.eq.s32.totalorder %s16, 0
    %p55 = por %p53, %p54
    %s56 = ssub.s32 %s18, %s25
    %p57 = scmp.eq.s32.totalorder %s56, 0
    %s59 = sadd.s32 %s58, 1
    %s60 = scalar_select %p57, %s58, %s59
    %p63 = pneg %p57
    %p64 = scmp.eq.s32.totalorder %s10, 3
    %p65 = por %p63, %p64
    %p66 = scmp.ne.s32.totalorder %s58, %s61
    %p67 = scmp.eq.s32.totalorder %s10, 0
    %p68 = por %p66, %p67
    %p69 = scmp.ne.s32.totalorder %s58, %s61
    %p70 = scmp.eq.s32.totalorder %s15, 3
    %p71 = por %p69, %p70
    %p72 = scmp.ne.s32.totalorder %s61, %s62
    %p73 = scmp.eq.s32.totalorder %s15, 0
    %p74 = por %p72, %p73
    %p75 = scmp.ne.s32.totalorder %s61, %s62
    %p76 = scmp.eq.s32.totalorder %s16, 3
    %p77 = por %p75, %p76
    %p79 = scmp.ne.s32.totalorder %s62, %s78
    %p80 = scmp.eq.s32.totalorder %s16, 0
    %p81 = por %p79, %p80
    %s82 = ssub.s32 %s18, %s25
    %p83 = scmp.eq.s32.totalorder %s82, 0
    %s85 = sadd.s32 %s84, 1
    %s86 = scalar_select %p83, %s84, %s85
    %p89 = pneg %p83
    %p90 = scmp.eq.s32.totalorder %s10, 3
    %p91 = por %p89, %p90
    %p92 = scmp.ne.s32.totalorder %s84, %s87
    %p93 = scmp.eq.s32.totalorder %s10, 0
    %p94 = por %p92, %p93
    %p95 = scmp.ne.s32.totalorder %s84, %s87
    %p96 = scmp.eq.s32.totalorder %s15, 3
    %p97 = por %p95, %p96
    %p98 = scmp.ne.s32.totalorder %s87, %s88
    %p99 = scmp.eq.s32.totalorder %s15, 0
    %p100 = por %p98, %p99
    %p101 = scmp.ne.s32.totalorder %s87, %s88
    %p102 = scmp.eq.s32.totalorder %s16, 3
    %p103 = por %p101, %p102
    %p105 = scmp.ne.s32.totalorder %s88, %s104
    %p106 = scmp.eq.s32.totalorder %s16, 0
    %p107 = por %p105, %p106
    %s108 = ssub.s32 %s18, %s25
    %p109 = scmp.eq.s32.totalorder %s108, 0
    %s111 = sadd.s32 %s110, 1
    %s112 = scalar_select %p109, %s110, %s111
    %p115 = pneg %p109
    %p116 = scmp.eq.s32.totalorder %s10, 3
    %p117 = por %p115, %p116
    %p118 = scmp.ne.s32.totalorder %s110, %s113
    %p119 = scmp.eq.s32.totalorder %s10, 0
    %p120 = por %p118, %p119
    %p121 = scmp.ne.s32.totalorder %s110, %s113
    %p122 = scmp.eq.s32.totalorder %s15, 3
    %p123 = por %p121, %p122
    %p124 = scmp.ne.s32.totalorder %s113, %s114
    %p125 = scmp.eq.s32.totalorder %s15, 0
    %p126 = por %p124, %p125
    %p127 = scmp.ne.s32.totalorder %s113, %s114
    %p128 = scmp.eq.s32.totalorder %s16, 3
    %p129 = por %p127, %p128
    %p131 = scmp.ne.s32.totalorder %s114, %s130
    %p132 = scmp.eq.s32.totalorder %s16, 0
    %p133 = por %p131, %p132
    %s134 = ssub.s32 %s17, %s29
    %s135 = ssub.s32 %s18, %s25
    %s136 = sor.u32 %s134, %s135
    %p137 = scmp.eq.s32.totalorder %s136, 0
    %s139 = sadd.s32 %s138, 1
    %s140 = scalar_select %p137, %s138, %s139
    %p143 = pneg %p137
    %p144 = scmp.eq.s32.totalorder %s10, 3
    %p145 = por %p143, %p144
    %p146 = scmp.ne.s32.totalorder %s138, %s141
    %p147 = scmp.eq.s32.totalorder %s10, 0
    %p148 = por %p146, %p147
    %p149 = scmp.ne.s32.totalorder %s138, %s141
    %p150 = scmp.eq.s32.totalorder %s15, 3
    %p151 = por %p149, %p150
    %p152 = scmp.ne.s32.totalorder %s141, %s142
    %p153 = scmp.eq.s32.totalorder %s15, 0
    %p154 = por %p152, %p153
    %p155 = scmp.ne.s32.totalorder %s141, %s142
    %p156 = scmp.eq.s32.totalorder %s16, 3
    %p157 = por %p155, %p156
    %p159 = scmp.ne.s32.totalorder %s142, %s158
    %p160 = scmp.eq.s32.totalorder %s16, 0
    %p161 = por %p159, %p160
    %p162 = scmp.le.s32.totalorder 1, %s10
    %p163 = scmp.lt.s32.totalorder %s10, 5
    %p164 = pnand %p162, %p163
    %p165 = pneg %p164
    // Predicated region
    $region9: #{cnn_forward.7} parent=5 // pred_check
      _
    $region10: #{cnn_forward.7} parent=5 // pred_check_branch
      %167 = sbr.rel (%p164) target = $region12
    $region11: #{cnn_forward.7} parent=5 // pred_region
      %s168 = ssub.s32 %s10, 1
      // Predicated region
      $region13: #{cnn_forward.7} parent=11 // pred_check
        %p169 = pneg %p74
      $region14: #{cnn_forward.7} parent=11 // pred_check_branch
        %171 = sbr.rel (%p169) target = $region16
      $region15: #{cnn_forward.7} parent=11 // pred_region
        %p172 = scmp.lt.s32.totalorder %s20, 0
        %s173 = scalar_select %p172, %s20, 0
        %s174 = smul.addr %s173, 4
        %s175 = scalar_lea.vmem %s1, %s174
      $region16: #{cnn_forward.7} parent=11 // pred_fallthru
        _
      // Predicated region
      $region17: #{cnn_forward.7} parent=11 // pred_check
        %p176 = pneg %p100
      $region18: #{cnn_forward.7} parent=11 // pred_check_branch
        %178 = sbr.rel (%p176) target = $region20
      $region19: #{cnn_forward.7} parent=11 // pred_region
        %p179 = scmp.lt.s32.totalorder %s20, 0
        %s180 = scalar_select %p179, %s20, 0
        %s181 = scalar_lea.vmem %s2, %s180
      $region20: #{cnn_forward.7} parent=11 // pred_fallthru
        _
      // Predicated region
      $region21: #{cnn_forward.7} parent=11 // pred_check
        %p182 = pneg %p126
      $region22: #{cnn_forward.7} parent=11 // pred_check_branch
        %184 = sbr.rel (%p182) target = $region24
      $region23: #{cnn_forward.7} parent=11 // pred_region
        %p185 = scmp.lt.s32.totalorder %s20, 0
        %s186 = scalar_select %p185, %s20, 0
        %s187 = scalar_lea.vmem %s3, %s186
      $region24: #{cnn_forward.7} parent=11 // pred_fallthru
        _
    $region12: #{cnn_forward.7} parent=5 // pred_fallthru
      _
    %p188 = scmp.lt.s32.totalorder %s10, 4
    // Predicated region
    $region25: #{cnn_forward.7} parent=5 // pred_check
      %p189 = pneg %p188
    $region26: #{cnn_forward.7} parent=5 // pred_check_branch
      %191 = sbr.rel (%p189) target = $region28
    $region27: #{cnn_forward.7} parent=5 // pred_region
      // Predicated region
      $region29: #{cnn_forward.7} parent=27 // pred_check
        %p192 = pneg %p42
      $region30: #{cnn_forward.7} parent=27 // pred_check_branch
        %194 = sbr.rel (%p192) target = $region32
      $region31: #{cnn_forward.7} parent=27 // pred_region
        %s195 = smul.u32 64, %s17
        %p196 = scmp.lt.s32.totalorder %s195, 255
        %s197 = scalar_select %p196, %s195, 255
        %s198 = smul.addr %s197, 3
        %s199 = smul.addr %s198, 4
        %s200 = scalar_lea.vmem %s0, %s199
        %s201 = smul.u32 64, %s17
      $region32: #{cnn_forward.7} parent=27 // pred_fallthru
        _
    $region28: #{cnn_forward.7} parent=5 // pred_fallthru
      _
    %p202 = scmp.le.s32.totalorder 1, %s10
    %p203 = scmp.lt.s32.totalorder %s10, 5
    %p204 = pnand %p202, %p203
    %p205 = pneg %p204
    // Predicated region
    $region33: #{cnn_forward.7} parent=5 // pred_check
      _
    $region34: #{cnn_forward.7} parent=5 // pred_check_branch
      %207 = sbr.rel (%p204) target = $region36
    $region35: #{cnn_forward.7} parent=5 // pred_region
      %s208 = ssub.s32 %s10, 1
      %s209 = smul.u32 64, %s19
      %p210 = scmp.lt.s32.totalorder %s209, 255
      %s211 = scalar_select %p210, %s209, 255
      %s212 = smul.addr %s211, 3
      %s213 = smul.addr %s212, 4
      %s214 = scalar_lea.vmem %s0, %s213
      %p215 = pneg %p48
      %p216 = pneg %p45
      %p217 = scmp.lt.s32.totalorder %s20, 0
      %s218 = scalar_select %p217, %s20, 0
      %s219 = smul.addr %s218, 4
      %s220 = scalar_lea.vmem %s1, %s219
      %p221 = pneg %p74
      %p222 = pneg %p71
      %p223 = scmp.lt.s32.totalorder %s20, 0
      %s224 = scalar_select %p223, %s20, 0
      %s225 = scalar_lea.vmem %s2, %s224
      %p226 = pneg %p100
      %p227 = pneg %p97
      %p228 = scmp.lt.s32.totalorder %s20, 0
      %s229 = scalar_select %p228, %s20, 0
      %s230 = scalar_lea.vmem %s3, %s229
      %p231 = pneg %p126
      %p232 = pneg %p123
      %p233 = pneg %p154
      %p234 = pneg %p151
      %s235 = smul.u32 64, %s19
      %p236 = scmp.lt.s32.totalorder %s235, 255
      %s237 = scalar_select %p236, %s235, 255
      %p238 = scmp.lt.s32.totalorder %s20, 0
      %s239 = scalar_select %p238, %s20, 0
      %s240 = sadd.s32 %s239, %s237
      %s241 = smul.addr %s240, 4
      %s242 = scalar_lea.vmem %s4, %s241
      %s243 = smul.u32 64, %s19
      %p244 = scmp.lt.s32.totalorder %s243, 255
      %s245 = scalar_select %p244, %s243, 255
      %s246 = smul.addr %s245, 3
      %s247 = smul.addr %s246, 4
      %s248 = scalar_lea.vmem %s0, %s247
      %s249 = smul.u32 64, %s19
      %p250 = scmp.lt.s32.totalorder %s20, 0
      %s251 = scalar_select %p250, %s20, 0
      %s252 = smul.addr %s251, 4
      %s253 = scalar_lea.vmem %s1, %s252
      %p254 = scmp.lt.s32.totalorder %s20, 0
      %s255 = scalar_select %p254, %s20, 0
      %s256 = scalar_lea.vmem %s2, %s255
      %p257 = scmp.lt.s32.totalorder %s20, 0
      %s258 = scalar_select %p257, %s20, 0
      %s259 = scalar_lea.vmem %s3, %s258
      %s260 = smul.u32 64, %s19
      %p261 = scmp.lt.s32.totalorder %s260, 255
      %s262 = scalar_select %p261, %s260, 255
      %p263 = scmp.lt.s32.totalorder %s20, 0
      %s264 = scalar_select %p263, %s20, 0
      %s265 = sadd.s32 %s264, %s262
      %s266 = smul.addr %s265, 4
      %s267 = scalar_lea.vmem %s4, %s266
      %s268 = smul.u32 64, %s19
      %v269 = vld [vmem:[%s248] sm:$0xff]
      %v270 = vld [vmem:[%s248 + $0x8] sm:$0xf]
      %v271 = vld [vmem:[%s248 + $0xc] sm:$0xff]
      %v272 = vld [vmem:[%s248 + $0x14] sm:$0xf]
      %v273 = vld [vmem:[%s248 + $0x18] sm:$0xff]
      %v274 = vld [vmem:[%s248 + $0x20] sm:$0xf]
      %v275 = vld [vmem:[%s248 + $0x24] sm:$0xff]
      %v276 = vld [vmem:[%s248 + $0x2c] sm:$0xf]
      %v277 = vld [vmem:[%s248 + $0x30] sm:$0xff]
      %v278 = vld [vmem:[%s248 + $0x38] sm:$0xf]
      %v279 = vld [vmem:[%s248 + $0x3c] sm:$0xff]
      %v280 = vld [vmem:[%s248 + $0x44] sm:$0xf]
      %v281 = vld [vmem:[%s248 + $0x48] sm:$0xff]
      %v282 = vld [vmem:[%s248 + $0x50] sm:$0xf]
      %v283 = vld [vmem:[%s248 + $0x54] sm:$0xff]
      %v284 = vld [vmem:[%s248 + $0x5c] sm:$0xf]
      %v285 = vld [vmem:[%s248 + $0x60] sm:$0xff]
      %v286 = vld [vmem:[%s248 + $0x68] sm:$0xf]
      %v287 = vld [vmem:[%s248 + $0x6c] sm:$0xff]
      %v288 = vld [vmem:[%s248 + $0x74] sm:$0xf]
      %v289 = vld [vmem:[%s248 + $0x78] sm:$0xff]
      %v290 = vld [vmem:[%s248 + $0x80] sm:$0xf]
      %v291 = vld [vmem:[%s248 + $0x84] sm:$0xff]
      %v292 = vld [vmem:[%s248 + $0x8c] sm:$0xf]
      %v293 = vld [vmem:[%s248 + $0x90] sm:$0xff]
      %v294 = vld [vmem:[%s248 + $0x98] sm:$0xf]
      %v295 = vld [vmem:[%s248 + $0x9c] sm:$0xff]
      %v296 = vld [vmem:[%s248 + $0xa4] sm:$0xf]
      %v297 = vld [vmem:[%s248 + $0xa8] sm:$0xff]
      %v298 = vld [vmem:[%s248 + $0xb0] sm:$0xf]
      %v299 = vld [vmem:[%s248 + $0xb4] sm:$0xff]
      %v300 = vld [vmem:[%s248 + $0xbc] sm:$0xf]
      %v301 = vld [vmem:[%s248 + $0xc0] sm:$0xff]
      %v302 = vld [vmem:[%s248 + $0xc8] sm:$0xf]
      %v303 = vld [vmem:[%s248 + $0xcc] sm:$0xff]
      %v304 = vld [vmem:[%s248 + $0xd4] sm:$0xf]
      %v305 = vld [vmem:[%s248 + $0xd8] sm:$0xff]
      %v306 = vld [vmem:[%s248 + $0xe0] sm:$0xf]
      %v307 = vld [vmem:[%s248 + $0xe4] sm:$0xff]
      %v308 = vld [vmem:[%s248 + $0xec] sm:$0xf]
      %v309 = vld [vmem:[%s248 + $0xf0] sm:$0xff]
      %v310 = vld [vmem:[%s248 + $0xf8] sm:$0xf]
      %v311 = vld [vmem:[%s248 + $0xfc] sm:$0xff]
      %v312 = vld [vmem:[%s248 + $0x104] sm:$0xf]
      %v313 = vld [vmem:[%s248 + $0x108] sm:$0xff]
      %v314 = vld [vmem:[%s248 + $0x110] sm:$0xf]
      %v315 = vld [vmem:[%s248 + $0x114] sm:$0xff]
      %v316 = vld [vmem:[%s248 + $0x11c] sm:$0xf]
      %v317 = vld [vmem:[%s248 + $0x120] sm:$0xff]
      %v318 = vld [vmem:[%s248 + $0x128] sm:$0xf]
      %v319 = vld [vmem:[%s248 + $0x12c] sm:$0xff]
      %v320 = vld [vmem:[%s248 + $0x134] sm:$0xf]
      %v321 = vld [vmem:[%s248 + $0x138] sm:$0xff]
      %v322 = vld [vmem:[%s248 + $0x140] sm:$0xf]
      %v323 = vld [vmem:[%s248 + $0x144] sm:$0xff]
      %v324 = vld [vmem:[%s248 + $0x14c] sm:$0xf]
      %v325 = vld [vmem:[%s248 + $0x150] sm:$0xff]
      %v326 = vld [vmem:[%s248 + $0x158] sm:$0xf]
      %v327 = vld [vmem:[%s248 + $0x15c] sm:$0xff]
      %v328 = vld [vmem:[%s248 + $0x164] sm:$0xf]
      %v329 = vld [vmem:[%s248 + $0x168] sm:$0xff]
      %v330 = vld [vmem:[%s248 + $0x170] sm:$0xf]
      %v331 = vld [vmem:[%s248 + $0x174] sm:$0xff]
      %v332 = vld [vmem:[%s248 + $0x17c] sm:$0xf]
      %v333 = vld [vmem:[%s248 + $0x180] sm:$0xff]
      %v334 = vld [vmem:[%s248 + $0x188] sm:$0xf]
      %v335 = vld [vmem:[%s248 + $0x18c] sm:$0xff]
      %v336 = vld [vmem:[%s248 + $0x194] sm:$0xf]
      %v337 = vld [vmem:[%s248 + $0x198] sm:$0xff]
      %v338 = vld [vmem:[%s248 + $0x1a0] sm:$0xf]
      %v339 = vld [vmem:[%s248 + $0x1a4] sm:$0xff]
      %v340 = vld [vmem:[%s248 + $0x1ac] sm:$0xf]
      %v341 = vld [vmem:[%s248 + $0x1b0] sm:$0xff]
      %v342 = vld [vmem:[%s248 + $0x1b8] sm:$0xf]
      %v343 = vld [vmem:[%s248 + $0x1bc] sm:$0xff]
      %v344 = vld [vmem:[%s248 + $0x1c4] sm:$0xf]
      %v345 = vld [vmem:[%s248 + $0x1c8] sm:$0xff]
      %v346 = vld [vmem:[%s248 + $0x1d0] sm:$0xf]
      %v347 = vld [vmem:[%s248 + $0x1d4] sm:$0xff]
      %v348 = vld [vmem:[%s248 + $0x1dc] sm:$0xf]
      %v349 = vld [vmem:[%s248 + $0x1e0] sm:$0xff]
      %v350 = vld [vmem:[%s248 + $0x1e8] sm:$0xf]
      %v351 = vld [vmem:[%s248 + $0x1ec] sm:$0xff]
      %v352 = vld [vmem:[%s248 + $0x1f4] sm:$0xf]
      %v353 = vld [vmem:[%s248 + $0x1f8] sm:$0xff]
      %v354 = vld [vmem:[%s248 + $0x200] sm:$0xf]
      %v355 = vld [vmem:[%s248 + $0x204] sm:$0xff]
      %v356 = vld [vmem:[%s248 + $0x20c] sm:$0xf]
      %v357 = vld [vmem:[%s248 + $0x210] sm:$0xff]
      %v358 = vld [vmem:[%s248 + $0x218] sm:$0xf]
      %v359 = vld [vmem:[%s248 + $0x21c] sm:$0xff]
      %v360 = vld [vmem:[%s248 + $0x224] sm:$0xf]
      %v361 = vld [vmem:[%s248 + $0x228] sm:$0xff]
      %v362 = vld [vmem:[%s248 + $0x230] sm:$0xf]
      %v363 = vld [vmem:[%s248 + $0x234] sm:$0xff]
      %v364 = vld [vmem:[%s248 + $0x23c] sm:$0xf]
      %v365 = vld [vmem:[%s248 + $0x240] sm:$0xff]
      %v366 = vld [vmem:[%s248 + $0x248] sm:$0xf]
      %v367 = vld [vmem:[%s248 + $0x24c] sm:$0xff]
      %v368 = vld [vmem:[%s248 + $0x254] sm:$0xf]
      %v369 = vld [vmem:[%s248 + $0x258] sm:$0xff]
      %v370 = vld [vmem:[%s248 + $0x260] sm:$0xf]
      %v371 = vld [vmem:[%s248 + $0x264] sm:$0xff]
      %v372 = vld [vmem:[%s248 + $0x26c] sm:$0xf]
      %v373 = vld [vmem:[%s248 + $0x270] sm:$0xff]
      %v374 = vld [vmem:[%s248 + $0x278] sm:$0xf]
      %v375 = vld [vmem:[%s248 + $0x27c] sm:$0xff]
      %v376 = vld [vmem:[%s248 + $0x284] sm:$0xf]
      %v377 = vld [vmem:[%s248 + $0x288] sm:$0xff]
      %v378 = vld [vmem:[%s248 + $0x290] sm:$0xf]
      %v379 = vld [vmem:[%s248 + $0x294] sm:$0xff]
      %v380 = vld [vmem:[%s248 + $0x29c] sm:$0xf]
      %v381 = vld [vmem:[%s248 + $0x2a0] sm:$0xff]
      %v382 = vld [vmem:[%s248 + $0x2a8] sm:$0xf]
      %v383 = vld [vmem:[%s248 + $0x2ac] sm:$0xff]
      %v384 = vld [vmem:[%s248 + $0x2b4] sm:$0xf]
      %v385 = vld [vmem:[%s248 + $0x2b8] sm:$0xff]
      %v386 = vld [vmem:[%s248 + $0x2c0] sm:$0xf]
      %v387 = vld [vmem:[%s248 + $0x2c4] sm:$0xff]
      %v388 = vld [vmem:[%s248 + $0x2cc] sm:$0xf]
      %v389 = vld [vmem:[%s248 + $0x2d0] sm:$0xff]
      %v390 = vld [vmem:[%s248 + $0x2d8] sm:$0xf]
      %v391 = vld [vmem:[%s248 + $0x2dc] sm:$0xff]
      %v392 = vld [vmem:[%s248 + $0x2e4] sm:$0xf]
      %v393 = vld [vmem:[%s248 + $0x2e8] sm:$0xff]
      %v394 = vld [vmem:[%s248 + $0x2f0] sm:$0xf]
      %v395 = vld [vmem:[%s248 + $0x2f4] sm:$0xff]
      %v396 = vld [vmem:[%s248 + $0x2fc] sm:$0xf]
      %v397 = vld [vmem:[%s253] sm:$0xf]
      %v398 = vld [vmem:[%s253 + $0x4] sm:$0xf]
      %v399 = vld [vmem:[%s253 + $0x8] sm:$0xf]
      %v400 = vld [vmem:[%s253 + $0xc] sm:$0xf]
      %v401 = vld [vmem:[%s253 + $0x10] sm:$0xf]
      %v402 = vld [vmem:[%s253 + $0x14] sm:$0xf]
      %v403 = vld [vmem:[%s253 + $0x18] sm:$0xf]
      %v404 = vld [vmem:[%s253 + $0x1c] sm:$0xf]
      %v405 = vld [vmem:[%s253 + $0x20] sm:$0xf]
      %v406 = vld [vmem:[%s253 + $0x24] sm:$0xf]
      %v407 = vld [vmem:[%s253 + $0x28] sm:$0xf]
      %v408 = vld [vmem:[%s253 + $0x2c] sm:$0xf]
      %v409 = vld [vmem:[%s253 + $0x30] sm:$0xf]
      %v410 = vld [vmem:[%s253 + $0x34] sm:$0xf]
      %v411 = vld [vmem:[%s253 + $0x38] sm:$0xf]
      %v412 = vld [vmem:[%s253 + $0x3c] sm:$0xf]
      %v413 = vld [vmem:[%s253 + $0x40] sm:$0xf]
      %v414 = vld [vmem:[%s253 + $0x44] sm:$0xf]
      %v415 = vld [vmem:[%s253 + $0x48] sm:$0xf]
      %v416 = vld [vmem:[%s253 + $0x4c] sm:$0xf]
      %v417 = vld [vmem:[%s253 + $0x50] sm:$0xf]
      %v418 = vld [vmem:[%s253 + $0x54] sm:$0xf]
      %v419 = vld [vmem:[%s253 + $0x58] sm:$0xf]
      %v420 = vld [vmem:[%s253 + $0x5c] sm:$0xf]
      %v421 = vld [vmem:[%s253 + $0x60] sm:$0xf]
      %v422 = vld [vmem:[%s253 + $0x64] sm:$0xf]
      %v423 = vld [vmem:[%s253 + $0x68] sm:$0xf]
      %v424 = vld [vmem:[%s253 + $0x6c] sm:$0xf]
      %v425 = vld [vmem:[%s253 + $0x70] sm:$0xf]
      %v426 = vld [vmem:[%s253 + $0x74] sm:$0xf]
      %v427 = vld [vmem:[%s253 + $0x78] sm:$0xf]
      %v428 = vld [vmem:[%s253 + $0x7c] sm:$0xf]
      %v429 = vld [vmem:[%s253 + $0x80] sm:$0xf]
      %v430 = vld [vmem:[%s253 + $0x84] sm:$0xf]
      %v431 = vld [vmem:[%s253 + $0x88] sm:$0xf]
      %v432 = vld [vmem:[%s253 + $0x8c] sm:$0xf]
      %v433 = vld [vmem:[%s253 + $0x90] sm:$0xf]
      %v434 = vld [vmem:[%s253 + $0x94] sm:$0xf]
      %v435 = vld [vmem:[%s253 + $0x98] sm:$0xf]
      %v436 = vld [vmem:[%s253 + $0x9c] sm:$0xf]
      %v437 = vld [vmem:[%s253 + $0xa0] sm:$0xf]
      %v438 = vld [vmem:[%s253 + $0xa4] sm:$0xf]
      %v439 = vld [vmem:[%s253 + $0xa8] sm:$0xf]
      %v440 = vld [vmem:[%s253 + $0xac] sm:$0xf]
      %v441 = vld [vmem:[%s253 + $0xb0] sm:$0xf]
      %v442 = vld [vmem:[%s253 + $0xb4] sm:$0xf]
      %v443 = vld [vmem:[%s253 + $0xb8] sm:$0xf]
      %v444 = vld [vmem:[%s253 + $0xbc] sm:$0xf]
      %v573 = vunpack.c.l.b16 %v269
      %v574 = vunpack.c.h.b16 %v269
      %v575 = vunpack.c.l.b16 %v270
      %v576 = vunpack.c.l.b16 %v271
      %v577 = vunpack.c.h.b16 %v271
      %v578 = vunpack.c.l.b16 %v272
      %v579 = vunpack.c.l.b16 %v273
      %v580 = vunpack.c.h.b16 %v273
      %v581 = vunpack.c.l.b16 %v274
      %v582 = vunpack.c.l.b16 %v275
      %v583 = vunpack.c.h.b16 %v275
      %v584 = vunpack.c.l.b16 %v276
      %v585 = vunpack.c.l.b16 %v277
      %v586 = vunpack.c.h.b16 %v277
      %v587 = vunpack.c.l.b16 %v278
      %v588 = vunpack.c.l.b16 %v279
      %v589 = vunpack.c.h.b16 %v279
      %v590 = vunpack.c.l.b16 %v280
      %v591 = vunpack.c.l.b16 %v281
      %v592 = vunpack.c.h.b16 %v281
      %v593 = vunpack.c.l.b16 %v282
      %v594 = vunpack.c.l.b16 %v283
      %v595 = vunpack.c.h.b16 %v283
      %v596 = vunpack.c.l.b16 %v284
      %v597 = vunpack.c.l.b16 %v285
      %v598 = vunpack.c.h.b16 %v285
      %v599 = vunpack.c.l.b16 %v286
      %v600 = vunpack.c.l.b16 %v287
      %v601 = vunpack.c.h.b16 %v287
      %v602 = vunpack.c.l.b16 %v288
      %v603 = vunpack.c.l.b16 %v289
      %v604 = vunpack.c.h.b16 %v289
      %v605 = vunpack.c.l.b16 %v290
      %v606 = vunpack.c.l.b16 %v291
      %v607 = vunpack.c.h.b16 %v291
      %v608 = vunpack.c.l.b16 %v292
      %v609 = vunpack.c.l.b16 %v293
      %v610 = vunpack.c.h.b16 %v293
      %v611 = vunpack.c.l.b16 %v294
      %v612 = vunpack.c.l.b16 %v295
      %v613 = vunpack.c.h.b16 %v295
      %v614 = vunpack.c.l.b16 %v296
      %v615 = vunpack.c.l.b16 %v297
      %v616 = vunpack.c.h.b16 %v297
      %v617 = vunpack.c.l.b16 %v298
      %v618 = vunpack.c.l.b16 %v299
      %v619 = vunpack.c.h.b16 %v299
      %v620 = vunpack.c.l.b16 %v300
      %v621 = vunpack.c.l.b16 %v301
      %v622 = vunpack.c.h.b16 %v301
      %v623 = vunpack.c.l.b16 %v302
      %v624 = vunpack.c.l.b16 %v303
      %v625 = vunpack.c.h.b16 %v303
      %v626 = vunpack.c.l.b16 %v304
      %v627 = vunpack.c.l.b16 %v305
      %v628 = vunpack.c.h.b16 %v305
      %v629 = vunpack.c.l.b16 %v306
      %v630 = vunpack.c.l.b16 %v307
      %v631 = vunpack.c.h.b16 %v307
      %v632 = vunpack.c.l.b16 %v308
      %v633 = vunpack.c.l.b16 %v309
      %v634 = vunpack.c.h.b16 %v309
      %v635 = vunpack.c.l.b16 %v310
      %v636 = vunpack.c.l.b16 %v311
      %v637 = vunpack.c.h.b16 %v311
      %v638 = vunpack.c.l.b16 %v312
      %v639 = vunpack.c.l.b16 %v313
      %v640 = vunpack.c.h.b16 %v313
      %v641 = vunpack.c.l.b16 %v314
      %v642 = vunpack.c.l.b16 %v315
      %v643 = vunpack.c.h.b16 %v315
      %v644 = vunpack.c.l.b16 %v316
      %v645 = vunpack.c.l.b16 %v317
      %v646 = vunpack.c.h.b16 %v317
      %v647 = vunpack.c.l.b16 %v318
      %v648 = vunpack.c.l.b16 %v319
      %v649 = vunpack.c.h.b16 %v319
      %v650 = vunpack.c.l.b16 %v320
      %v651 = vunpack.c.l.b16 %v321
      %v652 = vunpack.c.h.b16 %v321
      %v653 = vunpack.c.l.b16 %v322
      %v654 = vunpack.c.l.b16 %v323
      %v655 = vunpack.c.h.b16 %v323
      %v656 = vunpack.c.l.b16 %v324
      %v657 = vunpack.c.l.b16 %v325
      %v658 = vunpack.c.h.b16 %v325
      %v659 = vunpack.c.l.b16 %v326
      %v660 = vunpack.c.l.b16 %v327
      %v661 = vunpack.c.h.b16 %v327
      %v662 = vunpack.c.l.b16 %v328
      %v663 = vunpack.c.l.b16 %v329
      %v664 = vunpack.c.h.b16 %v329
      %v665 = vunpack.c.l.b16 %v330
      %v666 = vunpack.c.l.b16 %v331
      %v667 = vunpack.c.h.b16 %v331
      %v668 = vunpack.c.l.b16 %v332
      %v669 = vunpack.c.l.b16 %v333
      %v670 = vunpack.c.h.b16 %v333
      %v671 = vunpack.c.l.b16 %v334
      %v672 = vunpack.c.l.b16 %v335
      %v673 = vunpack.c.h.b16 %v335
      %v674 = vunpack.c.l.b16 %v336
      %v675 = vunpack.c.l.b16 %v337
      %v676 = vunpack.c.h.b16 %v337
      %v677 = vunpack.c.l.b16 %v338
      %v678 = vunpack.c.l.b16 %v339
      %v679 = vunpack.c.h.b16 %v339
      %v680 = vunpack.c.l.b16 %v340
      %v681 = vunpack.c.l.b16 %v341
      %v682 = vunpack.c.h.b16 %v341
      %v683 = vunpack.c.l.b16 %v342
      %v684 = vunpack.c.l.b16 %v343
      %v685 = vunpack.c.h.b16 %v343
      %v686 = vunpack.c.l.b16 %v344
      %v687 = vunpack.c.l.b16 %v345
      %v688 = vunpack.c.h.b16 %v345
      %v689 = vunpack.c.l.b16 %v346
      %v690 = vunpack.c.l.b16 %v347
      %v691 = vunpack.c.h.b16 %v347
      %v692 = vunpack.c.l.b16 %v348
      %v693 = vunpack.c.l.b16 %v349
      %v694 = vunpack.c.h.b16 %v349
      %v695 = vunpack.c.l.b16 %v350
      %v696 = vunpack.c.l.b16 %v351
      %v697 = vunpack.c.h.b16 %v351
      %v698 = vunpack.c.l.b16 %v352
      %v699 = vunpack.c.l.b16 %v353
      %v700 = vunpack.c.h.b16 %v353
      %v701 = vunpack.c.l.b16 %v354
      %v702 = vunpack.c.l.b16 %v355
      %v703 = vunpack.c.h.b16 %v355
      %v704 = vunpack.c.l.b16 %v356
      %v705 = vunpack.c.l.b16 %v357
      %v706 = vunpack.c.h.b16 %v357
      %v707 = vunpack.c.l.b16 %v358
      %v708 = vunpack.c.l.b16 %v359
      %v709 = vunpack.c.h.b16 %v359
      %v710 = vunpack.c.l.b16 %v360
      %v711 = vunpack.c.l.b16 %v361
      %v712 = vunpack.c.h.b16 %v361
      %v713 = vunpack.c.l.b16 %v362
      %v714 = vunpack.c.l.b16 %v363
      %v715 = vunpack.c.h.b16 %v363
      %v716 = vunpack.c.l.b16 %v364
      %v717 = vunpack.c.l.b16 %v365
      %v718 = vunpack.c.h.b16 %v365
      %v719 = vunpack.c.l.b16 %v366
      %v720 = vunpack.c.l.b16 %v367
      %v721 = vunpack.c.h.b16 %v367
      %v722 = vunpack.c.l.b16 %v368
      %v723 = vunpack.c.l.b16 %v369
      %v724 = vunpack.c.h.b16 %v369
      %v725 = vunpack.c.l.b16 %v370
      %v726 = vunpack.c.l.b16 %v371
      %v727 = vunpack.c.h.b16 %v371
      %v728 = vunpack.c.l.b16 %v372
      %v729 = vunpack.c.l.b16 %v373
      %v730 = vunpack.c.h.b16 %v373
      %v731 = vunpack.c.l.b16 %v374
      %v732 = vunpack.c.l.b16 %v375
      %v733 = vunpack.c.h.b16 %v375
      %v734 = vunpack.c.l.b16 %v376
      %v735 = vunpack.c.l.b16 %v377
      %v736 = vunpack.c.h.b16 %v377
      %v737 = vunpack.c.l.b16 %v378
      %v738 = vunpack.c.l.b16 %v379
      %v739 = vunpack.c.h.b16 %v379
      %v740 = vunpack.c.l.b16 %v380
      %v741 = vunpack.c.l.b16 %v381
      %v742 = vunpack.c.h.b16 %v381
      %v743 = vunpack.c.l.b16 %v382
      %v744 = vunpack.c.l.b16 %v383
      %v745 = vunpack.c.h.b16 %v383
      %v746 = vunpack.c.l.b16 %v384
      %v747 = vunpack.c.l.b16 %v385
      %v748 = vunpack.c.h.b16 %v385
      %v749 = vunpack.c.l.b16 %v386
      %v750 = vunpack.c.l.b16 %v387
      %v751 = vunpack.c.h.b16 %v387
      %v752 = vunpack.c.l.b16 %v388
      %v753 = vunpack.c.l.b16 %v389
      %v754 = vunpack.c.h.b16 %v389
      %v755 = vunpack.c.l.b16 %v390
      %v756 = vunpack.c.l.b16 %v391
      %v757 = vunpack.c.h.b16 %v391
      %v758 = vunpack.c.l.b16 %v392
      %v759 = vunpack.c.l.b16 %v393
      %v760 = vunpack.c.h.b16 %v393
      %v761 = vunpack.c.l.b16 %v394
      %v762 = vunpack.c.l.b16 %v395
      %v763 = vunpack.c.h.b16 %v395
      %v764 = vunpack.c.l.b16 %v396
      %v765 = vpack.c.b16 %v576, %v573
      %v766 = vpack.c.b16 %v577, %v574
      %v767 = vpack.c.b16 %v578, %v575
      %v768 = vpack.c.b16 %v582, %v579
      %v769 = vpack.c.b16 %v583, %v580
      %v770 = vpack.c.b16 %v584, %v581
      %v771 = vpack.c.b16 %v588, %v585
      %v772 = vpack.c.b16 %v589, %v586
      %v773 = vpack.c.b16 %v590, %v587
      %v774 = vpack.c.b16 %v594, %v591
      %v775 = vpack.c.b16 %v595, %v592
      %v776 = vpack.c.b16 %v596, %v593
      %v777 = vpack.c.b16 %v600, %v597
      %v778 = vpack.c.b16 %v601, %v598
      %v779 = vpack.c.b16 %v602, %v599
      %v780 = vpack.c.b16 %v606, %v603
      %v781 = vpack.c.b16 %v607, %v604
      %v782 = vpack.c.b16 %v608, %v605
      %v783 = vpack.c.b16 %v612, %v609
      %v784 = vpack.c.b16 %v613, %v610
      %v785 = vpack.c.b16 %v614, %v611
      %v786 = vpack.c.b16 %v618, %v615
      %v787 = vpack.c.b16 %v619, %v616
      %v788 = vpack.c.b16 %v620, %v617
      %v789 = vpack.c.b16 %v624, %v621
      %v790 = vpack.c.b16 %v625, %v622
      %v791 = vpack.c.b16 %v626, %v623
      %v792 = vpack.c.b16 %v630, %v627
      %v793 = vpack.c.b16 %v631, %v628
      %v794 = vpack.c.b16 %v632, %v629
      %v795 = vpack.c.b16 %v636, %v633
      %v796 = vpack.c.b16 %v637, %v634
      %v797 = vpack.c.b16 %v638, %v635
      %v798 = vpack.c.b16 %v642, %v639
      %v799 = vpack.c.b16 %v643, %v640
      %v800 = vpack.c.b16 %v644, %v641
      %v801 = vpack.c.b16 %v648, %v645
      %v802 = vpack.c.b16 %v649, %v646
      %v803 = vpack.c.b16 %v650, %v647
      %v804 = vpack.c.b16 %v654, %v651
      %v805 = vpack.c.b16 %v655, %v652
      %v806 = vpack.c.b16 %v656, %v653
      %v807 = vpack.c.b16 %v660, %v657
      %v808 = vpack.c.b16 %v661, %v658
      %v809 = vpack.c.b16 %v662, %v659
      %v810 = vpack.c.b16 %v666, %v663
      %v811 = vpack.c.b16 %v667, %v664
      %v812 = vpack.c.b16 %v668, %v665
      %v813 = vpack.c.b16 %v672, %v669
      %v814 = vpack.c.b16 %v673, %v670
      %v815 = vpack.c.b16 %v674, %v671
      %v816 = vpack.c.b16 %v678, %v675
      %v817 = vpack.c.b16 %v679, %v676
      %v818 = vpack.c.b16 %v680, %v677
      %v819 = vpack.c.b16 %v684, %v681
      %v820 = vpack.c.b16 %v685, %v682
      %v821 = vpack.c.b16 %v686, %v683
      %v822 = vpack.c.b16 %v690, %v687
      %v823 = vpack.c.b16 %v691, %v688
      %v824 = vpack.c.b16 %v692, %v689
      %v825 = vpack.c.b16 %v696, %v693
      %v826 = vpack.c.b16 %v697, %v694
      %v827 = vpack.c.b16 %v698, %v695
      %v828 = vpack.c.b16 %v702, %v699
      %v829 = vpack.c.b16 %v703, %v700
      %v830 = vpack.c.b16 %v704, %v701
      %v831 = vpack.c.b16 %v708, %v705
      %v832 = vpack.c.b16 %v709, %v706
      %v833 = vpack.c.b16 %v710, %v707
      %v834 = vpack.c.b16 %v714, %v711
      %v835 = vpack.c.b16 %v715, %v712
      %v836 = vpack.c.b16 %v716, %v713
      %v837 = vpack.c.b16 %v720, %v717
      %v838 = vpack.c.b16 %v721, %v718
      %v839 = vpack.c.b16 %v722, %v719
      %v840 = vpack.c.b16 %v726, %v723
      %v841 = vpack.c.b16 %v727, %v724
      %v842 = vpack.c.b16 %v728, %v725
      %v843 = vpack.c.b16 %v732, %v729
      %v844 = vpack.c.b16 %v733, %v730
      %v845 = vpack.c.b16 %v734, %v731
      %v846 = vpack.c.b16 %v738, %v735
      %v847 = vpack.c.b16 %v739, %v736
      %v848 = vpack.c.b16 %v740, %v737
      %v849 = vpack.c.b16 %v744, %v741
      %v850 = vpack.c.b16 %v745, %v742
      %v851 = vpack.c.b16 %v746, %v743
      %v852 = vpack.c.b16 %v750, %v747
      %v853 = vpack.c.b16 %v751, %v748
      %v854 = vpack.c.b16 %v752, %v749
      %v855 = vpack.c.b16 %v756, %v753
      %v856 = vpack.c.b16 %v757, %v754
      %v857 = vpack.c.b16 %v758, %v755
      %v858 = vpack.c.b16 %v762, %v759
      %v859 = vpack.c.b16 %v763, %v760
      %v860 = vpack.c.b16 %v764, %v761
      %v1005 = vunpack.c.l.b16 %v397
      %v1006 = vunpack.c.l.b16 %v398
      %v1007 = vunpack.c.l.b16 %v399
      %v1008 = vunpack.c.l.b16 %v400
      %v1009 = vunpack.c.l.b16 %v401
      %v1010 = vunpack.c.l.b16 %v402
      %v1011 = vunpack.c.l.b16 %v403
      %v1012 = vunpack.c.l.b16 %v404
      %v1013 = vunpack.c.l.b16 %v405
      %v1014 = vunpack.c.l.b16 %v406
      %v1015 = vunpack.c.l.b16 %v407
      %v1016 = vunpack.c.l.b16 %v408
      %v1017 = vunpack.c.l.b16 %v409
      %v1018 = vunpack.c.l.b16 %v410
      %v1019 = vunpack.c.l.b16 %v411
      %v1020 = vunpack.c.l.b16 %v412
      %v1021 = vunpack.c.l.b16 %v413
      %v1022 = vunpack.c.l.b16 %v414
      %v1023 = vunpack.c.l.b16 %v415
      %v1024 = vunpack.c.l.b16 %v416
      %v1025 = vunpack.c.l.b16 %v417
      %v1026 = vunpack.c.l.b16 %v418
      %v1027 = vunpack.c.l.b16 %v419
      %v1028 = vunpack.c.l.b16 %v420
      %v1029 = vunpack.c.l.b16 %v421
      %v1030 = vunpack.c.l.b16 %v422
      %v1031 = vunpack.c.l.b16 %v423
      %v1032 = vunpack.c.l.b16 %v424
      %v1033 = vunpack.c.l.b16 %v425
      %v1034 = vunpack.c.l.b16 %v426
      %v1035 = vunpack.c.l.b16 %v427
      %v1036 = vunpack.c.l.b16 %v428
      %v1037 = vunpack.c.l.b16 %v429
      %v1038 = vunpack.c.l.b16 %v430
      %v1039 = vunpack.c.l.b16 %v431
      %v1040 = vunpack.c.l.b16 %v432
      %v1041 = vunpack.c.l.b16 %v433
      %v1042 = vunpack.c.l.b16 %v434
      %v1043 = vunpack.c.l.b16 %v435
      %v1044 = vunpack.c.l.b16 %v436
      %v1045 = vunpack.c.l.b16 %v437
      %v1046 = vunpack.c.l.b16 %v438
      %v1047 = vunpack.c.l.b16 %v439
      %v1048 = vunpack.c.l.b16 %v440
      %v1049 = vunpack.c.l.b16 %v441
      %v1050 = vunpack.c.l.b16 %v442
      %v1051 = vunpack.c.l.b16 %v443
      %v1052 = vunpack.c.l.b16 %v444
      %v1053 = vpack.c.b16 %v1006, %v1005
      %v1054 = vpack.c.b16 %v1008, %v1007
      %v1055 = vpack.c.b16 %v1010, %v1009
      %v1056 = vpack.c.b16 %v1012, %v1011
      %v1057 = vpack.c.b16 %v1014, %v1013
      %v1058 = vpack.c.b16 %v1016, %v1015
      %v1059 = vpack.c.b16 %v1018, %v1017
      %v1060 = vpack.c.b16 %v1020, %v1019
      %v1061 = vpack.c.b16 %v1022, %v1021
      %v1062 = vpack.c.b16 %v1024, %v1023
      %v1063 = vpack.c.b16 %v1026, %v1025
      %v1064 = vpack.c.b16 %v1028, %v1027
      %v1065 = vpack.c.b16 %v1030, %v1029
      %v1066 = vpack.c.b16 %v1032, %v1031
      %v1067 = vpack.c.b16 %v1034, %v1033
      %v1068 = vpack.c.b16 %v1036, %v1035
      %v1069 = vpack.c.b16 %v1038, %v1037
      %v1070 = vpack.c.b16 %v1040, %v1039
      %v1071 = vpack.c.b16 %v1042, %v1041
      %v1072 = vpack.c.b16 %v1044, %v1043
      %v1073 = vpack.c.b16 %v1046, %v1045
      %v1074 = vpack.c.b16 %v1048, %v1047
      %v1075 = vpack.c.b16 %v1050, %v1049
      %v1076 = vpack.c.b16 %v1052, %v1051
      %1101 = vmatpush.bf16.msra.mxu0 %v1060
      %1102 = vmatpush.bf16.msra.mxu0 %v1059
      %1103 = vmatpush.bf16.msra.mxu0 %v1058
      %1104 = vmatpush.bf16.msra.mxu0 %v1057
      %1105 = vmatpush.bf16.msra.mxu0 %v1056
      %1106 = vmatpush.bf16.msra.mxu0 %v1055
      %1107 = vmatpush.bf16.msra.mxu0 %v1054
      %1108 = vmatpush.bf16.msra.mxu0 %v1053
      %1109 = vmatmul.bf16.gmra.mxu0 %v765
      %v1110 = vpop.f32.mrf.mxu0
      %v1111 = vadd.f32 0.0, %v1110
      %v1112 = vpop.f32.mrf.mxu0
      %v1113 = vadd.f32 0.0, %v1112
      %1114 = vmatmul.bf16.gmra.mxu0 %v768
      %v1115 = vpop.f32.mrf.mxu0
      %v1116 = vadd.f32 0.0, %v1115
      %v1117 = vpop.f32.mrf.mxu0
      %v1118 = vadd.f32 0.0, %v1117
      %1119 = vmatmul.bf16.gmra.mxu0 %v771
      %v1120 = vpop.f32.mrf.mxu0
      %v1121 = vadd.f32 0.0, %v1120
      %v1122 = vpop.f32.mrf.mxu0
      %v1123 = vadd.f32 0.0, %v1122
      %1124 = vmatmul.bf16.gmra.mxu0 %v774
      %v1125 = vpop.f32.mrf.mxu0
      %v1126 = vadd.f32 0.0, %v1125
      %v1127 = vpop.f32.mrf.mxu0
      %v1128 = vadd.f32 0.0, %v1127
      %1129 = vmatmul.bf16.gmra.mxu0 %v777
      %v1130 = vpop.f32.mrf.mxu0
      %v1131 = vadd.f32 0.0, %v1130
      %v1132 = vpop.f32.mrf.mxu0
      %v1133 = vadd.f32 0.0, %v1132
      %1134 = vmatmul.bf16.gmra.mxu0 %v780
      %v1135 = vpop.f32.mrf.mxu0
      %v1136 = vadd.f32 0.0, %v1135
      %v1137 = vpop.f32.mrf.mxu0
      %v1138 = vadd.f32 0.0, %v1137
      %1139 = vmatmul.bf16.gmra.mxu0 %v783
      %v1140 = vpop.f32.mrf.mxu0
      %v1141 = vadd.f32 0.0, %v1140
      %v1142 = vpop.f32.mrf.mxu0
      %v1143 = vadd.f32 0.0, %v1142
      %1144 = vmatmul.bf16.gmra.mxu0 %v786
      %v1145 = vpop.f32.mrf.mxu0
      %v1146 = vadd.f32 0.0, %v1145
      %v1147 = vpop.f32.mrf.mxu0
      %v1148 = vadd.f32 0.0, %v1147
      %1149 = vmatmul.bf16.gmra.mxu0 %v789
      %v1150 = vpop.f32.mrf.mxu0
      %v1151 = vadd.f32 0.0, %v1150
      %v1152 = vpop.f32.mrf.mxu0
      %v1153 = vadd.f32 0.0, %v1152
      %1154 = vmatmul.bf16.gmra.mxu0 %v792
      %v1155 = vpop.f32.mrf.mxu0
      %v1156 = vadd.f32 0.0, %v1155
      %v1157 = vpop.f32.mrf.mxu0
      %v1158 = vadd.f32 0.0, %v1157
      %1159 = vmatmul.bf16.gmra.mxu0 %v795
      %v1160 = vpop.f32.mrf.mxu0
      %v1161 = vadd.f32 0.0, %v1160
      %v1162 = vpop.f32.mrf.mxu0
      %v1163 = vadd.f32 0.0, %v1162
      %1164 = vmatmul.bf16.gmra.mxu0 %v798
      %v1165 = vpop.f32.mrf.mxu0
      %v1166 = vadd.f32 0.0, %v1165
      %v1167 = vpop.f32.mrf.mxu0
      %v1168 = vadd.f32 0.0, %v1167
      %1169 = vmatmul.bf16.gmra.mxu0 %v801
      %v1170 = vpop.f32.mrf.mxu0
      %v1171 = vadd.f32 0.0, %v1170
      %v1172 = vpop.f32.mrf.mxu0
      %v1173 = vadd.f32 0.0, %v1172
      %1174 = vmatmul.bf16.gmra.mxu0 %v804
      %v1175 = vpop.f32.mrf.mxu0
      %v1176 = vadd.f32 0.0, %v1175
      %v1177 = vpop.f32.mrf.mxu0
      %v1178 = vadd.f32 0.0, %v1177
      %1179 = vmatmul.bf16.gmra.mxu0 %v807
      %v1180 = vpop.f32.mrf.mxu0
      %v1181 = vadd.f32 0.0, %v1180
      %v1182 = vpop.f32.mrf.mxu0
      %v1183 = vadd.f32 0.0, %v1182
      %1184 = vmatmul.bf16.gmra.mxu0 %v810
      %v1185 = vpop.f32.mrf.mxu0
      %v1186 = vadd.f32 0.0, %v1185
      %v1187 = vpop.f32.mrf.mxu0
      %v1188 = vadd.f32 0.0, %v1187
      %1189 = vmatmul.bf16.gmra.mxu0 %v813
      %v1190 = vpop.f32.mrf.mxu0
      %v1191 = vadd.f32 0.0, %v1190
      %v1192 = vpop.f32.mrf.mxu0
      %v1193 = vadd.f32 0.0, %v1192
      %1194 = vmatmul.bf16.gmra.mxu0 %v816
      %v1195 = vpop.f32.mrf.mxu0
      %v1196 = vadd.f32 0.0, %v1195
      %v1197 = vpop.f32.mrf.mxu0
      %v1198 = vadd.f32 0.0, %v1197
      %1199 = vmatmul.bf16.gmra.mxu0 %v819
      %v1200 = vpop.f32.mrf.mxu0
      %v1201 = vadd.f32 0.0, %v1200
      %v1202 = vpop.f32.mrf.mxu0
      %v1203 = vadd.f32 0.0, %v1202
      %1204 = vmatmul.bf16.gmra.mxu0 %v822
      %v1205 = vpop.f32.mrf.mxu0
      %v1206 = vadd.f32 0.0, %v1205
      %v1207 = vpop.f32.mrf.mxu0
      %v1208 = vadd.f32 0.0, %v1207
      %1209 = vmatmul.bf16.gmra.mxu0 %v825
      %v1210 = vpop.f32.mrf.mxu0
      %v1211 = vadd.f32 0.0, %v1210
      %v1212 = vpop.f32.mrf.mxu0
      %v1213 = vadd.f32 0.0, %v1212
      %1214 = vmatmul.bf16.gmra.mxu0 %v828
      %v1215 = vpop.f32.mrf.mxu0
      %v1216 = vadd.f32 0.0, %v1215
      %v1217 = vpop.f32.mrf.mxu0
      %v1218 = vadd.f32 0.0, %v1217
      %1219 = vmatmul.bf16.gmra.mxu0 %v831
      %v1220 = vpop.f32.mrf.mxu0
      %v1221 = vadd.f32 0.0, %v1220
      %v1222 = vpop.f32.mrf.mxu0
      %v1223 = vadd.f32 0.0, %v1222
      %1224 = vmatmul.bf16.gmra.mxu0 %v834
      %v1225 = vpop.f32.mrf.mxu0
      %v1226 = vadd.f32 0.0, %v1225
      %v1227 = vpop.f32.mrf.mxu0
      %v1228 = vadd.f32 0.0, %v1227
      %1229 = vmatmul.bf16.gmra.mxu0 %v837
      %v1230 = vpop.f32.mrf.mxu0
      %v1231 = vadd.f32 0.0, %v1230
      %v1232 = vpop.f32.mrf.mxu0
      %v1233 = vadd.f32 0.0, %v1232
      %1234 = vmatmul.bf16.gmra.mxu0 %v840
      %v1235 = vpop.f32.mrf.mxu0
      %v1236 = vadd.f32 0.0, %v1235
      %v1237 = vpop.f32.mrf.mxu0
      %v1238 = vadd.f32 0.0, %v1237
      %1239 = vmatmul.bf16.gmra.mxu0 %v843
      %v1240 = vpop.f32.mrf.mxu0
      %v1241 = vadd.f32 0.0, %v1240
      %v1242 = vpop.f32.mrf.mxu0
      %v1243 = vadd.f32 0.0, %v1242
      %1244 = vmatmul.bf16.gmra.mxu0 %v846
      %v1245 = vpop.f32.mrf.mxu0
      %v1246 = vadd.f32 0.0, %v1245
      %v1247 = vpop.f32.mrf.mxu0
      %v1248 = vadd.f32 0.0, %v1247
      %1249 = vmatmul.bf16.gmra.mxu0 %v849
      %v1250 = vpop.f32.mrf.mxu0
      %v1251 = vadd.f32 0.0, %v1250
      %v1252 = vpop.f32.mrf.mxu0
      %v1253 = vadd.f32 0.0, %v1252
      %1254 = vmatmul.bf16.gmra.mxu0 %v852
      %v1255 = vpop.f32.mrf.mxu0
      %v1256 = vadd.f32 0.0, %v1255
      %v1257 = vpop.f32.mrf.mxu0
      %v1258 = vadd.f32 0.0, %v1257
      %1259 = vmatmul.bf16.gmra.mxu0 %v855
      %v1260 = vpop.f32.mrf.mxu0
      %v1261 = vadd.f32 0.0, %v1260
      %v1262 = vpop.f32.mrf.mxu0
      %v1263 = vadd.f32 0.0, %v1262
      %1264 = vmatmul.bf16.gmra.mxu0 %v858
      %v1265 = vpop.f32.mrf.mxu0
      %v1266 = vadd.f32 0.0, %v1265
      %v1267 = vpop.f32.mrf.mxu0
      %v1268 = vadd.f32 0.0, %v1267
      %1269 = vdwg.mxu0
      %1270 = vmatpush.bf16.msra.mxu0 %v1068
      %1271 = vmatpush.bf16.msra.mxu0 %v1067
      %1272 = vmatpush.bf16.msra.mxu0 %v1066
      %1273 = vmatpush.bf16.msra.mxu0 %v1065
      %1274 = vmatpush.bf16.msra.mxu0 %v1064
      %1275 = vmatpush.bf16.msra.mxu0 %v1063
      %1276 = vmatpush.bf16.msra.mxu0 %v1062
      %1277 = vmatpush.bf16.msra.mxu0 %v1061
      %1278 = vmatmul.bf16.gmra.mxu0 %v766
      %v1279 = vpop.f32.mrf.mxu0
      %v1280 = vadd.f32 %v1111, %v1279
      %v1281 = vpop.f32.mrf.mxu0
      %v1282 = vadd.f32 %v1113, %v1281
      %1283 = vmatmul.bf16.gmra.mxu0 %v769
      %v1284 = vpop.f32.mrf.mxu0
      %v1285 = vadd.f32 %v1116, %v1284
      %v1286 = vpop.f32.mrf.mxu0
      %v1287 = vadd.f32 %v1118, %v1286
      %1288 = vmatmul.bf16.gmra.mxu0 %v772
      %v1289 = vpop.f32.mrf.mxu0
      %v1290 = vadd.f32 %v1121, %v1289
      %v1291 = vpop.f32.mrf.mxu0
      %v1292 = vadd.f32 %v1123, %v1291
      %1293 = vmatmul.bf16.gmra.mxu0 %v775
      %v1294 = vpop.f32.mrf.mxu0
      %v1295 = vadd.f32 %v1126, %v1294
      %v1296 = vpop.f32.mrf.mxu0
      %v1297 = vadd.f32 %v1128, %v1296
      %1298 = vmatmul.bf16.gmra.mxu0 %v778
      %v1299 = vpop.f32.mrf.mxu0
      %v1300 = vadd.f32 %v1131, %v1299
      %v1301 = vpop.f32.mrf.mxu0
      %v1302 = vadd.f32 %v1133, %v1301
      %1303 = vmatmul.bf16.gmra.mxu0 %v781
      %v1304 = vpop.f32.mrf.mxu0
      %v1305 = vadd.f32 %v1136, %v1304
      %v1306 = vpop.f32.mrf.mxu0
      %v1307 = vadd.f32 %v1138, %v1306
      %1308 = vmatmul.bf16.gmra.mxu0 %v784
      %v1309 = vpop.f32.mrf.mxu0
      %v1310 = vadd.f32 %v1141, %v1309
      %v1311 = vpop.f32.mrf.mxu0
      %v1312 = vadd.f32 %v1143, %v1311
      %1313 = vmatmul.bf16.gmra.mxu0 %v787
      %v1314 = vpop.f32.mrf.mxu0
      %v1315 = vadd.f32 %v1146, %v1314
      %v1316 = vpop.f32.mrf.mxu0
      %v1317 = vadd.f32 %v1148, %v1316
      %1318 = vmatmul.bf16.gmra.mxu0 %v790
      %v1319 = vpop.f32.mrf.mxu0
      %v1320 = vadd.f32 %v1151, %v1319
      %v1321 = vpop.f32.mrf.mxu0
      %v1322 = vadd.f32 %v1153, %v1321
      %1323 = vmatmul.bf16.gmra.mxu0 %v793
      %v1324 = vpop.f32.mrf.mxu0
      %v1325 = vadd.f32 %v1156, %v1324
      %v1326 = vpop.f32.mrf.mxu0
      %v1327 = vadd.f32 %v1158, %v1326
      %1328 = vmatmul.bf16.gmra.mxu0 %v796
      %v1329 = vpop.f32.mrf.mxu0
      %v1330 = vadd.f32 %v1161, %v1329
      %v1331 = vpop.f32.mrf.mxu0
      %v1332 = vadd.f32 %v1163, %v1331
      %1333 = vmatmul.bf16.gmra.mxu0 %v799
      %v1334 = vpop.f32.mrf.mxu0
      %v1335 = vadd.f32 %v1166, %v1334
      %v1336 = vpop.f32.mrf.mxu0
      %v1337 = vadd.f32 %v1168, %v1336
      %1338 = vmatmul.bf16.gmra.mxu0 %v802
      %v1339 = vpop.f32.mrf.mxu0
      %v1340 = vadd.f32 %v1171, %v1339
      %v1341 = vpop.f32.mrf.mxu0
      %v1342 = vadd.f32 %v1173, %v1341
      %1343 = vmatmul.bf16.gmra.mxu0 %v805
      %v1344 = vpop.f32.mrf.mxu0
      %v1345 = vadd.f32 %v1176, %v1344
      %v1346 = vpop.f32.mrf.mxu0
      %v1347 = vadd.f32 %v1178, %v1346
      %1348 = vmatmul.bf16.gmra.mxu0 %v808
      %v1349 = vpop.f32.mrf.mxu0
      %v1350 = vadd.f32 %v1181, %v1349
      %v1351 = vpop.f32.mrf.mxu0
      %v1352 = vadd.f32 %v1183, %v1351
      %1353 = vmatmul.bf16.gmra.mxu0 %v811
      %v1354 = vpop.f32.mrf.mxu0
      %v1355 = vadd.f32 %v1186, %v1354
      %v1356 = vpop.f32.mrf.mxu0
      %v1357 = vadd.f32 %v1188, %v1356
      %1358 = vmatmul.bf16.gmra.mxu0 %v814
      %v1359 = vpop.f32.mrf.mxu0
      %v1360 = vadd.f32 %v1191, %v1359
      %v1361 = vpop.f32.mrf.mxu0
      %v1362 = vadd.f32 %v1193, %v1361
      %1363 = vmatmul.bf16.gmra.mxu0 %v817
      %v1364 = vpop.f32.mrf.mxu0
      %v1365 = vadd.f32 %v1196, %v1364
      %v1366 = vpop.f32.mrf.mxu0
      %v1367 = vadd.f32 %v1198, %v1366
      %1368 = vmatmul.bf16.gmra.mxu0 %v820
      %v1369 = vpop.f32.mrf.mxu0
      %v1370 = vadd.f32 %v1201, %v1369
      %v1371 = vpop.f32.mrf.mxu0
      %v1372 = vadd.f32 %v1203, %v1371
      %1373 = vmatmul.bf16.gmra.mxu0 %v823
      %v1374 = vpop.f32.mrf.mxu0
      %v1375 = vadd.f32 %v1206, %v1374
      %v1376 = vpop.f32.mrf.mxu0
      %v1377 = vadd.f32 %v1208, %v1376
      %1378 = vmatmul.bf16.gmra.mxu0 %v826
      %v1379 = vpop.f32.mrf.mxu0
      %v1380 = vadd.f32 %v1211, %v1379
      %v1381 = vpop.f32.mrf.mxu0
      %v1382 = vadd.f32 %v1213, %v1381
      %1383 = vmatmul.bf16.gmra.mxu0 %v829
      %v1384 = vpop.f32.mrf.mxu0
      %v1385 = vadd.f32 %v1216, %v1384
      %v1386 = vpop.f32.mrf.mxu0
      %v1387 = vadd.f32 %v1218, %v1386
      %1388 = vmatmul.bf16.gmra.mxu0 %v832
      %v1389 = vpop.f32.mrf.mxu0
      %v1390 = vadd.f32 %v1221, %v1389
      %v1391 = vpop.f32.mrf.mxu0
      %v1392 = vadd.f32 %v1223, %v1391
      %1393 = vmatmul.bf16.gmra.mxu0 %v835
      %v1394 = vpop.f32.mrf.mxu0
      %v1395 = vadd.f32 %v1226, %v1394
      %v1396 = vpop.f32.mrf.mxu0
      %v1397 = vadd.f32 %v1228, %v1396
      %1398 = vmatmul.bf16.gmra.mxu0 %v838
      %v1399 = vpop.f32.mrf.mxu0
      %v1400 = vadd.f32 %v1231, %v1399
      %v1401 = vpop.f32.mrf.mxu0
      %v1402 = vadd.f32 %v1233, %v1401
      %1403 = vmatmul.bf16.gmra.mxu0 %v841
      %v1404 = vpop.f32.mrf.mxu0
      %v1405 = vadd.f32 %v1236, %v1404
      %v1406 = vpop.f32.mrf.mxu0
      %v1407 = vadd.f32 %v1238, %v1406
      %1408 = vmatmul.bf16.gmra.mxu0 %v844
      %v1409 = vpop.f32.mrf.mxu0
      %v1410 = vadd.f32 %v1241, %v1409
      %v1411 = vpop.f32.mrf.mxu0
      %v1412 = vadd.f32 %v1243, %v1411
      %1413 = vmatmul.bf16.gmra.mxu0 %v847
      %v1414 = vpop.f32.mrf.mxu0
      %v1415 = vadd.f32 %v1246, %v1414
      %v1416 = vpop.f32.mrf.mxu0
      %v1417 = vadd.f32 %v1248, %v1416
      %1418 = vmatmul.bf16.gmra.mxu0 %v850
      %v1419 = vpop.f32.mrf.mxu0
      %v1420 = vadd.f32 %v1251, %v1419
      %v1421 = vpop.f32.mrf.mxu0
      %v1422 = vadd.f32 %v1253, %v1421
      %1423 = vmatmul.bf16.gmra.mxu0 %v853
      %v1424 = vpop.f32.mrf.mxu0
      %v1425 = vadd.f32 %v1256, %v1424
      %v1426 = vpop.f32.mrf.mxu0
      %v1427 = vadd.f32 %v1258, %v1426
      %1428 = vmatmul.bf16.gmra.mxu0 %v856
      %v1429 = vpop.f32.mrf.mxu0
      %v1430 = vadd.f32 %v1261, %v1429
      %v1431 = vpop.f32.mrf.mxu0
      %v1432 = vadd.f32 %v1263, %v1431
      %1433 = vmatmul.bf16.gmra.mxu0 %v859
      %v1434 = vpop.f32.mrf.mxu0
      %v1435 = vadd.f32 %v1266, %v1434
      %v1436 = vpop.f32.mrf.mxu0
      %v1437 = vadd.f32 %v1268, %v1436
      %1438 = vdwg.mxu0
      %1439 = vmatpush.bf16.msra.mxu0 %v1076
      %1440 = vmatpush.bf16.msra.mxu0 %v1075
      %1441 = vmatpush.bf16.msra.mxu0 %v1074
      %1442 = vmatpush.bf16.msra.mxu0 %v1073
      %1443 = vmatpush.bf16.msra.mxu0 %v1072
      %1444 = vmatpush.bf16.msra.mxu0 %v1071
      %1445 = vmatpush.bf16.msra.mxu0 %v1070
      %1446 = vmatpush.bf16.msra.mxu0 %v1069
      %1447 = vmatmul.bf16.gmra.mxu0 %v767
      %v1448 = vpop.f32.mrf.mxu0
      %v1449 = vadd.f32 %v1280, %v1448
      %v1450 = vpop.f32.mrf.mxu0
      %v1451 = vadd.f32 %v1282, %v1450
      %1452 = vmatmul.bf16.gmra.mxu0 %v770
      %v1453 = vpop.f32.mrf.mxu0
      %v1454 = vadd.f32 %v1285, %v1453
      %v1455 = vpop.f32.mrf.mxu0
      %v1456 = vadd.f32 %v1287, %v1455
      %1457 = vmatmul.bf16.gmra.mxu0 %v773
      %v1458 = vpop.f32.mrf.mxu0
      %v1459 = vadd.f32 %v1290, %v1458
      %v1460 = vpop.f32.mrf.mxu0
      %v1461 = vadd.f32 %v1292, %v1460
      %1462 = vmatmul.bf16.gmra.mxu0 %v776
      %v1463 = vpop.f32.mrf.mxu0
      %v1464 = vadd.f32 %v1295, %v1463
      %v1465 = vpop.f32.mrf.mxu0
      %v1466 = vadd.f32 %v1297, %v1465
      %1467 = vmatmul.bf16.gmra.mxu0 %v779
      %v1468 = vpop.f32.mrf.mxu0
      %v1469 = vadd.f32 %v1300, %v1468
      %v1470 = vpop.f32.mrf.mxu0
      %v1471 = vadd.f32 %v1302, %v1470
      %1472 = vmatmul.bf16.gmra.mxu0 %v782
      %v1473 = vpop.f32.mrf.mxu0
      %v1474 = vadd.f32 %v1305, %v1473
      %v1475 = vpop.f32.mrf.mxu0
      %v1476 = vadd.f32 %v1307, %v1475
      %1477 = vmatmul.bf16.gmra.mxu0 %v785
      %v1478 = vpop.f32.mrf.mxu0
      %v1479 = vadd.f32 %v1310, %v1478
      %v1480 = vpop.f32.mrf.mxu0
      %v1481 = vadd.f32 %v1312, %v1480
      %1482 = vmatmul.bf16.gmra.mxu0 %v788
      %v1483 = vpop.f32.mrf.mxu0
      %v1484 = vadd.f32 %v1315, %v1483
      %v1485 = vpop.f32.mrf.mxu0
      %v1486 = vadd.f32 %v1317, %v1485
      %1487 = vmatmul.bf16.gmra.mxu0 %v791
      %v1488 = vpop.f32.mrf.mxu0
      %v1489 = vadd.f32 %v1320, %v1488
      %v1490 = vpop.f32.mrf.mxu0
      %v1491 = vadd.f32 %v1322, %v1490
      %1492 = vmatmul.bf16.gmra.mxu0 %v794
      %v1493 = vpop.f32.mrf.mxu0
      %v1494 = vadd.f32 %v1325, %v1493
      %v1495 = vpop.f32.mrf.mxu0
      %v1496 = vadd.f32 %v1327, %v1495
      %1497 = vmatmul.bf16.gmra.mxu0 %v797
      %v1498 = vpop.f32.mrf.mxu0
      %v1499 = vadd.f32 %v1330, %v1498
      %v1500 = vpop.f32.mrf.mxu0
      %v1501 = vadd.f32 %v1332, %v1500
      %1502 = vmatmul.bf16.gmra.mxu0 %v800
      %v1503 = vpop.f32.mrf.mxu0
      %v1504 = vadd.f32 %v1335, %v1503
      %v1505 = vpop.f32.mrf.mxu0
      %v1506 = vadd.f32 %v1337, %v1505
      %1507 = vmatmul.bf16.gmra.mxu0 %v803
      %v1508 = vpop.f32.mrf.mxu0
      %v1509 = vadd.f32 %v1340, %v1508
      %v1510 = vpop.f32.mrf.mxu0
      %v1511 = vadd.f32 %v1342, %v1510
      %1512 = vmatmul.bf16.gmra.mxu0 %v806
      %v1513 = vpop.f32.mrf.mxu0
      %v1514 = vadd.f32 %v1345, %v1513
      %v1515 = vpop.f32.mrf.mxu0
      %v1516 = vadd.f32 %v1347, %v1515
      %1517 = vmatmul.bf16.gmra.mxu0 %v809
      %v1518 = vpop.f32.mrf.mxu0
      %v1519 = vadd.f32 %v1350, %v1518
      %v1520 = vpop.f32.mrf.mxu0
      %v1521 = vadd.f32 %v1352, %v1520
      %1522 = vmatmul.bf16.gmra.mxu0 %v812
      %v1523 = vpop.f32.mrf.mxu0
      %v1524 = vadd.f32 %v1355, %v1523
      %v1525 = vpop.f32.mrf.mxu0
      %v1526 = vadd.f32 %v1357, %v1525
      %1527 = vmatmul.bf16.gmra.mxu0 %v815
      %v1528 = vpop.f32.mrf.mxu0
      %v1529 = vadd.f32 %v1360, %v1528
      %v1530 = vpop.f32.mrf.mxu0
      %v1531 = vadd.f32 %v1362, %v1530
      %1532 = vmatmul.bf16.gmra.mxu0 %v818
      %v1533 = vpop.f32.mrf.mxu0
      %v1534 = vadd.f32 %v1365, %v1533
      %v1535 = vpop.f32.mrf.mxu0
      %v1536 = vadd.f32 %v1367, %v1535
      %1537 = vmatmul.bf16.gmra.mxu0 %v821
      %v1538 = vpop.f32.mrf.mxu0
      %v1539 = vadd.f32 %v1370, %v1538
      %v1540 = vpop.f32.mrf.mxu0
      %v1541 = vadd.f32 %v1372, %v1540
      %1542 = vmatmul.bf16.gmra.mxu0 %v824
      %v1543 = vpop.f32.mrf.mxu0
      %v1544 = vadd.f32 %v1375, %v1543
      %v1545 = vpop.f32.mrf.mxu0
      %v1546 = vadd.f32 %v1377, %v1545
      %1547 = vmatmul.bf16.gmra.mxu0 %v827
      %v1548 = vpop.f32.mrf.mxu0
      %v1549 = vadd.f32 %v1380, %v1548
      %v1550 = vpop.f32.mrf.mxu0
      %v1551 = vadd.f32 %v1382, %v1550
      %1552 = vmatmul.bf16.gmra.mxu0 %v830
      %v1553 = vpop.f32.mrf.mxu0
      %v1554 = vadd.f32 %v1385, %v1553
      %v1555 = vpop.f32.mrf.mxu0
      %v1556 = vadd.f32 %v1387, %v1555
      %1557 = vmatmul.bf16.gmra.mxu0 %v833
      %v1558 = vpop.f32.mrf.mxu0
      %v1559 = vadd.f32 %v1390, %v1558
      %v1560 = vpop.f32.mrf.mxu0
      %v1561 = vadd.f32 %v1392, %v1560
      %1562 = vmatmul.bf16.gmra.mxu0 %v836
      %v1563 = vpop.f32.mrf.mxu0
      %v1564 = vadd.f32 %v1395, %v1563
      %v1565 = vpop.f32.mrf.mxu0
      %v1566 = vadd.f32 %v1397, %v1565
      %1567 = vmatmul.bf16.gmra.mxu0 %v839
      %v1568 = vpop.f32.mrf.mxu0
      %v1569 = vadd.f32 %v1400, %v1568
      %v1570 = vpop.f32.mrf.mxu0
      %v1571 = vadd.f32 %v1402, %v1570
      %1572 = vmatmul.bf16.gmra.mxu0 %v842
      %v1573 = vpop.f32.mrf.mxu0
      %v1574 = vadd.f32 %v1405, %v1573
      %v1575 = vpop.f32.mrf.mxu0
      %v1576 = vadd.f32 %v1407, %v1575
      %1577 = vmatmul.bf16.gmra.mxu0 %v845
      %v1578 = vpop.f32.mrf.mxu0
      %v1579 = vadd.f32 %v1410, %v1578
      %v1580 = vpop.f32.mrf.mxu0
      %v1581 = vadd.f32 %v1412, %v1580
      %1582 = vmatmul.bf16.gmra.mxu0 %v848
      %v1583 = vpop.f32.mrf.mxu0
      %v1584 = vadd.f32 %v1415, %v1583
      %v1585 = vpop.f32.mrf.mxu0
      %v1586 = vadd.f32 %v1417, %v1585
      %1587 = vmatmul.bf16.gmra.mxu0 %v851
      %v1588 = vpop.f32.mrf.mxu0
      %v1589 = vadd.f32 %v1420, %v1588
      %v1590 = vpop.f32.mrf.mxu0
      %v1591 = vadd.f32 %v1422, %v1590
      %1592 = vmatmul.bf16.gmra.mxu0 %v854
      %v1593 = vpop.f32.mrf.mxu0
      %v1594 = vadd.f32 %v1425, %v1593
      %v1595 = vpop.f32.mrf.mxu0
      %v1596 = vadd.f32 %v1427, %v1595
      %1597 = vmatmul.bf16.gmra.mxu0 %v857
      %v1598 = vpop.f32.mrf.mxu0
      %v1599 = vadd.f32 %v1430, %v1598
      %v1600 = vpop.f32.mrf.mxu0
      %v1601 = vadd.f32 %v1432, %v1600
      %1602 = vmatmul.bf16.gmra.mxu0 %v860
      %v1603 = vpop.f32.mrf.mxu0
      %v1604 = vadd.f32 %v1435, %v1603
      %v1605 = vpop.f32.mrf.mxu0
      %v1606 = vadd.f32 %v1437, %v1605
      %1607 = vdwg.mxu0
      %v1608 = vld [vmem:[%s256] sm:$0x1]
      %v1609 = vld [vmem:[%s259] sm:$0x1]
      %v1611 = vperm.slane %v1608, 0
      %v1613 = vmul.f32 %v1449, %v1611
      %v1614 = vmul.f32 %v1451, %v1611
      %v1615 = vmul.f32 %v1454, %v1611
      %v1616 = vmul.f32 %v1456, %v1611
      %v1617 = vmul.f32 %v1459, %v1611
      %v1618 = vmul.f32 %v1461, %v1611
      %v1619 = vmul.f32 %v1464, %v1611
      %v1620 = vmul.f32 %v1466, %v1611
      %v1621 = vmul.f32 %v1469, %v1611
      %v1622 = vmul.f32 %v1471, %v1611
      %v1623 = vmul.f32 %v1474, %v1611
      %v1624 = vmul.f32 %v1476, %v1611
      %v1625 = vmul.f32 %v1479, %v1611
      %v1626 = vmul.f32 %v1481, %v1611
      %v1627 = vmul.f32 %v1484, %v1611
      %v1628 = vmul.f32 %v1486, %v1611
      %v1629 = vmul.f32 %v1489, %v1611
      %v1630 = vmul.f32 %v1491, %v1611
      %v1631 = vmul.f32 %v1494, %v1611
      %v1632 = vmul.f32 %v1496, %v1611
      %v1633 = vmul.f32 %v1499, %v1611
      %v1634 = vmul.f32 %v1501, %v1611
      %v1635 = vmul.f32 %v1504, %v1611
      %v1636 = vmul.f32 %v1506, %v1611
      %v1637 = vmul.f32 %v1509, %v1611
      %v1638 = vmul.f32 %v1511, %v1611
      %v1639 = vmul.f32 %v1514, %v1611
      %v1640 = vmul.f32 %v1516, %v1611
      %v1641 = vmul.f32 %v1519, %v1611
      %v1642 = vmul.f32 %v1521, %v1611
      %v1643 = vmul.f32 %v1524, %v1611
      %v1644 = vmul.f32 %v1526, %v1611
      %v1645 = vmul.f32 %v1529, %v1611
      %v1646 = vmul.f32 %v1531, %v1611
      %v1647 = vmul.f32 %v1534, %v1611
      %v1648 = vmul.f32 %v1536, %v1611
      %v1649 = vmul.f32 %v1539, %v1611
      %v1650 = vmul.f32 %v1541, %v1611
      %v1651 = vmul.f32 %v1544, %v1611
      %v1652 = vmul.f32 %v1546, %v1611
      %v1653 = vmul.f32 %v1549, %v1611
      %v1654 = vmul.f32 %v1551, %v1611
      %v1655 = vmul.f32 %v1554, %v1611
      %v1656 = vmul.f32 %v1556, %v1611
      %v1657 = vmul.f32 %v1559, %v1611
      %v1658 = vmul.f32 %v1561, %v1611
      %v1659 = vmul.f32 %v1564, %v1611
      %v1660 = vmul.f32 %v1566, %v1611
      %v1661 = vmul.f32 %v1569, %v1611
      %v1662 = vmul.f32 %v1571, %v1611
      %v1663 = vmul.f32 %v1574, %v1611
      %v1664 = vmul.f32 %v1576, %v1611
      %v1665 = vmul.f32 %v1579, %v1611
      %v1666 = vmul.f32 %v1581, %v1611
      %v1667 = vmul.f32 %v1584, %v1611
      %v1668 = vmul.f32 %v1586, %v1611
      %v1669 = vmul.f32 %v1589, %v1611
      %v1670 = vmul.f32 %v1591, %v1611
      %v1671 = vmul.f32 %v1594, %v1611
      %v1672 = vmul.f32 %v1596, %v1611
      %v1673 = vmul.f32 %v1599, %v1611
      %v1674 = vmul.f32 %v1601, %v1611
      %v1675 = vmul.f32 %v1604, %v1611
      %v1676 = vmul.f32 %v1606, %v1611
      %v1678 = vperm.slane %v1609, 0
      %v1680 = vadd.f32 %v1613, %v1678
      %v1681 = vadd.f32 %v1614, %v1678
      %v1682 = vadd.f32 %v1615, %v1678
      %v1683 = vadd.f32 %v1616, %v1678
      %v1684 = vadd.f32 %v1617, %v1678
      %v1685 = vadd.f32 %v1618, %v1678
      %v1686 = vadd.f32 %v1619, %v1678
      %v1687 = vadd.f32 %v1620, %v1678
      %v1688 = vadd.f32 %v1621, %v1678
      %v1689 = vadd.f32 %v1622, %v1678
      %v1690 = vadd.f32 %v1623, %v1678
      %v1691 = vadd.f32 %v1624, %v1678
      %v1692 = vadd.f32 %v1625, %v1678
      %v1693 = vadd.f32 %v1626, %v1678
      %v1694 = vadd.f32 %v1627, %v1678
      %v1695 = vadd.f32 %v1628, %v1678
      %v1696 = vadd.f32 %v1629, %v1678
      %v1697 = vadd.f32 %v1630, %v1678
      %v1698 = vadd.f32 %v1631, %v1678
      %v1699 = vadd.f32 %v1632, %v1678
      %v1700 = vadd.f32 %v1633, %v1678
      %v1701 = vadd.f32 %v1634, %v1678
      %v1702 = vadd.f32 %v1635, %v1678
      %v1703 = vadd.f32 %v1636, %v1678
      %v1704 = vadd.f32 %v1637, %v1678
      %v1705 = vadd.f32 %v1638, %v1678
      %v1706 = vadd.f32 %v1639, %v1678
      %v1707 = vadd.f32 %v1640, %v1678
      %v1708 = vadd.f32 %v1641, %v1678
      %v1709 = vadd.f32 %v1642, %v1678
      %v1710 = vadd.f32 %v1643, %v1678
      %v1711 = vadd.f32 %v1644, %v1678
      %v1712 = vadd.f32 %v1645, %v1678
      %v1713 = vadd.f32 %v1646, %v1678
      %v1714 = vadd.f32 %v1647, %v1678
      %v1715 = vadd.f32 %v1648, %v1678
      %v1716 = vadd.f32 %v1649, %v1678
      %v1717 = vadd.f32 %v1650, %v1678
      %v1718 = vadd.f32 %v1651, %v1678
      %v1719 = vadd.f32 %v1652, %v1678
      %v1720 = vadd.f32 %v1653, %v1678
      %v1721 = vadd.f32 %v1654, %v1678
      %v1722 = vadd.f32 %v1655, %v1678
      %v1723 = vadd.f32 %v1656, %v1678
      %v1724 = vadd.f32 %v1657, %v1678
      %v1725 = vadd.f32 %v1658, %v1678
      %v1726 = vadd.f32 %v1659, %v1678
      %v1727 = vadd.f32 %v1660, %v1678
      %v1728 = vadd.f32 %v1661, %v1678
      %v1729 = vadd.f32 %v1662, %v1678
      %v1730 = vadd.f32 %v1663, %v1678
      %v1731 = vadd.f32 %v1664, %v1678
      %v1732 = vadd.f32 %v1665, %v1678
      %v1733 = vadd.f32 %v1666, %v1678
      %v1734 = vadd.f32 %v1667, %v1678
      %v1735 = vadd.f32 %v1668, %v1678
      %v1736 = vadd.f32 %v1669, %v1678
      %v1737 = vadd.f32 %v1670, %v1678
      %v1738 = vadd.f32 %v1671, %v1678
      %v1739 = vadd.f32 %v1672, %v1678
      %v1740 = vadd.f32 %v1673, %v1678
      %v1741 = vadd.f32 %v1674, %v1678
      %v1742 = vadd.f32 %v1675, %v1678
      %v1743 = vadd.f32 %v1676, %v1678
      %v1744 = vmax.f32 %v1680, 0.0
      %v1745 = vmax.f32 %v1681, 0.0
      %v1746 = vmax.f32 %v1682, 0.0
      %v1747 = vmax.f32 %v1683, 0.0
      %v1748 = vmax.f32 %v1684, 0.0
      %v1749 = vmax.f32 %v1685, 0.0
      %v1750 = vmax.f32 %v1686, 0.0
      %v1751 = vmax.f32 %v1687, 0.0
      %v1752 = vmax.f32 %v1688, 0.0
      %v1753 = vmax.f32 %v1689, 0.0
      %v1754 = vmax.f32 %v1690, 0.0
      %v1755 = vmax.f32 %v1691, 0.0
      %v1756 = vmax.f32 %v1692, 0.0
      %v1757 = vmax.f32 %v1693, 0.0
      %v1758 = vmax.f32 %v1694, 0.0
      %v1759 = vmax.f32 %v1695, 0.0
      %v1760 = vmax.f32 %v1696, 0.0
      %v1761 = vmax.f32 %v1697, 0.0
      %v1762 = vmax.f32 %v1698, 0.0
      %v1763 = vmax.f32 %v1699, 0.0
      %v1764 = vmax.f32 %v1700, 0.0
      %v1765 = vmax.f32 %v1701, 0.0
      %v1766 = vmax.f32 %v1702, 0.0
      %v1767 = vmax.f32 %v1703, 0.0
      %v1768 = vmax.f32 %v1704, 0.0
      %v1769 = vmax.f32 %v1705, 0.0
      %v1770 = vmax.f32 %v1706, 0.0
      %v1771 = vmax.f32 %v1707, 0.0
      %v1772 = vmax.f32 %v1708, 0.0
      %v1773 = vmax.f32 %v1709, 0.0
      %v1774 = vmax.f32 %v1710, 0.0
      %v1775 = vmax.f32 %v1711, 0.0
      %v1776 = vmax.f32 %v1712, 0.0
      %v1777 = vmax.f32 %v1713, 0.0
      %v1778 = vmax.f32 %v1714, 0.0
      %v1779 = vmax.f32 %v1715, 0.0
      %v1780 = vmax.f32 %v1716, 0.0
      %v1781 = vmax.f32 %v1717, 0.0
      %v1782 = vmax.f32 %v1718, 0.0
      %v1783 = vmax.f32 %v1719, 0.0
      %v1784 = vmax.f32 %v1720, 0.0
      %v1785 = vmax.f32 %v1721, 0.0
      %v1786 = vmax.f32 %v1722, 0.0
      %v1787 = vmax.f32 %v1723, 0.0
      %v1788 = vmax.f32 %v1724, 0.0
      %v1789 = vmax.f32 %v1725, 0.0
      %v1790 = vmax.f32 %v1726, 0.0
      %v1791 = vmax.f32 %v1727, 0.0
      %v1792 = vmax.f32 %v1728, 0.0
      %v1793 = vmax.f32 %v1729, 0.0
      %v1794 = vmax.f32 %v1730, 0.0
      %v1795 = vmax.f32 %v1731, 0.0
      %v1796 = vmax.f32 %v1732, 0.0
      %v1797 = vmax.f32 %v1733, 0.0
      %v1798 = vmax.f32 %v1734, 0.0
      %v1799 = vmax.f32 %v1735, 0.0
      %v1800 = vmax.f32 %v1736, 0.0
      %v1801 = vmax.f32 %v1737, 0.0
      %v1802 = vmax.f32 %v1738, 0.0
      %v1803 = vmax.f32 %v1739, 0.0
      %v1804 = vmax.f32 %v1740, 0.0
      %v1805 = vmax.f32 %v1741, 0.0
      %v1806 = vmax.f32 %v1742, 0.0
      %v1807 = vmax.f32 %v1743, 0.0
      %v1808 = vpack.c.bf16 %v1744, %v1744
      %v1809 = vpack.c.bf16 %v1745, %v1745
      %v1810 = vpack.c.bf16 %v1746, %v1746
      %v1811 = vpack.c.bf16 %v1747, %v1747
      %v1812 = vpack.c.bf16 %v1748, %v1748
      %v1813 = vpack.c.bf16 %v1749, %v1749
      %v1814 = vpack.c.bf16 %v1750, %v1750
      %v1815 = vpack.c.bf16 %v1751, %v1751
      %v1816 = vpack.c.bf16 %v1752, %v1752
      %v1817 = vpack.c.bf16 %v1753, %v1753
      %v1818 = vpack.c.bf16 %v1754, %v1754
      %v1819 = vpack.c.bf16 %v1755, %v1755
      %v1820 = vpack.c.bf16 %v1756, %v1756
      %v1821 = vpack.c.bf16 %v1757, %v1757
      %v1822 = vpack.c.bf16 %v1758, %v1758
      %v1823 = vpack.c.bf16 %v1759, %v1759
      %v1824 = vpack.c.bf16 %v1760, %v1760
      %v1825 = vpack.c.bf16 %v1761, %v1761
      %v1826 = vpack.c.bf16 %v1762, %v1762
      %v1827 = vpack.c.bf16 %v1763, %v1763
      %v1828 = vpack.c.bf16 %v1764, %v1764
      %v1829 = vpack.c.bf16 %v1765, %v1765
      %v1830 = vpack.c.bf16 %v1766, %v1766
      %v1831 = vpack.c.bf16 %v1767, %v1767
      %v1832 = vpack.c.bf16 %v1768, %v1768
      %v1833 = vpack.c.bf16 %v1769, %v1769
      %v1834 = vpack.c.bf16 %v1770, %v1770
      %v1835 = vpack.c.bf16 %v1771, %v1771
      %v1836 = vpack.c.bf16 %v1772, %v1772
      %v1837 = vpack.c.bf16 %v1773, %v1773
      %v1838 = vpack.c.bf16 %v1774, %v1774
      %v1839 = vpack.c.bf16 %v1775, %v1775
      %v1840 = vpack.c.bf16 %v1776, %v1776
      %v1841 = vpack.c.bf16 %v1777, %v1777
      %v1842 = vpack.c.bf16 %v1778, %v1778
      %v1843 = vpack.c.bf16 %v1779, %v1779
      %v1844 = vpack.c.bf16 %v1780, %v1780
      %v1845 = vpack.c.bf16 %v1781, %v1781
      %v1846 = vpack.c.bf16 %v1782, %v1782
      %v1847 = vpack.c.bf16 %v1783, %v1783
      %v1848 = vpack.c.bf16 %v1784, %v1784
      %v1849 = vpack.c.bf16 %v1785, %v1785
      %v1850 = vpack.c.bf16 %v1786, %v1786
      %v1851 = vpack.c.bf16 %v1787, %v1787
      %v1852 = vpack.c.bf16 %v1788, %v1788
      %v1853 = vpack.c.bf16 %v1789, %v1789
      %v1854 = vpack.c.bf16 %v1790, %v1790
      %v1855 = vpack.c.bf16 %v1791, %v1791
      %v1856 = vpack.c.bf16 %v1792, %v1792
      %v1857 = vpack.c.bf16 %v1793, %v1793
      %v1858 = vpack.c.bf16 %v1794, %v1794
      %v1859 = vpack.c.bf16 %v1795, %v1795
      %v1860 = vpack.c.bf16 %v1796, %v1796
      %v1861 = vpack.c.bf16 %v1797, %v1797
      %v1862 = vpack.c.bf16 %v1798, %v1798
      %v1863 = vpack.c.bf16 %v1799, %v1799
      %v1864 = vpack.c.bf16 %v1800, %v1800
      %v1865 = vpack.c.bf16 %v1801, %v1801
      %v1866 = vpack.c.bf16 %v1802, %v1802
      %v1867 = vpack.c.bf16 %v1803, %v1803
      %v1868 = vpack.c.bf16 %v1804, %v1804
      %v1869 = vpack.c.bf16 %v1805, %v1805
      %v1870 = vpack.c.bf16 %v1806, %v1806
      %v1871 = vpack.c.bf16 %v1807, %v1807
      %1872 = vst [vmem:[%s267] sm:$0xf] %v1808
      %1873 = vst [vmem:[%s267 + $0x4] sm:$0xf] %v1809
      %1874 = vst [vmem:[%s267 + $0x8] sm:$0xf] %v1810
      %1875 = vst [vmem:[%s267 + $0xc] sm:$0xf] %v1811
      %1876 = vst [vmem:[%s267 + $0x10] sm:$0xf] %v1812
      %1877 = vst [vmem:[%s267 + $0x14] sm:$0xf] %v1813
      %1878 = vst [vmem:[%s267 + $0x18] sm:$0xf] %v1814
      %1879 = vst [vmem:[%s267 + $0x1c] sm:$0xf] %v1815
      %1880 = vst [vmem:[%s267 + $0x20] sm:$0xf] %v1816
      %1881 = vst [vmem:[%s267 + $0x24] sm:$0xf] %v1817
      %1882 = vst [vmem:[%s267 + $0x28] sm:$0xf] %v1818
      %1883 = vst [vmem:[%s267 + $0x2c] sm:$0xf] %v1819
      %1884 = vst [vmem:[%s267 + $0x30] sm:$0xf] %v1820
      %1885 = vst [vmem:[%s267 + $0x34] sm:$0xf] %v1821
      %1886 = vst [vmem:[%s267 + $0x38] sm:$0xf] %v1822
      %1887 = vst [vmem:[%s267 + $0x3c] sm:$0xf] %v1823
      %1888 = vst [vmem:[%s267 + $0x40] sm:$0xf] %v1824
      %1889 = vst [vmem:[%s267 + $0x44] sm:$0xf] %v1825
      %1890 = vst [vmem:[%s267 + $0x48] sm:$0xf] %v1826
      %1891 = vst [vmem:[%s267 + $0x4c] sm:$0xf] %v1827
      %1892 = vst [vmem:[%s267 + $0x50] sm:$0xf] %v1828
      %1893 = vst [vmem:[%s267 + $0x54] sm:$0xf] %v1829
      %1894 = vst [vmem:[%s267 + $0x58] sm:$0xf] %v1830
      %1895 = vst [vmem:[%s267 + $0x5c] sm:$0xf] %v1831
      %1896 = vst [vmem:[%s267 + $0x60] sm:$0xf] %v1832
      %1897 = vst [vmem:[%s267 + $0x64] sm:$0xf] %v1833
      %1898 = vst [vmem:[%s267 + $0x68] sm:$0xf] %v1834
      %1899 = vst [vmem:[%s267 + $0x6c] sm:$0xf] %v1835
      %1900 = vst [vmem:[%s267 + $0x70] sm:$0xf] %v1836
      %1901 = vst [vmem:[%s267 + $0x74] sm:$0xf] %v1837
      %1902 = vst [vmem:[%s267 + $0x78] sm:$0xf] %v1838
      %1903 = vst [vmem:[%s267 + $0x7c] sm:$0xf] %v1839
      %1904 = vst [vmem:[%s267 + $0x80] sm:$0xf] %v1840
      %1905 = vst [vmem:[%s267 + $0x84] sm:$0xf] %v1841
      %1906 = vst [vmem:[%s267 + $0x88] sm:$0xf] %v1842
      %1907 = vst [vmem:[%s267 + $0x8c] sm:$0xf] %v1843
      %1908 = vst [vmem:[%s267 + $0x90] sm:$0xf] %v1844
      %1909 = vst [vmem:[%s267 + $0x94] sm:$0xf] %v1845
      %1910 = vst [vmem:[%s267 + $0x98] sm:$0xf] %v1846
      %1911 = vst [vmem:[%s267 + $0x9c] sm:$0xf] %v1847
      %1912 = vst [vmem:[%s267 + $0xa0] sm:$0xf] %v1848
      %1913 = vst [vmem:[%s267 + $0xa4] sm:$0xf] %v1849
      %1914 = vst [vmem:[%s267 + $0xa8] sm:$0xf] %v1850
      %1915 = vst [vmem:[%s267 + $0xac] sm:$0xf] %v1851
      %1916 = vst [vmem:[%s267 + $0xb0] sm:$0xf] %v1852
      %1917 = vst [vmem:[%s267 + $0xb4] sm:$0xf] %v1853
      %1918 = vst [vmem:[%s267 + $0xb8] sm:$0xf] %v1854
      %1919 = vst [vmem:[%s267 + $0xbc] sm:$0xf] %v1855
      %1920 = vst [vmem:[%s267 + $0xc0] sm:$0xf] %v1856
      %1921 = vst [vmem:[%s267 + $0xc4] sm:$0xf] %v1857
      %1922 = vst [vmem:[%s267 + $0xc8] sm:$0xf] %v1858
      %1923 = vst [vmem:[%s267 + $0xcc] sm:$0xf] %v1859
      %1924 = vst [vmem:[%s267 + $0xd0] sm:$0xf] %v1860
      %1925 = vst [vmem:[%s267 + $0xd4] sm:$0xf] %v1861
      %1926 = vst [vmem:[%s267 + $0xd8] sm:$0xf] %v1862
      %1927 = vst [vmem:[%s267 + $0xdc] sm:$0xf] %v1863
      %1928 = vst [vmem:[%s267 + $0xe0] sm:$0xf] %v1864
      %1929 = vst [vmem:[%s267 + $0xe4] sm:$0xf] %v1865
      %1930 = vst [vmem:[%s267 + $0xe8] sm:$0xf] %v1866
      %1931 = vst [vmem:[%s267 + $0xec] sm:$0xf] %v1867
      %1932 = vst [vmem:[%s267 + $0xf0] sm:$0xf] %v1868
      %1933 = vst [vmem:[%s267 + $0xf4] sm:$0xf] %v1869
      %1934 = vst [vmem:[%s267 + $0xf8] sm:$0xf] %v1870
      %1935 = vst [vmem:[%s267 + $0xfc] sm:$0xf] %v1871
      %s1936 = smul.u32 64, %s19
      %p1937 = scmp.lt.s32.totalorder %s1936, 255
      %s1938 = scalar_select %p1937, %s1936, 255
      %p1939 = scmp.lt.s32.totalorder %s20, 0
      %s1940 = scalar_select %p1939, %s20, 0
      %s1941 = sadd.s32 %s1940, %s1938
      %s1942 = smul.addr %s1941, 4
      %s1943 = scalar_lea.vmem %s4, %s1942
      // Predicated region
      $region37: #{cnn_forward.7} parent=35 // pred_check
        %p1944 = pneg %p151
      $region38: #{cnn_forward.7} parent=35 // pred_check_branch
        %1946 = sbr.rel (%p1944) target = $region40
      $region39: #{cnn_forward.7} parent=35 // pred_region
        %s1947 = smul.u32 64, %s19
      $region40: #{cnn_forward.7} parent=35 // pred_fallthru
        _
    $region36: #{cnn_forward.7} parent=5 // pred_fallthru
      _
    %p1948 = scmp.le.s32.totalorder 2, %s10
    // Predicated region
    $region41: #{cnn_forward.7} parent=5 // pred_check
      %p1949 = pneg %p1948
    $region42: #{cnn_forward.7} parent=5 // pred_check_branch
      %1951 = sbr.rel (%p1949) target = $region44
    $region43: #{cnn_forward.7} parent=5 // pred_region
      %s1952 = ssub.s32 %s10, 2
      // Predicated region
      $region45: #{cnn_forward.7} parent=43 // pred_check
        %p1953 = pneg %p157
      $region46: #{cnn_forward.7} parent=43 // pred_check_branch
        %1955 = sbr.rel (%p1953) target = $region48
      $region47: #{cnn_forward.7} parent=43 // pred_region
        %s1956 = smul.u32 64, %s21
        %p1957 = scmp.lt.s32.totalorder %s1956, 255
        %s1958 = scalar_select %p1957, %s1956, 255
        %p1959 = scmp.lt.s32.totalorder %s22, 0
        %s1960 = scalar_select %p1959, %s22, 0
        %s1961 = sadd.s32 %s1960, %s1958
        %s1962 = smul.addr %s1961, 4
        %s1963 = scalar_lea.vmem %s4, %s1962
      $region48: #{cnn_forward.7} parent=43 // pred_fallthru
        _
    $region44: #{cnn_forward.7} parent=5 // pred_fallthru
      _
  $region6: #{cnn_forward.7} parent=0 // loop_footer
    %s14 = sadd.s32 1, %s10
  $region7: #{cnn_forward.7} parent=0 // loop_footer_branch
    %9 = sbr.rel target = $region3
  $region8: #{cnn_forward.7} parent=0 // loop_exit
    _

// kernel: cnn_forward.8
$region0: #{cnn_forward.8}
  #allocation0 [shape = 'u32[]', space=smem, size = 0x4, offset = 0x4, fixed_abs, tag = 'smem constant byte address 0x4 - core index']
  #allocation1 [shape = 'u32[72,128]{1,0:T(1,128)}', space=vmem, size = 0x9000, scoped, tag = 'internal scratch']
  %s0 = inlined_call_operand.vmem [shape: bf16[496,640], index: 0, kind: input, shape index: {}]
  %s1 = inlined_call_operand.vmem [shape: bf16[640,128], index: 1, kind: input, shape index: {}]
  %s2 = inlined_call_operand.vmem [shape: f32[1,128], index: 2, kind: input, shape index: {}]
  %s3 = inlined_call_operand.vmem [shape: f32[1,128], index: 3, kind: input, shape index: {}]
  %s4 = inlined_call_operand.vmem [shape: bf16[496,128], index: 4, kind: output, shape index: {}]
  %s5 = sld [smem:[#allocation0]]
  $region26: #{cnn_forward.8} parent=0
    _
  %s7 = ssub.s32 1, %s5
  %s8 = scalar_select 0, %s7, %s5
  // Predicated region
  $region2: #{cnn_forward.8} parent=0 // pred_check
    _
  $region3: #{cnn_forward.8} parent=0 // pred_check_branch
    %10 = sbr.rel (0) target = $region5
  $region4: #{cnn_forward.8} parent=0 // pred_region
    _
  $region5: #{cnn_forward.8} parent=0 // pred_fallthru
    _
  // Predicated region
  $region6: #{cnn_forward.8} parent=0 // pred_check
    _
  $region7: #{cnn_forward.8} parent=0 // pred_check_branch
    %12 = sbr.rel (0) target = $region9
  $region8: #{cnn_forward.8} parent=0 // pred_region
    _
  $region9: #{cnn_forward.8} parent=0 // pred_fallthru
    _
  // Predicated region
  $region10: #{cnn_forward.8} parent=0 // pred_check
    _
  $region11: #{cnn_forward.8} parent=0 // pred_check_branch
    %14 = sbr.rel (0) target = $region13
  $region12: #{cnn_forward.8} parent=0 // pred_region
    _
  $region13: #{cnn_forward.8} parent=0 // pred_fallthru
    _
  // Predicated region
  $region14: #{cnn_forward.8} parent=0 // pred_check
    _
  $region15: #{cnn_forward.8} parent=0 // pred_check_branch
    %16 = sbr.rel (0) target = $region17
  $region16: #{cnn_forward.8} parent=0 // pred_region
    _
  $region17: #{cnn_forward.8} parent=0 // pred_fallthru
    _
  %v17 = vld [vmem:[%s0] sm:$0xff]
  %v18 = vld [vmem:[%s0 + $0x8] sm:$0xff]
  %v19 = vld [vmem:[%s0 + $0x10] sm:$0xf]
  %v20 = vld [vmem:[%s0 + $0x14] sm:$0xff]
  %v21 = vld [vmem:[%s0 + $0x1c] sm:$0xff]
  %v22 = vld [vmem:[%s0 + $0x24] sm:$0xf]
  %v23 = vld [vmem:[%s0 + $0x28] sm:$0xff]
  %v24 = vld [vmem:[%s0 + $0x30] sm:$0xff]
  %v25 = vld [vmem:[%s0 + $0x38] sm:$0xf]
  %v26 = vld [vmem:[%s0 + $0x3c] sm:$0xff]
  %v27 = vld [vmem:[%s0 + $0x44] sm:$0xff]
  %v28 = vld [vmem:[%s0 + $0x4c] sm:$0xf]
  %v29 = vld [vmem:[%s0 + $0x50] sm:$0xff]
  %v30 = vld [vmem:[%s0 + $0x58] sm:$0xff]
  %v31 = vld [vmem:[%s0 + $0x60] sm:$0xf]
  %v32 = vld [vmem:[%s0 + $0x64] sm:$0xff]
  %v33 = vld [vmem:[%s0 + $0x6c] sm:$0xff]
  %v34 = vld [vmem:[%s0 + $0x74] sm:$0xf]
  %v35 = vld [vmem:[%s0 + $0x78] sm:$0xff]
  %v36 = vld [vmem:[%s0 + $0x80] sm:$0xff]
  %v37 = vld [vmem:[%s0 + $0x88] sm:$0xf]
  %v38 = vld [vmem:[%s0 + $0x8c] sm:$0xff]
  %v39 = vld [vmem:[%s0 + $0x94] sm:$0xff]
  %v40 = vld [vmem:[%s0 + $0x9c] sm:$0xf]
  %v41 = vld [vmem:[%s0 + $0xa0] sm:$0xff]
  %v42 = vld [vmem:[%s0 + $0xa8] sm:$0xff]
  %v43 = vld [vmem:[%s0 + $0xb0] sm:$0xf]
  %v44 = vld [vmem:[%s0 + $0xb4] sm:$0xff]
  %v45 = vld [vmem:[%s0 + $0xbc] sm:$0xff]
  %v46 = vld [vmem:[%s0 + $0xc4] sm:$0xf]
  %v47 = vld [vmem:[%s0 + $0xc8] sm:$0xff]
  %v48 = vld [vmem:[%s0 + $0xd0] sm:$0xff]
  %v49 = vld [vmem:[%s0 + $0xd8] sm:$0xf]
  %v50 = vld [vmem:[%s0 + $0xdc] sm:$0xff]
  %v51 = vld [vmem:[%s0 + $0xe4] sm:$0xff]
  %v52 = vld [vmem:[%s0 + $0xec] sm:$0xf]
  %v53 = vld [vmem:[%s0 + $0xf0] sm:$0xff]
  %v54 = vld [vmem:[%s0 + $0xf8] sm:$0xff]
  %v55 = vld [vmem:[%s0 + $0x100] sm:$0xf]
  %v56 = vld [vmem:[%s0 + $0x104] sm:$0xff]
  %v57 = vld [vmem:[%s0 + $0x10c] sm:$0xff]
  %v58 = vld [vmem:[%s0 + $0x114] sm:$0xf]
  %v59 = vld [vmem:[%s0 + $0x118] sm:$0xff]
  %v60 = vld [vmem:[%s0 + $0x120] sm:$0xff]
  %v61 = vld [vmem:[%s0 + $0x128] sm:$0xf]
  %v62 = vld [vmem:[%s0 + $0x12c] sm:$0xff]
  %v63 = vld [vmem:[%s0 + $0x134] sm:$0xff]
  %v64 = vld [vmem:[%s0 + $0x13c] sm:$0xf]
  %v65 = vld [vmem:[%s0 + $0x140] sm:$0xff]
  %v66 = vld [vmem:[%s0 + $0x148] sm:$0xff]
  %v67 = vld [vmem:[%s0 + $0x150] sm:$0xf]
  %v68 = vld [vmem:[%s0 + $0x154] sm:$0xff]
  %v69 = vld [vmem:[%s0 + $0x15c] sm:$0xff]
  %v70 = vld [vmem:[%s0 + $0x164] sm:$0xf]
  %v71 = vld [vmem:[%s0 + $0x168] sm:$0xff]
  %v72 = vld [vmem:[%s0 + $0x170] sm:$0xff]
  %v73 = vld [vmem:[%s0 + $0x178] sm:$0xf]
  %v74 = vld [vmem:[%s0 + $0x17c] sm:$0xff]
  %v75 = vld [vmem:[%s0 + $0x184] sm:$0xff]
  %v76 = vld [vmem:[%s0 + $0x18c] sm:$0xf]
  %v77 = vld [vmem:[%s0 + $0x190] sm:$0xff]
  %v78 = vld [vmem:[%s0 + $0x198] sm:$0xff]
  %v79 = vld [vmem:[%s0 + $0x1a0] sm:$0xf]
  %v80 = vld [vmem:[%s0 + $0x1a4] sm:$0xff]
  %v81 = vld [vmem:[%s0 + $0x1ac] sm:$0xff]
  %v82 = vld [vmem:[%s0 + $0x1b4] sm:$0xf]
  %v83 = vld [vmem:[%s0 + $0x1b8] sm:$0xff]
  %v84 = vld [vmem:[%s0 + $0x1c0] sm:$0xff]
  %v85 = vld [vmem:[%s0 + $0x1c8] sm:$0xf]
  %v86 = vld [vmem:[%s0 + $0x1cc] sm:$0xff]
  %v87 = vld [vmem:[%s0 + $0x1d4] sm:$0xff]
  %v88 = vld [vmem:[%s0 + $0x1dc] sm:$0xf]
  %v89 = vld [vmem:[%s0 + $0x1e0] sm:$0xff]
  %v90 = vld [vmem:[%s0 + $0x1e8] sm:$0xff]
  %v91 = vld [vmem:[%s0 + $0x1f0] sm:$0xf]
  %v92 = vld [vmem:[%s0 + $0x1f4] sm:$0xff]
  %v93 = vld [vmem:[%s0 + $0x1fc] sm:$0xff]
  %v94 = vld [vmem:[%s0 + $0x204] sm:$0xf]
  %v95 = vld [vmem:[%s0 + $0x208] sm:$0xff]
  %v96 = vld [vmem:[%s0 + $0x210] sm:$0xff]
  %v97 = vld [vmem:[%s0 + $0x218] sm:$0xf]
  %v98 = vld [vmem:[%s0 + $0x21c] sm:$0xff]
  %v99 = vld [vmem:[%s0 + $0x224] sm:$0xff]
  %v100 = vld [vmem:[%s0 + $0x22c] sm:$0xf]
  %v101 = vld [vmem:[%s0 + $0x230] sm:$0xff]
  %v102 = vld [vmem:[%s0 + $0x238] sm:$0xff]
  %v103 = vld [vmem:[%s0 + $0x240] sm:$0xf]
  %v104 = vld [vmem:[%s0 + $0x244] sm:$0xff]
  %v105 = vld [vmem:[%s0 + $0x24c] sm:$0xff]
  %v106 = vld [vmem:[%s0 + $0x254] sm:$0xf]
  %v107 = vld [vmem:[%s0 + $0x258] sm:$0xff]
  %v108 = vld [vmem:[%s0 + $0x260] sm:$0xff]
  %v109 = vld [vmem:[%s0 + $0x268] sm:$0xf]
  %v110 = vld [vmem:[%s0 + $0x26c] sm:$0xff]
  %v111 = vld [vmem:[%s0 + $0x274] sm:$0xff]
  %v112 = vld [vmem:[%s0 + $0x27c] sm:$0xf]
  %v113 = vld [vmem:[%s0 + $0x280] sm:$0xff]
  %v114 = vld [vmem:[%s0 + $0x288] sm:$0xff]
  %v115 = vld [vmem:[%s0 + $0x290] sm:$0xf]
  %v116 = vld [vmem:[%s0 + $0x294] sm:$0xff]
  %v117 = vld [vmem:[%s0 + $0x29c] sm:$0xff]
  %v118 = vld [vmem:[%s0 + $0x2a4] sm:$0xf]
  %v119 = vld [vmem:[%s0 + $0x2a8] sm:$0xff]
  %v120 = vld [vmem:[%s0 + $0x2b0] sm:$0xff]
  %v121 = vld [vmem:[%s0 + $0x2b8] sm:$0xf]
  %v122 = vld [vmem:[%s0 + $0x2bc] sm:$0xff]
  %v123 = vld [vmem:[%s0 + $0x2c4] sm:$0xff]
  %v124 = vld [vmem:[%s0 + $0x2cc] sm:$0xf]
  %v125 = vld [vmem:[%s0 + $0x2d0] sm:$0xff]
  %v126 = vld [vmem:[%s0 + $0x2d8] sm:$0xff]
  %v127 = vld [vmem:[%s0 + $0x2e0] sm:$0xf]
  %v128 = vld [vmem:[%s0 + $0x2e4] sm:$0xff]
  %v129 = vld [vmem:[%s0 + $0x2ec] sm:$0xff]
  %v130 = vld [vmem:[%s0 + $0x2f4] sm:$0xf]
  %v131 = vld [vmem:[%s0 + $0x2f8] sm:$0xff]
  %v132 = vld [vmem:[%s0 + $0x300] sm:$0xff]
  %v133 = vld [vmem:[%s0 + $0x308] sm:$0xf]
  %v134 = vld [vmem:[%s0 + $0x30c] sm:$0xff]
  %v135 = vld [vmem:[%s0 + $0x314] sm:$0xff]
  %v136 = vld [vmem:[%s0 + $0x31c] sm:$0xf]
  %v137 = vld [vmem:[%s0 + $0x320] sm:$0xff]
  %v138 = vld [vmem:[%s0 + $0x328] sm:$0xff]
  %v139 = vld [vmem:[%s0 + $0x330] sm:$0xf]
  %v140 = vld [vmem:[%s0 + $0x334] sm:$0xff]
  %v141 = vld [vmem:[%s0 + $0x33c] sm:$0xff]
  %v142 = vld [vmem:[%s0 + $0x344] sm:$0xf]
  %v143 = vld [vmem:[%s0 + $0x348] sm:$0xff]
  %v144 = vld [vmem:[%s0 + $0x350] sm:$0xff]
  %v145 = vld [vmem:[%s0 + $0x358] sm:$0xf]
  %v146 = vld [vmem:[%s0 + $0x35c] sm:$0xff]
  %v147 = vld [vmem:[%s0 + $0x364] sm:$0xff]
  %v148 = vld [vmem:[%s0 + $0x36c] sm:$0xf]
  %v149 = vld [vmem:[%s0 + $0x370] sm:$0xff]
  %v150 = vld [vmem:[%s0 + $0x378] sm:$0xff]
  %v151 = vld [vmem:[%s0 + $0x380] sm:$0xf]
  %v152 = vld [vmem:[%s0 + $0x384] sm:$0xff]
  %v153 = vld [vmem:[%s0 + $0x38c] sm:$0xff]
  %v154 = vld [vmem:[%s0 + $0x394] sm:$0xf]
  %v155 = vld [vmem:[%s0 + $0x398] sm:$0xff]
  %v156 = vld [vmem:[%s0 + $0x3a0] sm:$0xff]
  %v157 = vld [vmem:[%s0 + $0x3a8] sm:$0xf]
  %v158 = vld [vmem:[%s0 + $0x3ac] sm:$0xff]
  %v159 = vld [vmem:[%s0 + $0x3b4] sm:$0xff]
  %v160 = vld [vmem:[%s0 + $0x3bc] sm:$0xf]
  %v161 = vld [vmem:[%s0 + $0x3c0] sm:$0xff]
  %v162 = vld [vmem:[%s0 + $0x3c8] sm:$0xff]
  %v163 = vld [vmem:[%s0 + $0x3d0] sm:$0xf]
  %v164 = vld [vmem:[%s0 + $0x3d4] sm:$0xff]
  %v165 = vld [vmem:[%s0 + $0x3dc] sm:$0xff]
  %v166 = vld [vmem:[%s0 + $0x3e4] sm:$0xf]
  %v167 = vld [vmem:[%s0 + $0x3e8] sm:$0xff]
  %v168 = vld [vmem:[%s0 + $0x3f0] sm:$0xff]
  %v169 = vld [vmem:[%s0 + $0x3f8] sm:$0xf]
  %v170 = vld [vmem:[%s0 + $0x3fc] sm:$0xff]
  %v171 = vld [vmem:[%s0 + $0x404] sm:$0xff]
  %v172 = vld [vmem:[%s0 + $0x40c] sm:$0xf]
  %v173 = vld [vmem:[%s0 + $0x410] sm:$0xff]
  %v174 = vld [vmem:[%s0 + $0x418] sm:$0xff]
  %v175 = vld [vmem:[%s0 + $0x420] sm:$0xf]
  %v176 = vld [vmem:[%s0 + $0x424] sm:$0xff]
  %v177 = vld [vmem:[%s0 + $0x42c] sm:$0xff]
  %v178 = vld [vmem:[%s0 + $0x434] sm:$0xf]
  %v179 = vld [vmem:[%s0 + $0x438] sm:$0xff]
  %v180 = vld [vmem:[%s0 + $0x440] sm:$0xff]
  %v181 = vld [vmem:[%s0 + $0x448] sm:$0xf]
  %v182 = vld [vmem:[%s0 + $0x44c] sm:$0xff]
  %v183 = vld [vmem:[%s0 + $0x454] sm:$0xff]
  %v184 = vld [vmem:[%s0 + $0x45c] sm:$0xf]
  %v185 = vld [vmem:[%s0 + $0x460] sm:$0xff]
  %v186 = vld [vmem:[%s0 + $0x468] sm:$0xff]
  %v187 = vld [vmem:[%s0 + $0x470] sm:$0xf]
  %v188 = vld [vmem:[%s0 + $0x474] sm:$0xff]
  %v189 = vld [vmem:[%s0 + $0x47c] sm:$0xff]
  %v190 = vld [vmem:[%s0 + $0x484] sm:$0xf]
  %v191 = vld [vmem:[%s0 + $0x488] sm:$0xff]
  %v192 = vld [vmem:[%s0 + $0x490] sm:$0xff]
  %v193 = vld [vmem:[%s0 + $0x498] sm:$0xf]
  %v194 = vld [vmem:[%s0 + $0x49c] sm:$0xff]
  %v195 = vld [vmem:[%s0 + $0x4a4] sm:$0xff]
  %v196 = vld [vmem:[%s0 + $0x4ac] sm:$0xf]
  %v197 = vld [vmem:[%s0 + $0x4b0] sm:$0xff]
  %v198 = vld [vmem:[%s0 + $0x4b8] sm:$0xff]
  %v199 = vld [vmem:[%s0 + $0x4c0] sm:$0xf]
  %v200 = vld [vmem:[%s0 + $0x4c4] sm:$0xff]
  %v201 = vld [vmem:[%s0 + $0x4cc] sm:$0xff]
  %v202 = vld [vmem:[%s0 + $0x4d4] sm:$0xf]
  %v203 = vld [vmem:[%s1] sm:$0xf]
  %v204 = vld [vmem:[%s1 + $0x4] sm:$0xf]
  %v205 = vld [vmem:[%s1 + $0x8] sm:$0xf]
  %v206 = vld [vmem:[%s1 + $0xc] sm:$0xf]
  %v207 = vld [vmem:[%s1 + $0x10] sm:$0xf]
  %v208 = vld [vmem:[%s1 + $0x14] sm:$0xf]
  %v209 = vld [vmem:[%s1 + $0x18] sm:$0xf]
  %v210 = vld [vmem:[%s1 + $0x1c] sm:$0xf]
  %v211 = vld [vmem:[%s1 + $0x20] sm:$0xf]
  %v212 = vld [vmem:[%s1 + $0x24] sm:$0xf]
  %v213 = vld [vmem:[%s1 + $0x28] sm:$0xf]
  %v214 = vld [vmem:[%s1 + $0x2c] sm:$0xf]
  %v215 = vld [vmem:[%s1 + $0x30] sm:$0xf]
  %v216 = vld [vmem:[%s1 + $0x34] sm:$0xf]
  %v217 = vld [vmem:[%s1 + $0x38] sm:$0xf]
  %v218 = vld [vmem:[%s1 + $0x3c] sm:$0xf]
  %v219 = vld [vmem:[%s1 + $0x40] sm:$0xf]
  %v220 = vld [vmem:[%s1 + $0x44] sm:$0xf]
  %v221 = vld [vmem:[%s1 + $0x48] sm:$0xf]
  %v222 = vld [vmem:[%s1 + $0x4c] sm:$0xf]
  %v223 = vld [vmem:[%s1 + $0x50] sm:$0xf]
  %v224 = vld [vmem:[%s1 + $0x54] sm:$0xf]
  %v225 = vld [vmem:[%s1 + $0x58] sm:$0xf]
  %v226 = vld [vmem:[%s1 + $0x5c] sm:$0xf]
  %v227 = vld [vmem:[%s1 + $0x60] sm:$0xf]
  %v228 = vld [vmem:[%s1 + $0x64] sm:$0xf]
  %v229 = vld [vmem:[%s1 + $0x68] sm:$0xf]
  %v230 = vld [vmem:[%s1 + $0x6c] sm:$0xf]
  %v231 = vld [vmem:[%s1 + $0x70] sm:$0xf]
  %v232 = vld [vmem:[%s1 + $0x74] sm:$0xf]
  %v233 = vld [vmem:[%s1 + $0x78] sm:$0xf]
  %v234 = vld [vmem:[%s1 + $0x7c] sm:$0xf]
  %v235 = vld [vmem:[%s1 + $0x80] sm:$0xf]
  %v236 = vld [vmem:[%s1 + $0x84] sm:$0xf]
  %v237 = vld [vmem:[%s1 + $0x88] sm:$0xf]
  %v238 = vld [vmem:[%s1 + $0x8c] sm:$0xf]
  %v239 = vld [vmem:[%s1 + $0x90] sm:$0xf]
  %v240 = vld [vmem:[%s1 + $0x94] sm:$0xf]
  %v241 = vld [vmem:[%s1 + $0x98] sm:$0xf]
  %v242 = vld [vmem:[%s1 + $0x9c] sm:$0xf]
  %v243 = vld [vmem:[%s1 + $0xa0] sm:$0xf]
  %v244 = vld [vmem:[%s1 + $0xa4] sm:$0xf]
  %v245 = vld [vmem:[%s1 + $0xa8] sm:$0xf]
  %v246 = vld [vmem:[%s1 + $0xac] sm:$0xf]
  %v247 = vld [vmem:[%s1 + $0xb0] sm:$0xf]
  %v248 = vld [vmem:[%s1 + $0xb4] sm:$0xf]
  %v249 = vld [vmem:[%s1 + $0xb8] sm:$0xf]
  %v250 = vld [vmem:[%s1 + $0xbc] sm:$0xf]
  %v251 = vld [vmem:[%s1 + $0xc0] sm:$0xf]
  %v252 = vld [vmem:[%s1 + $0xc4] sm:$0xf]
  %v253 = vld [vmem:[%s1 + $0xc8] sm:$0xf]
  %v254 = vld [vmem:[%s1 + $0xcc] sm:$0xf]
  %v255 = vld [vmem:[%s1 + $0xd0] sm:$0xf]
  %v256 = vld [vmem:[%s1 + $0xd4] sm:$0xf]
  %v257 = vld [vmem:[%s1 + $0xd8] sm:$0xf]
  %v258 = vld [vmem:[%s1 + $0xdc] sm:$0xf]
  %v259 = vld [vmem:[%s1 + $0xe0] sm:$0xf]
  %v260 = vld [vmem:[%s1 + $0xe4] sm:$0xf]
  %v261 = vld [vmem:[%s1 + $0xe8] sm:$0xf]
  %v262 = vld [vmem:[%s1 + $0xec] sm:$0xf]
  %v263 = vld [vmem:[%s1 + $0xf0] sm:$0xf]
  %v264 = vld [vmem:[%s1 + $0xf4] sm:$0xf]
  %v265 = vld [vmem:[%s1 + $0xf8] sm:$0xf]
  %v266 = vld [vmem:[%s1 + $0xfc] sm:$0xf]
  %v267 = vld [vmem:[%s1 + $0x100] sm:$0xf]
  %v268 = vld [vmem:[%s1 + $0x104] sm:$0xf]
  %v269 = vld [vmem:[%s1 + $0x108] sm:$0xf]
  %v270 = vld [vmem:[%s1 + $0x10c] sm:$0xf]
  %v271 = vld [vmem:[%s1 + $0x110] sm:$0xf]
  %v272 = vld [vmem:[%s1 + $0x114] sm:$0xf]
  %v273 = vld [vmem:[%s1 + $0x118] sm:$0xf]
  %v274 = vld [vmem:[%s1 + $0x11c] sm:$0xf]
  %v275 = vld [vmem:[%s1 + $0x120] sm:$0xf]
  %v276 = vld [vmem:[%s1 + $0x124] sm:$0xf]
  %v277 = vld [vmem:[%s1 + $0x128] sm:$0xf]
  %v278 = vld [vmem:[%s1 + $0x12c] sm:$0xf]
  %v279 = vld [vmem:[%s1 + $0x130] sm:$0xf]
  %v280 = vld [vmem:[%s1 + $0x134] sm:$0xf]
  %v281 = vld [vmem:[%s1 + $0x138] sm:$0xf]
  %v282 = vld [vmem:[%s1 + $0x13c] sm:$0xf]
  %v469 = vunpack.c.l.b16 %v17
  %v470 = vunpack.c.h.b16 %v17
  %v471 = vunpack.c.l.b16 %v18
  %v472 = vunpack.c.h.b16 %v18
  %v473 = vunpack.c.l.b16 %v19
  %v474 = vunpack.c.l.b16 %v20
  %v475 = vunpack.c.h.b16 %v20
  %v476 = vunpack.c.l.b16 %v21
  %v477 = vunpack.c.h.b16 %v21
  %v478 = vunpack.c.l.b16 %v22
  %v479 = vunpack.c.l.b16 %v23
  %v480 = vunpack.c.h.b16 %v23
  %v481 = vunpack.c.l.b16 %v24
  %v482 = vunpack.c.h.b16 %v24
  %v483 = vunpack.c.l.b16 %v25
  %v484 = vunpack.c.l.b16 %v26
  %v485 = vunpack.c.h.b16 %v26
  %v486 = vunpack.c.l.b16 %v27
  %v487 = vunpack.c.h.b16 %v27
  %v488 = vunpack.c.l.b16 %v28
  %v489 = vunpack.c.l.b16 %v29
  %v490 = vunpack.c.h.b16 %v29
  %v491 = vunpack.c.l.b16 %v30
  %v492 = vunpack.c.h.b16 %v30
  %v493 = vunpack.c.l.b16 %v31
  %v494 = vunpack.c.l.b16 %v32
  %v495 = vunpack.c.h.b16 %v32
  %v496 = vunpack.c.l.b16 %v33
  %v497 = vunpack.c.h.b16 %v33
  %v498 = vunpack.c.l.b16 %v34
  %v499 = vunpack.c.l.b16 %v35
  %v500 = vunpack.c.h.b16 %v35
  %v501 = vunpack.c.l.b16 %v36
  %v502 = vunpack.c.h.b16 %v36
  %v503 = vunpack.c.l.b16 %v37
  %v504 = vunpack.c.l.b16 %v38
  %v505 = vunpack.c.h.b16 %v38
  %v506 = vunpack.c.l.b16 %v39
  %v507 = vunpack.c.h.b16 %v39
  %v508 = vunpack.c.l.b16 %v40
  %v509 = vunpack.c.l.b16 %v41
  %v510 = vunpack.c.h.b16 %v41
  %v511 = vunpack.c.l.b16 %v42
  %v512 = vunpack.c.h.b16 %v42
  %v513 = vunpack.c.l.b16 %v43
  %v514 = vunpack.c.l.b16 %v44
  %v515 = vunpack.c.h.b16 %v44
  %v516 = vunpack.c.l.b16 %v45
  %v517 = vunpack.c.h.b16 %v45
  %v518 = vunpack.c.l.b16 %v46
  %v519 = vunpack.c.l.b16 %v47
  %v520 = vunpack.c.h.b16 %v47
  %v521 = vunpack.c.l.b16 %v48
  %v522 = vunpack.c.h.b16 %v48
  %v523 = vunpack.c.l.b16 %v49
  %v524 = vunpack.c.l.b16 %v50
  %v525 = vunpack.c.h.b16 %v50
  %v526 = vunpack.c.l.b16 %v51
  %v527 = vunpack.c.h.b16 %v51
  %v528 = vunpack.c.l.b16 %v52
  %v529 = vunpack.c.l.b16 %v53
  %v530 = vunpack.c.h.b16 %v53
  %v531 = vunpack.c.l.b16 %v54
  %v532 = vunpack.c.h.b16 %v54
  %v533 = vunpack.c.l.b16 %v55
  %v534 = vunpack.c.l.b16 %v56
  %v535 = vunpack.c.h.b16 %v56
  %v536 = vunpack.c.l.b16 %v57
  %v537 = vunpack.c.h.b16 %v57
  %v538 = vunpack.c.l.b16 %v58
  %v539 = vunpack.c.l.b16 %v59
  %v540 = vunpack.c.h.b16 %v59
  %v541 = vunpack.c.l.b16 %v60
  %v542 = vunpack.c.h.b16 %v60
  %v543 = vunpack.c.l.b16 %v61
  %v544 = vunpack.c.l.b16 %v62
  %v545 = vunpack.c.h.b16 %v62
  %v546 = vunpack.c.l.b16 %v63
  %v547 = vunpack.c.h.b16 %v63
  %v548 = vunpack.c.l.b16 %v64
  %v549 = vunpack.c.l.b16 %v65
  %v550 = vunpack.c.h.b16 %v65
  %v551 = vunpack.c.l.b16 %v66
  %v552 = vunpack.c.h.b16 %v66
  %v553 = vunpack.c.l.b16 %v67
  %v554 = vunpack.c.l.b16 %v68
  %v555 = vunpack.c.h.b16 %v68
  %v556 = vunpack.c.l.b16 %v69
  %v557 = vunpack.c.h.b16 %v69
  %v558 = vunpack.c.l.b16 %v70
  %v559 = vunpack.c.l.b16 %v71
  %v560 = vunpack.c.h.b16 %v71
  %v561 = vunpack.c.l.b16 %v72
  %v562 = vunpack.c.h.b16 %v72
  %v563 = vunpack.c.l.b16 %v73
  %v564 = vunpack.c.l.b16 %v74
  %v565 = vunpack.c.h.b16 %v74
  %v566 = vunpack.c.l.b16 %v75
  %v567 = vunpack.c.h.b16 %v75
  %v568 = vunpack.c.l.b16 %v76
  %v569 = vunpack.c.l.b16 %v77
  %v570 = vunpack.c.h.b16 %v77
  %v571 = vunpack.c.l.b16 %v78
  %v572 = vunpack.c.h.b16 %v78
  %v573 = vunpack.c.l.b16 %v79
  %v574 = vunpack.c.l.b16 %v80
  %v575 = vunpack.c.h.b16 %v80
  %v576 = vunpack.c.l.b16 %v81
  %v577 = vunpack.c.h.b16 %v81
  %v578 = vunpack.c.l.b16 %v82
  %v579 = vunpack.c.l.b16 %v83
  %v580 = vunpack.c.h.b16 %v83
  %v581 = vunpack.c.l.b16 %v84
  %v582 = vunpack.c.h.b16 %v84
  %v583 = vunpack.c.l.b16 %v85
  %v584 = vunpack.c.l.b16 %v86
  %v585 = vunpack.c.h.b16 %v86
  %v586 = vunpack.c.l.b16 %v87
  %v587 = vunpack.c.h.b16 %v87
  %v588 = vunpack.c.l.b16 %v88
  %v589 = vunpack.c.l.b16 %v89
  %v590 = vunpack.c.h.b16 %v89
  %v591 = vunpack.c.l.b16 %v90
  %v592 = vunpack.c.h.b16 %v90
  %v593 = vunpack.c.l.b16 %v91
  %v594 = vunpack.c.l.b16 %v92
  %v595 = vunpack.c.h.b16 %v92
  %v596 = vunpack.c.l.b16 %v93
  %v597 = vunpack.c.h.b16 %v93
  %v598 = vunpack.c.l.b16 %v94
  %v599 = vunpack.c.l.b16 %v95
  %v600 = vunpack.c.h.b16 %v95
  %v601 = vunpack.c.l.b16 %v96
  %v602 = vunpack.c.h.b16 %v96
  %v603 = vunpack.c.l.b16 %v97
  %v604 = vunpack.c.l.b16 %v98
  %v605 = vunpack.c.h.b16 %v98
  %v606 = vunpack.c.l.b16 %v99
  %v607 = vunpack.c.h.b16 %v99
  %v608 = vunpack.c.l.b16 %v100
  %v609 = vunpack.c.l.b16 %v101
  %v610 = vunpack.c.h.b16 %v101
  %v611 = vunpack.c.l.b16 %v102
  %v612 = vunpack.c.h.b16 %v102
  %v613 = vunpack.c.l.b16 %v103
  %v614 = vunpack.c.l.b16 %v104
  %v615 = vunpack.c.h.b16 %v104
  %v616 = vunpack.c.l.b16 %v105
  %v617 = vunpack.c.h.b16 %v105
  %v618 = vunpack.c.l.b16 %v106
  %v619 = vunpack.c.l.b16 %v107
  %v620 = vunpack.c.h.b16 %v107
  %v621 = vunpack.c.l.b16 %v108
  %v622 = vunpack.c.h.b16 %v108
  %v623 = vunpack.c.l.b16 %v109
  %v624 = vunpack.c.l.b16 %v110
  %v625 = vunpack.c.h.b16 %v110
  %v626 = vunpack.c.l.b16 %v111
  %v627 = vunpack.c.h.b16 %v111
  %v628 = vunpack.c.l.b16 %v112
  %v629 = vunpack.c.l.b16 %v113
  %v630 = vunpack.c.h.b16 %v113
  %v631 = vunpack.c.l.b16 %v114
  %v632 = vunpack.c.h.b16 %v114
  %v633 = vunpack.c.l.b16 %v115
  %v634 = vunpack.c.l.b16 %v116
  %v635 = vunpack.c.h.b16 %v116
  %v636 = vunpack.c.l.b16 %v117
  %v637 = vunpack.c.h.b16 %v117
  %v638 = vunpack.c.l.b16 %v118
  %v639 = vunpack.c.l.b16 %v119
  %v640 = vunpack.c.h.b16 %v119
  %v641 = vunpack.c.l.b16 %v120
  %v642 = vunpack.c.h.b16 %v120
  %v643 = vunpack.c.l.b16 %v121
  %v644 = vunpack.c.l.b16 %v122
  %v645 = vunpack.c.h.b16 %v122
  %v646 = vunpack.c.l.b16 %v123
  %v647 = vunpack.c.h.b16 %v123
  %v648 = vunpack.c.l.b16 %v124
  %v649 = vunpack.c.l.b16 %v125
  %v650 = vunpack.c.h.b16 %v125
  %v651 = vunpack.c.l.b16 %v126
  %v652 = vunpack.c.h.b16 %v126
  %v653 = vunpack.c.l.b16 %v127
  %v654 = vunpack.c.l.b16 %v128
  %v655 = vunpack.c.h.b16 %v128
  %v656 = vunpack.c.l.b16 %v129
  %v657 = vunpack.c.h.b16 %v129
  %v658 = vunpack.c.l.b16 %v130
  %v659 = vunpack.c.l.b16 %v131
  %v660 = vunpack.c.h.b16 %v131
  %v661 = vunpack.c.l.b16 %v132
  %v662 = vunpack.c.h.b16 %v132
  %v663 = vunpack.c.l.b16 %v133
  %v664 = vunpack.c.l.b16 %v134
  %v665 = vunpack.c.h.b16 %v134
  %v666 = vunpack.c.l.b16 %v135
  %v667 = vunpack.c.h.b16 %v135
  %v668 = vunpack.c.l.b16 %v136
  %v669 = vunpack.c.l.b16 %v137
  %v670 = vunpack.c.h.b16 %v137
  %v671 = vunpack.c.l.b16 %v138
  %v672 = vunpack.c.h.b16 %v138
  %v673 = vunpack.c.l.b16 %v139
  %v674 = vunpack.c.l.b16 %v140
  %v675 = vunpack.c.h.b16 %v140
  %v676 = vunpack.c.l.b16 %v141
  %v677 = vunpack.c.h.b16 %v141
  %v678 = vunpack.c.l.b16 %v142
  %v679 = vunpack.c.l.b16 %v143
  %v680 = vunpack.c.h.b16 %v143
  %v681 = vunpack.c.l.b16 %v144
  %v682 = vunpack.c.h.b16 %v144
  %v683 = vunpack.c.l.b16 %v145
  %v684 = vunpack.c.l.b16 %v146
  %v685 = vunpack.c.h.b16 %v146
  %v686 = vunpack.c.l.b16 %v147
  %v687 = vunpack.c.h.b16 %v147
  %v688 = vunpack.c.l.b16 %v148
  %v689 = vunpack.c.l.b16 %v149
  %v690 = vunpack.c.h.b16 %v149
  %v691 = vunpack.c.l.b16 %v150
  %v692 = vunpack.c.h.b16 %v150
  %v693 = vunpack.c.l.b16 %v151
  %v694 = vunpack.c.l.b16 %v152
  %v695 = vunpack.c.h.b16 %v152
  %v696 = vunpack.c.l.b16 %v153
  %v697 = vunpack.c.h.b16 %v153
  %v698 = vunpack.c.l.b16 %v154
  %v699 = vunpack.c.l.b16 %v155
  %v700 = vunpack.c.h.b16 %v155
  %v701 = vunpack.c.l.b16 %v156
  %v702 = vunpack.c.h.b16 %v156
  %v703 = vunpack.c.l.b16 %v157
  %v704 = vunpack.c.l.b16 %v158
  %v705 = vunpack.c.h.b16 %v158
  %v706 = vunpack.c.l.b16 %v159
  %v707 = vunpack.c.h.b16 %v159
  %v708 = vunpack.c.l.b16 %v160
  %v709 = vunpack.c.l.b16 %v161
  %v710 = vunpack.c.h.b16 %v161
  %v711 = vunpack.c.l.b16 %v162
  %v712 = vunpack.c.h.b16 %v162
  %v713 = vunpack.c.l.b16 %v163
  %v714 = vunpack.c.l.b16 %v164
  %v715 = vunpack.c.h.b16 %v164
  %v716 = vunpack.c.l.b16 %v165
  %v717 = vunpack.c.h.b16 %v165
  %v718 = vunpack.c.l.b16 %v166
  %v719 = vunpack.c.l.b16 %v167
  %v720 = vunpack.c.h.b16 %v167
  %v721 = vunpack.c.l.b16 %v168
  %v722 = vunpack.c.h.b16 %v168
  %v723 = vunpack.c.l.b16 %v169
  %v724 = vunpack.c.l.b16 %v170
  %v725 = vunpack.c.h.b16 %v170
  %v726 = vunpack.c.l.b16 %v171
  %v727 = vunpack.c.h.b16 %v171
  %v728 = vunpack.c.l.b16 %v172
  %v729 = vunpack.c.l.b16 %v173
  %v730 = vunpack.c.h.b16 %v173
  %v731 = vunpack.c.l.b16 %v174
  %v732 = vunpack.c.h.b16 %v174
  %v733 = vunpack.c.l.b16 %v175
  %v734 = vunpack.c.l.b16 %v176
  %v735 = vunpack.c.h.b16 %v176
  %v736 = vunpack.c.l.b16 %v177
  %v737 = vunpack.c.h.b16 %v177
  %v738 = vunpack.c.l.b16 %v178
  %v739 = vunpack.c.l.b16 %v179
  %v740 = vunpack.c.h.b16 %v179
  %v741 = vunpack.c.l.b16 %v180
  %v742 = vunpack.c.h.b16 %v180
  %v743 = vunpack.c.l.b16 %v181
  %v744 = vunpack.c.l.b16 %v182
  %v745 = vunpack.c.h.b16 %v182
  %v746 = vunpack.c.l.b16 %v183
  %v747 = vunpack.c.h.b16 %v183
  %v748 = vunpack.c.l.b16 %v184
  %v749 = vunpack.c.l.b16 %v185
  %v750 = vunpack.c.h.b16 %v185
  %v751 = vunpack.c.l.b16 %v186
  %v752 = vunpack.c.h.b16 %v186
  %v753 = vunpack.c.l.b16 %v187
  %v754 = vunpack.c.l.b16 %v188
  %v755 = vunpack.c.h.b16 %v188
  %v756 = vunpack.c.l.b16 %v189
  %v757 = vunpack.c.h.b16 %v189
  %v758 = vunpack.c.l.b16 %v190
  %v759 = vunpack.c.l.b16 %v191
  %v760 = vunpack.c.h.b16 %v191
  %v761 = vunpack.c.l.b16 %v192
  %v762 = vunpack.c.h.b16 %v192
  %v763 = vunpack.c.l.b16 %v193
  %v764 = vunpack.c.l.b16 %v194
  %v765 = vunpack.c.h.b16 %v194
  %v766 = vunpack.c.l.b16 %v195
  %v767 = vunpack.c.h.b16 %v195
  %v768 = vunpack.c.l.b16 %v196
  %v769 = vunpack.c.l.b16 %v197
  %v770 = vunpack.c.h.b16 %v197
  %v771 = vunpack.c.l.b16 %v198
  %v772 = vunpack.c.h.b16 %v198
  %v773 = vunpack.c.l.b16 %v199
  %v774 = vunpack.c.l.b16 %v200
  %v775 = vunpack.c.h.b16 %v200
  %v776 = vunpack.c.l.b16 %v201
  %v777 = vunpack.c.h.b16 %v201
  %v778 = vunpack.c.l.b16 %v202
  %v779 = vpack.c.b16 %v474, %v469
  %v780 = vpack.c.b16 %v475, %v470
  %v781 = vpack.c.b16 %v476, %v471
  %v782 = vpack.c.b16 %v477, %v472
  %v783 = vpack.c.b16 %v478, %v473
  %v784 = vpack.c.b16 %v484, %v479
  %v785 = vpack.c.b16 %v485, %v480
  %v786 = vpack.c.b16 %v486, %v481
  %v787 = vpack.c.b16 %v487, %v482
  %v788 = vpack.c.b16 %v488, %v483
  %v789 = vpack.c.b16 %v494, %v489
  %v790 = vpack.c.b16 %v495, %v490
  %v791 = vpack.c.b16 %v496, %v491
  %v792 = vpack.c.b16 %v497, %v492
  %v793 = vpack.c.b16 %v498, %v493
  %v794 = vpack.c.b16 %v504, %v499
  %v795 = vpack.c.b16 %v505, %v500
  %v796 = vpack.c.b16 %v506, %v501
  %v797 = vpack.c.b16 %v507, %v502
  %v798 = vpack.c.b16 %v508, %v503
  %v799 = vpack.c.b16 %v514, %v509
  %v800 = vpack.c.b16 %v515, %v510
  %v801 = vpack.c.b16 %v516, %v511
  %v802 = vpack.c.b16 %v517, %v512
  %v803 = vpack.c.b16 %v518, %v513
  %v804 = vpack.c.b16 %v524, %v519
  %v805 = vpack.c.b16 %v525, %v520
  %v806 = vpack.c.b16 %v526, %v521
  %v807 = vpack.c.b16 %v527, %v522
  %v808 = vpack.c.b16 %v528, %v523
  %v809 = vpack.c.b16 %v534, %v529
  %v810 = vpack.c.b16 %v535, %v530
  %v811 = vpack.c.b16 %v536, %v531
  %v812 = vpack.c.b16 %v537, %v532
  %v813 = vpack.c.b16 %v538, %v533
  %v814 = vpack.c.b16 %v544, %v539
  %v815 = vpack.c.b16 %v545, %v540
  %v816 = vpack.c.b16 %v546, %v541
  %v817 = vpack.c.b16 %v547, %v542
  %v818 = vpack.c.b16 %v548, %v543
  %v819 = vpack.c.b16 %v554, %v549
  %v820 = vpack.c.b16 %v555, %v550
  %v821 = vpack.c.b16 %v556, %v551
  %v822 = vpack.c.b16 %v557, %v552
  %v823 = vpack.c.b16 %v558, %v553
  %v824 = vpack.c.b16 %v564, %v559
  %v825 = vpack.c.b16 %v565, %v560
  %v826 = vpack.c.b16 %v566, %v561
  %v827 = vpack.c.b16 %v567, %v562
  %v828 = vpack.c.b16 %v568, %v563
  %v829 = vpack.c.b16 %v574, %v569
  %v830 = vpack.c.b16 %v575, %v570
  %v831 = vpack.c.b16 %v576, %v571
  %v832 = vpack.c.b16 %v577, %v572
  %v833 = vpack.c.b16 %v578, %v573
  %v834 = vpack.c.b16 %v584, %v579
  %v835 = vpack.c.b16 %v585, %v580
  %v836 = vpack.c.b16 %v586, %v581
  %v837 = vpack.c.b16 %v587, %v582
  %v838 = vpack.c.b16 %v588, %v583
  %v839 = vpack.c.b16 %v594, %v589
  %v840 = vpack.c.b16 %v595, %v590
  %v841 = vpack.c.b16 %v596, %v591
  %v842 = vpack.c.b16 %v597, %v592
  %v843 = vpack.c.b16 %v598, %v593
  %v844 = vpack.c.b16 %v604, %v599
  %v845 = vpack.c.b16 %v605, %v600
  %v846 = vpack.c.b16 %v606, %v601
  %v847 = vpack.c.b16 %v607, %v602
  %v848 = vpack.c.b16 %v608, %v603
  %v849 = vpack.c.b16 %v614, %v609
  %v850 = vpack.c.b16 %v615, %v610
  %v851 = vpack.c.b16 %v616, %v611
  %v852 = vpack.c.b16 %v617, %v612
  %v853 = vpack.c.b16 %v618, %v613
  %v854 = vpack.c.b16 %v624, %v619
  %v855 = vpack.c.b16 %v625, %v620
  %v856 = vpack.c.b16 %v626, %v621
  %v857 = vpack.c.b16 %v627, %v622
  %v858 = vpack.c.b16 %v628, %v623
  %v859 = vpack.c.b16 %v634, %v629
  %v860 = vpack.c.b16 %v635, %v630
  %v861 = vpack.c.b16 %v636, %v631
  %v862 = vpack.c.b16 %v637, %v632
  %v863 = vpack.c.b16 %v638, %v633
  %v864 = vpack.c.b16 %v644, %v639
  %v865 = vpack.c.b16 %v645, %v640
  %v866 = vpack.c.b16 %v646, %v641
  %v867 = vpack.c.b16 %v647, %v642
  %v868 = vpack.c.b16 %v648, %v643
  %v869 = vpack.c.b16 %v654, %v649
  %v870 = vpack.c.b16 %v655, %v650
  %v871 = vpack.c.b16 %v656, %v651
  %v872 = vpack.c.b16 %v657, %v652
  %v873 = vpack.c.b16 %v658, %v653
  %v874 = vpack.c.b16 %v664, %v659
  %v875 = vpack.c.b16 %v665, %v660
  %v876 = vpack.c.b16 %v666, %v661
  %v877 = vpack.c.b16 %v667, %v662
  %v878 = vpack.c.b16 %v668, %v663
  %v879 = vpack.c.b16 %v674, %v669
  %v880 = vpack.c.b16 %v675, %v670
  %v881 = vpack.c.b16 %v676, %v671
  %v882 = vpack.c.b16 %v677, %v672
  %v883 = vpack.c.b16 %v678, %v673
  %v884 = vpack.c.b16 %v684, %v679
  %v885 = vpack.c.b16 %v685, %v680
  %v886 = vpack.c.b16 %v686, %v681
  %v887 = vpack.c.b16 %v687, %v682
  %v888 = vpack.c.b16 %v688, %v683
  %v889 = vpack.c.b16 %v694, %v689
  %v890 = vpack.c.b16 %v695, %v690
  %v891 = vpack.c.b16 %v696, %v691
  %v892 = vpack.c.b16 %v697, %v692
  %v893 = vpack.c.b16 %v698, %v693
  %v894 = vpack.c.b16 %v704, %v699
  %v895 = vpack.c.b16 %v705, %v700
  %v896 = vpack.c.b16 %v706, %v701
  %v897 = vpack.c.b16 %v707, %v702
  %v898 = vpack.c.b16 %v708, %v703
  %v899 = vpack.c.b16 %v714, %v709
  %v900 = vpack.c.b16 %v715, %v710
  %v901 = vpack.c.b16 %v716, %v711
  %v902 = vpack.c.b16 %v717, %v712
  %v903 = vpack.c.b16 %v718, %v713
  %v904 = vpack.c.b16 %v724, %v719
  %v905 = vpack.c.b16 %v725, %v720
  %v906 = vpack.c.b16 %v726, %v721
  %v907 = vpack.c.b16 %v727, %v722
  %v908 = vpack.c.b16 %v728, %v723
  %v909 = vpack.c.b16 %v734, %v729
  %v910 = vpack.c.b16 %v735, %v730
  %v911 = vpack.c.b16 %v736, %v731
  %v912 = vpack.c.b16 %v737, %v732
  %v913 = vpack.c.b16 %v738, %v733
  %v914 = vpack.c.b16 %v744, %v739
  %v915 = vpack.c.b16 %v745, %v740
  %v916 = vpack.c.b16 %v746, %v741
  %v917 = vpack.c.b16 %v747, %v742
  %v918 = vpack.c.b16 %v748, %v743
  %v919 = vpack.c.b16 %v754, %v749
  %v920 = vpack.c.b16 %v755, %v750
  %v921 = vpack.c.b16 %v756, %v751
  %v922 = vpack.c.b16 %v757, %v752
  %v923 = vpack.c.b16 %v758, %v753
  %v924 = vpack.c.b16 %v764, %v759
  %v925 = vpack.c.b16 %v765, %v760
  %v926 = vpack.c.b16 %v766, %v761
  %v927 = vpack.c.b16 %v767, %v762
  %v928 = vpack.c.b16 %v768, %v763
  %v929 = vpack.c.b16 %v774, %v769
  %v930 = vpack.c.b16 %v775, %v770
  %v931 = vpack.c.b16 %v776, %v771
  %v932 = vpack.c.b16 %v777, %v772
  %v933 = vpack.c.b16 %v778, %v773
  %v1169 = vunpack.c.l.b16 %v203
  %v1170 = vunpack.c.l.b16 %v204
  %v1171 = vunpack.c.l.b16 %v205
  %v1172 = vunpack.c.l.b16 %v206
  %v1173 = vunpack.c.l.b16 %v207
  %v1174 = vunpack.c.l.b16 %v208
  %v1175 = vunpack.c.l.b16 %v209
  %v1176 = vunpack.c.l.b16 %v210
  %v1177 = vunpack.c.l.b16 %v211
  %v1178 = vunpack.c.l.b16 %v212
  %v1179 = vunpack.c.l.b16 %v213
  %v1180 = vunpack.c.l.b16 %v214
  %v1181 = vunpack.c.l.b16 %v215
  %v1182 = vunpack.c.l.b16 %v216
  %v1183 = vunpack.c.l.b16 %v217
  %v1184 = vunpack.c.l.b16 %v218
  %v1185 = vunpack.c.l.b16 %v219
  %v1186 = vunpack.c.l.b16 %v220
  %v1187 = vunpack.c.l.b16 %v221
  %v1188 = vunpack.c.l.b16 %v222
  %v1189 = vunpack.c.l.b16 %v223
  %v1190 = vunpack.c.l.b16 %v224
  %v1191 = vunpack.c.l.b16 %v225
  %v1192 = vunpack.c.l.b16 %v226
  %v1193 = vunpack.c.l.b16 %v227
  %v1194 = vunpack.c.l.b16 %v228
  %v1195 = vunpack.c.l.b16 %v229
  %v1196 = vunpack.c.l.b16 %v230
  %v1197 = vunpack.c.l.b16 %v231
  %v1198 = vunpack.c.l.b16 %v232
  %v1199 = vunpack.c.l.b16 %v233
  %v1200 = vunpack.c.l.b16 %v234
  %v1201 = vunpack.c.l.b16 %v235
  %v1202 = vunpack.c.l.b16 %v236
  %v1203 = vunpack.c.l.b16 %v237
  %v1204 = vunpack.c.l.b16 %v238
  %v1205 = vunpack.c.l.b16 %v239
  %v1206 = vunpack.c.l.b16 %v240
  %v1207 = vunpack.c.l.b16 %v241
  %v1208 = vunpack.c.l.b16 %v242
  %v1209 = vunpack.c.l.b16 %v243
  %v1210 = vunpack.c.l.b16 %v244
  %v1211 = vunpack.c.l.b16 %v245
  %v1212 = vunpack.c.l.b16 %v246
  %v1213 = vunpack.c.l.b16 %v247
  %v1214 = vunpack.c.l.b16 %v248
  %v1215 = vunpack.c.l.b16 %v249
  %v1216 = vunpack.c.l.b16 %v250
  %v1217 = vunpack.c.l.b16 %v251
  %v1218 = vunpack.c.l.b16 %v252
  %v1219 = vunpack.c.l.b16 %v253
  %v1220 = vunpack.c.l.b16 %v254
  %v1221 = vunpack.c.l.b16 %v255
  %v1222 = vunpack.c.l.b16 %v256
  %v1223 = vunpack.c.l.b16 %v257
  %v1224 = vunpack.c.l.b16 %v258
  %v1225 = vunpack.c.l.b16 %v259
  %v1226 = vunpack.c.l.b16 %v260
  %v1227 = vunpack.c.l.b16 %v261
  %v1228 = vunpack.c.l.b16 %v262
  %v1229 = vunpack.c.l.b16 %v263
  %v1230 = vunpack.c.l.b16 %v264
  %v1231 = vunpack.c.l.b16 %v265
  %v1232 = vunpack.c.l.b16 %v266
  %v1233 = vunpack.c.l.b16 %v267
  %v1234 = vunpack.c.l.b16 %v268
  %v1235 = vunpack.c.l.b16 %v269
  %v1236 = vunpack.c.l.b16 %v270
  %v1237 = vunpack.c.l.b16 %v271
  %v1238 = vunpack.c.l.b16 %v272
  %v1239 = vunpack.c.l.b16 %v273
  %v1240 = vunpack.c.l.b16 %v274
  %v1241 = vunpack.c.l.b16 %v275
  %v1242 = vunpack.c.l.b16 %v276
  %v1243 = vunpack.c.l.b16 %v277
  %v1244 = vunpack.c.l.b16 %v278
  %v1245 = vunpack.c.l.b16 %v279
  %v1246 = vunpack.c.l.b16 %v280
  %v1247 = vunpack.c.l.b16 %v281
  %v1248 = vunpack.c.l.b16 %v282
  %v1249 = vpack.c.b16 %v1170, %v1169
  %v1250 = vpack.c.b16 %v1172, %v1171
  %v1251 = vpack.c.b16 %v1174, %v1173
  %v1252 = vpack.c.b16 %v1176, %v1175
  %v1253 = vpack.c.b16 %v1178, %v1177
  %v1254 = vpack.c.b16 %v1180, %v1179
  %v1255 = vpack.c.b16 %v1182, %v1181
  %v1256 = vpack.c.b16 %v1184, %v1183
  %v1257 = vpack.c.b16 %v1186, %v1185
  %v1258 = vpack.c.b16 %v1188, %v1187
  %v1259 = vpack.c.b16 %v1190, %v1189
  %v1260 = vpack.c.b16 %v1192, %v1191
  %v1261 = vpack.c.b16 %v1194, %v1193
  %v1262 = vpack.c.b16 %v1196, %v1195
  %v1263 = vpack.c.b16 %v1198, %v1197
  %v1264 = vpack.c.b16 %v1200, %v1199
  %v1265 = vpack.c.b16 %v1202, %v1201
  %v1266 = vpack.c.b16 %v1204, %v1203
  %v1267 = vpack.c.b16 %v1206, %v1205
  %v1268 = vpack.c.b16 %v1208, %v1207
  %v1269 = vpack.c.b16 %v1210, %v1209
  %v1270 = vpack.c.b16 %v1212, %v1211
  %v1271 = vpack.c.b16 %v1214, %v1213
  %v1272 = vpack.c.b16 %v1216, %v1215
  %v1273 = vpack.c.b16 %v1218, %v1217
  %v1274 = vpack.c.b16 %v1220, %v1219
  %v1275 = vpack.c.b16 %v1222, %v1221
  %v1276 = vpack.c.b16 %v1224, %v1223
  %v1277 = vpack.c.b16 %v1226, %v1225
  %v1278 = vpack.c.b16 %v1228, %v1227
  %v1279 = vpack.c.b16 %v1230, %v1229
  %v1280 = vpack.c.b16 %v1232, %v1231
  %v1281 = vpack.c.b16 %v1234, %v1233
  %v1282 = vpack.c.b16 %v1236, %v1235
  %v1283 = vpack.c.b16 %v1238, %v1237
  %v1284 = vpack.c.b16 %v1240, %v1239
  %v1285 = vpack.c.b16 %v1242, %v1241
  %v1286 = vpack.c.b16 %v1244, %v1243
  %v1287 = vpack.c.b16 %v1246, %v1245
  %v1288 = vpack.c.b16 %v1248, %v1247
  %1329 = vmatpush.bf16.msra.mxu0 %v1256
  %1330 = vmatpush.bf16.msra.mxu0 %v1255
  %1331 = vmatpush.bf16.msra.mxu0 %v1254
  %1332 = vmatpush.bf16.msra.mxu0 %v1253
  %1333 = vmatpush.bf16.msra.mxu0 %v1252
  %1334 = vmatpush.bf16.msra.mxu0 %v1251
  %1335 = vmatpush.bf16.msra.mxu0 %v1250
  %1336 = vmatpush.bf16.msra.mxu0 %v1249
  %1337 = vmatmul.bf16.gmra.mxu0 %v779
  %v1338 = vpop.f32.mrf.mxu0
  %v1339 = vadd.f32 0.0, %v1338
  %v1340 = vpop.f32.mrf.mxu0
  %v1341 = vadd.f32 0.0, %v1340
  %1342 = vmatmul.bf16.gmra.mxu0 %v784
  %v1343 = vpop.f32.mrf.mxu0
  %v1344 = vadd.f32 0.0, %v1343
  %v1345 = vpop.f32.mrf.mxu0
  %v1346 = vadd.f32 0.0, %v1345
  %1347 = vmatmul.bf16.gmra.mxu0 %v789
  %v1348 = vpop.f32.mrf.mxu0
  %v1349 = vadd.f32 0.0, %v1348
  %v1350 = vpop.f32.mrf.mxu0
  %v1351 = vadd.f32 0.0, %v1350
  %1352 = vmatmul.bf16.gmra.mxu0 %v794
  %v1353 = vpop.f32.mrf.mxu0
  %v1354 = vadd.f32 0.0, %v1353
  %v1355 = vpop.f32.mrf.mxu0
  %v1356 = vadd.f32 0.0, %v1355
  %1357 = vmatmul.bf16.gmra.mxu0 %v799
  %v1358 = vpop.f32.mrf.mxu0
  %v1359 = vadd.f32 0.0, %v1358
  %v1360 = vpop.f32.mrf.mxu0
  %v1361 = vadd.f32 0.0, %v1360
  %1362 = vmatmul.bf16.gmra.mxu0 %v804
  %v1363 = vpop.f32.mrf.mxu0
  %v1364 = vadd.f32 0.0, %v1363
  %v1365 = vpop.f32.mrf.mxu0
  %v1366 = vadd.f32 0.0, %v1365
  %1367 = vmatmul.bf16.gmra.mxu0 %v809
  %v1368 = vpop.f32.mrf.mxu0
  %v1369 = vadd.f32 0.0, %v1368
  %v1370 = vpop.f32.mrf.mxu0
  %v1371 = vadd.f32 0.0, %v1370
  %1372 = vmatmul.bf16.gmra.mxu0 %v814
  %v1373 = vpop.f32.mrf.mxu0
  %v1374 = vadd.f32 0.0, %v1373
  %v1375 = vpop.f32.mrf.mxu0
  %v1376 = vadd.f32 0.0, %v1375
  %1377 = vmatmul.bf16.gmra.mxu0 %v819
  %v1378 = vpop.f32.mrf.mxu0
  %v1379 = vadd.f32 0.0, %v1378
  %v1380 = vpop.f32.mrf.mxu0
  %v1381 = vadd.f32 0.0, %v1380
  %1382 = vmatmul.bf16.gmra.mxu0 %v824
  %v1383 = vpop.f32.mrf.mxu0
  %v1384 = vadd.f32 0.0, %v1383
  %v1385 = vpop.f32.mrf.mxu0
  %v1386 = vadd.f32 0.0, %v1385
  %1387 = vmatmul.bf16.gmra.mxu0 %v829
  %v1388 = vpop.f32.mrf.mxu0
  %v1389 = vadd.f32 0.0, %v1388
  %v1390 = vpop.f32.mrf.mxu0
  %v1391 = vadd.f32 0.0, %v1390
  %1392 = vmatmul.bf16.gmra.mxu0 %v834
  %v1393 = vpop.f32.mrf.mxu0
  %v1394 = vadd.f32 0.0, %v1393
  %v1395 = vpop.f32.mrf.mxu0
  %v1396 = vadd.f32 0.0, %v1395
  %1397 = vmatmul.bf16.gmra.mxu0 %v839
  %v1398 = vpop.f32.mrf.mxu0
  %v1399 = vadd.f32 0.0, %v1398
  %v1400 = vpop.f32.mrf.mxu0
  %v1401 = vadd.f32 0.0, %v1400
  %1402 = vmatmul.bf16.gmra.mxu0 %v844
  %v1403 = vpop.f32.mrf.mxu0
  %v1404 = vadd.f32 0.0, %v1403
  %v1405 = vpop.f32.mrf.mxu0
  %v1406 = vadd.f32 0.0, %v1405
  %1407 = vmatmul.bf16.gmra.mxu0 %v849
  %v1408 = vpop.f32.mrf.mxu0
  %v1409 = vadd.f32 0.0, %v1408
  %v1410 = vpop.f32.mrf.mxu0
  %v1411 = vadd.f32 0.0, %v1410
  %1412 = vmatmul.bf16.gmra.mxu0 %v854
  %v1413 = vpop.f32.mrf.mxu0
  %v1414 = vadd.f32 0.0, %v1413
  %v1415 = vpop.f32.mrf.mxu0
  %v1416 = vadd.f32 0.0, %v1415
  %1417 = vmatmul.bf16.gmra.mxu0 %v859
  %v1418 = vpop.f32.mrf.mxu0
  %v1419 = vadd.f32 0.0, %v1418
  %v1420 = vpop.f32.mrf.mxu0
  %v1421 = vadd.f32 0.0, %v1420
  %1422 = vmatmul.bf16.gmra.mxu0 %v864
  %v1423 = vpop.f32.mrf.mxu0
  %v1424 = vadd.f32 0.0, %v1423
  %v1425 = vpop.f32.mrf.mxu0
  %v1426 = vadd.f32 0.0, %v1425
  %1427 = vmatmul.bf16.gmra.mxu0 %v869
  %v1428 = vpop.f32.mrf.mxu0
  %v1429 = vadd.f32 0.0, %v1428
  %v1430 = vpop.f32.mrf.mxu0
  %v1431 = vadd.f32 0.0, %v1430
  %1432 = vmatmul.bf16.gmra.mxu0 %v874
  %v1433 = vpop.f32.mrf.mxu0
  %v1434 = vadd.f32 0.0, %v1433
  %v1435 = vpop.f32.mrf.mxu0
  %v1436 = vadd.f32 0.0, %v1435
  %1437 = vmatmul.bf16.gmra.mxu0 %v879
  %v1438 = vpop.f32.mrf.mxu0
  %v1439 = vadd.f32 0.0, %v1438
  %v1440 = vpop.f32.mrf.mxu0
  %v1441 = vadd.f32 0.0, %v1440
  %1442 = vmatmul.bf16.gmra.mxu0 %v884
  %v1443 = vpop.f32.mrf.mxu0
  %v1444 = vadd.f32 0.0, %v1443
  %v1445 = vpop.f32.mrf.mxu0
  %v1446 = vadd.f32 0.0, %v1445
  %1447 = vmatmul.bf16.gmra.mxu0 %v889
  %v1448 = vpop.f32.mrf.mxu0
  %v1449 = vadd.f32 0.0, %v1448
  %v1450 = vpop.f32.mrf.mxu0
  %v1451 = vadd.f32 0.0, %v1450
  %1452 = vmatmul.bf16.gmra.mxu0 %v894
  %v1453 = vpop.f32.mrf.mxu0
  %v1454 = vadd.f32 0.0, %v1453
  %v1455 = vpop.f32.mrf.mxu0
  %v1456 = vadd.f32 0.0, %v1455
  %1457 = vmatmul.bf16.gmra.mxu0 %v899
  %v1458 = vpop.f32.mrf.mxu0
  %v1459 = vadd.f32 0.0, %v1458
  %v1460 = vpop.f32.mrf.mxu0
  %v1461 = vadd.f32 0.0, %v1460
  %1462 = vmatmul.bf16.gmra.mxu0 %v904
  %v1463 = vpop.f32.mrf.mxu0
  %v1464 = vadd.f32 0.0, %v1463
  %v1465 = vpop.f32.mrf.mxu0
  %v1466 = vadd.f32 0.0, %v1465
  %1467 = vmatmul.bf16.gmra.mxu0 %v909
  %v1468 = vpop.f32.mrf.mxu0
  %v1469 = vadd.f32 0.0, %v1468
  %v1470 = vpop.f32.mrf.mxu0
  %v1471 = vadd.f32 0.0, %v1470
  %1472 = vmatmul.bf16.gmra.mxu0 %v914
  %v1473 = vpop.f32.mrf.mxu0
  %v1474 = vadd.f32 0.0, %v1473
  %v1475 = vpop.f32.mrf.mxu0
  %v1476 = vadd.f32 0.0, %v1475
  %1477 = vmatmul.bf16.gmra.mxu0 %v919
  %v1478 = vpop.f32.mrf.mxu0
  %v1479 = vadd.f32 0.0, %v1478
  %v1480 = vpop.f32.mrf.mxu0
  %v1481 = vadd.f32 0.0, %v1480
  %1482 = vmatmul.bf16.gmra.mxu0 %v924
  %v1483 = vpop.f32.mrf.mxu0
  %v1484 = vadd.f32 0.0, %v1483
  %v1485 = vpop.f32.mrf.mxu0
  %v1486 = vadd.f32 0.0, %v1485
  %1487 = vmatmul.bf16.gmra.mxu0 %v929
  %v1488 = vpop.f32.mrf.mxu0
  %v1489 = vadd.f32 0.0, %v1488
  %v1490 = vpop.f32.mrf.mxu0
  %v1491 = vadd.f32 0.0, %v1490
  %1492 = vdwg.mxu0
  %1493 = vmatpush.bf16.msra.mxu0 %v1264
  %1494 = vmatpush.bf16.msra.mxu0 %v1263
  %1495 = vmatpush.bf16.msra.mxu0 %v1262
  %1496 = vmatpush.bf16.msra.mxu0 %v1261
  %1497 = vmatpush.bf16.msra.mxu0 %v1260
  %1498 = vmatpush.bf16.msra.mxu0 %v1259
  %1499 = vmatpush.bf16.msra.mxu0 %v1258
  %1500 = vmatpush.bf16.msra.mxu0 %v1257
  %1501 = vmatmul.bf16.gmra.mxu0 %v780
  %v1502 = vpop.f32.mrf.mxu0
  %v1503 = vadd.f32 %v1339, %v1502
  %v1504 = vpop.f32.mrf.mxu0
  %v1505 = vadd.f32 %v1341, %v1504
  %1506 = vmatmul.bf16.gmra.mxu0 %v785
  %v1507 = vpop.f32.mrf.mxu0
  %v1508 = vadd.f32 %v1344, %v1507
  %v1509 = vpop.f32.mrf.mxu0
  %v1510 = vadd.f32 %v1346, %v1509
  %1511 = vmatmul.bf16.gmra.mxu0 %v790
  %v1512 = vpop.f32.mrf.mxu0
  %v1513 = vadd.f32 %v1349, %v1512
  %v1514 = vpop.f32.mrf.mxu0
  %v1515 = vadd.f32 %v1351, %v1514
  %1516 = vmatmul.bf16.gmra.mxu0 %v795
  %v1517 = vpop.f32.mrf.mxu0
  %v1518 = vadd.f32 %v1354, %v1517
  %v1519 = vpop.f32.mrf.mxu0
  %v1520 = vadd.f32 %v1356, %v1519
  %1521 = vmatmul.bf16.gmra.mxu0 %v800
  %v1522 = vpop.f32.mrf.mxu0
  %v1523 = vadd.f32 %v1359, %v1522
  %v1524 = vpop.f32.mrf.mxu0
  %v1525 = vadd.f32 %v1361, %v1524
  %1526 = vmatmul.bf16.gmra.mxu0 %v805
  %v1527 = vpop.f32.mrf.mxu0
  %v1528 = vadd.f32 %v1364, %v1527
  %v1529 = vpop.f32.mrf.mxu0
  %v1530 = vadd.f32 %v1366, %v1529
  %1531 = vmatmul.bf16.gmra.mxu0 %v810
  %v1532 = vpop.f32.mrf.mxu0
  %v1533 = vadd.f32 %v1369, %v1532
  %v1534 = vpop.f32.mrf.mxu0
  %v1535 = vadd.f32 %v1371, %v1534
  %1536 = vmatmul.bf16.gmra.mxu0 %v815
  %v1537 = vpop.f32.mrf.mxu0
  %v1538 = vadd.f32 %v1374, %v1537
  %v1539 = vpop.f32.mrf.mxu0
  %v1540 = vadd.f32 %v1376, %v1539
  %1541 = vmatmul.bf16.gmra.mxu0 %v820
  %v1542 = vpop.f32.mrf.mxu0
  %v1543 = vadd.f32 %v1379, %v1542
  %v1544 = vpop.f32.mrf.mxu0
  %v1545 = vadd.f32 %v1381, %v1544
  %1546 = vmatmul.bf16.gmra.mxu0 %v825
  %v1547 = vpop.f32.mrf.mxu0
  %v1548 = vadd.f32 %v1384, %v1547
  %v1549 = vpop.f32.mrf.mxu0
  %v1550 = vadd.f32 %v1386, %v1549
  %1551 = vmatmul.bf16.gmra.mxu0 %v830
  %v1552 = vpop.f32.mrf.mxu0
  %v1553 = vadd.f32 %v1389, %v1552
  %v1554 = vpop.f32.mrf.mxu0
  %v1555 = vadd.f32 %v1391, %v1554
  %1556 = vmatmul.bf16.gmra.mxu0 %v835
  %v1557 = vpop.f32.mrf.mxu0
  %v1558 = vadd.f32 %v1394, %v1557
  %v1559 = vpop.f32.mrf.mxu0
  %v1560 = vadd.f32 %v1396, %v1559
  %1561 = vmatmul.bf16.gmra.mxu0 %v840
  %v1562 = vpop.f32.mrf.mxu0
  %v1563 = vadd.f32 %v1399, %v1562
  %v1564 = vpop.f32.mrf.mxu0
  %v1565 = vadd.f32 %v1401, %v1564
  %1566 = vmatmul.bf16.gmra.mxu0 %v845
  %v1567 = vpop.f32.mrf.mxu0
  %v1568 = vadd.f32 %v1404, %v1567
  %v1569 = vpop.f32.mrf.mxu0
  %v1570 = vadd.f32 %v1406, %v1569
  %1571 = vmatmul.bf16.gmra.mxu0 %v850
  %v1572 = vpop.f32.mrf.mxu0
  %v1573 = vadd.f32 %v1409, %v1572
  %v1574 = vpop.f32.mrf.mxu0
  %v1575 = vadd.f32 %v1411, %v1574
  %1576 = vmatmul.bf16.gmra.mxu0 %v855
  %v1577 = vpop.f32.mrf.mxu0
  %v1578 = vadd.f32 %v1414, %v1577
  %v1579 = vpop.f32.mrf.mxu0
  %v1580 = vadd.f32 %v1416, %v1579
  %1581 = vmatmul.bf16.gmra.mxu0 %v860
  %v1582 = vpop.f32.mrf.mxu0
  %v1583 = vadd.f32 %v1419, %v1582
  %v1584 = vpop.f32.mrf.mxu0
  %v1585 = vadd.f32 %v1421, %v1584
  %1586 = vmatmul.bf16.gmra.mxu0 %v865
  %v1587 = vpop.f32.mrf.mxu0
  %v1588 = vadd.f32 %v1424, %v1587
  %v1589 = vpop.f32.mrf.mxu0
  %v1590 = vadd.f32 %v1426, %v1589
  %1591 = vmatmul.bf16.gmra.mxu0 %v870
  %v1592 = vpop.f32.mrf.mxu0
  %v1593 = vadd.f32 %v1429, %v1592
  %v1594 = vpop.f32.mrf.mxu0
  %v1595 = vadd.f32 %v1431, %v1594
  %1596 = vmatmul.bf16.gmra.mxu0 %v875
  %v1597 = vpop.f32.mrf.mxu0
  %v1598 = vadd.f32 %v1434, %v1597
  %v1599 = vpop.f32.mrf.mxu0
  %v1600 = vadd.f32 %v1436, %v1599
  %1601 = vmatmul.bf16.gmra.mxu0 %v880
  %v1602 = vpop.f32.mrf.mxu0
  %v1603 = vadd.f32 %v1439, %v1602
  %v1604 = vpop.f32.mrf.mxu0
  %v1605 = vadd.f32 %v1441, %v1604
  %1606 = vmatmul.bf16.gmra.mxu0 %v885
  %v1607 = vpop.f32.mrf.mxu0
  %v1608 = vadd.f32 %v1444, %v1607
  %v1609 = vpop.f32.mrf.mxu0
  %v1610 = vadd.f32 %v1446, %v1609
  %1611 = vmatmul.bf16.gmra.mxu0 %v890
  %v1612 = vpop.f32.mrf.mxu0
  %v1613 = vadd.f32 %v1449, %v1612
  %v1614 = vpop.f32.mrf.mxu0
  %v1615 = vadd.f32 %v1451, %v1614
  %1616 = vmatmul.bf16.gmra.mxu0 %v895
  %v1617 = vpop.f32.mrf.mxu0
  %v1618 = vadd.f32 %v1454, %v1617
  %v1619 = vpop.f32.mrf.mxu0
  %v1620 = vadd.f32 %v1456, %v1619
  %1621 = vmatmul.bf16.gmra.mxu0 %v900
  %v1622 = vpop.f32.mrf.mxu0
  %v1623 = vadd.f32 %v1459, %v1622
  %v1624 = vpop.f32.mrf.mxu0
  %v1625 = vadd.f32 %v1461, %v1624
  %1626 = vmatmul.bf16.gmra.mxu0 %v905
  %v1627 = vpop.f32.mrf.mxu0
  %v1628 = vadd.f32 %v1464, %v1627
  %v1629 = vpop.f32.mrf.mxu0
  %v1630 = vadd.f32 %v1466, %v1629
  %1631 = vmatmul.bf16.gmra.mxu0 %v910
  %v1632 = vpop.f32.mrf.mxu0
  %v1633 = vadd.f32 %v1469, %v1632
  %v1634 = vpop.f32.mrf.mxu0
  %v1635 = vadd.f32 %v1471, %v1634
  %1636 = vmatmul.bf16.gmra.mxu0 %v915
  %v1637 = vpop.f32.mrf.mxu0
  %v1638 = vadd.f32 %v1474, %v1637
  %v1639 = vpop.f32.mrf.mxu0
  %v1640 = vadd.f32 %v1476, %v1639
  %1641 = vmatmul.bf16.gmra.mxu0 %v920
  %v1642 = vpop.f32.mrf.mxu0
  %v1643 = vadd.f32 %v1479, %v1642
  %v1644 = vpop.f32.mrf.mxu0
  %v1645 = vadd.f32 %v1481, %v1644
  %1646 = vmatmul.bf16.gmra.mxu0 %v925
  %v1647 = vpop.f32.mrf.mxu0
  %v1648 = vadd.f32 %v1484, %v1647
  %v1649 = vpop.f32.mrf.mxu0
  %v1650 = vadd.f32 %v1486, %v1649
  %1651 = vmatmul.bf16.gmra.mxu0 %v930
  %v1652 = vpop.f32.mrf.mxu0
  %v1653 = vadd.f32 %v1489, %v1652
  %v1654 = vpop.f32.mrf.mxu0
  %v1655 = vadd.f32 %v1491, %v1654
  %1656 = vdwg.mxu0
  %1657 = vmatpush.bf16.msra.mxu0 %v1272
  %1658 = vmatpush.bf16.msra.mxu0 %v1271
  %1659 = vmatpush.bf16.msra.mxu0 %v1270
  %1660 = vmatpush.bf16.msra.mxu0 %v1269
  %1661 = vmatpush.bf16.msra.mxu0 %v1268
  %1662 = vmatpush.bf16.msra.mxu0 %v1267
  %1663 = vmatpush.bf16.msra.mxu0 %v1266
  %1664 = vmatpush.bf16.msra.mxu0 %v1265
  %1665 = vmatmul.bf16.gmra.mxu0 %v781
  %v1666 = vpop.f32.mrf.mxu0
  %v1667 = vadd.f32 %v1503, %v1666
  %v1668 = vpop.f32.mrf.mxu0
  %v1669 = vadd.f32 %v1505, %v1668
  %1670 = vmatmul.bf16.gmra.mxu0 %v786
  %v1671 = vpop.f32.mrf.mxu0
  %v1672 = vadd.f32 %v1508, %v1671
  %v1673 = vpop.f32.mrf.mxu0
  %v1674 = vadd.f32 %v1510, %v1673
  %1675 = vmatmul.bf16.gmra.mxu0 %v791
  %v1676 = vpop.f32.mrf.mxu0
  %v1677 = vadd.f32 %v1513, %v1676
  %v1678 = vpop.f32.mrf.mxu0
  %v1679 = vadd.f32 %v1515, %v1678
  %1680 = vmatmul.bf16.gmra.mxu0 %v796
  %v1681 = vpop.f32.mrf.mxu0
  %v1682 = vadd.f32 %v1518, %v1681
  %v1683 = vpop.f32.mrf.mxu0
  %v1684 = vadd.f32 %v1520, %v1683
  %1685 = vmatmul.bf16.gmra.mxu0 %v801
  %v1686 = vpop.f32.mrf.mxu0
  %v1687 = vadd.f32 %v1523, %v1686
  %v1688 = vpop.f32.mrf.mxu0
  %v1689 = vadd.f32 %v1525, %v1688
  %1690 = vmatmul.bf16.gmra.mxu0 %v806
  %v1691 = vpop.f32.mrf.mxu0
  %v1692 = vadd.f32 %v1528, %v1691
  %v1693 = vpop.f32.mrf.mxu0
  %v1694 = vadd.f32 %v1530, %v1693
  %1695 = vmatmul.bf16.gmra.mxu0 %v811
  %v1696 = vpop.f32.mrf.mxu0
  %v1697 = vadd.f32 %v1533, %v1696
  %v1698 = vpop.f32.mrf.mxu0
  %v1699 = vadd.f32 %v1535, %v1698
  %1700 = vmatmul.bf16.gmra.mxu0 %v816
  %v1701 = vpop.f32.mrf.mxu0
  %v1702 = vadd.f32 %v1538, %v1701
  %v1703 = vpop.f32.mrf.mxu0
  %v1704 = vadd.f32 %v1540, %v1703
  %1705 = vmatmul.bf16.gmra.mxu0 %v821
  %v1706 = vpop.f32.mrf.mxu0
  %v1707 = vadd.f32 %v1543, %v1706
  %v1708 = vpop.f32.mrf.mxu0
  %v1709 = vadd.f32 %v1545, %v1708
  %1710 = vmatmul.bf16.gmra.mxu0 %v826
  %v1711 = vpop.f32.mrf.mxu0
  %v1712 = vadd.f32 %v1548, %v1711
  %v1713 = vpop.f32.mrf.mxu0
  %v1714 = vadd.f32 %v1550, %v1713
  %1715 = vmatmul.bf16.gmra.mxu0 %v831
  %v1716 = vpop.f32.mrf.mxu0
  %v1717 = vadd.f32 %v1553, %v1716
  %v1718 = vpop.f32.mrf.mxu0
  %v1719 = vadd.f32 %v1555, %v1718
  %1720 = vmatmul.bf16.gmra.mxu0 %v836
  %v1721 = vpop.f32.mrf.mxu0
  %v1722 = vadd.f32 %v1558, %v1721
  %v1723 = vpop.f32.mrf.mxu0
  %v1724 = vadd.f32 %v1560, %v1723
  %1725 = vmatmul.bf16.gmra.mxu0 %v841
  %v1726 = vpop.f32.mrf.mxu0
  %v1727 = vadd.f32 %v1563, %v1726
  %v1728 = vpop.f32.mrf.mxu0
  %v1729 = vadd.f32 %v1565, %v1728
  %1730 = vmatmul.bf16.gmra.mxu0 %v846
  %v1731 = vpop.f32.mrf.mxu0
  %v1732 = vadd.f32 %v1568, %v1731
  %v1733 = vpop.f32.mrf.mxu0
  %v1734 = vadd.f32 %v1570, %v1733
  %1735 = vmatmul.bf16.gmra.mxu0 %v851
  %v1736 = vpop.f32.mrf.mxu0
  %v1737 = vadd.f32 %v1573, %v1736
  %v1738 = vpop.f32.mrf.mxu0
  %v1739 = vadd.f32 %v1575, %v1738
  %1740 = vmatmul.bf16.gmra.mxu0 %v856
  %v1741 = vpop.f32.mrf.mxu0
  %v1742 = vadd.f32 %v1578, %v1741
  %v1743 = vpop.f32.mrf.mxu0
  %v1744 = vadd.f32 %v1580, %v1743
  %1745 = vmatmul.bf16.gmra.mxu0 %v861
  %v1746 = vpop.f32.mrf.mxu0
  %v1747 = vadd.f32 %v1583, %v1746
  %v1748 = vpop.f32.mrf.mxu0
  %v1749 = vadd.f32 %v1585, %v1748
  %1750 = vmatmul.bf16.gmra.mxu0 %v866
  %v1751 = vpop.f32.mrf.mxu0
  %v1752 = vadd.f32 %v1588, %v1751
  %v1753 = vpop.f32.mrf.mxu0
  %v1754 = vadd.f32 %v1590, %v1753
  %1755 = vmatmul.bf16.gmra.mxu0 %v871
  %v1756 = vpop.f32.mrf.mxu0
  %v1757 = vadd.f32 %v1593, %v1756
  %v1758 = vpop.f32.mrf.mxu0
  %v1759 = vadd.f32 %v1595, %v1758
  %1760 = vmatmul.bf16.gmra.mxu0 %v876
  %v1761 = vpop.f32.mrf.mxu0
  %v1762 = vadd.f32 %v1598, %v1761
  %v1763 = vpop.f32.mrf.mxu0
  %v1764 = vadd.f32 %v1600, %v1763
  %1765 = vmatmul.bf16.gmra.mxu0 %v881
  %v1766 = vpop.f32.mrf.mxu0
  %v1767 = vadd.f32 %v1603, %v1766
  %v1768 = vpop.f32.mrf.mxu0
  %v1769 = vadd.f32 %v1605, %v1768
  %1770 = vmatmul.bf16.gmra.mxu0 %v886
  %v1771 = vpop.f32.mrf.mxu0
  %v1772 = vadd.f32 %v1608, %v1771
  %v1773 = vpop.f32.mrf.mxu0
  %v1774 = vadd.f32 %v1610, %v1773
  %1775 = vmatmul.bf16.gmra.mxu0 %v891
  %v1776 = vpop.f32.mrf.mxu0
  %v1777 = vadd.f32 %v1613, %v1776
  %v1778 = vpop.f32.mrf.mxu0
  %v1779 = vadd.f32 %v1615, %v1778
  %1780 = vmatmul.bf16.gmra.mxu0 %v896
  %v1781 = vpop.f32.mrf.mxu0
  %v1782 = vadd.f32 %v1618, %v1781
  %v1783 = vpop.f32.mrf.mxu0
  %v1784 = vadd.f32 %v1620, %v1783
  %1785 = vmatmul.bf16.gmra.mxu0 %v901
  %v1786 = vpop.f32.mrf.mxu0
  %v1787 = vadd.f32 %v1623, %v1786
  %v1788 = vpop.f32.mrf.mxu0
  %v1789 = vadd.f32 %v1625, %v1788
  %1790 = vmatmul.bf16.gmra.mxu0 %v906
  %v1791 = vpop.f32.mrf.mxu0
  %v1792 = vadd.f32 %v1628, %v1791
  %v1793 = vpop.f32.mrf.mxu0
  %v1794 = vadd.f32 %v1630, %v1793
  %1795 = vmatmul.bf16.gmra.mxu0 %v911
  %v1796 = vpop.f32.mrf.mxu0
  %v1797 = vadd.f32 %v1633, %v1796
  %v1798 = vpop.f32.mrf.mxu0
  %v1799 = vadd.f32 %v1635, %v1798
  %1800 = vmatmul.bf16.gmra.mxu0 %v916
  %v1801 = vpop.f32.mrf.mxu0
  %v1802 = vadd.f32 %v1638, %v1801
  %v1803 = vpop.f32.mrf.mxu0
  %v1804 = vadd.f32 %v1640, %v1803
  %1805 = vmatmul.bf16.gmra.mxu0 %v921
  %v1806 = vpop.f32.mrf.mxu0
  %v1807 = vadd.f32 %v1643, %v1806
  %v1808 = vpop.f32.mrf.mxu0
  %v1809 = vadd.f32 %v1645, %v1808
  %1810 = vmatmul.bf16.gmra.mxu0 %v926
  %v1811 = vpop.f32.mrf.mxu0
  %v1812 = vadd.f32 %v1648, %v1811
  %v1813 = vpop.f32.mrf.mxu0
  %v1814 = vadd.f32 %v1650, %v1813
  %1815 = vmatmul.bf16.gmra.mxu0 %v931
  %v1816 = vpop.f32.mrf.mxu0
  %v1817 = vadd.f32 %v1653, %v1816
  %v1818 = vpop.f32.mrf.mxu0
  %v1819 = vadd.f32 %v1655, %v1818
  %1820 = vdwg.mxu0
  %1821 = vmatpush.bf16.msra.mxu0 %v1280
  %1822 = vmatpush.bf16.msra.mxu0 %v1279
  %1823 = vmatpush.bf16.msra.mxu0 %v1278
  %1824 = vmatpush.bf16.msra.mxu0 %v1277
  %1825 = vmatpush.bf16.msra.mxu0 %v1276
  %1826 = vmatpush.bf16.msra.mxu0 %v1275
  %1827 = vmatpush.bf16.msra.mxu0 %v1274
  %1828 = vmatpush.bf16.msra.mxu0 %v1273
  %1829 = vmatmul.bf16.gmra.mxu0 %v782
  %v1830 = vpop.f32.mrf.mxu0
  %v1831 = vadd.f32 %v1667, %v1830
  %v1832 = vpop.f32.mrf.mxu0
  %v1833 = vadd.f32 %v1669, %v1832
  %1834 = vmatmul.bf16.gmra.mxu0 %v787
  %v1835 = vpop.f32.mrf.mxu0
  %v1836 = vadd.f32 %v1672, %v1835
  %v1837 = vpop.f32.mrf.mxu0
  %v1838 = vadd.f32 %v1674, %v1837
  %1839 = vmatmul.bf16.gmra.mxu0 %v792
  %v1840 = vpop.f32.mrf.mxu0
  %v1841 = vadd.f32 %v1677, %v1840
  %v1842 = vpop.f32.mrf.mxu0
  %v1843 = vadd.f32 %v1679, %v1842
  %1844 = vmatmul.bf16.gmra.mxu0 %v797
  %v1845 = vpop.f32.mrf.mxu0
  %v1846 = vadd.f32 %v1682, %v1845
  %v1847 = vpop.f32.mrf.mxu0
  %v1848 = vadd.f32 %v1684, %v1847
  %1849 = vmatmul.bf16.gmra.mxu0 %v802
  %v1850 = vpop.f32.mrf.mxu0
  %v1851 = vadd.f32 %v1687, %v1850
  %v1852 = vpop.f32.mrf.mxu0
  %v1853 = vadd.f32 %v1689, %v1852
  %1854 = vmatmul.bf16.gmra.mxu0 %v807
  %v1855 = vpop.f32.mrf.mxu0
  %v1856 = vadd.f32 %v1692, %v1855
  %v1857 = vpop.f32.mrf.mxu0
  %v1858 = vadd.f32 %v1694, %v1857
  %1859 = vmatmul.bf16.gmra.mxu0 %v812
  %v1860 = vpop.f32.mrf.mxu0
  %v1861 = vadd.f32 %v1697, %v1860
  %v1862 = vpop.f32.mrf.mxu0
  %v1863 = vadd.f32 %v1699, %v1862
  %1864 = vmatmul.bf16.gmra.mxu0 %v817
  %v1865 = vpop.f32.mrf.mxu0
  %v1866 = vadd.f32 %v1702, %v1865
  %v1867 = vpop.f32.mrf.mxu0
  %v1868 = vadd.f32 %v1704, %v1867
  %1869 = vmatmul.bf16.gmra.mxu0 %v822
  %v1870 = vpop.f32.mrf.mxu0
  %v1871 = vadd.f32 %v1707, %v1870
  %v1872 = vpop.f32.mrf.mxu0
  %v1873 = vadd.f32 %v1709, %v1872
  %1874 = vmatmul.bf16.gmra.mxu0 %v827
  %v1875 = vpop.f32.mrf.mxu0
  %v1876 = vadd.f32 %v1712, %v1875
  %v1877 = vpop.f32.mrf.mxu0
  %v1878 = vadd.f32 %v1714, %v1877
  %1879 = vmatmul.bf16.gmra.mxu0 %v832
  %v1880 = vpop.f32.mrf.mxu0
  %v1881 = vadd.f32 %v1717, %v1880
  %v1882 = vpop.f32.mrf.mxu0
  %v1883 = vadd.f32 %v1719, %v1882
  %1884 = vmatmul.bf16.gmra.mxu0 %v837
  %v1885 = vpop.f32.mrf.mxu0
  %v1886 = vadd.f32 %v1722, %v1885
  %v1887 = vpop.f32.mrf.mxu0
  %v1888 = vadd.f32 %v1724, %v1887
  %1889 = vmatmul.bf16.gmra.mxu0 %v842
  %v1890 = vpop.f32.mrf.mxu0
  %v1891 = vadd.f32 %v1727, %v1890
  %v1892 = vpop.f32.mrf.mxu0
  %v1893 = vadd.f32 %v1729, %v1892
  %1894 = vmatmul.bf16.gmra.mxu0 %v847
  %v1895 = vpop.f32.mrf.mxu0
  %v1896 = vadd.f32 %v1732, %v1895
  %v1897 = vpop.f32.mrf.mxu0
  %v1898 = vadd.f32 %v1734, %v1897
  %1899 = vmatmul.bf16.gmra.mxu0 %v852
  %v1900 = vpop.f32.mrf.mxu0
  %v1901 = vadd.f32 %v1737, %v1900
  %v1902 = vpop.f32.mrf.mxu0
  %v1903 = vadd.f32 %v1739, %v1902
  %1904 = vmatmul.bf16.gmra.mxu0 %v857
  %v1905 = vpop.f32.mrf.mxu0
  %v1906 = vadd.f32 %v1742, %v1905
  %v1907 = vpop.f32.mrf.mxu0
  %v1908 = vadd.f32 %v1744, %v1907
  %1909 = vmatmul.bf16.gmra.mxu0 %v862
  %v1910 = vpop.f32.mrf.mxu0
  %v1911 = vadd.f32 %v1747, %v1910
  %v1912 = vpop.f32.mrf.mxu0
  %v1913 = vadd.f32 %v1749, %v1912
  %1914 = vmatmul.bf16.gmra.mxu0 %v867
  %v1915 = vpop.f32.mrf.mxu0
  %v1916 = vadd.f32 %v1752, %v1915
  %v1917 = vpop.f32.mrf.mxu0
  %v1918 = vadd.f32 %v1754, %v1917
  %1919 = vmatmul.bf16.gmra.mxu0 %v872
  %v1920 = vpop.f32.mrf.mxu0
  %v1921 = vadd.f32 %v1757, %v1920
  %v1922 = vpop.f32.mrf.mxu0
  %v1923 = vadd.f32 %v1759, %v1922
  %1924 = vmatmul.bf16.gmra.mxu0 %v877
  %v1925 = vpop.f32.mrf.mxu0
  %v1926 = vadd.f32 %v1762, %v1925
  %v1927 = vpop.f32.mrf.mxu0
  %v1928 = vadd.f32 %v1764, %v1927
  %1929 = vmatmul.bf16.gmra.mxu0 %v882
  %v1930 = vpop.f32.mrf.mxu0
  %v1931 = vadd.f32 %v1767, %v1930
  %v1932 = vpop.f32.mrf.mxu0
  %v1933 = vadd.f32 %v1769, %v1932
  %1934 = vmatmul.bf16.gmra.mxu0 %v887
  %v1935 = vpop.f32.mrf.mxu0
  %v1936 = vadd.f32 %v1772, %v1935
  %v1937 = vpop.f32.mrf.mxu0
  %v1938 = vadd.f32 %v1774, %v1937
  %1939 = vmatmul.bf16.gmra.mxu0 %v892
  %v1940 = vpop.f32.mrf.mxu0
  %v1941 = vadd.f32 %v1777, %v1940
  %v1942 = vpop.f32.mrf.mxu0
  %v1943 = vadd.f32 %v1779, %v1942
  %1944 = vmatmul.bf16.gmra.mxu0 %v897
  %v1945 = vpop.f32.mrf.mxu0
  %v1946 = vadd.f32 %v1782, %v1945
  %v1947 = vpop.f32.mrf.mxu0
  %v1948 = vadd.f32 %v1784, %v1947
  %1949 = vmatmul.bf16.gmra.mxu0 %v902
  %v1950 = vpop.f32.mrf.mxu0
  %v1951 = vadd.f32 %v1787, %v1950
  %v1952 = vpop.f32.mrf.mxu0
  %v1953 = vadd.f32 %v1789, %v1952
  %1954 = vmatmul.bf16.gmra.mxu0 %v907
  %v1955 = vpop.f32.mrf.mxu0
  %v1956 = vadd.f32 %v1792, %v1955
  %v1957 = vpop.f32.mrf.mxu0
  %v1958 = vadd.f32 %v1794, %v1957
  %1959 = vmatmul.bf16.gmra.mxu0 %v912
  %v1960 = vpop.f32.mrf.mxu0
  %v1961 = vadd.f32 %v1797, %v1960
  %v1962 = vpop.f32.mrf.mxu0
  %v1963 = vadd.f32 %v1799, %v1962
  %1964 = vmatmul.bf16.gmra.mxu0 %v917
  %v1965 = vpop.f32.mrf.mxu0
  %v1966 = vadd.f32 %v1802, %v1965
  %v1967 = vpop.f32.mrf.mxu0
  %v1968 = vadd.f32 %v1804, %v1967
  %1969 = vmatmul.bf16.gmra.mxu0 %v922
  %v1970 = vpop.f32.mrf.mxu0
  %v1971 = vadd.f32 %v1807, %v1970
  %v1972 = vpop.f32.mrf.mxu0
  %v1973 = vadd.f32 %v1809, %v1972
  %1974 = vmatmul.bf16.gmra.mxu0 %v927
  %v1975 = vpop.f32.mrf.mxu0
  %v1976 = vadd.f32 %v1812, %v1975
  %v1977 = vpop.f32.mrf.mxu0
  %v1978 = vadd.f32 %v1814, %v1977
  %1979 = vmatmul.bf16.gmra.mxu0 %v932
  %v1980 = vpop.f32.mrf.mxu0
  %v1981 = vadd.f32 %v1817, %v1980
  %v1982 = vpop.f32.mrf.mxu0
  %v1983 = vadd.f32 %v1819, %v1982
  %1984 = vdwg.mxu0
  %1985 = vmatpush.bf16.msra.mxu0 %v1288
  %1986 = vmatpush.bf16.msra.mxu0 %v1287
  %1987 = vmatpush.bf16.msra.mxu0 %v1286
  %1988 = vmatpush.bf16.msra.mxu0 %v1285
  %1989 = vmatpush.bf16.msra.mxu0 %v1284
  %1990 = vmatpush.bf16.msra.mxu0 %v1283
  %1991 = vmatpush.bf16.msra.mxu0 %v1282
  %1992 = vmatpush.bf16.msra.mxu0 %v1281
  %1993 = vmatmul.bf16.gmra.mxu0 %v783
  %v1994 = vpop.f32.mrf.mxu0
  %v1995 = vadd.f32 %v1831, %v1994
  %v1996 = vpop.f32.mrf.mxu0
  %v1997 = vadd.f32 %v1833, %v1996
  %1998 = vmatmul.bf16.gmra.mxu0 %v788
  %v1999 = vpop.f32.mrf.mxu0
  %v2000 = vadd.f32 %v1836, %v1999
  %v2001 = vpop.f32.mrf.mxu0
  %v2002 = vadd.f32 %v1838, %v2001
  %2003 = vmatmul.bf16.gmra.mxu0 %v793
  %v2004 = vpop.f32.mrf.mxu0
  %v2005 = vadd.f32 %v1841, %v2004
  %v2006 = vpop.f32.mrf.mxu0
  %v2007 = vadd.f32 %v1843, %v2006
  %2008 = vmatmul.bf16.gmra.mxu0 %v798
  %v2009 = vpop.f32.mrf.mxu0
  %v2010 = vadd.f32 %v1846, %v2009
  %v2011 = vpop.f32.mrf.mxu0
  %v2012 = vadd.f32 %v1848, %v2011
  %2013 = vmatmul.bf16.gmra.mxu0 %v803
  %v2014 = vpop.f32.mrf.mxu0
  %v2015 = vadd.f32 %v1851, %v2014
  %v2016 = vpop.f32.mrf.mxu0
  %v2017 = vadd.f32 %v1853, %v2016
  %2018 = vmatmul.bf16.gmra.mxu0 %v808
  %v2019 = vpop.f32.mrf.mxu0
  %v2020 = vadd.f32 %v1856, %v2019
  %v2021 = vpop.f32.mrf.mxu0
  %v2022 = vadd.f32 %v1858, %v2021
  %2023 = vmatmul.bf16.gmra.mxu0 %v813
  %v2024 = vpop.f32.mrf.mxu0
  %v2025 = vadd.f32 %v1861, %v2024
  %v2026 = vpop.f32.mrf.mxu0
  %v2027 = vadd.f32 %v1863, %v2026
  %2028 = vmatmul.bf16.gmra.mxu0 %v818
  %v2029 = vpop.f32.mrf.mxu0
  %v2030 = vadd.f32 %v1866, %v2029
  %v2031 = vpop.f32.mrf.mxu0
  %v2032 = vadd.f32 %v1868, %v2031
  %2033 = vmatmul.bf16.gmra.mxu0 %v823
  %v2034 = vpop.f32.mrf.mxu0
  %v2035 = vadd.f32 %v1871, %v2034
  %v2036 = vpop.f32.mrf.mxu0
  %v2037 = vadd.f32 %v1873, %v2036
  %2038 = vmatmul.bf16.gmra.mxu0 %v828
  %v2039 = vpop.f32.mrf.mxu0
  %v2040 = vadd.f32 %v1876, %v2039
  %v2041 = vpop.f32.mrf.mxu0
  %v2042 = vadd.f32 %v1878, %v2041
  %2043 = vmatmul.bf16.gmra.mxu0 %v833
  %v2044 = vpop.f32.mrf.mxu0
  %v2045 = vadd.f32 %v1881, %v2044
  %v2046 = vpop.f32.mrf.mxu0
  %v2047 = vadd.f32 %v1883, %v2046
  %2048 = vmatmul.bf16.gmra.mxu0 %v838
  %v2049 = vpop.f32.mrf.mxu0
  %v2050 = vadd.f32 %v1886, %v2049
  %v2051 = vpop.f32.mrf.mxu0
  %v2052 = vadd.f32 %v1888, %v2051
  %2053 = vmatmul.bf16.gmra.mxu0 %v843
  %v2054 = vpop.f32.mrf.mxu0
  %v2055 = vadd.f32 %v1891, %v2054
  %v2056 = vpop.f32.mrf.mxu0
  %v2057 = vadd.f32 %v1893, %v2056
  %2058 = vmatmul.bf16.gmra.mxu0 %v848
  %v2059 = vpop.f32.mrf.mxu0
  %v2060 = vadd.f32 %v1896, %v2059
  %v2061 = vpop.f32.mrf.mxu0
  %v2062 = vadd.f32 %v1898, %v2061
  %2063 = vmatmul.bf16.gmra.mxu0 %v853
  %v2064 = vpop.f32.mrf.mxu0
  %v2065 = vadd.f32 %v1901, %v2064
  %v2066 = vpop.f32.mrf.mxu0
  %v2067 = vadd.f32 %v1903, %v2066
  %2068 = vmatmul.bf16.gmra.mxu0 %v858
  %v2069 = vpop.f32.mrf.mxu0
  %v2070 = vadd.f32 %v1906, %v2069
  %v2071 = vpop.f32.mrf.mxu0
  %v2072 = vadd.f32 %v1908, %v2071
  %2073 = vmatmul.bf16.gmra.mxu0 %v863
  %v2074 = vpop.f32.mrf.mxu0
  %v2075 = vadd.f32 %v1911, %v2074
  %v2076 = vpop.f32.mrf.mxu0
  %v2077 = vadd.f32 %v1913, %v2076
  %2078 = vmatmul.bf16.gmra.mxu0 %v868
  %v2079 = vpop.f32.mrf.mxu0
  %v2080 = vadd.f32 %v1916, %v2079
  %v2081 = vpop.f32.mrf.mxu0
  %v2082 = vadd.f32 %v1918, %v2081
  %2083 = vmatmul.bf16.gmra.mxu0 %v873
  %v2084 = vpop.f32.mrf.mxu0
  %v2085 = vadd.f32 %v1921, %v2084
  %v2086 = vpop.f32.mrf.mxu0
  %v2087 = vadd.f32 %v1923, %v2086
  %2088 = vmatmul.bf16.gmra.mxu0 %v878
  %v2089 = vpop.f32.mrf.mxu0
  %v2090 = vadd.f32 %v1926, %v2089
  %v2091 = vpop.f32.mrf.mxu0
  %v2092 = vadd.f32 %v1928, %v2091
  %2093 = vmatmul.bf16.gmra.mxu0 %v883
  %v2094 = vpop.f32.mrf.mxu0
  %v2095 = vadd.f32 %v1931, %v2094
  %v2096 = vpop.f32.mrf.mxu0
  %v2097 = vadd.f32 %v1933, %v2096
  %2098 = vmatmul.bf16.gmra.mxu0 %v888
  %v2099 = vpop.f32.mrf.mxu0
  %v2100 = vadd.f32 %v1936, %v2099
  %v2101 = vpop.f32.mrf.mxu0
  %v2102 = vadd.f32 %v1938, %v2101
  %2103 = vmatmul.bf16.gmra.mxu0 %v893
  %v2104 = vpop.f32.mrf.mxu0
  %v2105 = vadd.f32 %v1941, %v2104
  %v2106 = vpop.f32.mrf.mxu0
  %v2107 = vadd.f32 %v1943, %v2106
  %2108 = vmatmul.bf16.gmra.mxu0 %v898
  %v2109 = vpop.f32.mrf.mxu0
  %v2110 = vadd.f32 %v1946, %v2109
  %v2111 = vpop.f32.mrf.mxu0
  %v2112 = vadd.f32 %v1948, %v2111
  %2113 = vmatmul.bf16.gmra.mxu0 %v903
  %v2114 = vpop.f32.mrf.mxu0
  %v2115 = vadd.f32 %v1951, %v2114
  %v2116 = vpop.f32.mrf.mxu0
  %v2117 = vadd.f32 %v1953, %v2116
  %2118 = vmatmul.bf16.gmra.mxu0 %v908
  %v2119 = vpop.f32.mrf.mxu0
  %v2120 = vadd.f32 %v1956, %v2119
  %v2121 = vpop.f32.mrf.mxu0
  %v2122 = vadd.f32 %v1958, %v2121
  %2123 = vmatmul.bf16.gmra.mxu0 %v913
  %v2124 = vpop.f32.mrf.mxu0
  %v2125 = vadd.f32 %v1961, %v2124
  %v2126 = vpop.f32.mrf.mxu0
  %v2127 = vadd.f32 %v1963, %v2126
  %2128 = vmatmul.bf16.gmra.mxu0 %v918
  %v2129 = vpop.f32.mrf.mxu0
  %v2130 = vadd.f32 %v1966, %v2129
  %v2131 = vpop.f32.mrf.mxu0
  %v2132 = vadd.f32 %v1968, %v2131
  %2133 = vmatmul.bf16.gmra.mxu0 %v923
  %v2134 = vpop.f32.mrf.mxu0
  %v2135 = vadd.f32 %v1971, %v2134
  %v2136 = vpop.f32.mrf.mxu0
  %v2137 = vadd.f32 %v1973, %v2136
  %2138 = vmatmul.bf16.gmra.mxu0 %v928
  %v2139 = vpop.f32.mrf.mxu0
  %v2140 = vadd.f32 %v1976, %v2139
  %v2141 = vpop.f32.mrf.mxu0
  %v2142 = vadd.f32 %v1978, %v2141
  %2143 = vmatmul.bf16.gmra.mxu0 %v933
  %v2144 = vpop.f32.mrf.mxu0
  %v2145 = vadd.f32 %v1981, %v2144
  %v2146 = vpop.f32.mrf.mxu0
  %v2147 = vadd.f32 %v1983, %v2146
  %2148 = vdwg.mxu0
  %v2149 = vld [vmem:[%s2] sm:$0x1]
  %v2150 = vld [vmem:[%s3] sm:$0x1]
  %v2152 = vperm.slane %v2149, 0
  %v2154 = vmul.f32 %v1995, %v2152
  %v2155 = vmul.f32 %v1997, %v2152
  %v2156 = vmul.f32 %v2000, %v2152
  %v2157 = vmul.f32 %v2002, %v2152
  %v2158 = vmul.f32 %v2005, %v2152
  %v2159 = vmul.f32 %v2007, %v2152
  %v2160 = vmul.f32 %v2010, %v2152
  %v2161 = vmul.f32 %v2012, %v2152
  %v2162 = vmul.f32 %v2015, %v2152
  %v2163 = vmul.f32 %v2017, %v2152
  %v2164 = vmul.f32 %v2020, %v2152
  %v2165 = vmul.f32 %v2022, %v2152
  %v2166 = vmul.f32 %v2025, %v2152
  %v2167 = vmul.f32 %v2027, %v2152
  %v2168 = vmul.f32 %v2030, %v2152
  %v2169 = vmul.f32 %v2032, %v2152
  %v2170 = vmul.f32 %v2035, %v2152
  %v2171 = vmul.f32 %v2037, %v2152
  %v2172 = vmul.f32 %v2040, %v2152
  %v2173 = vmul.f32 %v2042, %v2152
  %v2174 = vmul.f32 %v2045, %v2152
  %v2175 = vmul.f32 %v2047, %v2152
  %v2176 = vmul.f32 %v2050, %v2152
  %v2177 = vmul.f32 %v2052, %v2152
  %v2178 = vmul.f32 %v2055, %v2152
  %v2179 = vmul.f32 %v2057, %v2152
  %v2180 = vmul.f32 %v2060, %v2152
  %v2181 = vmul.f32 %v2062, %v2152
  %v2182 = vmul.f32 %v2065, %v2152
  %v2183 = vmul.f32 %v2067, %v2152
  %v2184 = vmul.f32 %v2070, %v2152
  %v2185 = vmul.f32 %v2072, %v2152
  %v2186 = vmul.f32 %v2075, %v2152
  %v2187 = vmul.f32 %v2077, %v2152
  %v2188 = vmul.f32 %v2080, %v2152
  %v2189 = vmul.f32 %v2082, %v2152
  %v2190 = vmul.f32 %v2085, %v2152
  %v2191 = vmul.f32 %v2087, %v2152
  %v2192 = vmul.f32 %v2090, %v2152
  %v2193 = vmul.f32 %v2092, %v2152
  %v2194 = vmul.f32 %v2095, %v2152
  %v2195 = vmul.f32 %v2097, %v2152
  %v2196 = vmul.f32 %v2100, %v2152
  %v2197 = vmul.f32 %v2102, %v2152
  %v2198 = vmul.f32 %v2105, %v2152
  %v2199 = vmul.f32 %v2107, %v2152
  %v2200 = vmul.f32 %v2110, %v2152
  %v2201 = vmul.f32 %v2112, %v2152
  %v2202 = vmul.f32 %v2115, %v2152
  %v2203 = vmul.f32 %v2117, %v2152
  %v2204 = vmul.f32 %v2120, %v2152
  %v2205 = vmul.f32 %v2122, %v2152
  %v2206 = vmul.f32 %v2125, %v2152
  %v2207 = vmul.f32 %v2127, %v2152
  %v2208 = vmul.f32 %v2130, %v2152
  %v2209 = vmul.f32 %v2132, %v2152
  %v2210 = vmul.f32 %v2135, %v2152
  %v2211 = vmul.f32 %v2137, %v2152
  %v2212 = vmul.f32 %v2140, %v2152
  %v2213 = vmul.f32 %v2142, %v2152
  %v2214 = vmul.f32 %v2145, %v2152
  %v2215 = vmul.f32 %v2147, %v2152
  %v2217 = vperm.slane %v2150, 0
  %v2219 = vadd.f32 %v2154, %v2217
  %v2220 = vadd.f32 %v2155, %v2217
  %v2221 = vadd.f32 %v2156, %v2217
  %v2222 = vadd.f32 %v2157, %v2217
  %v2223 = vadd.f32 %v2158, %v2217
  %v2224 = vadd.f32 %v2159, %v2217
  %v2225 = vadd.f32 %v2160, %v2217
  %v2226 = vadd.f32 %v2161, %v2217
  %v2227 = vadd.f32 %v2162, %v2217
  %v2228 = vadd.f32 %v2163, %v2217
  %v2229 = vadd.f32 %v2164, %v2217
  %v2230 = vadd.f32 %v2165, %v2217
  %v2231 = vadd.f32 %v2166, %v2217
  %v2232 = vadd.f32 %v2167, %v2217
  %v2233 = vadd.f32 %v2168, %v2217
  %v2234 = vadd.f32 %v2169, %v2217
  %v2235 = vadd.f32 %v2170, %v2217
  %v2236 = vadd.f32 %v2171, %v2217
  %v2237 = vadd.f32 %v2172, %v2217
  %v2238 = vadd.f32 %v2173, %v2217
  %v2239 = vadd.f32 %v2174, %v2217
  %v2240 = vadd.f32 %v2175, %v2217
  %v2241 = vadd.f32 %v2176, %v2217
  %v2242 = vadd.f32 %v2177, %v2217
  %v2243 = vadd.f32 %v2178, %v2217
  %v2244 = vadd.f32 %v2179, %v2217
  %v2245 = vadd.f32 %v2180, %v2217
  %v2246 = vadd.f32 %v2181, %v2217
  %v2247 = vadd.f32 %v2182, %v2217
  %v2248 = vadd.f32 %v2183, %v2217
  %v2249 = vadd.f32 %v2184, %v2217
  %v2250 = vadd.f32 %v2185, %v2217
  %v2251 = vadd.f32 %v2186, %v2217
  %v2252 = vadd.f32 %v2187, %v2217
  %v2253 = vadd.f32 %v2188, %v2217
  %v2254 = vadd.f32 %v2189, %v2217
  %v2255 = vadd.f32 %v2190, %v2217
  %v2256 = vadd.f32 %v2191, %v2217
  %v2257 = vadd.f32 %v2192, %v2217
  %v2258 = vadd.f32 %v2193, %v2217
  %v2259 = vadd.f32 %v2194, %v2217
  %v2260 = vadd.f32 %v2195, %v2217
  %v2261 = vadd.f32 %v2196, %v2217
  %v2262 = vadd.f32 %v2197, %v2217
  %v2263 = vadd.f32 %v2198, %v2217
  %v2264 = vadd.f32 %v2199, %v2217
  %v2265 = vadd.f32 %v2200, %v2217
  %v2266 = vadd.f32 %v2201, %v2217
  %v2267 = vadd.f32 %v2202, %v2217
  %v2268 = vadd.f32 %v2203, %v2217
  %v2269 = vadd.f32 %v2204, %v2217
  %v2270 = vadd.f32 %v2205, %v2217
  %v2271 = vadd.f32 %v2206, %v2217
  %v2272 = vadd.f32 %v2207, %v2217
  %v2273 = vadd.f32 %v2208, %v2217
  %v2274 = vadd.f32 %v2209, %v2217
  %v2275 = vadd.f32 %v2210, %v2217
  %v2276 = vadd.f32 %v2211, %v2217
  %v2277 = vadd.f32 %v2212, %v2217
  %v2278 = vadd.f32 %v2213, %v2217
  %v2279 = vadd.f32 %v2214, %v2217
  %v2280 = vadd.f32 %v2215, %v2217
  %v2281 = vmax.f32 %v2219, 0.0
  %v2282 = vmax.f32 %v2220, 0.0
  %v2283 = vmax.f32 %v2221, 0.0
  %v2284 = vmax.f32 %v2222, 0.0
  %v2285 = vmax.f32 %v2223, 0.0
  %v2286 = vmax.f32 %v2224, 0.0
  %v2287 = vmax.f32 %v2225, 0.0
  %v2288 = vmax.f32 %v2226, 0.0
  %v2289 = vmax.f32 %v2227, 0.0
  %v2290 = vmax.f32 %v2228, 0.0
  %v2291 = vmax.f32 %v2229, 0.0
  %v2292 = vmax.f32 %v2230, 0.0
  %v2293 = vmax.f32 %v2231, 0.0
  %v2294 = vmax.f32 %v2232, 0.0
  %v2295 = vmax.f32 %v2233, 0.0
  %v2296 = vmax.f32 %v2234, 0.0
  %v2297 = vmax.f32 %v2235, 0.0
  %v2298 = vmax.f32 %v2236, 0.0
  %v2299 = vmax.f32 %v2237, 0.0
  %v2300 = vmax.f32 %v2238, 0.0
  %v2301 = vmax.f32 %v2239, 0.0
  %v2302 = vmax.f32 %v2240, 0.0
  %v2303 = vmax.f32 %v2241, 0.0
  %v2304 = vmax.f32 %v2242, 0.0
  %v2305 = vmax.f32 %v2243, 0.0
  %v2306 = vmax.f32 %v2244, 0.0
  %v2307 = vmax.f32 %v2245, 0.0
  %v2308 = vmax.f32 %v2246, 0.0
  %v2309 = vmax.f32 %v2247, 0.0
  %v2310 = vmax.f32 %v2248, 0.0
  %v2311 = vmax.f32 %v2249, 0.0
  %v2312 = vmax.f32 %v2250, 0.0
  %v2313 = vmax.f32 %v2251, 0.0
  %v2314 = vmax.f32 %v2252, 0.0
  %v2315 = vmax.f32 %v2253, 0.0
  %v2316 = vmax.f32 %v2254, 0.0
  %v2317 = vmax.f32 %v2255, 0.0
  %v2318 = vmax.f32 %v2256, 0.0
  %v2319 = vmax.f32 %v2257, 0.0
  %v2320 = vmax.f32 %v2258, 0.0
  %v2321 = vmax.f32 %v2259, 0.0
  %v2322 = vmax.f32 %v2260, 0.0
  %v2323 = vmax.f32 %v2261, 0.0
  %v2324 = vmax.f32 %v2262, 0.0
  %v2325 = vmax.f32 %v2263, 0.0
  %v2326 = vmax.f32 %v2264, 0.0
  %v2327 = vmax.f32 %v2265, 0.0
  %v2328 = vmax.f32 %v2266, 0.0
  %v2329 = vmax.f32 %v2267, 0.0
  %v2330 = vmax.f32 %v2268, 0.0
  %v2331 = vmax.f32 %v2269, 0.0
  %v2332 = vmax.f32 %v2270, 0.0
  %v2333 = vmax.f32 %v2271, 0.0
  %v2334 = vmax.f32 %v2272, 0.0
  %v2335 = vmax.f32 %v2273, 0.0
  %v2336 = vmax.f32 %v2274, 0.0
  %v2337 = vmax.f32 %v2275, 0.0
  %v2338 = vmax.f32 %v2276, 0.0
  %v2339 = vmax.f32 %v2277, 0.0
  %v2340 = vmax.f32 %v2278, 0.0
  %v2341 = vmax.f32 %v2279, 0.0
  %v2342 = vmax.f32 %v2280, 0.0
  %v2343 = vpack.c.bf16 %v2281, %v2281
  %v2344 = vpack.c.bf16 %v2282, %v2282
  %v2345 = vpack.c.bf16 %v2283, %v2283
  %v2346 = vpack.c.bf16 %v2284, %v2284
  %v2347 = vpack.c.bf16 %v2285, %v2285
  %v2348 = vpack.c.bf16 %v2286, %v2286
  %v2349 = vpack.c.bf16 %v2287, %v2287
  %v2350 = vpack.c.bf16 %v2288, %v2288
  %v2351 = vpack.c.bf16 %v2289, %v2289
  %v2352 = vpack.c.bf16 %v2290, %v2290
  %v2353 = vpack.c.bf16 %v2291, %v2291
  %v2354 = vpack.c.bf16 %v2292, %v2292
  %v2355 = vpack.c.bf16 %v2293, %v2293
  %v2356 = vpack.c.bf16 %v2294, %v2294
  %v2357 = vpack.c.bf16 %v2295, %v2295
  %v2358 = vpack.c.bf16 %v2296, %v2296
  %v2359 = vpack.c.bf16 %v2297, %v2297
  %v2360 = vpack.c.bf16 %v2298, %v2298
  %v2361 = vpack.c.bf16 %v2299, %v2299
  %v2362 = vpack.c.bf16 %v2300, %v2300
  %v2363 = vpack.c.bf16 %v2301, %v2301
  %v2364 = vpack.c.bf16 %v2302, %v2302
  %v2365 = vpack.c.bf16 %v2303, %v2303
  %v2366 = vpack.c.bf16 %v2304, %v2304
  %v2367 = vpack.c.bf16 %v2305, %v2305
  %v2368 = vpack.c.bf16 %v2306, %v2306
  %v2369 = vpack.c.bf16 %v2307, %v2307
  %v2370 = vpack.c.bf16 %v2308, %v2308
  %v2371 = vpack.c.bf16 %v2309, %v2309
  %v2372 = vpack.c.bf16 %v2310, %v2310
  %v2373 = vpack.c.bf16 %v2311, %v2311
  %v2374 = vpack.c.bf16 %v2312, %v2312
  %v2375 = vpack.c.bf16 %v2313, %v2313
  %v2376 = vpack.c.bf16 %v2314, %v2314
  %v2377 = vpack.c.bf16 %v2315, %v2315
  %v2378 = vpack.c.bf16 %v2316, %v2316
  %v2379 = vpack.c.bf16 %v2317, %v2317
  %v2380 = vpack.c.bf16 %v2318, %v2318
  %v2381 = vpack.c.bf16 %v2319, %v2319
  %v2382 = vpack.c.bf16 %v2320, %v2320
  %v2383 = vpack.c.bf16 %v2321, %v2321
  %v2384 = vpack.c.bf16 %v2322, %v2322
  %v2385 = vpack.c.bf16 %v2323, %v2323
  %v2386 = vpack.c.bf16 %v2324, %v2324
  %v2387 = vpack.c.bf16 %v2325, %v2325
  %v2388 = vpack.c.bf16 %v2326, %v2326
  %v2389 = vpack.c.bf16 %v2327, %v2327
  %v2390 = vpack.c.bf16 %v2328, %v2328
  %v2391 = vpack.c.bf16 %v2329, %v2329
  %v2392 = vpack.c.bf16 %v2330, %v2330
  %v2393 = vpack.c.bf16 %v2331, %v2331
  %v2394 = vpack.c.bf16 %v2332, %v2332
  %v2395 = vpack.c.bf16 %v2333, %v2333
  %v2396 = vpack.c.bf16 %v2334, %v2334
  %v2397 = vpack.c.bf16 %v2335, %v2335
  %v2398 = vpack.c.bf16 %v2336, %v2336
  %v2399 = vpack.c.bf16 %v2337, %v2337
  %v2400 = vpack.c.bf16 %v2338, %v2338
  %v2401 = vpack.c.bf16 %v2339, %v2339
  %v2402 = vpack.c.bf16 %v2340, %v2340
  %v2403 = vpack.c.bf16 %v2341, %v2341
  %v2404 = vpack.c.bf16 %v2342, %v2342
  %2405 = vst [vmem:[%s4] sm:$0xf] %v2343
  %2406 = vst [vmem:[%s4 + $0x4] sm:$0xf] %v2344
  %2407 = vst [vmem:[%s4 + $0x8] sm:$0xf] %v2345
  %2408 = vst [vmem:[%s4 + $0xc] sm:$0xf] %v2346
  %2409 = vst [vmem:[%s4 + $0x10] sm:$0xf] %v2347
  %2410 = vst [vmem:[%s4 + $0x14] sm:$0xf] %v2348
  %2411 = vst [vmem:[%s4 + $0x18] sm:$0xf] %v2349
  %2412 = vst [vmem:[%s4 + $0x1c] sm:$0xf] %v2350
  %2413 = vst [vmem:[%s4 + $0x20] sm:$0xf] %v2351
  %2414 = vst [vmem:[%s4 + $0x24] sm:$0xf] %v2352
  %2415 = vst [vmem:[%s4 + $0x28] sm:$0xf] %v2353
  %2416 = vst [vmem:[%s4 + $0x2c] sm:$0xf] %v2354
  %2417 = vst [vmem:[%s4 + $0x30] sm:$0xf] %v2355
  %2418 = vst [vmem:[%s4 + $0x34] sm:$0xf] %v2356
  %2419 = vst [vmem:[%s4 + $0x38] sm:$0xf] %v2357
  %2420 = vst [vmem:[%s4 + $0x3c] sm:$0xf] %v2358
  %2421 = vst [vmem:[%s4 + $0x40] sm:$0xf] %v2359
  %2422 = vst [vmem:[%s4 + $0x44] sm:$0xf] %v2360
  %2423 = vst [vmem:[%s4 + $0x48] sm:$0xf] %v2361
  %2424 = vst [vmem:[%s4 + $0x4c] sm:$0xf] %v2362
  %2425 = vst [vmem:[%s4 + $0x50] sm:$0xf] %v2363
  %2426 = vst [vmem:[%s4 + $0x54] sm:$0xf] %v2364
  %2427 = vst [vmem:[%s4 + $0x58] sm:$0xf] %v2365
  %2428 = vst [vmem:[%s4 + $0x5c] sm:$0xf] %v2366
  %2429 = vst [vmem:[%s4 + $0x60] sm:$0xf] %v2367
  %2430 = vst [vmem:[%s4 + $0x64] sm:$0xf] %v2368
  %2431 = vst [vmem:[%s4 + $0x68] sm:$0xf] %v2369
  %2432 = vst [vmem:[%s4 + $0x6c] sm:$0xf] %v2370
  %2433 = vst [vmem:[%s4 + $0x70] sm:$0xf] %v2371
  %2434 = vst [vmem:[%s4 + $0x74] sm:$0xf] %v2372
  %2435 = vst [vmem:[%s4 + $0x78] sm:$0xf] %v2373
  %2436 = vst [vmem:[%s4 + $0x7c] sm:$0xf] %v2374
  %2437 = vst [vmem:[%s4 + $0x80] sm:$0xf] %v2375
  %2438 = vst [vmem:[%s4 + $0x84] sm:$0xf] %v2376
  %2439 = vst [vmem:[%s4 + $0x88] sm:$0xf] %v2377
  %2440 = vst [vmem:[%s4 + $0x8c] sm:$0xf] %v2378
  %2441 = vst [vmem:[%s4 + $0x90] sm:$0xf] %v2379
  %2442 = vst [vmem:[%s4 + $0x94] sm:$0xf] %v2380
  %2443 = vst [vmem:[%s4 + $0x98] sm:$0xf] %v2381
  %2444 = vst [vmem:[%s4 + $0x9c] sm:$0xf] %v2382
  %2445 = vst [vmem:[%s4 + $0xa0] sm:$0xf] %v2383
  %2446 = vst [vmem:[%s4 + $0xa4] sm:$0xf] %v2384
  %2447 = vst [vmem:[%s4 + $0xa8] sm:$0xf] %v2385
  %2448 = vst [vmem:[%s4 + $0xac] sm:$0xf] %v2386
  %2449 = vst [vmem:[%s4 + $0xb0] sm:$0xf] %v2387
  %2450 = vst [vmem:[%s4 + $0xb4] sm:$0xf] %v2388
  %2451 = vst [vmem:[%s4 + $0xb8] sm:$0xf] %v2389
  %2452 = vst [vmem:[%s4 + $0xbc] sm:$0xf] %v2390
  %2453 = vst [vmem:[%s4 + $0xc0] sm:$0xf] %v2391
  %2454 = vst [vmem:[%s4 + $0xc4] sm:$0xf] %v2392
  %2455 = vst [vmem:[%s4 + $0xc8] sm:$0xf] %v2393
  %2456 = vst [vmem:[%s4 + $0xcc] sm:$0xf] %v2394
  %2457 = vst [vmem:[%s4 + $0xd0] sm:$0xf] %v2395
  %2458 = vst [vmem:[%s4 + $0xd4] sm:$0xf] %v2396
  %2459 = vst [vmem:[%s4 + $0xd8] sm:$0xf] %v2397
  %2460 = vst [vmem:[%s4 + $0xdc] sm:$0xf] %v2398
  %2461 = vst [vmem:[%s4 + $0xe0] sm:$0xf] %v2399
  %2462 = vst [vmem:[%s4 + $0xe4] sm:$0xf] %v2400
  %2463 = vst [vmem:[%s4 + $0xe8] sm:$0xf] %v2401
  %2464 = vst [vmem:[%s4 + $0xec] sm:$0xf] %v2402
  %2465 = vst [vmem:[%s4 + $0xf0] sm:$0xf] %v2403
  %2466 = vst [vmem:[%s4 + $0xf4] sm:$0xf] %v2404
  // Predicated region
  $region18: #{cnn_forward.8} parent=0 // pred_check
    _
  $region19: #{cnn_forward.8} parent=0 // pred_check_branch
    %2468 = sbr.rel (0) target = $region21
  $region20: #{cnn_forward.8} parent=0 // pred_region
    _
  $region21: #{cnn_forward.8} parent=0 // pred_fallthru
    _
  // Predicated region
  $region22: #{cnn_forward.8} parent=0 // pred_check
    _
  $region23: #{cnn_forward.8} parent=0 // pred_check_branch
    %2470 = sbr.rel (0) target = $region25
  $region24: #{cnn_forward.8} parent=0 // pred_region
    _
  $region25: #{cnn_forward.8} parent=0 // pred_fallthru
    _

// kernel: cnn_forward.9
$region0: #{cnn_forward.9}
  #allocation0 [shape = 'u32[]', space=smem, size = 0x4, offset = 0x4, fixed_abs, tag = 'smem constant byte address 0x4 - core index']
  #allocation1 [shape = 'u32[72,128]{1,0:T(1,128)}', space=vmem, size = 0x9000, scoped, tag = 'internal scratch']
  #allocation2 [shape = 'f32[16,512]{1,0:T(8,128)}', space=vmem, size = 0x8000, scoped, tag = 'scratch operand']
  %s0 = inlined_call_operand.vmem [shape: bf16[16,15488], index: 0, kind: input, shape index: {}]
  %s1 = inlined_call_operand.vmem [shape: bf16[15488,1024], index: 1, kind: input, shape index: {}]
  %s2 = inlined_call_operand.vmem [shape: f32[1,1024], index: 2, kind: input, shape index: {}]
  %s3 = inlined_call_operand.vmem [shape: f32[1,1024], index: 3, kind: input, shape index: {}]
  %s4 = inlined_call_operand.vmem [shape: f32[16,1024], index: 4, kind: output, shape index: {}]
  %s5 = sld [smem:[#allocation0]]
  $region125: #{cnn_forward.9} parent=0
    _
  %s7 = ssub.s32 1, %s5
  %s8 = scalar_select 0, %s7, %s5
  $region1: #{cnn_forward.9} parent=0
    #allocation3 [shape = 'u8[90112]{0}', space=vmem, size = 0x16000, scoped, tag = 'input window, operand 0']
    #allocation4 [shape = 'u8[2883584]{0}', space=vmem, size = 0x2c0000, scoped, tag = 'input window, operand 1']
    #allocation5 [shape = 'u8[65536]{0}', space=vmem, size = 0x10000, scoped, tag = 'output window, operand 0']
    loop: start=0, step=1, limit=24
    $region2: #{cnn_forward.9} parent=1 // loop_pre_header
      _
    $region3: #{cnn_forward.9} parent=1 // loop_header
      %s10 = sphi 0, %s14
      %p11 = scmp.ge.s32.totalorder %s10, 24
      %s17 = sphi 0, %s36
      %s18 = sphi 0, %s32
      %s19 = sphi 0, %s28
      %s20 = sphi 0, %s17
      %s21 = sphi 0, %s18
      %s22 = sphi 0, %s19
      %s23 = sphi 0, %s20
      %s24 = sphi 0, %s21
      %s25 = sphi 0, %s22
      %s41 = sphi 0, %s43
      %s44 = sphi 0, %s41
      %s45 = sphi 0, %s44
      %s61 = sphi 0, %s45
      %s69 = sphi 0, %s71
      %s72 = sphi 0, %s69
      %s73 = sphi 0, %s72
      %s89 = sphi 0, %s73
      %s95 = sphi 0, %s97
      %s98 = sphi 0, %s95
      %s99 = sphi 0, %s98
      %s115 = sphi 0, %s99
      %s121 = sphi 0, %s123
      %s124 = sphi 0, %s121
      %s125 = sphi 0, %s124
      %s141 = sphi 0, %s125
      %s149 = sphi 0, %s151
      %s152 = sphi 0, %s149
      %s153 = sphi 0, %s152
      %s169 = sphi 0, %s153
    $region4: #{cnn_forward.9} parent=1 // loop_header_branch
      %13 = sbr.rel (%p11) target = $region8
    $region5: #{cnn_forward.9} parent=1 // loop_body
      %s15 = ssub.s32 %s10, 1
      %s16 = ssub.s32 %s10, 2
      %s26 = sadd.s32 1, %s19
      %p27 = scmp.ge.s32.totalorder %s26, 11
      %s28 = scalar_select %p27, 0, %s26
      %s29 = sadd.s32 1, %s18
      %s30 = scalar_select %p27, %s29, %s18
      %p31 = scmp.ge.s32.totalorder %s30, 2
      %s32 = scalar_select %p31, 0, %s30
      %s33 = sadd.s32 1, %s17
      %s34 = scalar_select %p31, %s33, %s17
      %p35 = scmp.ge.s32.totalorder %s34, 1
      %s36 = scalar_select %p35, 0, %s34
      %s37 = ssub.s32 %s17, %s36
      %s38 = ssub.s32 %s19, %s28
      %s39 = sor.u32 %s37, %s38
      %p40 = scmp.eq.s32.totalorder %s39, 0
      %s42 = sadd.s32 %s41, 1
      %s43 = scalar_select %p40, %s41, %s42
      %p46 = pneg %p40
      %p47 = scmp.eq.s32.totalorder %s10, 21
      %p48 = por %p46, %p47
      %p49 = scmp.ne.s32.totalorder %s41, %s44
      %p50 = scmp.eq.s32.totalorder %s10, 0
      %p51 = por %p49, %p50
      %p52 = scmp.ne.s32.totalorder %s41, %s44
      %p53 = scmp.eq.s32.totalorder %s15, 21
      %p54 = por %p52, %p53
      %p55 = scmp.ne.s32.totalorder %s44, %s45
      %p56 = scmp.eq.s32.totalorder %s15, 0
      %p57 = por %p55, %p56
      %p58 = scmp.ne.s32.totalorder %s44, %s45
      %p59 = scmp.eq.s32.totalorder %s16, 21
      %p60 = por %p58, %p59
      %p62 = scmp.ne.s32.totalorder %s45, %s61
      %p63 = scmp.eq.s32.totalorder %s16, 0
      %p64 = por %p62, %p63
      %s65 = ssub.s32 %s19, %s28
      %s66 = ssub.s32 %s18, %s32
      %s67 = sor.u32 %s65, %s66
      %p68 = scmp.eq.s32.totalorder %s67, 0
      %s70 = sadd.s32 %s69, 1
      %s71 = scalar_select %p68, %s69, %s70
      %p74 = pneg %p68
      %p75 = scmp.eq.s32.totalorder %s10, 21
      %p76 = por %p74, %p75
      %p77 = scmp.ne.s32.totalorder %s69, %s72
      %p78 = scmp.eq.s32.totalorder %s10, 0
      %p79 = por %p77, %p78
      %p80 = scmp.ne.s32.totalorder %s69, %s72
      %p81 = scmp.eq.s32.totalorder %s15, 21
      %p82 = por %p80, %p81
      %p83 = scmp.ne.s32.totalorder %s72, %s73
      %p84 = scmp.eq.s32.totalorder %s15, 0
      %p85 = por %p83, %p84
      %p86 = scmp.ne.s32.totalorder %s72, %s73
      %p87 = scmp.eq.s32.totalorder %s16, 21
      %p88 = por %p86, %p87
      %p90 = scmp.ne.s32.totalorder %s73, %s89
      %p91 = scmp.eq.s32.totalorder %s16, 0
      %p92 = por %p90, %p91
      %s93 = ssub.s32 %s18, %s32
      %p94 = scmp.eq.s32.totalorder %s93, 0
      %s96 = sadd.s32 %s95, 1
      %s97 = scalar_select %p94, %s95, %s96
      %p100 = pneg %p94
      %p101 = scmp.eq.s32.totalorder %s10, 21
      %p102 = por %p100, %p101
      %p103 = scmp.ne.s32.totalorder %s95, %s98
      %p104 = scmp.eq.s32.totalorder %s10, 0
      %p105 = por %p103, %p104
      %p106 = scmp.ne.s32.totalorder %s95, %s98
      %p107 = scmp.eq.s32.totalorder %s15, 21
      %p108 = por %p106, %p107
      %p109 = scmp.ne.s32.totalorder %s98, %s99
      %p110 = scmp.eq.s32.totalorder %s15, 0
      %p111 = por %p109, %p110
      %p112 = scmp.ne.s32.totalorder %s98, %s99
      %p113 = scmp.eq.s32.totalorder %s16, 21
      %p114 = por %p112, %p113
      %p116 = scmp.ne.s32.totalorder %s99, %s115
      %p117 = scmp.eq.s32.totalorder %s16, 0
      %p118 = por %p116, %p117
      %s119 = ssub.s32 %s18, %s32
      %p120 = scmp.eq.s32.totalorder %s119, 0
      %s122 = sadd.s32 %s121, 1
      %s123 = scalar_select %p120, %s121, %s122
      %p126 = pneg %p120
      %p127 = scmp.eq.s32.totalorder %s10, 21
      %p128 = por %p126, %p127
      %p129 = scmp.ne.s32.totalorder %s121, %s124
      %p130 = scmp.eq.s32.totalorder %s10, 0
      %p131 = por %p129, %p130
      %p132 = scmp.ne.s32.totalorder %s121, %s124
      %p133 = scmp.eq.s32.totalorder %s15, 21
      %p134 = por %p132, %p133
      %p135 = scmp.ne.s32.totalorder %s124, %s125
      %p136 = scmp.eq.s32.totalorder %s15, 0
      %p137 = por %p135, %p136
      %p138 = scmp.ne.s32.totalorder %s124, %s125
      %p139 = scmp.eq.s32.totalorder %s16, 21
      %p140 = por %p138, %p139
      %p142 = scmp.ne.s32.totalorder %s125, %s141
      %p143 = scmp.eq.s32.totalorder %s16, 0
      %p144 = por %p142, %p143
      %s145 = ssub.s32 %s17, %s36
      %s146 = ssub.s32 %s18, %s32
      %s147 = sor.u32 %s145, %s146
      %p148 = scmp.eq.s32.totalorder %s147, 0
      %s150 = sadd.s32 %s149, 1
      %s151 = scalar_select %p148, %s149, %s150
      %p154 = pneg %p148
      %p155 = scmp.eq.s32.totalorder %s10, 21
      %p156 = por %p154, %p155
      %p157 = scmp.ne.s32.totalorder %s149, %s152
      %p158 = scmp.eq.s32.totalorder %s10, 0
      %p159 = por %p157, %p158
      %p160 = scmp.ne.s32.totalorder %s149, %s152
      %p161 = scmp.eq.s32.totalorder %s15, 21
      %p162 = por %p160, %p161
      %p163 = scmp.ne.s32.totalorder %s152, %s153
      %p164 = scmp.eq.s32.totalorder %s15, 0
      %p165 = por %p163, %p164
      %p166 = scmp.ne.s32.totalorder %s152, %s153
      %p167 = scmp.eq.s32.totalorder %s16, 21
      %p168 = por %p166, %p167
      %p170 = scmp.ne.s32.totalorder %s153, %s169
      %p171 = scmp.eq.s32.totalorder %s16, 0
      %p172 = por %p170, %p171
      %p173 = scmp.le.s32.totalorder 1, %s10
      %p174 = scmp.lt.s32.totalorder %s10, 23
      %p175 = pnand %p173, %p174
      %p176 = pneg %p175
      // Predicated region
      $region9: #{cnn_forward.9} parent=5 // pred_check
        _
      $region10: #{cnn_forward.9} parent=5 // pred_check_branch
        %178 = sbr.rel (%p175) target = $region12
      $region11: #{cnn_forward.9} parent=5 // pred_region
        %s179 = ssub.s32 %s10, 1
      $region12: #{cnn_forward.9} parent=5 // pred_fallthru
        _
      %p180 = scmp.lt.s32.totalorder %s10, 22
      // Predicated region
      $region13: #{cnn_forward.9} parent=5 // pred_check
        %p181 = pneg %p180
      $region14: #{cnn_forward.9} parent=5 // pred_check_branch
        %183 = sbr.rel (%p181) target = $region16
      $region15: #{cnn_forward.9} parent=5 // pred_region
        // Predicated region
        $region17: #{cnn_forward.9} parent=15 // pred_check
          %p184 = pneg %p51
        $region18: #{cnn_forward.9} parent=15 // pred_check_branch
          %186 = sbr.rel (%p184) target = $region20
        $region19: #{cnn_forward.9} parent=15 // pred_region
          %s187 = sand.u32 %s41, 1
          %s188 = sand.u32 %s41, 1
          %s189 = smul.addr %s188, 88
          %s190 = scalar_lea.vmem [#allocation3], %s189
          %s191 = smul.u32 2, %s17
          %s192 = smul.u32 11, %s19
          %s193 = smul.addr %s191, 121
          %s194 = sadd.s32 %s192, %s193
          %s195 = smul.addr %s194, 4
          %s196 = scalar_lea.vmem %s0, %s195
          // Predicated region
          $region21: #{cnn_forward.9} parent=19 // pred_check
            _
          $region22: #{cnn_forward.9} parent=19 // pred_check_branch
            %198 = sbr.rel (0) target = $region24
          $region23: #{cnn_forward.9} parent=19 // pred_region
            // Predicated region
            $region25: #{cnn_forward.9} parent=23 // pred_check
              _
            $region26: #{cnn_forward.9} parent=23 // pred_check_branch
              %200 = sbr.rel (0) target = $region28
            $region27: #{cnn_forward.9} parent=23 // pred_region
              %s201 = scalar_lea.vmem %s196, 40
              %s202 = scalar_lea.vmem %s190, 40 [#allocation3]
              loop: start=0, step=1, limit=1
              $region29: #{cnn_forward.9} parent=27 // loop_pre_header
                _
              $region30: #{cnn_forward.9} parent=27 // loop_header
                %s204 = sphi 0, %s208
                %p205 = scmp.ge.s32.totalorder %s204, 1
                %s209 = sphi %s196, %s196
                %s210 = sphi %s190, %s190
              $region31: #{cnn_forward.9} parent=27 // loop_header_branch
                %207 = sbr.rel (%p205) target = $region35
              $region32: #{cnn_forward.9} parent=27 // loop_body
                %v211 = vld [vmem:[%s209] sm:$0xff]
                %212 = vst [vmem:[%s210] sm:$0xff] %v211
                %v213 = vld [vmem:[%s209 + $0x8] sm:$0xff]
                %214 = vst [vmem:[%s210 + $0x8] sm:$0xff] %v213
                %v215 = vld [vmem:[%s209 + $0x10] sm:$0xff]
                %216 = vst [vmem:[%s210 + $0x10] sm:$0xff] %v215
                %v217 = vld [vmem:[%s209 + $0x18] sm:$0xff]
                %218 = vst [vmem:[%s210 + $0x18] sm:$0xff] %v217
                %v219 = vld [vmem:[%s209 + $0x20] sm:$0xff]
                %220 = vst [vmem:[%s210 + $0x20] sm:$0xff] %v219
                %v221 = vld [vmem:[%s209 + $0x1e4] sm:$0xff]
                %222 = vst [vmem:[%s210 + $0x2c] sm:$0xff] %v221
                %v223 = vld [vmem:[%s209 + $0x1ec] sm:$0xff]
                %224 = vst [vmem:[%s210 + $0x34] sm:$0xff] %v223
                %v225 = vld [vmem:[%s209 + $0x1f4] sm:$0xff]
                %226 = vst [vmem:[%s210 + $0x3c] sm:$0xff] %v225
                %v227 = vld [vmem:[%s209 + $0x1fc] sm:$0xff]
                %228 = vst [vmem:[%s210 + $0x44] sm:$0xff] %v227
                %v229 = vld [vmem:[%s209 + $0x204] sm:$0xff]
                %230 = vst [vmem:[%s210 + $0x4c] sm:$0xff] %v229
              $region33: #{cnn_forward.9} parent=27 // loop_footer
                %s208 = sadd.s32 1, %s204
              $region34: #{cnn_forward.9} parent=27 // loop_footer_branch
                %203 = sbr.rel target = $region30
              $region35: #{cnn_forward.9} parent=27 // loop_exit
                _
              %s232 = ssub.s32 16, 1
              loop: start=0, step=1, limit=1
              $region36: #{cnn_forward.9} parent=27 // loop_pre_header
                _
              $region37: #{cnn_forward.9} parent=27 // loop_header
                %s234 = sphi 0, %s238
                %p235 = scmp.ge.s32.totalorder %s234, 1
                %s239 = sphi %s201, %s201
                %s240 = sphi %s202, %s202
              $region38: #{cnn_forward.9} parent=27 // loop_header_branch
                %237 = sbr.rel (%p235) target = $region42
              $region39: #{cnn_forward.9} parent=27 // loop_body
                %v241 = vld [vmem:[%s239] sm:%s232]
                %242 = vst [vmem:[%s240] sm:%s232] %v241
                %v243 = vld [vmem:[%s239 + $0x1e4] sm:%s232]
                %244 = vst [vmem:[%s240 + $0x2c] sm:%s232] %v243
              $region40: #{cnn_forward.9} parent=27 // loop_footer
                %s238 = sadd.s32 1, %s234
              $region41: #{cnn_forward.9} parent=27 // loop_footer_branch
                %233 = sbr.rel target = $region37
              $region42: #{cnn_forward.9} parent=27 // loop_exit
                _
            $region28: #{cnn_forward.9} parent=23 // pred_fallthru
              _
          $region24: #{cnn_forward.9} parent=19 // pred_fallthru
            _
          %245 = vnop
        $region20: #{cnn_forward.9} parent=15 // pred_fallthru
          _
        // Predicated region
        $region43: #{cnn_forward.9} parent=15 // pred_check
          %p246 = pneg %p79
        $region44: #{cnn_forward.9} parent=15 // pred_check_branch
          %248 = sbr.rel (%p246) target = $region46
        $region45: #{cnn_forward.9} parent=15 // pred_region
          %s249 = sand.u32 %s69, 1
          %s250 = sand.u32 %s69, 1
          %s251 = smul.addr %s250, 2816
          %s252 = scalar_lea.vmem [#allocation4], %s251
          %s253 = smul.u32 176, %s19
          %s254 = smul.u32 4, %s18
          %s255 = smul.addr %s253, 8
          %s256 = sadd.s32 %s254, %s255
          %s257 = smul.addr %s256, 4
          %s258 = scalar_lea.vmem %s1, %s257
          // Predicated region
          $region47: #{cnn_forward.9} parent=45 // pred_check
            _
          $region48: #{cnn_forward.9} parent=45 // pred_check_branch
            %260 = sbr.rel (0) target = $region50
          $region49: #{cnn_forward.9} parent=45 // pred_region
            // Predicated region
            $region51: #{cnn_forward.9} parent=49 // pred_check
              _
            $region52: #{cnn_forward.9} parent=49 // pred_check_branch
              %262 = sbr.rel (0) target = $region54
            $region53: #{cnn_forward.9} parent=49 // pred_region
              loop: start=0, step=1, limit=1
              $region55: #{cnn_forward.9} parent=53 // loop_pre_header
                _
              $region56: #{cnn_forward.9} parent=53 // loop_header
                %s264 = sphi 0, %s268
                %p265 = scmp.ge.s32.totalorder %s264, 1
                %s269 = sphi %s258, %s258
                %s270 = sphi %s252, %s252
              $region57: #{cnn_forward.9} parent=53 // loop_header_branch
                %267 = sbr.rel (%p265) target = $region61
              $region58: #{cnn_forward.9} parent=53 // loop_body
                %v271 = vld [vmem:[%s269] sm:$0xff]
                %272 = vst [vmem:[%s270] sm:$0xff] %v271
                %v273 = vld [vmem:[%s269 + $0x8] sm:$0xff]
                %274 = vst [vmem:[%s270 + $0x8] sm:$0xff] %v273
                %v275 = vld [vmem:[%s269 + $0x20] sm:$0xff]
                %276 = vst [vmem:[%s270 + $0x10] sm:$0xff] %v275
                %v277 = vld [vmem:[%s269 + $0x28] sm:$0xff]
                %278 = vst [vmem:[%s270 + $0x18] sm:$0xff] %v277
                %v279 = vld [vmem:[%s269 + $0x40] sm:$0xff]
                %280 = vst [vmem:[%s270 + $0x20] sm:$0xff] %v279
                %v281 = vld [vmem:[%s269 + $0x48] sm:$0xff]
                %282 = vst [vmem:[%s270 + $0x28] sm:$0xff] %v281
                %v283 = vld [vmem:[%s269 + $0x60] sm:$0xff]
                %284 = vst [vmem:[%s270 + $0x30] sm:$0xff] %v283
                %v285 = vld [vmem:[%s269 + $0x68] sm:$0xff]
                %286 = vst [vmem:[%s270 + $0x38] sm:$0xff] %v285
                %v287 = vld [vmem:[%s269 + $0x80] sm:$0xff]
                %288 = vst [vmem:[%s270 + $0x40] sm:$0xff] %v287
                %v289 = vld [vmem:[%s269 + $0x88] sm:$0xff]
                %290 = vst [vmem:[%s270 + $0x48] sm:$0xff] %v289
                %v291 = vld [vmem:[%s269 + $0xa0] sm:$0xff]
                %292 = vst [vmem:[%s270 + $0x50] sm:$0xff] %v291
                %v293 = vld [vmem:[%s269 + $0xa8] sm:$0xff]
                %294 = vst [vmem:[%s270 + $0x58] sm:$0xff] %v293
                %v295 = vld [vmem:[%s269 + $0xc0] sm:$0xff]
                %296 = vst [vmem:[%s270 + $0x60] sm:$0xff] %v295
                %v297 = vld [vmem:[%s269 + $0xc8] sm:$0xff]
                %298 = vst [vmem:[%s270 + $0x68] sm:$0xff] %v297
                %v299 = vld [vmem:[%s269 + $0xe0] sm:$0xff]
                %300 = vst [vmem:[%s270 + $0x70] sm:$0xff] %v299
                %v301 = vld [vmem:[%s269 + $0xe8] sm:$0xff]
                %302 = vst [vmem:[%s270 + $0x78] sm:$0xff] %v301
                %v303 = vld [vmem:[%s269 + $0x100] sm:$0xff]
                %304 = vst [vmem:[%s270 + $0x80] sm:$0xff] %v303
                %v305 = vld [vmem:[%s269 + $0x108] sm:$0xff]
                %306 = vst [vmem:[%s270 + $0x88] sm:$0xff] %v305
                %v307 = vld [vmem:[%s269 + $0x120] sm:$0xff]
                %308 = vst [vmem:[%s270 + $0x90] sm:$0xff] %v307
                %v309 = vld [vmem:[%s269 + $0x128] sm:$0xff]
                %310 = vst [vmem:[%s270 + $0x98] sm:$0xff] %v309
                %v311 = vld [vmem:[%s269 + $0x140] sm:$0xff]
                %312 = vst [vmem:[%s270 + $0xa0] sm:$0xff] %v311
                %v313 = vld [vmem:[%s269 + $0x148] sm:$0xff]
                %314 = vst [vmem:[%s270 + $0xa8] sm:$0xff] %v313
                %v315 = vld [vmem:[%s269 + $0x160] sm:$0xff]
                %316 = vst [vmem:[%s270 + $0xb0] sm:$0xff] %v315
                %v317 = vld [vmem:[%s269 + $0x168] sm:$0xff]
                %318 = vst [vmem:[%s270 + $0xb8] sm:$0xff] %v317
                %v319 = vld [vmem:[%s269 + $0x180] sm:$0xff]
                %320 = vst [vmem:[%s270 + $0xc0] sm:$0xff] %v319
                %v321 = vld [vmem:[%s269 + $0x188] sm:$0xff]
                %322 = vst [vmem:[%s270 + $0xc8] sm:$0xff] %v321
                %v323 = vld [vmem:[%s269 + $0x1a0] sm:$0xff]
                %324 = vst [vmem:[%s270 + $0xd0] sm:$0xff] %v323
                %v325 = vld [vmem:[%s269 + $0x1a8] sm:$0xff]
                %326 = vst [vmem:[%s270 + $0xd8] sm:$0xff] %v325
                %v327 = vld [vmem:[%s269 + $0x1c0] sm:$0xff]
                %328 = vst [vmem:[%s270 + $0xe0] sm:$0xff] %v327
                %v329 = vld [vmem:[%s269 + $0x1c8] sm:$0xff]
                %330 = vst [vmem:[%s270 + $0xe8] sm:$0xff] %v329
                %v331 = vld [vmem:[%s269 + $0x1e0] sm:$0xff]
                %332 = vst [vmem:[%s270 + $0xf0] sm:$0xff] %v331
                %v333 = vld [vmem:[%s269 + $0x1e8] sm:$0xff]
                %334 = vst [vmem:[%s270 + $0xf8] sm:$0xff] %v333
                %v335 = vld [vmem:[%s269 + $0x200] sm:$0xff]
                %336 = vst [vmem:[%s270 + $0x100] sm:$0xff] %v335
                %v337 = vld [vmem:[%s269 + $0x208] sm:$0xff]
                %338 = vst [vmem:[%s270 + $0x108] sm:$0xff] %v337
                %v339 = vld [vmem:[%s269 + $0x220] sm:$0xff]
                %340 = vst [vmem:[%s270 + $0x110] sm:$0xff] %v339
                %v341 = vld [vmem:[%s269 + $0x228] sm:$0xff]
                %342 = vst [vmem:[%s270 + $0x118] sm:$0xff] %v341
                %v343 = vld [vmem:[%s269 + $0x240] sm:$0xff]
                %344 = vst [vmem:[%s270 + $0x120] sm:$0xff] %v343
                %v345 = vld [vmem:[%s269 + $0x248] sm:$0xff]
                %346 = vst [vmem:[%s270 + $0x128] sm:$0xff] %v345
                %v347 = vld [vmem:[%s269 + $0x260] sm:$0xff]
                %348 = vst [vmem:[%s270 + $0x130] sm:$0xff] %v347
                %v349 = vld [vmem:[%s269 + $0x268] sm:$0xff]
                %350 = vst [vmem:[%s270 + $0x138] sm:$0xff] %v349
                %v351 = vld [vmem:[%s269 + $0x280] sm:$0xff]
                %352 = vst [vmem:[%s270 + $0x140] sm:$0xff] %v351
                %v353 = vld [vmem:[%s269 + $0x288] sm:$0xff]
                %354 = vst [vmem:[%s270 + $0x148] sm:$0xff] %v353
                %v355 = vld [vmem:[%s269 + $0x2a0] sm:$0xff]
                %356 = vst [vmem:[%s270 + $0x150] sm:$0xff] %v355
                %v357 = vld [vmem:[%s269 + $0x2a8] sm:$0xff]
                %358 = vst [vmem:[%s270 + $0x158] sm:$0xff] %v357
                %v359 = vld [vmem:[%s269 + $0x2c0] sm:$0xff]
                %360 = vst [vmem:[%s270 + $0x160] sm:$0xff] %v359
                %v361 = vld [vmem:[%s269 + $0x2c8] sm:$0xff]
                %362 = vst [vmem:[%s270 + $0x168] sm:$0xff] %v361
                %v363 = vld [vmem:[%s269 + $0x2e0] sm:$0xff]
                %364 = vst [vmem:[%s270 + $0x170] sm:$0xff] %v363
                %v365 = vld [vmem:[%s269 + $0x2e8] sm:$0xff]
                %366 = vst [vmem:[%s270 + $0x178] sm:$0xff] %v365
                %v367 = vld [vmem:[%s269 + $0x300] sm:$0xff]
                %368 = vst [vmem:[%s270 + $0x180] sm:$0xff] %v367
                %v369 = vld [vmem:[%s269 + $0x308] sm:$0xff]
                %370 = vst [vmem:[%s270 + $0x188] sm:$0xff] %v369
                %v371 = vld [vmem:[%s269 + $0x320] sm:$0xff]
                %372 = vst [vmem:[%s270 + $0x190] sm:$0xff] %v371
                %v373 = vld [vmem:[%s269 + $0x328] sm:$0xff]
                %374 = vst [vmem:[%s270 + $0x198] sm:$0xff] %v373
                %v375 = vld [vmem:[%s269 + $0x340] sm:$0xff]
                %376 = vst [vmem:[%s270 + $0x1a0] sm:$0xff] %v375
                %v377 = vld [vmem:[%s269 + $0x348] sm:$0xff]
                %378 = vst [vmem:[%s270 + $0x1a8] sm:$0xff] %v377
                %v379 = vld [vmem:[%s269 + $0x360] sm:$0xff]
                %380 = vst [vmem:[%s270 + $0x1b0] sm:$0xff] %v379
                %v381 = vld [vmem:[%s269 + $0x368] sm:$0xff]
                %382 = vst [vmem:[%s270 + $0x1b8] sm:$0xff] %v381
                %v383 = vld [vmem:[%s269 + $0x380] sm:$0xff]
                %384 = vst [vmem:[%s270 + $0x1c0] sm:$0xff] %v383
                %v385 = vld [vmem:[%s269 + $0x388] sm:$0xff]
                %386 = vst [vmem:[%s270 + $0x1c8] sm:$0xff] %v385
                %v387 = vld [vmem:[%s269 + $0x3a0] sm:$0xff]
                %388 = vst [vmem:[%s270 + $0x1d0] sm:$0xff] %v387
                %v389 = vld [vmem:[%s269 + $0x3a8] sm:$0xff]
                %390 = vst [vmem:[%s270 + $0x1d8] sm:$0xff] %v389
                %v391 = vld [vmem:[%s269 + $0x3c0] sm:$0xff]
                %392 = vst [vmem:[%s270 + $0x1e0] sm:$0xff] %v391
                %v393 = vld [vmem:[%s269 + $0x3c8] sm:$0xff]
                %394 = vst [vmem:[%s270 + $0x1e8] sm:$0xff] %v393
                %v395 = vld [vmem:[%s269 + $0x3e0] sm:$0xff]
                %396 = vst [vmem:[%s270 + $0x1f0] sm:$0xff] %v395
                %v397 = vld [vmem:[%s269 + $0x3e8] sm:$0xff]
                %398 = vst [vmem:[%s270 + $0x1f8] sm:$0xff] %v397
                %v399 = vld [vmem:[%s269 + $0x400] sm:$0xff]
                %400 = vst [vmem:[%s270 + $0x200] sm:$0xff] %v399
                %v401 = vld [vmem:[%s269 + $0x408] sm:$0xff]
                %402 = vst [vmem:[%s270 + $0x208] sm:$0xff] %v401
                %v403 = vld [vmem:[%s269 + $0x420] sm:$0xff]
                %404 = vst [vmem:[%s270 + $0x210] sm:$0xff] %v403
                %v405 = vld [vmem:[%s269 + $0x428] sm:$0xff]
                %406 = vst [vmem:[%s270 + $0x218] sm:$0xff] %v405
                %v407 = vld [vmem:[%s269 + $0x440] sm:$0xff]
                %408 = vst [vmem:[%s270 + $0x220] sm:$0xff] %v407
                %v409 = vld [vmem:[%s269 + $0x448] sm:$0xff]
                %410 = vst [vmem:[%s270 + $0x228] sm:$0xff] %v409
                %v411 = vld [vmem:[%s269 + $0x460] sm:$0xff]
                %412 = vst [vmem:[%s270 + $0x230] sm:$0xff] %v411
                %v413 = vld [vmem:[%s269 + $0x468] sm:$0xff]
                %414 = vst [vmem:[%s270 + $0x238] sm:$0xff] %v413
                %v415 = vld [vmem:[%s269 + $0x480] sm:$0xff]
                %416 = vst [vmem:[%s270 + $0x240] sm:$0xff] %v415
                %v417 = vld [vmem:[%s269 + $0x488] sm:$0xff]
                %418 = vst [vmem:[%s270 + $0x248] sm:$0xff] %v417
                %v419 = vld [vmem:[%s269 + $0x4a0] sm:$0xff]
                %420 = vst [vmem:[%s270 + $0x250] sm:$0xff] %v419
                %v421 = vld [vmem:[%s269 + $0x4a8] sm:$0xff]
                %422 = vst [vmem:[%s270 + $0x258] sm:$0xff] %v421
                %v423 = vld [vmem:[%s269 + $0x4c0] sm:$0xff]
                %424 = vst [vmem:[%s270 + $0x260] sm:$0xff] %v423
                %v425 = vld [vmem:[%s269 + $0x4c8] sm:$0xff]
                %426 = vst [vmem:[%s270 + $0x268] sm:$0xff] %v425
                %v427 = vld [vmem:[%s269 + $0x4e0] sm:$0xff]
                %428 = vst [vmem:[%s270 + $0x270] sm:$0xff] %v427
                %v429 = vld [vmem:[%s269 + $0x4e8] sm:$0xff]
                %430 = vst [vmem:[%s270 + $0x278] sm:$0xff] %v429
                %v431 = vld [vmem:[%s269 + $0x500] sm:$0xff]
                %432 = vst [vmem:[%s270 + $0x280] sm:$0xff] %v431
                %v433 = vld [vmem:[%s269 + $0x508] sm:$0xff]
                %434 = vst [vmem:[%s270 + $0x288] sm:$0xff] %v433
                %v435 = vld [vmem:[%s269 + $0x520] sm:$0xff]
                %436 = vst [vmem:[%s270 + $0x290] sm:$0xff] %v435
                %v437 = vld [vmem:[%s269 + $0x528] sm:$0xff]
                %438 = vst [vmem:[%s270 + $0x298] sm:$0xff] %v437
                %v439 = vld [vmem:[%s269 + $0x540] sm:$0xff]
                %440 = vst [vmem:[%s270 + $0x2a0] sm:$0xff] %v439
                %v441 = vld [vmem:[%s269 + $0x548] sm:$0xff]
                %442 = vst [vmem:[%s270 + $0x2a8] sm:$0xff] %v441
                %v443 = vld [vmem:[%s269 + $0x560] sm:$0xff]
                %444 = vst [vmem:[%s270 + $0x2b0] sm:$0xff] %v443
                %v445 = vld [vmem:[%s269 + $0x568] sm:$0xff]
                %446 = vst [vmem:[%s270 + $0x2b8] sm:$0xff] %v445
                %v447 = vld [vmem:[%s269 + $0x580] sm:$0xff]
                %448 = vst [vmem:[%s270 + $0x2c0] sm:$0xff] %v447
                %v449 = vld [vmem:[%s269 + $0x588] sm:$0xff]
                %450 = vst [vmem:[%s270 + $0x2c8] sm:$0xff] %v449
                %v451 = vld [vmem:[%s269 + $0x5a0] sm:$0xff]
                %452 = vst [vmem:[%s270 + $0x2d0] sm:$0xff] %v451
                %v453 = vld [vmem:[%s269 + $0x5a8] sm:$0xff]
                %454 = vst [vmem:[%s270 + $0x2d8] sm:$0xff] %v453
                %v455 = vld [vmem:[%s269 + $0x5c0] sm:$0xff]
                %456 = vst [vmem:[%s270 + $0x2e0] sm:$0xff] %v455
                %v457 = vld [vmem:[%s269 + $0x5c8] sm:$0xff]
                %458 = vst [vmem:[%s270 + $0x2e8] sm:$0xff] %v457
                %v459 = vld [vmem:[%s269 + $0x5e0] sm:$0xff]
                %460 = vst [vmem:[%s270 + $0x2f0] sm:$0xff] %v459
                %v461 = vld [vmem:[%s269 + $0x5e8] sm:$0xff]
                %462 = vst [vmem:[%s270 + $0x2f8] sm:$0xff] %v461
                %v463 = vld [vmem:[%s269 + $0x600] sm:$0xff]
                %464 = vst [vmem:[%s270 + $0x300] sm:$0xff] %v463
                %v465 = vld [vmem:[%s269 + $0x608] sm:$0xff]
                %466 = vst [vmem:[%s270 + $0x308] sm:$0xff] %v465
                %v467 = vld [vmem:[%s269 + $0x620] sm:$0xff]
                %468 = vst [vmem:[%s270 + $0x310] sm:$0xff] %v467
                %v469 = vld [vmem:[%s269 + $0x628] sm:$0xff]
                %470 = vst [vmem:[%s270 + $0x318] sm:$0xff] %v469
                %v471 = vld [vmem:[%s269 + $0x640] sm:$0xff]
                %472 = vst [vmem:[%s270 + $0x320] sm:$0xff] %v471
                %v473 = vld [vmem:[%s269 + $0x648] sm:$0xff]
                %474 = vst [vmem:[%s270 + $0x328] sm:$0xff] %v473
                %v475 = vld [vmem:[%s269 + $0x660] sm:$0xff]
                %476 = vst [vmem:[%s270 + $0x330] sm:$0xff] %v475
                %v477 = vld [vmem:[%s269 + $0x668] sm:$0xff]
                %478 = vst [vmem:[%s270 + $0x338] sm:$0xff] %v477
                %v479 = vld [vmem:[%s269 + $0x680] sm:$0xff]
                %480 = vst [vmem:[%s270 + $0x340] sm:$0xff] %v479
                %v481 = vld [vmem:[%s269 + $0x688] sm:$0xff]
                %482 = vst [vmem:[%s270 + $0x348] sm:$0xff] %v481
                %v483 = vld [vmem:[%s269 + $0x6a0] sm:$0xff]
                %484 = vst [vmem:[%s270 + $0x350] sm:$0xff] %v483
                %v485 = vld [vmem:[%s269 + $0x6a8] sm:$0xff]
                %486 = vst [vmem:[%s270 + $0x358] sm:$0xff] %v485
                %v487 = vld [vmem:[%s269 + $0x6c0] sm:$0xff]
                %488 = vst [vmem:[%s270 + $0x360] sm:$0xff] %v487
                %v489 = vld [vmem:[%s269 + $0x6c8] sm:$0xff]
                %490 = vst [vmem:[%s270 + $0x368] sm:$0xff] %v489
                %v491 = vld [vmem:[%s269 + $0x6e0] sm:$0xff]
                %492 = vst [vmem:[%s270 + $0x370] sm:$0xff] %v491
                %v493 = vld [vmem:[%s269 + $0x6e8] sm:$0xff]
                %494 = vst [vmem:[%s270 + $0x378] sm:$0xff] %v493
                %v495 = vld [vmem:[%s269 + $0x700] sm:$0xff]
                %496 = vst [vmem:[%s270 + $0x380] sm:$0xff] %v495
                %v497 = vld [vmem:[%s269 + $0x708] sm:$0xff]
                %498 = vst [vmem:[%s270 + $0x388] sm:$0xff] %v497
                %v499 = vld [vmem:[%s269 + $0x720] sm:$0xff]
                %500 = vst [vmem:[%s270 + $0x390] sm:$0xff] %v499
                %v501 = vld [vmem:[%s269 + $0x728] sm:$0xff]
                %502 = vst [vmem:[%s270 + $0x398] sm:$0xff] %v501
                %v503 = vld [vmem:[%s269 + $0x740] sm:$0xff]
                %504 = vst [vmem:[%s270 + $0x3a0] sm:$0xff] %v503
                %v505 = vld [vmem:[%s269 + $0x748] sm:$0xff]
                %506 = vst [vmem:[%s270 + $0x3a8] sm:$0xff] %v505
                %v507 = vld [vmem:[%s269 + $0x760] sm:$0xff]
                %508 = vst [vmem:[%s270 + $0x3b0] sm:$0xff] %v507
                %v509 = vld [vmem:[%s269 + $0x768] sm:$0xff]
                %510 = vst [vmem:[%s270 + $0x3b8] sm:$0xff] %v509
                %v511 = vld [vmem:[%s269 + $0x780] sm:$0xff]
                %512 = vst [vmem:[%s270 + $0x3c0] sm:$0xff] %v511
                %v513 = vld [vmem:[%s269 + $0x788] sm:$0xff]
                %514 = vst [vmem:[%s270 + $0x3c8] sm:$0xff] %v513
                %v515 = vld [vmem:[%s269 + $0x7a0] sm:$0xff]
                %516 = vst [vmem:[%s270 + $0x3d0] sm:$0xff] %v515
                %v517 = vld [vmem:[%s269 + $0x7a8] sm:$0xff]
                %518 = vst [vmem:[%s270 + $0x3d8] sm:$0xff] %v517
                %v519 = vld [vmem:[%s269 + $0x7c0] sm:$0xff]
                %520 = vst [vmem:[%s270 + $0x3e0] sm:$0xff] %v519
                %v521 = vld [vmem:[%s269 + $0x7c8] sm:$0xff]
                %522 = vst [vmem:[%s270 + $0x3e8] sm:$0xff] %v521
                %v523 = vld [vmem:[%s269 + $0x7e0] sm:$0xff]
                %524 = vst [vmem:[%s270 + $0x3f0] sm:$0xff] %v523
                %v525 = vld [vmem:[%s269 + $0x7e8] sm:$0xff]
                %526 = vst [vmem:[%s270 + $0x3f8] sm:$0xff] %v525
                %v527 = vld [vmem:[%s269 + $0x800] sm:$0xff]
                %528 = vst [vmem:[%s270 + $0x400] sm:$0xff] %v527
                %v529 = vld [vmem:[%s269 + $0x808] sm:$0xff]
                %530 = vst [vmem:[%s270 + $0x408] sm:$0xff] %v529
                %v531 = vld [vmem:[%s269 + $0x820] sm:$0xff]
                %532 = vst [vmem:[%s270 + $0x410] sm:$0xff] %v531
                %v533 = vld [vmem:[%s269 + $0x828] sm:$0xff]
                %534 = vst [vmem:[%s270 + $0x418] sm:$0xff] %v533
                %v535 = vld [vmem:[%s269 + $0x840] sm:$0xff]
                %536 = vst [vmem:[%s270 + $0x420] sm:$0xff] %v535
                %v537 = vld [vmem:[%s269 + $0x848] sm:$0xff]
                %538 = vst [vmem:[%s270 + $0x428] sm:$0xff] %v537
                %v539 = vld [vmem:[%s269 + $0x860] sm:$0xff]
                %540 = vst [vmem:[%s270 + $0x430] sm:$0xff] %v539
                %v541 = vld [vmem:[%s269 + $0x868] sm:$0xff]
                %542 = vst [vmem:[%s270 + $0x438] sm:$0xff] %v541
                %v543 = vld [vmem:[%s269 + $0x880] sm:$0xff]
                %544 = vst [vmem:[%s270 + $0x440] sm:$0xff] %v543
                %v545 = vld [vmem:[%s269 + $0x888] sm:$0xff]
                %546 = vst [vmem:[%s270 + $0x448] sm:$0xff] %v545
                %v547 = vld [vmem:[%s269 + $0x8a0] sm:$0xff]
                %548 = vst [vmem:[%s270 + $0x450] sm:$0xff] %v547
                %v549 = vld [vmem:[%s269 + $0x8a8] sm:$0xff]
                %550 = vst [vmem:[%s270 + $0x458] sm:$0xff] %v549
                %v551 = vld [vmem:[%s269 + $0x8c0] sm:$0xff]
                %552 = vst [vmem:[%s270 + $0x460] sm:$0xff] %v551
                %v553 = vld [vmem:[%s269 + $0x8c8] sm:$0xff]
                %554 = vst [vmem:[%s270 + $0x468] sm:$0xff] %v553
                %v555 = vld [vmem:[%s269 + $0x8e0] sm:$0xff]
                %556 = vst [vmem:[%s270 + $0x470] sm:$0xff] %v555
                %v557 = vld [vmem:[%s269 + $0x8e8] sm:$0xff]
                %558 = vst [vmem:[%s270 + $0x478] sm:$0xff] %v557
                %v559 = vld [vmem:[%s269 + $0x900] sm:$0xff]
                %560 = vst [vmem:[%s270 + $0x480] sm:$0xff] %v559
                %v561 = vld [vmem:[%s269 + $0x908] sm:$0xff]
                %562 = vst [vmem:[%s270 + $0x488] sm:$0xff] %v561
                %v563 = vld [vmem:[%s269 + $0x920] sm:$0xff]
                %564 = vst [vmem:[%s270 + $0x490] sm:$0xff] %v563
                %v565 = vld [vmem:[%s269 + $0x928] sm:$0xff]
                %566 = vst [vmem:[%s270 + $0x498] sm:$0xff] %v565
                %v567 = vld [vmem:[%s269 + $0x940] sm:$0xff]
                %568 = vst [vmem:[%s270 + $0x4a0] sm:$0xff] %v567
                %v569 = vld [vmem:[%s269 + $0x948] sm:$0xff]
                %570 = vst [vmem:[%s270 + $0x4a8] sm:$0xff] %v569
                %v571 = vld [vmem:[%s269 + $0x960] sm:$0xff]
                %572 = vst [vmem:[%s270 + $0x4b0] sm:$0xff] %v571
                %v573 = vld [vmem:[%s269 + $0x968] sm:$0xff]
                %574 = vst [vmem:[%s270 + $0x4b8] sm:$0xff] %v573
                %v575 = vld [vmem:[%s269 + $0x980] sm:$0xff]
                %576 = vst [vmem:[%s270 + $0x4c0] sm:$0xff] %v575
                %v577 = vld [vmem:[%s269 + $0x988] sm:$0xff]
                %578 = vst [vmem:[%s270 + $0x4c8] sm:$0xff] %v577
                %v579 = vld [vmem:[%s269 + $0x9a0] sm:$0xff]
                %580 = vst [vmem:[%s270 + $0x4d0] sm:$0xff] %v579
                %v581 = vld [vmem:[%s269 + $0x9a8] sm:$0xff]
                %582 = vst [vmem:[%s270 + $0x4d8] sm:$0xff] %v581
                %v583 = vld [vmem:[%s269 + $0x9c0] sm:$0xff]
                %584 = vst [vmem:[%s270 + $0x4e0] sm:$0xff] %v583
                %v585 = vld [vmem:[%s269 + $0x9c8] sm:$0xff]
                %586 = vst [vmem:[%s270 + $0x4e8] sm:$0xff] %v585
                %v587 = vld [vmem:[%s269 + $0x9e0] sm:$0xff]
                %588 = vst [vmem:[%s270 + $0x4f0] sm:$0xff] %v587
                %v589 = vld [vmem:[%s269 + $0x9e8] sm:$0xff]
                %590 = vst [vmem:[%s270 + $0x4f8] sm:$0xff] %v589
                %v591 = vld [vmem:[%s269 + $0xa00] sm:$0xff]
                %592 = vst [vmem:[%s270 + $0x500] sm:$0xff] %v591
                %v593 = vld [vmem:[%s269 + $0xa08] sm:$0xff]
                %594 = vst [vmem:[%s270 + $0x508] sm:$0xff] %v593
                %v595 = vld [vmem:[%s269 + $0xa20] sm:$0xff]
                %596 = vst [vmem:[%s270 + $0x510] sm:$0xff] %v595
                %v597 = vld [vmem:[%s269 + $0xa28] sm:$0xff]
                %598 = vst [vmem:[%s270 + $0x518] sm:$0xff] %v597
                %v599 = vld [vmem:[%s269 + $0xa40] sm:$0xff]
                %600 = vst [vmem:[%s270 + $0x520] sm:$0xff] %v599
                %v601 = vld [vmem:[%s269 + $0xa48] sm:$0xff]
                %602 = vst [vmem:[%s270 + $0x528] sm:$0xff] %v601
                %v603 = vld [vmem:[%s269 + $0xa60] sm:$0xff]
                %604 = vst [vmem:[%s270 + $0x530] sm:$0xff] %v603
                %v605 = vld [vmem:[%s269 + $0xa68] sm:$0xff]
                %606 = vst [vmem:[%s270 + $0x538] sm:$0xff] %v605
                %v607 = vld [vmem:[%s269 + $0xa80] sm:$0xff]
                %608 = vst [vmem:[%s270 + $0x540] sm:$0xff] %v607
                %v609 = vld [vmem:[%s269 + $0xa88] sm:$0xff]
                %610 = vst [vmem:[%s270 + $0x548] sm:$0xff] %v609
                %v611 = vld [vmem:[%s269 + $0xaa0] sm:$0xff]
                %612 = vst [vmem:[%s270 + $0x550] sm:$0xff] %v611
                %v613 = vld [vmem:[%s269 + $0xaa8] sm:$0xff]
                %614 = vst [vmem:[%s270 + $0x558] sm:$0xff] %v613
                %v615 = vld [vmem:[%s269 + $0xac0] sm:$0xff]
                %616 = vst [vmem:[%s270 + $0x560] sm:$0xff] %v615
                %v617 = vld [vmem:[%s269 + $0xac8] sm:$0xff]
                %618 = vst [vmem:[%s270 + $0x568] sm:$0xff] %v617
                %v619 = vld [vmem:[%s269 + $0xae0] sm:$0xff]
                %620 = vst [vmem:[%s270 + $0x570] sm:$0xff] %v619
                %v621 = vld [vmem:[%s269 + $0xae8] sm:$0xff]
                %622 = vst [vmem:[%s270 + $0x578] sm:$0xff] %v621
                %v623 = vld [vmem:[%s269 + $0xb00] sm:$0xff]
                %624 = vst [vmem:[%s270 + $0x580] sm:$0xff] %v623
                %v625 = vld [vmem:[%s269 + $0xb08] sm:$0xff]
                %626 = vst [vmem:[%s270 + $0x588] sm:$0xff] %v625
                %v627 = vld [vmem:[%s269 + $0xb20] sm:$0xff]
                %628 = vst [vmem:[%s270 + $0x590] sm:$0xff] %v627
                %v629 = vld [vmem:[%s269 + $0xb28] sm:$0xff]
                %630 = vst [vmem:[%s270 + $0x598] sm:$0xff] %v629
                %v631 = vld [vmem:[%s269 + $0xb40] sm:$0xff]
                %632 = vst [vmem:[%s270 + $0x5a0] sm:$0xff] %v631
                %v633 = vld [vmem:[%s269 + $0xb48] sm:$0xff]
                %634 = vst [vmem:[%s270 + $0x5a8] sm:$0xff] %v633
                %v635 = vld [vmem:[%s269 + $0xb60] sm:$0xff]
                %636 = vst [vmem:[%s270 + $0x5b0] sm:$0xff] %v635
                %v637 = vld [vmem:[%s269 + $0xb68] sm:$0xff]
                %638 = vst [vmem:[%s270 + $0x5b8] sm:$0xff] %v637
                %v639 = vld [vmem:[%s269 + $0xb80] sm:$0xff]
                %640 = vst [vmem:[%s270 + $0x5c0] sm:$0xff] %v639
                %v641 = vld [vmem:[%s269 + $0xb88] sm:$0xff]
                %642 = vst [vmem:[%s270 + $0x5c8] sm:$0xff] %v641
                %v643 = vld [vmem:[%s269 + $0xba0] sm:$0xff]
                %644 = vst [vmem:[%s270 + $0x5d0] sm:$0xff] %v643
                %v645 = vld [vmem:[%s269 + $0xba8] sm:$0xff]
                %646 = vst [vmem:[%s270 + $0x5d8] sm:$0xff] %v645
                %v647 = vld [vmem:[%s269 + $0xbc0] sm:$0xff]
                %648 = vst [vmem:[%s270 + $0x5e0] sm:$0xff] %v647
                %v649 = vld [vmem:[%s269 + $0xbc8] sm:$0xff]
                %650 = vst [vmem:[%s270 + $0x5e8] sm:$0xff] %v649
                %v651 = vld [vmem:[%s269 + $0xbe0] sm:$0xff]
                %652 = vst [vmem:[%s270 + $0x5f0] sm:$0xff] %v651
                %v653 = vld [vmem:[%s269 + $0xbe8] sm:$0xff]
                %654 = vst [vmem:[%s270 + $0x5f8] sm:$0xff] %v653
                %v655 = vld [vmem:[%s269 + $0xc00] sm:$0xff]
                %656 = vst [vmem:[%s270 + $0x600] sm:$0xff] %v655
                %v657 = vld [vmem:[%s269 + $0xc08] sm:$0xff]
                %658 = vst [vmem:[%s270 + $0x608] sm:$0xff] %v657
                %v659 = vld [vmem:[%s269 + $0xc20] sm:$0xff]
                %660 = vst [vmem:[%s270 + $0x610] sm:$0xff] %v659
                %v661 = vld [vmem:[%s269 + $0xc28] sm:$0xff]
                %662 = vst [vmem:[%s270 + $0x618] sm:$0xff] %v661
                %v663 = vld [vmem:[%s269 + $0xc40] sm:$0xff]
                %664 = vst [vmem:[%s270 + $0x620] sm:$0xff] %v663
                %v665 = vld [vmem:[%s269 + $0xc48] sm:$0xff]
                %666 = vst [vmem:[%s270 + $0x628] sm:$0xff] %v665
                %v667 = vld [vmem:[%s269 + $0xc60] sm:$0xff]
                %668 = vst [vmem:[%s270 + $0x630] sm:$0xff] %v667
                %v669 = vld [vmem:[%s269 + $0xc68] sm:$0xff]
                %670 = vst [vmem:[%s270 + $0x638] sm:$0xff] %v669
                %v671 = vld [vmem:[%s269 + $0xc80] sm:$0xff]
                %672 = vst [vmem:[%s270 + $0x640] sm:$0xff] %v671
                %v673 = vld [vmem:[%s269 + $0xc88] sm:$0xff]
                %674 = vst [vmem:[%s270 + $0x648] sm:$0xff] %v673
                %v675 = vld [vmem:[%s269 + $0xca0] sm:$0xff]
                %676 = vst [vmem:[%s270 + $0x650] sm:$0xff] %v675
                %v677 = vld [vmem:[%s269 + $0xca8] sm:$0xff]
                %678 = vst [vmem:[%s270 + $0x658] sm:$0xff] %v677
                %v679 = vld [vmem:[%s269 + $0xcc0] sm:$0xff]
                %680 = vst [vmem:[%s270 + $0x660] sm:$0xff] %v679
                %v681 = vld [vmem:[%s269 + $0xcc8] sm:$0xff]
                %682 = vst [vmem:[%s270 + $0x668] sm:$0xff] %v681
                %v683 = vld [vmem:[%s269 + $0xce0] sm:$0xff]
                %684 = vst [vmem:[%s270 + $0x670] sm:$0xff] %v683
                %v685 = vld [vmem:[%s269 + $0xce8] sm:$0xff]
                %686 = vst [vmem:[%s270 + $0x678] sm:$0xff] %v685
                %v687 = vld [vmem:[%s269 + $0xd00] sm:$0xff]
                %688 = vst [vmem:[%s270 + $0x680] sm:$0xff] %v687
                %v689 = vld [vmem:[%s269 + $0xd08] sm:$0xff]
                %690 = vst [vmem:[%s270 + $0x688] sm:$0xff] %v689
                %v691 = vld [vmem:[%s269 + $0xd20] sm:$0xff]
                %692 = vst [vmem:[%s270 + $0x690] sm:$0xff] %v691
                %v693 = vld [vmem:[%s269 + $0xd28] sm:$0xff]
                %694 = vst [vmem:[%s270 + $0x698] sm:$0xff] %v693
                %v695 = vld [vmem:[%s269 + $0xd40] sm:$0xff]
                %696 = vst [vmem:[%s270 + $0x6a0] sm:$0xff] %v695
                %v697 = vld [vmem:[%s269 + $0xd48] sm:$0xff]
                %698 = vst [vmem:[%s270 + $0x6a8] sm:$0xff] %v697
                %v699 = vld [vmem:[%s269 + $0xd60] sm:$0xff]
                %700 = vst [vmem:[%s270 + $0x6b0] sm:$0xff] %v699
                %v701 = vld [vmem:[%s269 + $0xd68] sm:$0xff]
                %702 = vst [vmem:[%s270 + $0x6b8] sm:$0xff] %v701
                %v703 = vld [vmem:[%s269 + $0xd80] sm:$0xff]
                %704 = vst [vmem:[%s270 + $0x6c0] sm:$0xff] %v703
                %v705 = vld [vmem:[%s269 + $0xd88] sm:$0xff]
                %706 = vst [vmem:[%s270 + $0x6c8] sm:$0xff] %v705
                %v707 = vld [vmem:[%s269 + $0xda0] sm:$0xff]
                %708 = vst [vmem:[%s270 + $0x6d0] sm:$0xff] %v707
                %v709 = vld [vmem:[%s269 + $0xda8] sm:$0xff]
                %710 = vst [vmem:[%s270 + $0x6d8] sm:$0xff] %v709
                %v711 = vld [vmem:[%s269 + $0xdc0] sm:$0xff]
                %712 = vst [vmem:[%s270 + $0x6e0] sm:$0xff] %v711
                %v713 = vld [vmem:[%s269 + $0xdc8] sm:$0xff]
                %714 = vst [vmem:[%s270 + $0x6e8] sm:$0xff] %v713
                %v715 = vld [vmem:[%s269 + $0xde0] sm:$0xff]
                %716 = vst [vmem:[%s270 + $0x6f0] sm:$0xff] %v715
                %v717 = vld [vmem:[%s269 + $0xde8] sm:$0xff]
                %718 = vst [vmem:[%s270 + $0x6f8] sm:$0xff] %v717
                %v719 = vld [vmem:[%s269 + $0xe00] sm:$0xff]
                %720 = vst [vmem:[%s270 + $0x700] sm:$0xff] %v719
                %v721 = vld [vmem:[%s269 + $0xe08] sm:$0xff]
                %722 = vst [vmem:[%s270 + $0x708] sm:$0xff] %v721
                %v723 = vld [vmem:[%s269 + $0xe20] sm:$0xff]
                %724 = vst [vmem:[%s270 + $0x710] sm:$0xff] %v723
                %v725 = vld [vmem:[%s269 + $0xe28] sm:$0xff]
                %726 = vst [vmem:[%s270 + $0x718] sm:$0xff] %v725
                %v727 = vld [vmem:[%s269 + $0xe40] sm:$0xff]
                %728 = vst [vmem:[%s270 + $0x720] sm:$0xff] %v727
                %v729 = vld [vmem:[%s269 + $0xe48] sm:$0xff]
                %730 = vst [vmem:[%s270 + $0x728] sm:$0xff] %v729
                %v731 = vld [vmem:[%s269 + $0xe60] sm:$0xff]
                %732 = vst [vmem:[%s270 + $0x730] sm:$0xff] %v731
                %v733 = vld [vmem:[%s269 + $0xe68] sm:$0xff]
                %734 = vst [vmem:[%s270 + $0x738] sm:$0xff] %v733
                %v735 = vld [vmem:[%s269 + $0xe80] sm:$0xff]
                %736 = vst [vmem:[%s270 + $0x740] sm:$0xff] %v735
                %v737 = vld [vmem:[%s269 + $0xe88] sm:$0xff]
                %738 = vst [vmem:[%s270 + $0x748] sm:$0xff] %v737
                %v739 = vld [vmem:[%s269 + $0xea0] sm:$0xff]
                %740 = vst [vmem:[%s270 + $0x750] sm:$0xff] %v739
                %v741 = vld [vmem:[%s269 + $0xea8] sm:$0xff]
                %742 = vst [vmem:[%s270 + $0x758] sm:$0xff] %v741
                %v743 = vld [vmem:[%s269 + $0xec0] sm:$0xff]
                %744 = vst [vmem:[%s270 + $0x760] sm:$0xff] %v743
                %v745 = vld [vmem:[%s269 + $0xec8] sm:$0xff]
                %746 = vst [vmem:[%s270 + $0x768] sm:$0xff] %v745
                %v747 = vld [vmem:[%s269 + $0xee0] sm:$0xff]
                %748 = vst [vmem:[%s270 + $0x770] sm:$0xff] %v747
                %v749 = vld [vmem:[%s269 + $0xee8] sm:$0xff]
                %750 = vst [vmem:[%s270 + $0x778] sm:$0xff] %v749
                %v751 = vld [vmem:[%s269 + $0xf00] sm:$0xff]
                %752 = vst [vmem:[%s270 + $0x780] sm:$0xff] %v751
                %v753 = vld [vmem:[%s269 + $0xf08] sm:$0xff]
                %754 = vst [vmem:[%s270 + $0x788] sm:$0xff] %v753
                %v755 = vld [vmem:[%s269 + $0xf20] sm:$0xff]
                %756 = vst [vmem:[%s270 + $0x790] sm:$0xff] %v755
                %v757 = vld [vmem:[%s269 + $0xf28] sm:$0xff]
                %758 = vst [vmem:[%s270 + $0x798] sm:$0xff] %v757
                %v759 = vld [vmem:[%s269 + $0xf40] sm:$0xff]
                %760 = vst [vmem:[%s270 + $0x7a0] sm:$0xff] %v759
                %v761 = vld [vmem:[%s269 + $0xf48] sm:$0xff]
                %762 = vst [vmem:[%s270 + $0x7a8] sm:$0xff] %v761
                %v763 = vld [vmem:[%s269 + $0xf60] sm:$0xff]
                %764 = vst [vmem:[%s270 + $0x7b0] sm:$0xff] %v763
                %v765 = vld [vmem:[%s269 + $0xf68] sm:$0xff]
                %766 = vst [vmem:[%s270 + $0x7b8] sm:$0xff] %v765
                %v767 = vld [vmem:[%s269 + $0xf80] sm:$0xff]
                %768 = vst [vmem:[%s270 + $0x7c0] sm:$0xff] %v767
                %v769 = vld [vmem:[%s269 + $0xf88] sm:$0xff]
                %770 = vst [vmem:[%s270 + $0x7c8] sm:$0xff] %v769
                %v771 = vld [vmem:[%s269 + $0xfa0] sm:$0xff]
                %772 = vst [vmem:[%s270 + $0x7d0] sm:$0xff] %v771
                %v773 = vld [vmem:[%s269 + $0xfa8] sm:$0xff]
                %774 = vst [vmem:[%s270 + $0x7d8] sm:$0xff] %v773
                %v775 = vld [vmem:[%s269 + $0xfc0] sm:$0xff]
                %776 = vst [vmem:[%s270 + $0x7e0] sm:$0xff] %v775
                %v777 = vld [vmem:[%s269 + $0xfc8] sm:$0xff]
                %778 = vst [vmem:[%s270 + $0x7e8] sm:$0xff] %v777
                %v779 = vld [vmem:[%s269 + $0xfe0] sm:$0xff]
                %780 = vst [vmem:[%s270 + $0x7f0] sm:$0xff] %v779
                %v781 = vld [vmem:[%s269 + $0xfe8] sm:$0xff]
                %782 = vst [vmem:[%s270 + $0x7f8] sm:$0xff] %v781
                %v783 = vld [vmem:[%s269 + $0x1000] sm:$0xff]
                %784 = vst [vmem:[%s270 + $0x800] sm:$0xff] %v783
                %v785 = vld [vmem:[%s269 + $0x1008] sm:$0xff]
                %786 = vst [vmem:[%s270 + $0x808] sm:$0xff] %v785
                %v787 = vld [vmem:[%s269 + $0x1020] sm:$0xff]
                %788 = vst [vmem:[%s270 + $0x810] sm:$0xff] %v787
                %v789 = vld [vmem:[%s269 + $0x1028] sm:$0xff]
                %790 = vst [vmem:[%s270 + $0x818] sm:$0xff] %v789
                %v791 = vld [vmem:[%s269 + $0x1040] sm:$0xff]
                %792 = vst [vmem:[%s270 + $0x820] sm:$0xff] %v791
                %v793 = vld [vmem:[%s269 + $0x1048] sm:$0xff]
                %794 = vst [vmem:[%s270 + $0x828] sm:$0xff] %v793
                %v795 = vld [vmem:[%s269 + $0x1060] sm:$0xff]
                %796 = vst [vmem:[%s270 + $0x830] sm:$0xff] %v795
                %v797 = vld [vmem:[%s269 + $0x1068] sm:$0xff]
                %798 = vst [vmem:[%s270 + $0x838] sm:$0xff] %v797
                %v799 = vld [vmem:[%s269 + $0x1080] sm:$0xff]
                %800 = vst [vmem:[%s270 + $0x840] sm:$0xff] %v799
                %v801 = vld [vmem:[%s269 + $0x1088] sm:$0xff]
                %802 = vst [vmem:[%s270 + $0x848] sm:$0xff] %v801
                %v803 = vld [vmem:[%s269 + $0x10a0] sm:$0xff]
                %804 = vst [vmem:[%s270 + $0x850] sm:$0xff] %v803
                %v805 = vld [vmem:[%s269 + $0x10a8] sm:$0xff]
                %806 = vst [vmem:[%s270 + $0x858] sm:$0xff] %v805
                %v807 = vld [vmem:[%s269 + $0x10c0] sm:$0xff]
                %808 = vst [vmem:[%s270 + $0x860] sm:$0xff] %v807
                %v809 = vld [vmem:[%s269 + $0x10c8] sm:$0xff]
                %810 = vst [vmem:[%s270 + $0x868] sm:$0xff] %v809
                %v811 = vld [vmem:[%s269 + $0x10e0] sm:$0xff]
                %812 = vst [vmem:[%s270 + $0x870] sm:$0xff] %v811
                %v813 = vld [vmem:[%s269 + $0x10e8] sm:$0xff]
                %814 = vst [vmem:[%s270 + $0x878] sm:$0xff] %v813
                %v815 = vld [vmem:[%s269 + $0x1100] sm:$0xff]
                %816 = vst [vmem:[%s270 + $0x880] sm:$0xff] %v815
                %v817 = vld [vmem:[%s269 + $0x1108] sm:$0xff]
                %818 = vst [vmem:[%s270 + $0x888] sm:$0xff] %v817
                %v819 = vld [vmem:[%s269 + $0x1120] sm:$0xff]
                %820 = vst [vmem:[%s270 + $0x890] sm:$0xff] %v819
                %v821 = vld [vmem:[%s269 + $0x1128] sm:$0xff]
                %822 = vst [vmem:[%s270 + $0x898] sm:$0xff] %v821
                %v823 = vld [vmem:[%s269 + $0x1140] sm:$0xff]
                %824 = vst [vmem:[%s270 + $0x8a0] sm:$0xff] %v823
                %v825 = vld [vmem:[%s269 + $0x1148] sm:$0xff]
                %826 = vst [vmem:[%s270 + $0x8a8] sm:$0xff] %v825
                %v827 = vld [vmem:[%s269 + $0x1160] sm:$0xff]
                %828 = vst [vmem:[%s270 + $0x8b0] sm:$0xff] %v827
                %v829 = vld [vmem:[%s269 + $0x1168] sm:$0xff]
                %830 = vst [vmem:[%s270 + $0x8b8] sm:$0xff] %v829
                %v831 = vld [vmem:[%s269 + $0x1180] sm:$0xff]
                %832 = vst [vmem:[%s270 + $0x8c0] sm:$0xff] %v831
                %v833 = vld [vmem:[%s269 + $0x1188] sm:$0xff]
                %834 = vst [vmem:[%s270 + $0x8c8] sm:$0xff] %v833
                %v835 = vld [vmem:[%s269 + $0x11a0] sm:$0xff]
                %836 = vst [vmem:[%s270 + $0x8d0] sm:$0xff] %v835
                %v837 = vld [vmem:[%s269 + $0x11a8] sm:$0xff]
                %838 = vst [vmem:[%s270 + $0x8d8] sm:$0xff] %v837
                %v839 = vld [vmem:[%s269 + $0x11c0] sm:$0xff]
                %840 = vst [vmem:[%s270 + $0x8e0] sm:$0xff] %v839
                %v841 = vld [vmem:[%s269 + $0x11c8] sm:$0xff]
                %842 = vst [vmem:[%s270 + $0x8e8] sm:$0xff] %v841
                %v843 = vld [vmem:[%s269 + $0x11e0] sm:$0xff]
                %844 = vst [vmem:[%s270 + $0x8f0] sm:$0xff] %v843
                %v845 = vld [vmem:[%s269 + $0x11e8] sm:$0xff]
                %846 = vst [vmem:[%s270 + $0x8f8] sm:$0xff] %v845
                %v847 = vld [vmem:[%s269 + $0x1200] sm:$0xff]
                %848 = vst [vmem:[%s270 + $0x900] sm:$0xff] %v847
                %v849 = vld [vmem:[%s269 + $0x1208] sm:$0xff]
                %850 = vst [vmem:[%s270 + $0x908] sm:$0xff] %v849
                %v851 = vld [vmem:[%s269 + $0x1220] sm:$0xff]
                %852 = vst [vmem:[%s270 + $0x910] sm:$0xff] %v851
                %v853 = vld [vmem:[%s269 + $0x1228] sm:$0xff]
                %854 = vst [vmem:[%s270 + $0x918] sm:$0xff] %v853
                %v855 = vld [vmem:[%s269 + $0x1240] sm:$0xff]
                %856 = vst [vmem:[%s270 + $0x920] sm:$0xff] %v855
                %v857 = vld [vmem:[%s269 + $0x1248] sm:$0xff]
                %858 = vst [vmem:[%s270 + $0x928] sm:$0xff] %v857
                %v859 = vld [vmem:[%s269 + $0x1260] sm:$0xff]
                %860 = vst [vmem:[%s270 + $0x930] sm:$0xff] %v859
                %v861 = vld [vmem:[%s269 + $0x1268] sm:$0xff]
                %862 = vst [vmem:[%s270 + $0x938] sm:$0xff] %v861
                %v863 = vld [vmem:[%s269 + $0x1280] sm:$0xff]
                %864 = vst [vmem:[%s270 + $0x940] sm:$0xff] %v863
                %v865 = vld [vmem:[%s269 + $0x1288] sm:$0xff]
                %866 = vst [vmem:[%s270 + $0x948] sm:$0xff] %v865
                %v867 = vld [vmem:[%s269 + $0x12a0] sm:$0xff]
                %868 = vst [vmem:[%s270 + $0x950] sm:$0xff] %v867
                %v869 = vld [vmem:[%s269 + $0x12a8] sm:$0xff]
                %870 = vst [vmem:[%s270 + $0x958] sm:$0xff] %v869
                %v871 = vld [vmem:[%s269 + $0x12c0] sm:$0xff]
                %872 = vst [vmem:[%s270 + $0x960] sm:$0xff] %v871
                %v873 = vld [vmem:[%s269 + $0x12c8] sm:$0xff]
                %874 = vst [vmem:[%s270 + $0x968] sm:$0xff] %v873
                %v875 = vld [vmem:[%s269 + $0x12e0] sm:$0xff]
                %876 = vst [vmem:[%s270 + $0x970] sm:$0xff] %v875
                %v877 = vld [vmem:[%s269 + $0x12e8] sm:$0xff]
                %878 = vst [vmem:[%s270 + $0x978] sm:$0xff] %v877
                %v879 = vld [vmem:[%s269 + $0x1300] sm:$0xff]
                %880 = vst [vmem:[%s270 + $0x980] sm:$0xff] %v879
                %v881 = vld [vmem:[%s269 + $0x1308] sm:$0xff]
                %882 = vst [vmem:[%s270 + $0x988] sm:$0xff] %v881
                %v883 = vld [vmem:[%s269 + $0x1320] sm:$0xff]
                %884 = vst [vmem:[%s270 + $0x990] sm:$0xff] %v883
                %v885 = vld [vmem:[%s269 + $0x1328] sm:$0xff]
                %886 = vst [vmem:[%s270 + $0x998] sm:$0xff] %v885
                %v887 = vld [vmem:[%s269 + $0x1340] sm:$0xff]
                %888 = vst [vmem:[%s270 + $0x9a0] sm:$0xff] %v887
                %v889 = vld [vmem:[%s269 + $0x1348] sm:$0xff]
                %890 = vst [vmem:[%s270 + $0x9a8] sm:$0xff] %v889
                %v891 = vld [vmem:[%s269 + $0x1360] sm:$0xff]
                %892 = vst [vmem:[%s270 + $0x9b0] sm:$0xff] %v891
                %v893 = vld [vmem:[%s269 + $0x1368] sm:$0xff]
                %894 = vst [vmem:[%s270 + $0x9b8] sm:$0xff] %v893
                %v895 = vld [vmem:[%s269 + $0x1380] sm:$0xff]
                %896 = vst [vmem:[%s270 + $0x9c0] sm:$0xff] %v895
                %v897 = vld [vmem:[%s269 + $0x1388] sm:$0xff]
                %898 = vst [vmem:[%s270 + $0x9c8] sm:$0xff] %v897
                %v899 = vld [vmem:[%s269 + $0x13a0] sm:$0xff]
                %900 = vst [vmem:[%s270 + $0x9d0] sm:$0xff] %v899
                %v901 = vld [vmem:[%s269 + $0x13a8] sm:$0xff]
                %902 = vst [vmem:[%s270 + $0x9d8] sm:$0xff] %v901
                %v903 = vld [vmem:[%s269 + $0x13c0] sm:$0xff]
                %904 = vst [vmem:[%s270 + $0x9e0] sm:$0xff] %v903
                %v905 = vld [vmem:[%s269 + $0x13c8] sm:$0xff]
                %906 = vst [vmem:[%s270 + $0x9e8] sm:$0xff] %v905
                %v907 = vld [vmem:[%s269 + $0x13e0] sm:$0xff]
                %908 = vst [vmem:[%s270 + $0x9f0] sm:$0xff] %v907
                %v909 = vld [vmem:[%s269 + $0x13e8] sm:$0xff]
                %910 = vst [vmem:[%s270 + $0x9f8] sm:$0xff] %v909
                %v911 = vld [vmem:[%s269 + $0x1400] sm:$0xff]
                %912 = vst [vmem:[%s270 + $0xa00] sm:$0xff] %v911
                %v913 = vld [vmem:[%s269 + $0x1408] sm:$0xff]
                %914 = vst [vmem:[%s270 + $0xa08] sm:$0xff] %v913
                %v915 = vld [vmem:[%s269 + $0x1420] sm:$0xff]
                %916 = vst [vmem:[%s270 + $0xa10] sm:$0xff] %v915
                %v917 = vld [vmem:[%s269 + $0x1428] sm:$0xff]
                %918 = vst [vmem:[%s270 + $0xa18] sm:$0xff] %v917
                %v919 = vld [vmem:[%s269 + $0x1440] sm:$0xff]
                %920 = vst [vmem:[%s270 + $0xa20] sm:$0xff] %v919
                %v921 = vld [vmem:[%s269 + $0x1448] sm:$0xff]
                %922 = vst [vmem:[%s270 + $0xa28] sm:$0xff] %v921
                %v923 = vld [vmem:[%s269 + $0x1460] sm:$0xff]
                %924 = vst [vmem:[%s270 + $0xa30] sm:$0xff] %v923
                %v925 = vld [vmem:[%s269 + $0x1468] sm:$0xff]
                %926 = vst [vmem:[%s270 + $0xa38] sm:$0xff] %v925
                %v927 = vld [vmem:[%s269 + $0x1480] sm:$0xff]
                %928 = vst [vmem:[%s270 + $0xa40] sm:$0xff] %v927
                %v929 = vld [vmem:[%s269 + $0x1488] sm:$0xff]
                %930 = vst [vmem:[%s270 + $0xa48] sm:$0xff] %v929
                %v931 = vld [vmem:[%s269 + $0x14a0] sm:$0xff]
                %932 = vst [vmem:[%s270 + $0xa50] sm:$0xff] %v931
                %v933 = vld [vmem:[%s269 + $0x14a8] sm:$0xff]
                %934 = vst [vmem:[%s270 + $0xa58] sm:$0xff] %v933
                %v935 = vld [vmem:[%s269 + $0x14c0] sm:$0xff]
                %936 = vst [vmem:[%s270 + $0xa60] sm:$0xff] %v935
                %v937 = vld [vmem:[%s269 + $0x14c8] sm:$0xff]
                %938 = vst [vmem:[%s270 + $0xa68] sm:$0xff] %v937
                %v939 = vld [vmem:[%s269 + $0x14e0] sm:$0xff]
                %940 = vst [vmem:[%s270 + $0xa70] sm:$0xff] %v939
                %v941 = vld [vmem:[%s269 + $0x14e8] sm:$0xff]
                %942 = vst [vmem:[%s270 + $0xa78] sm:$0xff] %v941
                %v943 = vld [vmem:[%s269 + $0x1500] sm:$0xff]
                %944 = vst [vmem:[%s270 + $0xa80] sm:$0xff] %v943
                %v945 = vld [vmem:[%s269 + $0x1508] sm:$0xff]
                %946 = vst [vmem:[%s270 + $0xa88] sm:$0xff] %v945
                %v947 = vld [vmem:[%s269 + $0x1520] sm:$0xff]
                %948 = vst [vmem:[%s270 + $0xa90] sm:$0xff] %v947
                %v949 = vld [vmem:[%s269 + $0x1528] sm:$0xff]
                %950 = vst [vmem:[%s270 + $0xa98] sm:$0xff] %v949
                %v951 = vld [vmem:[%s269 + $0x1540] sm:$0xff]
                %952 = vst [vmem:[%s270 + $0xaa0] sm:$0xff] %v951
                %v953 = vld [vmem:[%s269 + $0x1548] sm:$0xff]
                %954 = vst [vmem:[%s270 + $0xaa8] sm:$0xff] %v953
                %v955 = vld [vmem:[%s269 + $0x1560] sm:$0xff]
                %956 = vst [vmem:[%s270 + $0xab0] sm:$0xff] %v955
                %v957 = vld [vmem:[%s269 + $0x1568] sm:$0xff]
                %958 = vst [vmem:[%s270 + $0xab8] sm:$0xff] %v957
                %v959 = vld [vmem:[%s269 + $0x1580] sm:$0xff]
                %960 = vst [vmem:[%s270 + $0xac0] sm:$0xff] %v959
                %v961 = vld [vmem:[%s269 + $0x1588] sm:$0xff]
                %962 = vst [vmem:[%s270 + $0xac8] sm:$0xff] %v961
                %v963 = vld [vmem:[%s269 + $0x15a0] sm:$0xff]
                %964 = vst [vmem:[%s270 + $0xad0] sm:$0xff] %v963
                %v965 = vld [vmem:[%s269 + $0x15a8] sm:$0xff]
                %966 = vst [vmem:[%s270 + $0xad8] sm:$0xff] %v965
                %v967 = vld [vmem:[%s269 + $0x15c0] sm:$0xff]
                %968 = vst [vmem:[%s270 + $0xae0] sm:$0xff] %v967
                %v969 = vld [vmem:[%s269 + $0x15c8] sm:$0xff]
                %970 = vst [vmem:[%s270 + $0xae8] sm:$0xff] %v969
                %v971 = vld [vmem:[%s269 + $0x15e0] sm:$0xff]
                %972 = vst [vmem:[%s270 + $0xaf0] sm:$0xff] %v971
                %v973 = vld [vmem:[%s269 + $0x15e8] sm:$0xff]
                %974 = vst [vmem:[%s270 + $0xaf8] sm:$0xff] %v973
              $region59: #{cnn_forward.9} parent=53 // loop_footer
                %s268 = sadd.s32 1, %s264
              $region60: #{cnn_forward.9} parent=53 // loop_footer_branch
                %263 = sbr.rel target = $region56
              $region61: #{cnn_forward.9} parent=53 // loop_exit
                _
            $region54: #{cnn_forward.9} parent=49 // pred_fallthru
              _
            // Predicated region
            $region62: #{cnn_forward.9} parent=49 // pred_check
              _
            $region63: #{cnn_forward.9} parent=49 // pred_check_branch
              %976 = sbr.rel target = $region65
            $region64: #{cnn_forward.9} parent=49 // pred_region
              _
            $region65: #{cnn_forward.9} parent=49 // pred_fallthru
              _
          $region50: #{cnn_forward.9} parent=45 // pred_fallthru
            _
          %977 = vnop
        $region46: #{cnn_forward.9} parent=15 // pred_fallthru
          _
        // Predicated region
        $region66: #{cnn_forward.9} parent=15 // pred_check
          %p978 = pneg %p105
        $region67: #{cnn_forward.9} parent=15 // pred_check_branch
          %980 = sbr.rel (%p978) target = $region69
        $region68: #{cnn_forward.9} parent=15 // pred_region
          %s981 = smul.u32 4, %s18
          %p982 = scmp.lt.s32.totalorder %s981, 7
          %s983 = scalar_select %p982, %s981, 7
          %s984 = scalar_lea.vmem %s2, %s983
          %s985 = smul.u32 4, %s18
        $region69: #{cnn_forward.9} parent=15 // pred_fallthru
          _
        // Predicated region
        $region70: #{cnn_forward.9} parent=15 // pred_check
          %p986 = pneg %p131
        $region71: #{cnn_forward.9} parent=15 // pred_check_branch
          %988 = sbr.rel (%p986) target = $region73
        $region72: #{cnn_forward.9} parent=15 // pred_region
          %s989 = smul.u32 4, %s18
          %p990 = scmp.lt.s32.totalorder %s989, 7
          %s991 = scalar_select %p990, %s989, 7
          %s992 = scalar_lea.vmem %s3, %s991
          %s993 = smul.u32 4, %s18
        $region73: #{cnn_forward.9} parent=15 // pred_fallthru
          _
      $region16: #{cnn_forward.9} parent=5 // pred_fallthru
        _
      %p994 = scmp.le.s32.totalorder 1, %s10
      %p995 = scmp.lt.s32.totalorder %s10, 23
      %p996 = pnand %p994, %p995
      %p997 = pneg %p996
      // Predicated region
      $region74: #{cnn_forward.9} parent=5 // pred_check
        _
      $region75: #{cnn_forward.9} parent=5 // pred_check_branch
        %999 = sbr.rel (%p996) target = $region77
      $region76: #{cnn_forward.9} parent=5 // pred_region
        %s1000 = ssub.s32 %s10, 1
        %s1001 = sand.u32 %s44, 1
        %s1002 = sand.u32 %s44, 1
        %s1003 = smul.addr %s1002, 88
        %s1004 = scalar_lea.vmem [#allocation3], %s1003
        // Predicated region
        $region78: #{cnn_forward.9} parent=76 // pred_check
          %p1005 = pneg %p57
        $region79: #{cnn_forward.9} parent=76 // pred_check_branch
          %1007 = sbr.rel (%p1005) target = $region81
        $region80: #{cnn_forward.9} parent=76 // pred_region
          _
        $region81: #{cnn_forward.9} parent=76 // pred_fallthru
          _
        %s1008 = sand.u32 %s72, 1
        %s1009 = sand.u32 %s72, 1
        %s1010 = smul.addr %s1009, 2816
        %s1011 = scalar_lea.vmem [#allocation4], %s1010
        // Predicated region
        $region82: #{cnn_forward.9} parent=76 // pred_check
          %p1012 = pneg %p85
        $region83: #{cnn_forward.9} parent=76 // pred_check_branch
          %1014 = sbr.rel (%p1012) target = $region85
        $region84: #{cnn_forward.9} parent=76 // pred_region
          _
        $region85: #{cnn_forward.9} parent=76 // pred_fallthru
          _
        %s1015 = sand.u32 %s44, 1
        %s1016 = sand.u32 %s44, 1
        %s1017 = smul.addr %s1016, 88
        %s1018 = scalar_lea.vmem [#allocation3], %s1017
        %p1019 = pneg %p57
        %p1020 = pneg %p54
        %s1021 = sand.u32 %s72, 1
        %s1022 = sand.u32 %s72, 1
        %s1023 = smul.addr %s1022, 2816
        %s1024 = scalar_lea.vmem [#allocation4], %s1023
        %p1025 = pneg %p85
        %p1026 = pneg %p82
        %s1027 = smul.u32 4, %s21
        %p1028 = scmp.lt.s32.totalorder %s1027, 7
        %s1029 = scalar_select %p1028, %s1027, 7
        %s1030 = scalar_lea.vmem %s2, %s1029
        %p1031 = pneg %p111
        %p1032 = pneg %p108
        %s1033 = smul.u32 4, %s21
        %p1034 = scmp.lt.s32.totalorder %s1033, 7
        %s1035 = scalar_select %p1034, %s1033, 7
        %s1036 = scalar_lea.vmem %s3, %s1035
        %p1037 = pneg %p137
        %p1038 = pneg %p134
        %p1039 = pneg %p165
        %p1040 = pneg %p162
        %s1041 = sand.u32 %s152, 1
        %s1042 = sand.u32 %s152, 1
        %s1043 = smul.addr %s1042, 64
        %s1044 = scalar_lea.vmem [#allocation5], %s1043
        %s1045 = smul.u32 2, %s20
        %s1046 = smul.u32 11, %s22
        %s1047 = smul.u32 176, %s22
        %s1048 = smul.u32 4, %s21
        %s1049 = smul.u32 4, %s21
        %p1050 = scmp.lt.s32.totalorder %s1049, 7
        %s1051 = scalar_select %p1050, %s1049, 7
        %s1052 = scalar_lea.vmem %s2, %s1051
        %s1053 = smul.u32 4, %s21
        %s1054 = smul.u32 4, %s21
        %p1055 = scmp.lt.s32.totalorder %s1054, 7
        %s1056 = scalar_select %p1055, %s1054, 7
        %s1057 = scalar_lea.vmem %s3, %s1056
        %s1058 = smul.u32 4, %s21
        %s1059 = smul.u32 2, %s20
        %s1060 = smul.u32 4, %s21
        %p1061 = scmp.eq.s32.totalorder %s22, 0
        // Predicated region
        $region86: #{cnn_forward.9} parent=76 // pred_check
          %p1062 = pneg %p1061
        $region87: #{cnn_forward.9} parent=76 // pred_check_branch
          %1064 = sbr.rel (%p1062) target = $region89
        $region88: #{cnn_forward.9} parent=76 // pred_region
          %1065 = vst [vmem:[#allocation2] sm:$0xff] 0.0
          %1066 = vst [vmem:[#allocation2 + $0x8] sm:$0xff] 0.0
          %1067 = vst [vmem:[#allocation2 + $0x10] sm:$0xff] 0.0
          %1068 = vst [vmem:[#allocation2 + $0x18] sm:$0xff] 0.0
          %1069 = vst [vmem:[#allocation2 + $0x20] sm:$0xff] 0.0
          %1070 = vst [vmem:[#allocation2 + $0x28] sm:$0xff] 0.0
          %1071 = vst [vmem:[#allocation2 + $0x30] sm:$0xff] 0.0
          %1072 = vst [vmem:[#allocation2 + $0x38] sm:$0xff] 0.0
        $region89: #{cnn_forward.9} parent=76 // pred_fallthru
          _
        %v1073 = vld [vmem:[#allocation2] sm:$0xff]
        %v1074 = vld [vmem:[#allocation2 + $0x8] sm:$0xff]
        %v1075 = vld [vmem:[#allocation2 + $0x10] sm:$0xff]
        %v1076 = vld [vmem:[#allocation2 + $0x18] sm:$0xff]
        %v1077 = vld [vmem:[#allocation2 + $0x20] sm:$0xff]
        %v1078 = vld [vmem:[#allocation2 + $0x28] sm:$0xff]
        %v1079 = vld [vmem:[#allocation2 + $0x30] sm:$0xff]
        %v1080 = vld [vmem:[#allocation2 + $0x38] sm:$0xff]
        %v1081 = vld [vmem:[%s1004] sm:$0xff]
        %v1082 = vld [vmem:[%s1004 + $0x8] sm:$0xff]
        %v1083 = vld [vmem:[%s1004 + $0x10] sm:$0xff]
        %v1084 = vld [vmem:[%s1004 + $0x18] sm:$0xff]
        %v1085 = vld [vmem:[%s1004 + $0x20] sm:$0xff]
        %v1086 = vld [vmem:[%s1004 + $0x28] sm:$0xf]
        %v1087 = vld [vmem:[%s1004 + $0x2c] sm:$0xff]
        %v1088 = vld [vmem:[%s1004 + $0x34] sm:$0xff]
        %v1089 = vld [vmem:[%s1004 + $0x3c] sm:$0xff]
        %v1090 = vld [vmem:[%s1004 + $0x44] sm:$0xff]
        %v1091 = vld [vmem:[%s1004 + $0x4c] sm:$0xff]
        %v1092 = vld [vmem:[%s1004 + $0x54] sm:$0xf]
        %v1093 = vld [vmem:[%s1011] sm:$0xff]
        %v1094 = vld [vmem:[%s1011 + $0x8] sm:$0xff]
        %v1095 = vld [vmem:[%s1011 + $0x10] sm:$0xff]
        %v1096 = vld [vmem:[%s1011 + $0x18] sm:$0xff]
        %v1097 = vld [vmem:[%s1011 + $0x20] sm:$0xff]
        %v1098 = vld [vmem:[%s1011 + $0x28] sm:$0xff]
        %v1099 = vld [vmem:[%s1011 + $0x30] sm:$0xff]
        %v1100 = vld [vmem:[%s1011 + $0x38] sm:$0xff]
        %v1101 = vld [vmem:[%s1011 + $0x40] sm:$0xff]
        %v1102 = vld [vmem:[%s1011 + $0x48] sm:$0xff]
        %v1103 = vld [vmem:[%s1011 + $0x50] sm:$0xff]
        %v1104 = vld [vmem:[%s1011 + $0x58] sm:$0xff]
        %v1105 = vld [vmem:[%s1011 + $0x60] sm:$0xff]
        %v1106 = vld [vmem:[%s1011 + $0x68] sm:$0xff]
        %v1107 = vld [vmem:[%s1011 + $0x70] sm:$0xff]
        %v1108 = vld [vmem:[%s1011 + $0x78] sm:$0xff]
        %v1109 = vld [vmem:[%s1011 + $0x80] sm:$0xff]
        %v1110 = vld [vmem:[%s1011 + $0x88] sm:$0xff]
        %v1111 = vld [vmem:[%s1011 + $0x90] sm:$0xff]
        %v1112 = vld [vmem:[%s1011 + $0x98] sm:$0xff]
        %v1113 = vld [vmem:[%s1011 + $0xa0] sm:$0xff]
        %v1114 = vld [vmem:[%s1011 + $0xa8] sm:$0xff]
        %v1115 = vld [vmem:[%s1011 + $0xb0] sm:$0xff]
        %v1116 = vld [vmem:[%s1011 + $0xb8] sm:$0xff]
        %v1117 = vld [vmem:[%s1011 + $0xc0] sm:$0xff]
        %v1118 = vld [vmem:[%s1011 + $0xc8] sm:$0xff]
        %v1119 = vld [vmem:[%s1011 + $0xd0] sm:$0xff]
        %v1120 = vld [vmem:[%s1011 + $0xd8] sm:$0xff]
        %v1121 = vld [vmem:[%s1011 + $0xe0] sm:$0xff]
        %v1122 = vld [vmem:[%s1011 + $0xe8] sm:$0xff]
        %v1123 = vld [vmem:[%s1011 + $0xf0] sm:$0xff]
        %v1124 = vld [vmem:[%s1011 + $0xf8] sm:$0xff]
        %v1125 = vld [vmem:[%s1011 + $0x100] sm:$0xff]
        %v1126 = vld [vmem:[%s1011 + $0x108] sm:$0xff]
        %v1127 = vld [vmem:[%s1011 + $0x110] sm:$0xff]
        %v1128 = vld [vmem:[%s1011 + $0x118] sm:$0xff]
        %v1129 = vld [vmem:[%s1011 + $0x120] sm:$0xff]
        %v1130 = vld [vmem:[%s1011 + $0x128] sm:$0xff]
        %v1131 = vld [vmem:[%s1011 + $0x130] sm:$0xff]
        %v1132 = vld [vmem:[%s1011 + $0x138] sm:$0xff]
        %v1133 = vld [vmem:[%s1011 + $0x140] sm:$0xff]
        %v1134 = vld [vmem:[%s1011 + $0x148] sm:$0xff]
        %v1135 = vld [vmem:[%s1011 + $0x150] sm:$0xff]
        %v1136 = vld [vmem:[%s1011 + $0x158] sm:$0xff]
        %v1137 = vld [vmem:[%s1011 + $0x160] sm:$0xff]
        %v1138 = vld [vmem:[%s1011 + $0x168] sm:$0xff]
        %v1139 = vld [vmem:[%s1011 + $0x170] sm:$0xff]
        %v1140 = vld [vmem:[%s1011 + $0x178] sm:$0xff]
        %v1141 = vld [vmem:[%s1011 + $0x180] sm:$0xff]
        %v1142 = vld [vmem:[%s1011 + $0x188] sm:$0xff]
        %v1143 = vld [vmem:[%s1011 + $0x190] sm:$0xff]
        %v1144 = vld [vmem:[%s1011 + $0x198] sm:$0xff]
        %v1145 = vld [vmem:[%s1011 + $0x1a0] sm:$0xff]
        %v1146 = vld [vmem:[%s1011 + $0x1a8] sm:$0xff]
        %v1147 = vld [vmem:[%s1011 + $0x1b0] sm:$0xff]
        %v1148 = vld [vmem:[%s1011 + $0x1b8] sm:$0xff]
        %v1149 = vld [vmem:[%s1011 + $0x1c0] sm:$0xff]
        %v1150 = vld [vmem:[%s1011 + $0x1c8] sm:$0xff]
        %v1151 = vld [vmem:[%s1011 + $0x1d0] sm:$0xff]
        %v1152 = vld [vmem:[%s1011 + $0x1d8] sm:$0xff]
        %v1153 = vld [vmem:[%s1011 + $0x1e0] sm:$0xff]
        %v1154 = vld [vmem:[%s1011 + $0x1e8] sm:$0xff]
        %v1155 = vld [vmem:[%s1011 + $0x1f0] sm:$0xff]
        %v1156 = vld [vmem:[%s1011 + $0x1f8] sm:$0xff]
        %v1157 = vld [vmem:[%s1011 + $0x200] sm:$0xff]
        %v1158 = vld [vmem:[%s1011 + $0x208] sm:$0xff]
        %v1159 = vld [vmem:[%s1011 + $0x210] sm:$0xff]
        %v1160 = vld [vmem:[%s1011 + $0x218] sm:$0xff]
        %v1161 = vld [vmem:[%s1011 + $0x220] sm:$0xff]
        %v1162 = vld [vmem:[%s1011 + $0x228] sm:$0xff]
        %v1163 = vld [vmem:[%s1011 + $0x230] sm:$0xff]
        %v1164 = vld [vmem:[%s1011 + $0x238] sm:$0xff]
        %v1165 = vld [vmem:[%s1011 + $0x240] sm:$0xff]
        %v1166 = vld [vmem:[%s1011 + $0x248] sm:$0xff]
        %v1167 = vld [vmem:[%s1011 + $0x250] sm:$0xff]
        %v1168 = vld [vmem:[%s1011 + $0x258] sm:$0xff]
        %v1169 = vld [vmem:[%s1011 + $0x260] sm:$0xff]
        %v1170 = vld [vmem:[%s1011 + $0x268] sm:$0xff]
        %v1171 = vld [vmem:[%s1011 + $0x270] sm:$0xff]
        %v1172 = vld [vmem:[%s1011 + $0x278] sm:$0xff]
        %v1173 = vld [vmem:[%s1011 + $0x280] sm:$0xff]
        %v1174 = vld [vmem:[%s1011 + $0x288] sm:$0xff]
        %v1175 = vld [vmem:[%s1011 + $0x290] sm:$0xff]
        %v1176 = vld [vmem:[%s1011 + $0x298] sm:$0xff]
        %v1177 = vld [vmem:[%s1011 + $0x2a0] sm:$0xff]
        %v1178 = vld [vmem:[%s1011 + $0x2a8] sm:$0xff]
        %v1179 = vld [vmem:[%s1011 + $0x2b0] sm:$0xff]
        %v1180 = vld [vmem:[%s1011 + $0x2b8] sm:$0xff]
        %v1181 = vld [vmem:[%s1011 + $0x2c0] sm:$0xff]
        %v1182 = vld [vmem:[%s1011 + $0x2c8] sm:$0xff]
        %v1183 = vld [vmem:[%s1011 + $0x2d0] sm:$0xff]
        %v1184 = vld [vmem:[%s1011 + $0x2d8] sm:$0xff]
        %v1185 = vld [vmem:[%s1011 + $0x2e0] sm:$0xff]
        %v1186 = vld [vmem:[%s1011 + $0x2e8] sm:$0xff]
        %v1187 = vld [vmem:[%s1011 + $0x2f0] sm:$0xff]
        %v1188 = vld [vmem:[%s1011 + $0x2f8] sm:$0xff]
        %v1189 = vld [vmem:[%s1011 + $0x300] sm:$0xff]
        %v1190 = vld [vmem:[%s1011 + $0x308] sm:$0xff]
        %v1191 = vld [vmem:[%s1011 + $0x310] sm:$0xff]
        %v1192 = vld [vmem:[%s1011 + $0x318] sm:$0xff]
        %v1193 = vld [vmem:[%s1011 + $0x320] sm:$0xff]
        %v1194 = vld [vmem:[%s1011 + $0x328] sm:$0xff]
        %v1195 = vld [vmem:[%s1011 + $0x330] sm:$0xff]
        %v1196 = vld [vmem:[%s1011 + $0x338] sm:$0xff]
        %v1197 = vld [vmem:[%s1011 + $0x340] sm:$0xff]
        %v1198 = vld [vmem:[%s1011 + $0x348] sm:$0xff]
        %v1199 = vld [vmem:[%s1011 + $0x350] sm:$0xff]
        %v1200 = vld [vmem:[%s1011 + $0x358] sm:$0xff]
        %v1201 = vld [vmem:[%s1011 + $0x360] sm:$0xff]
        %v1202 = vld [vmem:[%s1011 + $0x368] sm:$0xff]
        %v1203 = vld [vmem:[%s1011 + $0x370] sm:$0xff]
        %v1204 = vld [vmem:[%s1011 + $0x378] sm:$0xff]
        %v1205 = vld [vmem:[%s1011 + $0x380] sm:$0xff]
        %v1206 = vld [vmem:[%s1011 + $0x388] sm:$0xff]
        %v1207 = vld [vmem:[%s1011 + $0x390] sm:$0xff]
        %v1208 = vld [vmem:[%s1011 + $0x398] sm:$0xff]
        %v1209 = vld [vmem:[%s1011 + $0x3a0] sm:$0xff]
        %v1210 = vld [vmem:[%s1011 + $0x3a8] sm:$0xff]
        %v1211 = vld [vmem:[%s1011 + $0x3b0] sm:$0xff]
        %v1212 = vld [vmem:[%s1011 + $0x3b8] sm:$0xff]
        %v1213 = vld [vmem:[%s1011 + $0x3c0] sm:$0xff]
        %v1214 = vld [vmem:[%s1011 + $0x3c8] sm:$0xff]
        %v1215 = vld [vmem:[%s1011 + $0x3d0] sm:$0xff]
        %v1216 = vld [vmem:[%s1011 + $0x3d8] sm:$0xff]
        %v1217 = vld [vmem:[%s1011 + $0x3e0] sm:$0xff]
        %v1218 = vld [vmem:[%s1011 + $0x3e8] sm:$0xff]
        %v1219 = vld [vmem:[%s1011 + $0x3f0] sm:$0xff]
        %v1220 = vld [vmem:[%s1011 + $0x3f8] sm:$0xff]
        %v1221 = vld [vmem:[%s1011 + $0x400] sm:$0xff]
        %v1222 = vld [vmem:[%s1011 + $0x408] sm:$0xff]
        %v1223 = vld [vmem:[%s1011 + $0x410] sm:$0xff]
        %v1224 = vld [vmem:[%s1011 + $0x418] sm:$0xff]
        %v1225 = vld [vmem:[%s1011 + $0x420] sm:$0xff]
        %v1226 = vld [vmem:[%s1011 + $0x428] sm:$0xff]
        %v1227 = vld [vmem:[%s1011 + $0x430] sm:$0xff]
        %v1228 = vld [vmem:[%s1011 + $0x438] sm:$0xff]
        %v1229 = vld [vmem:[%s1011 + $0x440] sm:$0xff]
        %v1230 = vld [vmem:[%s1011 + $0x448] sm:$0xff]
        %v1231 = vld [vmem:[%s1011 + $0x450] sm:$0xff]
        %v1232 = vld [vmem:[%s1011 + $0x458] sm:$0xff]
        %v1233 = vld [vmem:[%s1011 + $0x460] sm:$0xff]
        %v1234 = vld [vmem:[%s1011 + $0x468] sm:$0xff]
        %v1235 = vld [vmem:[%s1011 + $0x470] sm:$0xff]
        %v1236 = vld [vmem:[%s1011 + $0x478] sm:$0xff]
        %v1237 = vld [vmem:[%s1011 + $0x480] sm:$0xff]
        %v1238 = vld [vmem:[%s1011 + $0x488] sm:$0xff]
        %v1239 = vld [vmem:[%s1011 + $0x490] sm:$0xff]
        %v1240 = vld [vmem:[%s1011 + $0x498] sm:$0xff]
        %v1241 = vld [vmem:[%s1011 + $0x4a0] sm:$0xff]
        %v1242 = vld [vmem:[%s1011 + $0x4a8] sm:$0xff]
        %v1243 = vld [vmem:[%s1011 + $0x4b0] sm:$0xff]
        %v1244 = vld [vmem:[%s1011 + $0x4b8] sm:$0xff]
        %v1245 = vld [vmem:[%s1011 + $0x4c0] sm:$0xff]
        %v1246 = vld [vmem:[%s1011 + $0x4c8] sm:$0xff]
        %v1247 = vld [vmem:[%s1011 + $0x4d0] sm:$0xff]
        %v1248 = vld [vmem:[%s1011 + $0x4d8] sm:$0xff]
        %v1249 = vld [vmem:[%s1011 + $0x4e0] sm:$0xff]
        %v1250 = vld [vmem:[%s1011 + $0x4e8] sm:$0xff]
        %v1251 = vld [vmem:[%s1011 + $0x4f0] sm:$0xff]
        %v1252 = vld [vmem:[%s1011 + $0x4f8] sm:$0xff]
        %v1253 = vld [vmem:[%s1011 + $0x500] sm:$0xff]
        %v1254 = vld [vmem:[%s1011 + $0x508] sm:$0xff]
        %v1255 = vld [vmem:[%s1011 + $0x510] sm:$0xff]
        %v1256 = vld [vmem:[%s1011 + $0x518] sm:$0xff]
        %v1257 = vld [vmem:[%s1011 + $0x520] sm:$0xff]
        %v1258 = vld [vmem:[%s1011 + $0x528] sm:$0xff]
        %v1259 = vld [vmem:[%s1011 + $0x530] sm:$0xff]
        %v1260 = vld [vmem:[%s1011 + $0x538] sm:$0xff]
        %v1261 = vld [vmem:[%s1011 + $0x540] sm:$0xff]
        %v1262 = vld [vmem:[%s1011 + $0x548] sm:$0xff]
        %v1263 = vld [vmem:[%s1011 + $0x550] sm:$0xff]
        %v1264 = vld [vmem:[%s1011 + $0x558] sm:$0xff]
        %v1265 = vld [vmem:[%s1011 + $0x560] sm:$0xff]
        %v1266 = vld [vmem:[%s1011 + $0x568] sm:$0xff]
        %v1267 = vld [vmem:[%s1011 + $0x570] sm:$0xff]
        %v1268 = vld [vmem:[%s1011 + $0x578] sm:$0xff]
        %v1269 = vld [vmem:[%s1011 + $0x580] sm:$0xff]
        %v1270 = vld [vmem:[%s1011 + $0x588] sm:$0xff]
        %v1271 = vld [vmem:[%s1011 + $0x590] sm:$0xff]
        %v1272 = vld [vmem:[%s1011 + $0x598] sm:$0xff]
        %v1273 = vld [vmem:[%s1011 + $0x5a0] sm:$0xff]
        %v1274 = vld [vmem:[%s1011 + $0x5a8] sm:$0xff]
        %v1275 = vld [vmem:[%s1011 + $0x5b0] sm:$0xff]
        %v1276 = vld [vmem:[%s1011 + $0x5b8] sm:$0xff]
        %v1277 = vld [vmem:[%s1011 + $0x5c0] sm:$0xff]
        %v1278 = vld [vmem:[%s1011 + $0x5c8] sm:$0xff]
        %v1279 = vld [vmem:[%s1011 + $0x5d0] sm:$0xff]
        %v1280 = vld [vmem:[%s1011 + $0x5d8] sm:$0xff]
        %v1281 = vld [vmem:[%s1011 + $0x5e0] sm:$0xff]
        %v1282 = vld [vmem:[%s1011 + $0x5e8] sm:$0xff]
        %v1283 = vld [vmem:[%s1011 + $0x5f0] sm:$0xff]
        %v1284 = vld [vmem:[%s1011 + $0x5f8] sm:$0xff]
        %v1285 = vld [vmem:[%s1011 + $0x600] sm:$0xff]
        %v1286 = vld [vmem:[%s1011 + $0x608] sm:$0xff]
        %v1287 = vld [vmem:[%s1011 + $0x610] sm:$0xff]
        %v1288 = vld [vmem:[%s1011 + $0x618] sm:$0xff]
        %v1289 = vld [vmem:[%s1011 + $0x620] sm:$0xff]
        %v1290 = vld [vmem:[%s1011 + $0x628] sm:$0xff]
        %v1291 = vld [vmem:[%s1011 + $0x630] sm:$0xff]
        %v1292 = vld [vmem:[%s1011 + $0x638] sm:$0xff]
        %v1293 = vld [vmem:[%s1011 + $0x640] sm:$0xff]
        %v1294 = vld [vmem:[%s1011 + $0x648] sm:$0xff]
        %v1295 = vld [vmem:[%s1011 + $0x650] sm:$0xff]
        %v1296 = vld [vmem:[%s1011 + $0x658] sm:$0xff]
        %v1297 = vld [vmem:[%s1011 + $0x660] sm:$0xff]
        %v1298 = vld [vmem:[%s1011 + $0x668] sm:$0xff]
        %v1299 = vld [vmem:[%s1011 + $0x670] sm:$0xff]
        %v1300 = vld [vmem:[%s1011 + $0x678] sm:$0xff]
        %v1301 = vld [vmem:[%s1011 + $0x680] sm:$0xff]
        %v1302 = vld [vmem:[%s1011 + $0x688] sm:$0xff]
        %v1303 = vld [vmem:[%s1011 + $0x690] sm:$0xff]
        %v1304 = vld [vmem:[%s1011 + $0x698] sm:$0xff]
        %v1305 = vld [vmem:[%s1011 + $0x6a0] sm:$0xff]
        %v1306 = vld [vmem:[%s1011 + $0x6a8] sm:$0xff]
        %v1307 = vld [vmem:[%s1011 + $0x6b0] sm:$0xff]
        %v1308 = vld [vmem:[%s1011 + $0x6b8] sm:$0xff]
        %v1309 = vld [vmem:[%s1011 + $0x6c0] sm:$0xff]
        %v1310 = vld [vmem:[%s1011 + $0x6c8] sm:$0xff]
        %v1311 = vld [vmem:[%s1011 + $0x6d0] sm:$0xff]
        %v1312 = vld [vmem:[%s1011 + $0x6d8] sm:$0xff]
        %v1313 = vld [vmem:[%s1011 + $0x6e0] sm:$0xff]
        %v1314 = vld [vmem:[%s1011 + $0x6e8] sm:$0xff]
        %v1315 = vld [vmem:[%s1011 + $0x6f0] sm:$0xff]
        %v1316 = vld [vmem:[%s1011 + $0x6f8] sm:$0xff]
        %v1317 = vld [vmem:[%s1011 + $0x700] sm:$0xff]
        %v1318 = vld [vmem:[%s1011 + $0x708] sm:$0xff]
        %v1319 = vld [vmem:[%s1011 + $0x710] sm:$0xff]
        %v1320 = vld [vmem:[%s1011 + $0x718] sm:$0xff]
        %v1321 = vld [vmem:[%s1011 + $0x720] sm:$0xff]
        %v1322 = vld [vmem:[%s1011 + $0x728] sm:$0xff]
        %v1323 = vld [vmem:[%s1011 + $0x730] sm:$0xff]
        %v1324 = vld [vmem:[%s1011 + $0x738] sm:$0xff]
        %v1325 = vld [vmem:[%s1011 + $0x740] sm:$0xff]
        %v1326 = vld [vmem:[%s1011 + $0x748] sm:$0xff]
        %v1327 = vld [vmem:[%s1011 + $0x750] sm:$0xff]
        %v1328 = vld [vmem:[%s1011 + $0x758] sm:$0xff]
        %v1329 = vld [vmem:[%s1011 + $0x760] sm:$0xff]
        %v1330 = vld [vmem:[%s1011 + $0x768] sm:$0xff]
        %v1331 = vld [vmem:[%s1011 + $0x770] sm:$0xff]
        %v1332 = vld [vmem:[%s1011 + $0x778] sm:$0xff]
        %v1333 = vld [vmem:[%s1011 + $0x780] sm:$0xff]
        %v1334 = vld [vmem:[%s1011 + $0x788] sm:$0xff]
        %v1335 = vld [vmem:[%s1011 + $0x790] sm:$0xff]
        %v1336 = vld [vmem:[%s1011 + $0x798] sm:$0xff]
        %v1337 = vld [vmem:[%s1011 + $0x7a0] sm:$0xff]
        %v1338 = vld [vmem:[%s1011 + $0x7a8] sm:$0xff]
        %v1339 = vld [vmem:[%s1011 + $0x7b0] sm:$0xff]
        %v1340 = vld [vmem:[%s1011 + $0x7b8] sm:$0xff]
        %v1341 = vld [vmem:[%s1011 + $0x7c0] sm:$0xff]
        %v1342 = vld [vmem:[%s1011 + $0x7c8] sm:$0xff]
        %v1343 = vld [vmem:[%s1011 + $0x7d0] sm:$0xff]
        %v1344 = vld [vmem:[%s1011 + $0x7d8] sm:$0xff]
        %v1345 = vld [vmem:[%s1011 + $0x7e0] sm:$0xff]
        %v1346 = vld [vmem:[%s1011 + $0x7e8] sm:$0xff]
        %v1347 = vld [vmem:[%s1011 + $0x7f0] sm:$0xff]
        %v1348 = vld [vmem:[%s1011 + $0x7f8] sm:$0xff]
        %v1349 = vld [vmem:[%s1011 + $0x800] sm:$0xff]
        %v1350 = vld [vmem:[%s1011 + $0x808] sm:$0xff]
        %v1351 = vld [vmem:[%s1011 + $0x810] sm:$0xff]
        %v1352 = vld [vmem:[%s1011 + $0x818] sm:$0xff]
        %v1353 = vld [vmem:[%s1011 + $0x820] sm:$0xff]
        %v1354 = vld [vmem:[%s1011 + $0x828] sm:$0xff]
        %v1355 = vld [vmem:[%s1011 + $0x830] sm:$0xff]
        %v1356 = vld [vmem:[%s1011 + $0x838] sm:$0xff]
        %v1357 = vld [vmem:[%s1011 + $0x840] sm:$0xff]
        %v1358 = vld [vmem:[%s1011 + $0x848] sm:$0xff]
        %v1359 = vld [vmem:[%s1011 + $0x850] sm:$0xff]
        %v1360 = vld [vmem:[%s1011 + $0x858] sm:$0xff]
        %v1361 = vld [vmem:[%s1011 + $0x860] sm:$0xff]
        %v1362 = vld [vmem:[%s1011 + $0x868] sm:$0xff]
        %v1363 = vld [vmem:[%s1011 + $0x870] sm:$0xff]
        %v1364 = vld [vmem:[%s1011 + $0x878] sm:$0xff]
        %v1365 = vld [vmem:[%s1011 + $0x880] sm:$0xff]
        %v1366 = vld [vmem:[%s1011 + $0x888] sm:$0xff]
        %v1367 = vld [vmem:[%s1011 + $0x890] sm:$0xff]
        %v1368 = vld [vmem:[%s1011 + $0x898] sm:$0xff]
        %v1369 = vld [vmem:[%s1011 + $0x8a0] sm:$0xff]
        %v1370 = vld [vmem:[%s1011 + $0x8a8] sm:$0xff]
        %v1371 = vld [vmem:[%s1011 + $0x8b0] sm:$0xff]
        %v1372 = vld [vmem:[%s1011 + $0x8b8] sm:$0xff]
        %v1373 = vld [vmem:[%s1011 + $0x8c0] sm:$0xff]
        %v1374 = vld [vmem:[%s1011 + $0x8c8] sm:$0xff]
        %v1375 = vld [vmem:[%s1011 + $0x8d0] sm:$0xff]
        %v1376 = vld [vmem:[%s1011 + $0x8d8] sm:$0xff]
        %v1377 = vld [vmem:[%s1011 + $0x8e0] sm:$0xff]
        %v1378 = vld [vmem:[%s1011 + $0x8e8] sm:$0xff]
        %v1379 = vld [vmem:[%s1011 + $0x8f0] sm:$0xff]
        %v1380 = vld [vmem:[%s1011 + $0x8f8] sm:$0xff]
        %v1381 = vld [vmem:[%s1011 + $0x900] sm:$0xff]
        %v1382 = vld [vmem:[%s1011 + $0x908] sm:$0xff]
        %v1383 = vld [vmem:[%s1011 + $0x910] sm:$0xff]
        %v1384 = vld [vmem:[%s1011 + $0x918] sm:$0xff]
        %v1385 = vld [vmem:[%s1011 + $0x920] sm:$0xff]
        %v1386 = vld [vmem:[%s1011 + $0x928] sm:$0xff]
        %v1387 = vld [vmem:[%s1011 + $0x930] sm:$0xff]
        %v1388 = vld [vmem:[%s1011 + $0x938] sm:$0xff]
        %v1389 = vld [vmem:[%s1011 + $0x940] sm:$0xff]
        %v1390 = vld [vmem:[%s1011 + $0x948] sm:$0xff]
        %v1391 = vld [vmem:[%s1011 + $0x950] sm:$0xff]
        %v1392 = vld [vmem:[%s1011 + $0x958] sm:$0xff]
        %v1393 = vld [vmem:[%s1011 + $0x960] sm:$0xff]
        %v1394 = vld [vmem:[%s1011 + $0x968] sm:$0xff]
        %v1395 = vld [vmem:[%s1011 + $0x970] sm:$0xff]
        %v1396 = vld [vmem:[%s1011 + $0x978] sm:$0xff]
        %v1397 = vld [vmem:[%s1011 + $0x980] sm:$0xff]
        %v1398 = vld [vmem:[%s1011 + $0x988] sm:$0xff]
        %v1399 = vld [vmem:[%s1011 + $0x990] sm:$0xff]
        %v1400 = vld [vmem:[%s1011 + $0x998] sm:$0xff]
        %v1401 = vld [vmem:[%s1011 + $0x9a0] sm:$0xff]
        %v1402 = vld [vmem:[%s1011 + $0x9a8] sm:$0xff]
        %v1403 = vld [vmem:[%s1011 + $0x9b0] sm:$0xff]
        %v1404 = vld [vmem:[%s1011 + $0x9b8] sm:$0xff]
        %v1405 = vld [vmem:[%s1011 + $0x9c0] sm:$0xff]
        %v1406 = vld [vmem:[%s1011 + $0x9c8] sm:$0xff]
        %v1407 = vld [vmem:[%s1011 + $0x9d0] sm:$0xff]
        %v1408 = vld [vmem:[%s1011 + $0x9d8] sm:$0xff]
        %v1409 = vld [vmem:[%s1011 + $0x9e0] sm:$0xff]
        %v1410 = vld [vmem:[%s1011 + $0x9e8] sm:$0xff]
        %v1411 = vld [vmem:[%s1011 + $0x9f0] sm:$0xff]
        %v1412 = vld [vmem:[%s1011 + $0x9f8] sm:$0xff]
        %v1413 = vld [vmem:[%s1011 + $0xa00] sm:$0xff]
        %v1414 = vld [vmem:[%s1011 + $0xa08] sm:$0xff]
        %v1415 = vld [vmem:[%s1011 + $0xa10] sm:$0xff]
        %v1416 = vld [vmem:[%s1011 + $0xa18] sm:$0xff]
        %v1417 = vld [vmem:[%s1011 + $0xa20] sm:$0xff]
        %v1418 = vld [vmem:[%s1011 + $0xa28] sm:$0xff]
        %v1419 = vld [vmem:[%s1011 + $0xa30] sm:$0xff]
        %v1420 = vld [vmem:[%s1011 + $0xa38] sm:$0xff]
        %v1421 = vld [vmem:[%s1011 + $0xa40] sm:$0xff]
        %v1422 = vld [vmem:[%s1011 + $0xa48] sm:$0xff]
        %v1423 = vld [vmem:[%s1011 + $0xa50] sm:$0xff]
        %v1424 = vld [vmem:[%s1011 + $0xa58] sm:$0xff]
        %v1425 = vld [vmem:[%s1011 + $0xa60] sm:$0xff]
        %v1426 = vld [vmem:[%s1011 + $0xa68] sm:$0xff]
        %v1427 = vld [vmem:[%s1011 + $0xa70] sm:$0xff]
        %v1428 = vld [vmem:[%s1011 + $0xa78] sm:$0xff]
        %v1429 = vld [vmem:[%s1011 + $0xa80] sm:$0xff]
        %v1430 = vld [vmem:[%s1011 + $0xa88] sm:$0xff]
        %v1431 = vld [vmem:[%s1011 + $0xa90] sm:$0xff]
        %v1432 = vld [vmem:[%s1011 + $0xa98] sm:$0xff]
        %v1433 = vld [vmem:[%s1011 + $0xaa0] sm:$0xff]
        %v1434 = vld [vmem:[%s1011 + $0xaa8] sm:$0xff]
        %v1435 = vld [vmem:[%s1011 + $0xab0] sm:$0xff]
        %v1436 = vld [vmem:[%s1011 + $0xab8] sm:$0xff]
        %v1437 = vld [vmem:[%s1011 + $0xac0] sm:$0xff]
        %v1438 = vld [vmem:[%s1011 + $0xac8] sm:$0xff]
        %v1439 = vld [vmem:[%s1011 + $0xad0] sm:$0xff]
        %v1440 = vld [vmem:[%s1011 + $0xad8] sm:$0xff]
        %v1441 = vld [vmem:[%s1011 + $0xae0] sm:$0xff]
        %v1442 = vld [vmem:[%s1011 + $0xae8] sm:$0xff]
        %v1443 = vld [vmem:[%s1011 + $0xaf0] sm:$0xff]
        %v1444 = vld [vmem:[%s1011 + $0xaf8] sm:$0xff]
        %v1457 = vunpack.c.l.b16 %v1081
        %v1458 = vunpack.c.h.b16 %v1081
        %v1459 = vunpack.c.l.b16 %v1082
        %v1460 = vunpack.c.h.b16 %v1082
        %v1461 = vunpack.c.l.b16 %v1083
        %v1462 = vunpack.c.h.b16 %v1083
        %v1463 = vunpack.c.l.b16 %v1084
        %v1464 = vunpack.c.h.b16 %v1084
        %v1465 = vunpack.c.l.b16 %v1085
        %v1466 = vunpack.c.h.b16 %v1085
        %v1467 = vunpack.c.l.b16 %v1086
        %v1468 = vunpack.c.l.b16 %v1087
        %v1469 = vunpack.c.h.b16 %v1087
        %v1470 = vunpack.c.l.b16 %v1088
        %v1471 = vunpack.c.h.b16 %v1088
        %v1472 = vunpack.c.l.b16 %v1089
        %v1473 = vunpack.c.h.b16 %v1089
        %v1474 = vunpack.c.l.b16 %v1090
        %v1475 = vunpack.c.h.b16 %v1090
        %v1476 = vunpack.c.l.b16 %v1091
        %v1477 = vunpack.c.h.b16 %v1091
        %v1478 = vunpack.c.l.b16 %v1092
        %v1479 = vpack.c.b16 %v1468, %v1457
        %v1480 = vpack.c.b16 %v1469, %v1458
        %v1481 = vpack.c.b16 %v1470, %v1459
        %v1482 = vpack.c.b16 %v1471, %v1460
        %v1483 = vpack.c.b16 %v1472, %v1461
        %v1484 = vpack.c.b16 %v1473, %v1462
        %v1485 = vpack.c.b16 %v1474, %v1463
        %v1486 = vpack.c.b16 %v1475, %v1464
        %v1487 = vpack.c.b16 %v1476, %v1465
        %v1488 = vpack.c.b16 %v1477, %v1466
        %v1489 = vpack.c.b16 %v1478, %v1467
        %v1853 = vunpack.c.l.b16 %v1093
        %v1854 = vunpack.c.h.b16 %v1093
        %v1855 = vunpack.c.l.b16 %v1094
        %v1856 = vunpack.c.h.b16 %v1094
        %v1857 = vunpack.c.l.b16 %v1095
        %v1858 = vunpack.c.h.b16 %v1095
        %v1859 = vunpack.c.l.b16 %v1096
        %v1860 = vunpack.c.h.b16 %v1096
        %v1861 = vunpack.c.l.b16 %v1097
        %v1862 = vunpack.c.h.b16 %v1097
        %v1863 = vunpack.c.l.b16 %v1098
        %v1864 = vunpack.c.h.b16 %v1098
        %v1865 = vunpack.c.l.b16 %v1099
        %v1866 = vunpack.c.h.b16 %v1099
        %v1867 = vunpack.c.l.b16 %v1100
        %v1868 = vunpack.c.h.b16 %v1100
        %v1869 = vunpack.c.l.b16 %v1101
        %v1870 = vunpack.c.h.b16 %v1101
        %v1871 = vunpack.c.l.b16 %v1102
        %v1872 = vunpack.c.h.b16 %v1102
        %v1873 = vunpack.c.l.b16 %v1103
        %v1874 = vunpack.c.h.b16 %v1103
        %v1875 = vunpack.c.l.b16 %v1104
        %v1876 = vunpack.c.h.b16 %v1104
        %v1877 = vunpack.c.l.b16 %v1105
        %v1878 = vunpack.c.h.b16 %v1105
        %v1879 = vunpack.c.l.b16 %v1106
        %v1880 = vunpack.c.h.b16 %v1106
        %v1881 = vunpack.c.l.b16 %v1107
        %v1882 = vunpack.c.h.b16 %v1107
        %v1883 = vunpack.c.l.b16 %v1108
        %v1884 = vunpack.c.h.b16 %v1108
        %v1885 = vunpack.c.l.b16 %v1109
        %v1886 = vunpack.c.h.b16 %v1109
        %v1887 = vunpack.c.l.b16 %v1110
        %v1888 = vunpack.c.h.b16 %v1110
        %v1889 = vunpack.c.l.b16 %v1111
        %v1890 = vunpack.c.h.b16 %v1111
        %v1891 = vunpack.c.l.b16 %v1112
        %v1892 = vunpack.c.h.b16 %v1112
        %v1893 = vunpack.c.l.b16 %v1113
        %v1894 = vunpack.c.h.b16 %v1113
        %v1895 = vunpack.c.l.b16 %v1114
        %v1896 = vunpack.c.h.b16 %v1114
        %v1897 = vunpack.c.l.b16 %v1115
        %v1898 = vunpack.c.h.b16 %v1115
        %v1899 = vunpack.c.l.b16 %v1116
        %v1900 = vunpack.c.h.b16 %v1116
        %v1901 = vunpack.c.l.b16 %v1117
        %v1902 = vunpack.c.h.b16 %v1117
        %v1903 = vunpack.c.l.b16 %v1118
        %v1904 = vunpack.c.h.b16 %v1118
        %v1905 = vunpack.c.l.b16 %v1119
        %v1906 = vunpack.c.h.b16 %v1119
        %v1907 = vunpack.c.l.b16 %v1120
        %v1908 = vunpack.c.h.b16 %v1120
        %v1909 = vunpack.c.l.b16 %v1121
        %v1910 = vunpack.c.h.b16 %v1121
        %v1911 = vunpack.c.l.b16 %v1122
        %v1912 = vunpack.c.h.b16 %v1122
        %v1913 = vunpack.c.l.b16 %v1123
        %v1914 = vunpack.c.h.b16 %v1123
        %v1915 = vunpack.c.l.b16 %v1124
        %v1916 = vunpack.c.h.b16 %v1124
        %v1917 = vunpack.c.l.b16 %v1125
        %v1918 = vunpack.c.h.b16 %v1125
        %v1919 = vunpack.c.l.b16 %v1126
        %v1920 = vunpack.c.h.b16 %v1126
        %v1921 = vunpack.c.l.b16 %v1127
        %v1922 = vunpack.c.h.b16 %v1127
        %v1923 = vunpack.c.l.b16 %v1128
        %v1924 = vunpack.c.h.b16 %v1128
        %v1925 = vunpack.c.l.b16 %v1129
        %v1926 = vunpack.c.h.b16 %v1129
        %v1927 = vunpack.c.l.b16 %v1130
        %v1928 = vunpack.c.h.b16 %v1130
        %v1929 = vunpack.c.l.b16 %v1131
        %v1930 = vunpack.c.h.b16 %v1131
        %v1931 = vunpack.c.l.b16 %v1132
        %v1932 = vunpack.c.h.b16 %v1132
        %v1933 = vunpack.c.l.b16 %v1133
        %v1934 = vunpack.c.h.b16 %v1133
        %v1935 = vunpack.c.l.b16 %v1134
        %v1936 = vunpack.c.h.b16 %v1134
        %v1937 = vunpack.c.l.b16 %v1135
        %v1938 = vunpack.c.h.b16 %v1135
        %v1939 = vunpack.c.l.b16 %v1136
        %v1940 = vunpack.c.h.b16 %v1136
        %v1941 = vunpack.c.l.b16 %v1137
        %v1942 = vunpack.c.h.b16 %v1137
        %v1943 = vunpack.c.l.b16 %v1138
        %v1944 = vunpack.c.h.b16 %v1138
        %v1945 = vunpack.c.l.b16 %v1139
        %v1946 = vunpack.c.h.b16 %v1139
        %v1947 = vunpack.c.l.b16 %v1140
        %v1948 = vunpack.c.h.b16 %v1140
        %v1949 = vunpack.c.l.b16 %v1141
        %v1950 = vunpack.c.h.b16 %v1141
        %v1951 = vunpack.c.l.b16 %v1142
        %v1952 = vunpack.c.h.b16 %v1142
        %v1953 = vunpack.c.l.b16 %v1143
        %v1954 = vunpack.c.h.b16 %v1143
        %v1955 = vunpack.c.l.b16 %v1144
        %v1956 = vunpack.c.h.b16 %v1144
        %v1957 = vunpack.c.l.b16 %v1145
        %v1958 = vunpack.c.h.b16 %v1145
        %v1959 = vunpack.c.l.b16 %v1146
        %v1960 = vunpack.c.h.b16 %v1146
        %v1961 = vunpack.c.l.b16 %v1147
        %v1962 = vunpack.c.h.b16 %v1147
        %v1963 = vunpack.c.l.b16 %v1148
        %v1964 = vunpack.c.h.b16 %v1148
        %v1965 = vunpack.c.l.b16 %v1149
        %v1966 = vunpack.c.h.b16 %v1149
        %v1967 = vunpack.c.l.b16 %v1150
        %v1968 = vunpack.c.h.b16 %v1150
        %v1969 = vunpack.c.l.b16 %v1151
        %v1970 = vunpack.c.h.b16 %v1151
        %v1971 = vunpack.c.l.b16 %v1152
        %v1972 = vunpack.c.h.b16 %v1152
        %v1973 = vunpack.c.l.b16 %v1153
        %v1974 = vunpack.c.h.b16 %v1153
        %v1975 = vunpack.c.l.b16 %v1154
        %v1976 = vunpack.c.h.b16 %v1154
        %v1977 = vunpack.c.l.b16 %v1155
        %v1978 = vunpack.c.h.b16 %v1155
        %v1979 = vunpack.c.l.b16 %v1156
        %v1980 = vunpack.c.h.b16 %v1156
        %v1981 = vunpack.c.l.b16 %v1157
        %v1982 = vunpack.c.h.b16 %v1157
        %v1983 = vunpack.c.l.b16 %v1158
        %v1984 = vunpack.c.h.b16 %v1158
        %v1985 = vunpack.c.l.b16 %v1159
        %v1986 = vunpack.c.h.b16 %v1159
        %v1987 = vunpack.c.l.b16 %v1160
        %v1988 = vunpack.c.h.b16 %v1160
        %v1989 = vunpack.c.l.b16 %v1161
        %v1990 = vunpack.c.h.b16 %v1161
        %v1991 = vunpack.c.l.b16 %v1162
        %v1992 = vunpack.c.h.b16 %v1162
        %v1993 = vunpack.c.l.b16 %v1163
        %v1994 = vunpack.c.h.b16 %v1163
        %v1995 = vunpack.c.l.b16 %v1164
        %v1996 = vunpack.c.h.b16 %v1164
        %v1997 = vunpack.c.l.b16 %v1165
        %v1998 = vunpack.c.h.b16 %v1165
        %v1999 = vunpack.c.l.b16 %v1166
        %v2000 = vunpack.c.h.b16 %v1166
        %v2001 = vunpack.c.l.b16 %v1167
        %v2002 = vunpack.c.h.b16 %v1167
        %v2003 = vunpack.c.l.b16 %v1168
        %v2004 = vunpack.c.h.b16 %v1168
        %v2005 = vunpack.c.l.b16 %v1169
        %v2006 = vunpack.c.h.b16 %v1169
        %v2007 = vunpack.c.l.b16 %v1170
        %v2008 = vunpack.c.h.b16 %v1170
        %v2009 = vunpack.c.l.b16 %v1171
        %v2010 = vunpack.c.h.b16 %v1171
        %v2011 = vunpack.c.l.b16 %v1172
        %v2012 = vunpack.c.h.b16 %v1172
        %v2013 = vunpack.c.l.b16 %v1173
        %v2014 = vunpack.c.h.b16 %v1173
        %v2015 = vunpack.c.l.b16 %v1174
        %v2016 = vunpack.c.h.b16 %v1174
        %v2017 = vunpack.c.l.b16 %v1175
        %v2018 = vunpack.c.h.b16 %v1175
        %v2019 = vunpack.c.l.b16 %v1176
        %v2020 = vunpack.c.h.b16 %v1176
        %v2021 = vunpack.c.l.b16 %v1177
        %v2022 = vunpack.c.h.b16 %v1177
        %v2023 = vunpack.c.l.b16 %v1178
        %v2024 = vunpack.c.h.b16 %v1178
        %v2025 = vunpack.c.l.b16 %v1179
        %v2026 = vunpack.c.h.b16 %v1179
        %v2027 = vunpack.c.l.b16 %v1180
        %v2028 = vunpack.c.h.b16 %v1180
        %v2029 = vunpack.c.l.b16 %v1181
        %v2030 = vunpack.c.h.b16 %v1181
        %v2031 = vunpack.c.l.b16 %v1182
        %v2032 = vunpack.c.h.b16 %v1182
        %v2033 = vunpack.c.l.b16 %v1183
        %v2034 = vunpack.c.h.b16 %v1183
        %v2035 = vunpack.c.l.b16 %v1184
        %v2036 = vunpack.c.h.b16 %v1184
        %v2037 = vunpack.c.l.b16 %v1185
        %v2038 = vunpack.c.h.b16 %v1185
        %v2039 = vunpack.c.l.b16 %v1186
        %v2040 = vunpack.c.h.b16 %v1186
        %v2041 = vunpack.c.l.b16 %v1187
        %v2042 = vunpack.c.h.b16 %v1187
        %v2043 = vunpack.c.l.b16 %v1188
        %v2044 = vunpack.c.h.b16 %v1188
        %v2045 = vunpack.c.l.b16 %v1189
        %v2046 = vunpack.c.h.b16 %v1189
        %v2047 = vunpack.c.l.b16 %v1190
        %v2048 = vunpack.c.h.b16 %v1190
        %v2049 = vunpack.c.l.b16 %v1191
        %v2050 = vunpack.c.h.b16 %v1191
        %v2051 = vunpack.c.l.b16 %v1192
        %v2052 = vunpack.c.h.b16 %v1192
        %v2053 = vunpack.c.l.b16 %v1193
        %v2054 = vunpack.c.h.b16 %v1193
        %v2055 = vunpack.c.l.b16 %v1194
        %v2056 = vunpack.c.h.b16 %v1194
        %v2057 = vunpack.c.l.b16 %v1195
        %v2058 = vunpack.c.h.b16 %v1195
        %v2059 = vunpack.c.l.b16 %v1196
        %v2060 = vunpack.c.h.b16 %v1196
        %v2061 = vunpack.c.l.b16 %v1197
        %v2062 = vunpack.c.h.b16 %v1197
        %v2063 = vunpack.c.l.b16 %v1198
        %v2064 = vunpack.c.h.b16 %v1198
        %v2065 = vunpack.c.l.b16 %v1199
        %v2066 = vunpack.c.h.b16 %v1199
        %v2067 = vunpack.c.l.b16 %v1200
        %v2068 = vunpack.c.h.b16 %v1200
        %v2069 = vunpack.c.l.b16 %v1201
        %v2070 = vunpack.c.h.b16 %v1201
        %v2071 = vunpack.c.l.b16 %v1202
        %v2072 = vunpack.c.h.b16 %v1202
        %v2073 = vunpack.c.l.b16 %v1203
        %v2074 = vunpack.c.h.b16 %v1203
        %v2075 = vunpack.c.l.b16 %v1204
        %v2076 = vunpack.c.h.b16 %v1204
        %v2077 = vunpack.c.l.b16 %v1205
        %v2078 = vunpack.c.h.b16 %v1205
        %v2079 = vunpack.c.l.b16 %v1206
        %v2080 = vunpack.c.h.b16 %v1206
        %v2081 = vunpack.c.l.b16 %v1207
        %v2082 = vunpack.c.h.b16 %v1207
        %v2083 = vunpack.c.l.b16 %v1208
        %v2084 = vunpack.c.h.b16 %v1208
        %v2085 = vunpack.c.l.b16 %v1209
        %v2086 = vunpack.c.h.b16 %v1209
        %v2087 = vunpack.c.l.b16 %v1210
        %v2088 = vunpack.c.h.b16 %v1210
        %v2089 = vunpack.c.l.b16 %v1211
        %v2090 = vunpack.c.h.b16 %v1211
        %v2091 = vunpack.c.l.b16 %v1212
        %v2092 = vunpack.c.h.b16 %v1212
        %v2093 = vunpack.c.l.b16 %v1213
        %v2094 = vunpack.c.h.b16 %v1213
        %v2095 = vunpack.c.l.b16 %v1214
        %v2096 = vunpack.c.h.b16 %v1214
        %v2097 = vunpack.c.l.b16 %v1215
        %v2098 = vunpack.c.h.b16 %v1215
        %v2099 = vunpack.c.l.b16 %v1216
        %v2100 = vunpack.c.h.b16 %v1216
        %v2101 = vunpack.c.l.b16 %v1217
        %v2102 = vunpack.c.h.b16 %v1217
        %v2103 = vunpack.c.l.b16 %v1218
        %v2104 = vunpack.c.h.b16 %v1218
        %v2105 = vunpack.c.l.b16 %v1219
        %v2106 = vunpack.c.h.b16 %v1219
        %v2107 = vunpack.c.l.b16 %v1220
        %v2108 = vunpack.c.h.b16 %v1220
        %v2109 = vunpack.c.l.b16 %v1221
        %v2110 = vunpack.c.h.b16 %v1221
        %v2111 = vunpack.c.l.b16 %v1222
        %v2112 = vunpack.c.h.b16 %v1222
        %v2113 = vunpack.c.l.b16 %v1223
        %v2114 = vunpack.c.h.b16 %v1223
        %v2115 = vunpack.c.l.b16 %v1224
        %v2116 = vunpack.c.h.b16 %v1224
        %v2117 = vunpack.c.l.b16 %v1225
        %v2118 = vunpack.c.h.b16 %v1225
        %v2119 = vunpack.c.l.b16 %v1226
        %v2120 = vunpack.c.h.b16 %v1226
        %v2121 = vunpack.c.l.b16 %v1227
        %v2122 = vunpack.c.h.b16 %v1227
        %v2123 = vunpack.c.l.b16 %v1228
        %v2124 = vunpack.c.h.b16 %v1228
        %v2125 = vunpack.c.l.b16 %v1229
        %v2126 = vunpack.c.h.b16 %v1229
        %v2127 = vunpack.c.l.b16 %v1230
        %v2128 = vunpack.c.h.b16 %v1230
        %v2129 = vunpack.c.l.b16 %v1231
        %v2130 = vunpack.c.h.b16 %v1231
        %v2131 = vunpack.c.l.b16 %v1232
        %v2132 = vunpack.c.h.b16 %v1232
        %v2133 = vunpack.c.l.b16 %v1233
        %v2134 = vunpack.c.h.b16 %v1233
        %v2135 = vunpack.c.l.b16 %v1234
        %v2136 = vunpack.c.h.b16 %v1234
        %v2137 = vunpack.c.l.b16 %v1235
        %v2138 = vunpack.c.h.b16 %v1235
        %v2139 = vunpack.c.l.b16 %v1236
        %v2140 = vunpack.c.h.b16 %v1236
        %v2141 = vunpack.c.l.b16 %v1237
        %v2142 = vunpack.c.h.b16 %v1237
        %v2143 = vunpack.c.l.b16 %v1238
        %v2144 = vunpack.c.h.b16 %v1238
        %v2145 = vunpack.c.l.b16 %v1239
        %v2146 = vunpack.c.h.b16 %v1239
        %v2147 = vunpack.c.l.b16 %v1240
        %v2148 = vunpack.c.h.b16 %v1240
        %v2149 = vunpack.c.l.b16 %v1241
        %v2150 = vunpack.c.h.b16 %v1241
        %v2151 = vunpack.c.l.b16 %v1242
        %v2152 = vunpack.c.h.b16 %v1242
        %v2153 = vunpack.c.l.b16 %v1243
        %v2154 = vunpack.c.h.b16 %v1243
        %v2155 = vunpack.c.l.b16 %v1244
        %v2156 = vunpack.c.h.b16 %v1244
        %v2157 = vunpack.c.l.b16 %v1245
        %v2158 = vunpack.c.h.b16 %v1245
        %v2159 = vunpack.c.l.b16 %v1246
        %v2160 = vunpack.c.h.b16 %v1246
        %v2161 = vunpack.c.l.b16 %v1247
        %v2162 = vunpack.c.h.b16 %v1247
        %v2163 = vunpack.c.l.b16 %v1248
        %v2164 = vunpack.c.h.b16 %v1248
        %v2165 = vunpack.c.l.b16 %v1249
        %v2166 = vunpack.c.h.b16 %v1249
        %v2167 = vunpack.c.l.b16 %v1250
        %v2168 = vunpack.c.h.b16 %v1250
        %v2169 = vunpack.c.l.b16 %v1251
        %v2170 = vunpack.c.h.b16 %v1251
        %v2171 = vunpack.c.l.b16 %v1252
        %v2172 = vunpack.c.h.b16 %v1252
        %v2173 = vunpack.c.l.b16 %v1253
        %v2174 = vunpack.c.h.b16 %v1253
        %v2175 = vunpack.c.l.b16 %v1254
        %v2176 = vunpack.c.h.b16 %v1254
        %v2177 = vunpack.c.l.b16 %v1255
        %v2178 = vunpack.c.h.b16 %v1255
        %v2179 = vunpack.c.l.b16 %v1256
        %v2180 = vunpack.c.h.b16 %v1256
        %v2181 = vunpack.c.l.b16 %v1257
        %v2182 = vunpack.c.h.b16 %v1257
        %v2183 = vunpack.c.l.b16 %v1258
        %v2184 = vunpack.c.h.b16 %v1258
        %v2185 = vunpack.c.l.b16 %v1259
        %v2186 = vunpack.c.h.b16 %v1259
        %v2187 = vunpack.c.l.b16 %v1260
        %v2188 = vunpack.c.h.b16 %v1260
        %v2189 = vunpack.c.l.b16 %v1261
        %v2190 = vunpack.c.h.b16 %v1261
        %v2191 = vunpack.c.l.b16 %v1262
        %v2192 = vunpack.c.h.b16 %v1262
        %v2193 = vunpack.c.l.b16 %v1263
        %v2194 = vunpack.c.h.b16 %v1263
        %v2195 = vunpack.c.l.b16 %v1264
        %v2196 = vunpack.c.h.b16 %v1264
        %v2197 = vunpack.c.l.b16 %v1265
        %v2198 = vunpack.c.h.b16 %v1265
        %v2199 = vunpack.c.l.b16 %v1266
        %v2200 = vunpack.c.h.b16 %v1266
        %v2201 = vunpack.c.l.b16 %v1267
        %v2202 = vunpack.c.h.b16 %v1267
        %v2203 = vunpack.c.l.b16 %v1268
        %v2204 = vunpack.c.h.b16 %v1268
        %v2205 = vunpack.c.l.b16 %v1269
        %v2206 = vunpack.c.h.b16 %v1269
        %v2207 = vunpack.c.l.b16 %v1270
        %v2208 = vunpack.c.h.b16 %v1270
        %v2209 = vunpack.c.l.b16 %v1271
        %v2210 = vunpack.c.h.b16 %v1271
        %v2211 = vunpack.c.l.b16 %v1272
        %v2212 = vunpack.c.h.b16 %v1272
        %v2213 = vunpack.c.l.b16 %v1273
        %v2214 = vunpack.c.h.b16 %v1273
        %v2215 = vunpack.c.l.b16 %v1274
        %v2216 = vunpack.c.h.b16 %v1274
        %v2217 = vunpack.c.l.b16 %v1275
        %v2218 = vunpack.c.h.b16 %v1275
        %v2219 = vunpack.c.l.b16 %v1276
        %v2220 = vunpack.c.h.b16 %v1276
        %v2221 = vunpack.c.l.b16 %v1277
        %v2222 = vunpack.c.h.b16 %v1277
        %v2223 = vunpack.c.l.b16 %v1278
        %v2224 = vunpack.c.h.b16 %v1278
        %v2225 = vunpack.c.l.b16 %v1279
        %v2226 = vunpack.c.h.b16 %v1279
        %v2227 = vunpack.c.l.b16 %v1280
        %v2228 = vunpack.c.h.b16 %v1280
        %v2229 = vunpack.c.l.b16 %v1281
        %v2230 = vunpack.c.h.b16 %v1281
        %v2231 = vunpack.c.l.b16 %v1282
        %v2232 = vunpack.c.h.b16 %v1282
        %v2233 = vunpack.c.l.b16 %v1283
        %v2234 = vunpack.c.h.b16 %v1283
        %v2235 = vunpack.c.l.b16 %v1284
        %v2236 = vunpack.c.h.b16 %v1284
        %v2237 = vunpack.c.l.b16 %v1285
        %v2238 = vunpack.c.h.b16 %v1285
        %v2239 = vunpack.c.l.b16 %v1286
        %v2240 = vunpack.c.h.b16 %v1286
        %v2241 = vunpack.c.l.b16 %v1287
        %v2242 = vunpack.c.h.b16 %v1287
        %v2243 = vunpack.c.l.b16 %v1288
        %v2244 = vunpack.c.h.b16 %v1288
        %v2245 = vunpack.c.l.b16 %v1289
        %v2246 = vunpack.c.h.b16 %v1289
        %v2247 = vunpack.c.l.b16 %v1290
        %v2248 = vunpack.c.h.b16 %v1290
        %v2249 = vunpack.c.l.b16 %v1291
        %v2250 = vunpack.c.h.b16 %v1291
        %v2251 = vunpack.c.l.b16 %v1292
        %v2252 = vunpack.c.h.b16 %v1292
        %v2253 = vunpack.c.l.b16 %v1293
        %v2254 = vunpack.c.h.b16 %v1293
        %v2255 = vunpack.c.l.b16 %v1294
        %v2256 = vunpack.c.h.b16 %v1294
        %v2257 = vunpack.c.l.b16 %v1295
        %v2258 = vunpack.c.h.b16 %v1295
        %v2259 = vunpack.c.l.b16 %v1296
        %v2260 = vunpack.c.h.b16 %v1296
        %v2261 = vunpack.c.l.b16 %v1297
        %v2262 = vunpack.c.h.b16 %v1297
        %v2263 = vunpack.c.l.b16 %v1298
        %v2264 = vunpack.c.h.b16 %v1298
        %v2265 = vunpack.c.l.b16 %v1299
        %v2266 = vunpack.c.h.b16 %v1299
        %v2267 = vunpack.c.l.b16 %v1300
        %v2268 = vunpack.c.h.b16 %v1300
        %v2269 = vunpack.c.l.b16 %v1301
        %v2270 = vunpack.c.h.b16 %v1301
        %v2271 = vunpack.c.l.b16 %v1302
        %v2272 = vunpack.c.h.b16 %v1302
        %v2273 = vunpack.c.l.b16 %v1303
        %v2274 = vunpack.c.h.b16 %v1303
        %v2275 = vunpack.c.l.b16 %v1304
        %v2276 = vunpack.c.h.b16 %v1304
        %v2277 = vunpack.c.l.b16 %v1305
        %v2278 = vunpack.c.h.b16 %v1305
        %v2279 = vunpack.c.l.b16 %v1306
        %v2280 = vunpack.c.h.b16 %v1306
        %v2281 = vunpack.c.l.b16 %v1307
        %v2282 = vunpack.c.h.b16 %v1307
        %v2283 = vunpack.c.l.b16 %v1308
        %v2284 = vunpack.c.h.b16 %v1308
        %v2285 = vunpack.c.l.b16 %v1309
        %v2286 = vunpack.c.h.b16 %v1309
        %v2287 = vunpack.c.l.b16 %v1310
        %v2288 = vunpack.c.h.b16 %v1310
        %v2289 = vunpack.c.l.b16 %v1311
        %v2290 = vunpack.c.h.b16 %v1311
        %v2291 = vunpack.c.l.b16 %v1312
        %v2292 = vunpack.c.h.b16 %v1312
        %v2293 = vunpack.c.l.b16 %v1313
        %v2294 = vunpack.c.h.b16 %v1313
        %v2295 = vunpack.c.l.b16 %v1314
        %v2296 = vunpack.c.h.b16 %v1314
        %v2297 = vunpack.c.l.b16 %v1315
        %v2298 = vunpack.c.h.b16 %v1315
        %v2299 = vunpack.c.l.b16 %v1316
        %v2300 = vunpack.c.h.b16 %v1316
        %v2301 = vunpack.c.l.b16 %v1317
        %v2302 = vunpack.c.h.b16 %v1317
        %v2303 = vunpack.c.l.b16 %v1318
        %v2304 = vunpack.c.h.b16 %v1318
        %v2305 = vunpack.c.l.b16 %v1319
        %v2306 = vunpack.c.h.b16 %v1319
        %v2307 = vunpack.c.l.b16 %v1320
        %v2308 = vunpack.c.h.b16 %v1320
        %v2309 = vunpack.c.l.b16 %v1321
        %v2310 = vunpack.c.h.b16 %v1321
        %v2311 = vunpack.c.l.b16 %v1322
        %v2312 = vunpack.c.h.b16 %v1322
        %v2313 = vunpack.c.l.b16 %v1323
        %v2314 = vunpack.c.h.b16 %v1323
        %v2315 = vunpack.c.l.b16 %v1324
        %v2316 = vunpack.c.h.b16 %v1324
        %v2317 = vunpack.c.l.b16 %v1325
        %v2318 = vunpack.c.h.b16 %v1325
        %v2319 = vunpack.c.l.b16 %v1326
        %v2320 = vunpack.c.h.b16 %v1326
        %v2321 = vunpack.c.l.b16 %v1327
        %v2322 = vunpack.c.h.b16 %v1327
        %v2323 = vunpack.c.l.b16 %v1328
        %v2324 = vunpack.c.h.b16 %v1328
        %v2325 = vunpack.c.l.b16 %v1329
        %v2326 = vunpack.c.h.b16 %v1329
        %v2327 = vunpack.c.l.b16 %v1330
        %v2328 = vunpack.c.h.b16 %v1330
        %v2329 = vunpack.c.l.b16 %v1331
        %v2330 = vunpack.c.h.b16 %v1331
        %v2331 = vunpack.c.l.b16 %v1332
        %v2332 = vunpack.c.h.b16 %v1332
        %v2333 = vunpack.c.l.b16 %v1333
        %v2334 = vunpack.c.h.b16 %v1333
        %v2335 = vunpack.c.l.b16 %v1334
        %v2336 = vunpack.c.h.b16 %v1334
        %v2337 = vunpack.c.l.b16 %v1335
        %v2338 = vunpack.c.h.b16 %v1335
        %v2339 = vunpack.c.l.b16 %v1336
        %v2340 = vunpack.c.h.b16 %v1336
        %v2341 = vunpack.c.l.b16 %v1337
        %v2342 = vunpack.c.h.b16 %v1337
        %v2343 = vunpack.c.l.b16 %v1338
        %v2344 = vunpack.c.h.b16 %v1338
        %v2345 = vunpack.c.l.b16 %v1339
        %v2346 = vunpack.c.h.b16 %v1339
        %v2347 = vunpack.c.l.b16 %v1340
        %v2348 = vunpack.c.h.b16 %v1340
        %v2349 = vunpack.c.l.b16 %v1341
        %v2350 = vunpack.c.h.b16 %v1341
        %v2351 = vunpack.c.l.b16 %v1342
        %v2352 = vunpack.c.h.b16 %v1342
        %v2353 = vunpack.c.l.b16 %v1343
        %v2354 = vunpack.c.h.b16 %v1343
        %v2355 = vunpack.c.l.b16 %v1344
        %v2356 = vunpack.c.h.b16 %v1344
        %v2357 = vunpack.c.l.b16 %v1345
        %v2358 = vunpack.c.h.b16 %v1345
        %v2359 = vunpack.c.l.b16 %v1346
        %v2360 = vunpack.c.h.b16 %v1346
        %v2361 = vunpack.c.l.b16 %v1347
        %v2362 = vunpack.c.h.b16 %v1347
        %v2363 = vunpack.c.l.b16 %v1348
        %v2364 = vunpack.c.h.b16 %v1348
        %v2365 = vunpack.c.l.b16 %v1349
        %v2366 = vunpack.c.h.b16 %v1349
        %v2367 = vunpack.c.l.b16 %v1350
        %v2368 = vunpack.c.h.b16 %v1350
        %v2369 = vunpack.c.l.b16 %v1351
        %v2370 = vunpack.c.h.b16 %v1351
        %v2371 = vunpack.c.l.b16 %v1352
        %v2372 = vunpack.c.h.b16 %v1352
        %v2373 = vunpack.c.l.b16 %v1353
        %v2374 = vunpack.c.h.b16 %v1353
        %v2375 = vunpack.c.l.b16 %v1354
        %v2376 = vunpack.c.h.b16 %v1354
        %v2377 = vunpack.c.l.b16 %v1355
        %v2378 = vunpack.c.h.b16 %v1355
        %v2379 = vunpack.c.l.b16 %v1356
        %v2380 = vunpack.c.h.b16 %v1356
        %v2381 = vunpack.c.l.b16 %v1357
        %v2382 = vunpack.c.h.b16 %v1357
        %v2383 = vunpack.c.l.b16 %v1358
        %v2384 = vunpack.c.h.b16 %v1358
        %v2385 = vunpack.c.l.b16 %v1359
        %v2386 = vunpack.c.h.b16 %v1359
        %v2387 = vunpack.c.l.b16 %v1360
        %v2388 = vunpack.c.h.b16 %v1360
        %v2389 = vunpack.c.l.b16 %v1361
        %v2390 = vunpack.c.h.b16 %v1361
        %v2391 = vunpack.c.l.b16 %v1362
        %v2392 = vunpack.c.h.b16 %v1362
        %v2393 = vunpack.c.l.b16 %v1363
        %v2394 = vunpack.c.h.b16 %v1363
        %v2395 = vunpack.c.l.b16 %v1364
        %v2396 = vunpack.c.h.b16 %v1364
        %v2397 = vunpack.c.l.b16 %v1365
        %v2398 = vunpack.c.h.b16 %v1365
        %v2399 = vunpack.c.l.b16 %v1366
        %v2400 = vunpack.c.h.b16 %v1366
        %v2401 = vunpack.c.l.b16 %v1367
        %v2402 = vunpack.c.h.b16 %v1367
        %v2403 = vunpack.c.l.b16 %v1368
        %v2404 = vunpack.c.h.b16 %v1368
        %v2405 = vunpack.c.l.b16 %v1369
        %v2406 = vunpack.c.h.b16 %v1369
        %v2407 = vunpack.c.l.b16 %v1370
        %v2408 = vunpack.c.h.b16 %v1370
        %v2409 = vunpack.c.l.b16 %v1371
        %v2410 = vunpack.c.h.b16 %v1371
        %v2411 = vunpack.c.l.b16 %v1372
        %v2412 = vunpack.c.h.b16 %v1372
        %v2413 = vunpack.c.l.b16 %v1373
        %v2414 = vunpack.c.h.b16 %v1373
        %v2415 = vunpack.c.l.b16 %v1374
        %v2416 = vunpack.c.h.b16 %v1374
        %v2417 = vunpack.c.l.b16 %v1375
        %v2418 = vunpack.c.h.b16 %v1375
        %v2419 = vunpack.c.l.b16 %v1376
        %v2420 = vunpack.c.h.b16 %v1376
        %v2421 = vunpack.c.l.b16 %v1377
        %v2422 = vunpack.c.h.b16 %v1377
        %v2423 = vunpack.c.l.b16 %v1378
        %v2424 = vunpack.c.h.b16 %v1378
        %v2425 = vunpack.c.l.b16 %v1379
        %v2426 = vunpack.c.h.b16 %v1379
        %v2427 = vunpack.c.l.b16 %v1380
        %v2428 = vunpack.c.h.b16 %v1380
        %v2429 = vunpack.c.l.b16 %v1381
        %v2430 = vunpack.c.h.b16 %v1381
        %v2431 = vunpack.c.l.b16 %v1382
        %v2432 = vunpack.c.h.b16 %v1382
        %v2433 = vunpack.c.l.b16 %v1383
        %v2434 = vunpack.c.h.b16 %v1383
        %v2435 = vunpack.c.l.b16 %v1384
        %v2436 = vunpack.c.h.b16 %v1384
        %v2437 = vunpack.c.l.b16 %v1385
        %v2438 = vunpack.c.h.b16 %v1385
        %v2439 = vunpack.c.l.b16 %v1386
        %v2440 = vunpack.c.h.b16 %v1386
        %v2441 = vunpack.c.l.b16 %v1387
        %v2442 = vunpack.c.h.b16 %v1387
        %v2443 = vunpack.c.l.b16 %v1388
        %v2444 = vunpack.c.h.b16 %v1388
        %v2445 = vunpack.c.l.b16 %v1389
        %v2446 = vunpack.c.h.b16 %v1389
        %v2447 = vunpack.c.l.b16 %v1390
        %v2448 = vunpack.c.h.b16 %v1390
        %v2449 = vunpack.c.l.b16 %v1391
        %v2450 = vunpack.c.h.b16 %v1391
        %v2451 = vunpack.c.l.b16 %v1392
        %v2452 = vunpack.c.h.b16 %v1392
        %v2453 = vunpack.c.l.b16 %v1393
        %v2454 = vunpack.c.h.b16 %v1393
        %v2455 = vunpack.c.l.b16 %v1394
        %v2456 = vunpack.c.h.b16 %v1394
        %v2457 = vunpack.c.l.b16 %v1395
        %v2458 = vunpack.c.h.b16 %v1395
        %v2459 = vunpack.c.l.b16 %v1396
        %v2460 = vunpack.c.h.b16 %v1396
        %v2461 = vunpack.c.l.b16 %v1397
        %v2462 = vunpack.c.h.b16 %v1397
        %v2463 = vunpack.c.l.b16 %v1398
        %v2464 = vunpack.c.h.b16 %v1398
        %v2465 = vunpack.c.l.b16 %v1399
        %v2466 = vunpack.c.h.b16 %v1399
        %v2467 = vunpack.c.l.b16 %v1400
        %v2468 = vunpack.c.h.b16 %v1400
        %v2469 = vunpack.c.l.b16 %v1401
        %v2470 = vunpack.c.h.b16 %v1401
        %v2471 = vunpack.c.l.b16 %v1402
        %v2472 = vunpack.c.h.b16 %v1402
        %v2473 = vunpack.c.l.b16 %v1403
        %v2474 = vunpack.c.h.b16 %v1403
        %v2475 = vunpack.c.l.b16 %v1404
        %v2476 = vunpack.c.h.b16 %v1404
        %v2477 = vunpack.c.l.b16 %v1405
        %v2478 = vunpack.c.h.b16 %v1405
        %v2479 = vunpack.c.l.b16 %v1406
        %v2480 = vunpack.c.h.b16 %v1406
        %v2481 = vunpack.c.l.b16 %v1407
        %v2482 = vunpack.c.h.b16 %v1407
        %v2483 = vunpack.c.l.b16 %v1408
        %v2484 = vunpack.c.h.b16 %v1408
        %v2485 = vunpack.c.l.b16 %v1409
        %v2486 = vunpack.c.h.b16 %v1409
        %v2487 = vunpack.c.l.b16 %v1410
        %v2488 = vunpack.c.h.b16 %v1410
        %v2489 = vunpack.c.l.b16 %v1411
        %v2490 = vunpack.c.h.b16 %v1411
        %v2491 = vunpack.c.l.b16 %v1412
        %v2492 = vunpack.c.h.b16 %v1412
        %v2493 = vunpack.c.l.b16 %v1413
        %v2494 = vunpack.c.h.b16 %v1413
        %v2495 = vunpack.c.l.b16 %v1414
        %v2496 = vunpack.c.h.b16 %v1414
        %v2497 = vunpack.c.l.b16 %v1415
        %v2498 = vunpack.c.h.b16 %v1415
        %v2499 = vunpack.c.l.b16 %v1416
        %v2500 = vunpack.c.h.b16 %v1416
        %v2501 = vunpack.c.l.b16 %v1417
        %v2502 = vunpack.c.h.b16 %v1417
        %v2503 = vunpack.c.l.b16 %v1418
        %v2504 = vunpack.c.h.b16 %v1418
        %v2505 = vunpack.c.l.b16 %v1419
        %v2506 = vunpack.c.h.b16 %v1419
        %v2507 = vunpack.c.l.b16 %v1420
        %v2508 = vunpack.c.h.b16 %v1420
        %v2509 = vunpack.c.l.b16 %v1421
        %v2510 = vunpack.c.h.b16 %v1421
        %v2511 = vunpack.c.l.b16 %v1422
        %v2512 = vunpack.c.h.b16 %v1422
        %v2513 = vunpack.c.l.b16 %v1423
        %v2514 = vunpack.c.h.b16 %v1423
        %v2515 = vunpack.c.l.b16 %v1424
        %v2516 = vunpack.c.h.b16 %v1424
        %v2517 = vunpack.c.l.b16 %v1425
        %v2518 = vunpack.c.h.b16 %v1425
        %v2519 = vunpack.c.l.b16 %v1426
        %v2520 = vunpack.c.h.b16 %v1426
        %v2521 = vunpack.c.l.b16 %v1427
        %v2522 = vunpack.c.h.b16 %v1427
        %v2523 = vunpack.c.l.b16 %v1428
        %v2524 = vunpack.c.h.b16 %v1428
        %v2525 = vunpack.c.l.b16 %v1429
        %v2526 = vunpack.c.h.b16 %v1429
        %v2527 = vunpack.c.l.b16 %v1430
        %v2528 = vunpack.c.h.b16 %v1430
        %v2529 = vunpack.c.l.b16 %v1431
        %v2530 = vunpack.c.h.b16 %v1431
        %v2531 = vunpack.c.l.b16 %v1432
        %v2532 = vunpack.c.h.b16 %v1432
        %v2533 = vunpack.c.l.b16 %v1433
        %v2534 = vunpack.c.h.b16 %v1433
        %v2535 = vunpack.c.l.b16 %v1434
        %v2536 = vunpack.c.h.b16 %v1434
        %v2537 = vunpack.c.l.b16 %v1435
        %v2538 = vunpack.c.h.b16 %v1435
        %v2539 = vunpack.c.l.b16 %v1436
        %v2540 = vunpack.c.h.b16 %v1436
        %v2541 = vunpack.c.l.b16 %v1437
        %v2542 = vunpack.c.h.b16 %v1437
        %v2543 = vunpack.c.l.b16 %v1438
        %v2544 = vunpack.c.h.b16 %v1438
        %v2545 = vunpack.c.l.b16 %v1439
        %v2546 = vunpack.c.h.b16 %v1439
        %v2547 = vunpack.c.l.b16 %v1440
        %v2548 = vunpack.c.h.b16 %v1440
        %v2549 = vunpack.c.l.b16 %v1441
        %v2550 = vunpack.c.h.b16 %v1441
        %v2551 = vunpack.c.l.b16 %v1442
        %v2552 = vunpack.c.h.b16 %v1442
        %v2553 = vunpack.c.l.b16 %v1443
        %v2554 = vunpack.c.h.b16 %v1443
        %v2555 = vunpack.c.l.b16 %v1444
        %v2556 = vunpack.c.h.b16 %v1444
        %v2557 = vpack.c.b16 %v1857, %v1853
        %v2558 = vpack.c.b16 %v1858, %v1854
        %v2559 = vpack.c.b16 %v1859, %v1855
        %v2560 = vpack.c.b16 %v1860, %v1856
        %v2561 = vpack.c.b16 %v1865, %v1861
        %v2562 = vpack.c.b16 %v1866, %v1862
        %v2563 = vpack.c.b16 %v1867, %v1863
        %v2564 = vpack.c.b16 %v1868, %v1864
        %v2565 = vpack.c.b16 %v1873, %v1869
        %v2566 = vpack.c.b16 %v1874, %v1870
        %v2567 = vpack.c.b16 %v1875, %v1871
        %v2568 = vpack.c.b16 %v1876, %v1872
        %v2569 = vpack.c.b16 %v1881, %v1877
        %v2570 = vpack.c.b16 %v1882, %v1878
        %v2571 = vpack.c.b16 %v1883, %v1879
        %v2572 = vpack.c.b16 %v1884, %v1880
        %v2573 = vpack.c.b16 %v1889, %v1885
        %v2574 = vpack.c.b16 %v1890, %v1886
        %v2575 = vpack.c.b16 %v1891, %v1887
        %v2576 = vpack.c.b16 %v1892, %v1888
        %v2577 = vpack.c.b16 %v1897, %v1893
        %v2578 = vpack.c.b16 %v1898, %v1894
        %v2579 = vpack.c.b16 %v1899, %v1895
        %v2580 = vpack.c.b16 %v1900, %v1896
        %v2581 = vpack.c.b16 %v1905, %v1901
        %v2582 = vpack.c.b16 %v1906, %v1902
        %v2583 = vpack.c.b16 %v1907, %v1903
        %v2584 = vpack.c.b16 %v1908, %v1904
        %v2585 = vpack.c.b16 %v1913, %v1909
        %v2586 = vpack.c.b16 %v1914, %v1910
        %v2587 = vpack.c.b16 %v1915, %v1911
        %v2588 = vpack.c.b16 %v1916, %v1912
        %v2589 = vpack.c.b16 %v1921, %v1917
        %v2590 = vpack.c.b16 %v1922, %v1918
        %v2591 = vpack.c.b16 %v1923, %v1919
        %v2592 = vpack.c.b16 %v1924, %v1920
        %v2593 = vpack.c.b16 %v1929, %v1925
        %v2594 = vpack.c.b16 %v1930, %v1926
        %v2595 = vpack.c.b16 %v1931, %v1927
        %v2596 = vpack.c.b16 %v1932, %v1928
        %v2597 = vpack.c.b16 %v1937, %v1933
        %v2598 = vpack.c.b16 %v1938, %v1934
        %v2599 = vpack.c.b16 %v1939, %v1935
        %v2600 = vpack.c.b16 %v1940, %v1936
        %v2601 = vpack.c.b16 %v1945, %v1941
        %v2602 = vpack.c.b16 %v1946, %v1942
        %v2603 = vpack.c.b16 %v1947, %v1943
        %v2604 = vpack.c.b16 %v1948, %v1944
        %v2605 = vpack.c.b16 %v1953, %v1949
        %v2606 = vpack.c.b16 %v1954, %v1950
        %v2607 = vpack.c.b16 %v1955, %v1951
        %v2608 = vpack.c.b16 %v1956, %v1952
        %v2609 = vpack.c.b16 %v1961, %v1957
        %v2610 = vpack.c.b16 %v1962, %v1958
        %v2611 = vpack.c.b16 %v1963, %v1959
        %v2612 = vpack.c.b16 %v1964, %v1960
        %v2613 = vpack.c.b16 %v1969, %v1965
        %v2614 = vpack.c.b16 %v1970, %v1966
        %v2615 = vpack.c.b16 %v1971, %v1967
        %v2616 = vpack.c.b16 %v1972, %v1968
        %v2617 = vpack.c.b16 %v1977, %v1973
        %v2618 = vpack.c.b16 %v1978, %v1974
        %v2619 = vpack.c.b16 %v1979, %v1975
        %v2620 = vpack.c.b16 %v1980, %v1976
        %v2621 = vpack.c.b16 %v1985, %v1981
        %v2622 = vpack.c.b16 %v1986, %v1982
        %v2623 = vpack.c.b16 %v1987, %v1983
        %v2624 = vpack.c.b16 %v1988, %v1984
        %v2625 = vpack.c.b16 %v1993, %v1989
        %v2626 = vpack.c.b16 %v1994, %v1990
        %v2627 = vpack.c.b16 %v1995, %v1991
        %v2628 = vpack.c.b16 %v1996, %v1992
        %v2629 = vpack.c.b16 %v2001, %v1997
        %v2630 = vpack.c.b16 %v2002, %v1998
        %v2631 = vpack.c.b16 %v2003, %v1999
        %v2632 = vpack.c.b16 %v2004, %v2000
        %v2633 = vpack.c.b16 %v2009, %v2005
        %v2634 = vpack.c.b16 %v2010, %v2006
        %v2635 = vpack.c.b16 %v2011, %v2007
        %v2636 = vpack.c.b16 %v2012, %v2008
        %v2637 = vpack.c.b16 %v2017, %v2013
        %v2638 = vpack.c.b16 %v2018, %v2014
        %v2639 = vpack.c.b16 %v2019, %v2015
        %v2640 = vpack.c.b16 %v2020, %v2016
        %v2641 = vpack.c.b16 %v2025, %v2021
        %v2642 = vpack.c.b16 %v2026, %v2022
        %v2643 = vpack.c.b16 %v2027, %v2023
        %v2644 = vpack.c.b16 %v2028, %v2024
        %v2645 = vpack.c.b16 %v2033, %v2029
        %v2646 = vpack.c.b16 %v2034, %v2030
        %v2647 = vpack.c.b16 %v2035, %v2031
        %v2648 = vpack.c.b16 %v2036, %v2032
        %v2649 = vpack.c.b16 %v2041, %v2037
        %v2650 = vpack.c.b16 %v2042, %v2038
        %v2651 = vpack.c.b16 %v2043, %v2039
        %v2652 = vpack.c.b16 %v2044, %v2040
        %v2653 = vpack.c.b16 %v2049, %v2045
        %v2654 = vpack.c.b16 %v2050, %v2046
        %v2655 = vpack.c.b16 %v2051, %v2047
        %v2656 = vpack.c.b16 %v2052, %v2048
        %v2657 = vpack.c.b16 %v2057, %v2053
        %v2658 = vpack.c.b16 %v2058, %v2054
        %v2659 = vpack.c.b16 %v2059, %v2055
        %v2660 = vpack.c.b16 %v2060, %v2056
        %v2661 = vpack.c.b16 %v2065, %v2061
        %v2662 = vpack.c.b16 %v2066, %v2062
        %v2663 = vpack.c.b16 %v2067, %v2063
        %v2664 = vpack.c.b16 %v2068, %v2064
        %v2665 = vpack.c.b16 %v2073, %v2069
        %v2666 = vpack.c.b16 %v2074, %v2070
        %v2667 = vpack.c.b16 %v2075, %v2071
        %v2668 = vpack.c.b16 %v2076, %v2072
        %v2669 = vpack.c.b16 %v2081, %v2077
        %v2670 = vpack.c.b16 %v2082, %v2078
        %v2671 = vpack.c.b16 %v2083, %v2079
        %v2672 = vpack.c.b16 %v2084, %v2080
        %v2673 = vpack.c.b16 %v2089, %v2085
        %v2674 = vpack.c.b16 %v2090, %v2086
        %v2675 = vpack.c.b16 %v2091, %v2087
        %v2676 = vpack.c.b16 %v2092, %v2088
        %v2677 = vpack.c.b16 %v2097, %v2093
        %v2678 = vpack.c.b16 %v2098, %v2094
        %v2679 = vpack.c.b16 %v2099, %v2095
        %v2680 = vpack.c.b16 %v2100, %v2096
        %v2681 = vpack.c.b16 %v2105, %v2101
        %v2682 = vpack.c.b16 %v2106, %v2102
        %v2683 = vpack.c.b16 %v2107, %v2103
        %v2684 = vpack.c.b16 %v2108, %v2104
        %v2685 = vpack.c.b16 %v2113, %v2109
        %v2686 = vpack.c.b16 %v2114, %v2110
        %v2687 = vpack.c.b16 %v2115, %v2111
        %v2688 = vpack.c.b16 %v2116, %v2112
        %v2689 = vpack.c.b16 %v2121, %v2117
        %v2690 = vpack.c.b16 %v2122, %v2118
        %v2691 = vpack.c.b16 %v2123, %v2119
        %v2692 = vpack.c.b16 %v2124, %v2120
        %v2693 = vpack.c.b16 %v2129, %v2125
        %v2694 = vpack.c.b16 %v2130, %v2126
        %v2695 = vpack.c.b16 %v2131, %v2127
        %v2696 = vpack.c.b16 %v2132, %v2128
        %v2697 = vpack.c.b16 %v2137, %v2133
        %v2698 = vpack.c.b16 %v2138, %v2134
        %v2699 = vpack.c.b16 %v2139, %v2135
        %v2700 = vpack.c.b16 %v2140, %v2136
        %v2701 = vpack.c.b16 %v2145, %v2141
        %v2702 = vpack.c.b16 %v2146, %v2142
        %v2703 = vpack.c.b16 %v2147, %v2143
        %v2704 = vpack.c.b16 %v2148, %v2144
        %v2705 = vpack.c.b16 %v2153, %v2149
        %v2706 = vpack.c.b16 %v2154, %v2150
        %v2707 = vpack.c.b16 %v2155, %v2151
        %v2708 = vpack.c.b16 %v2156, %v2152
        %v2709 = vpack.c.b16 %v2161, %v2157
        %v2710 = vpack.c.b16 %v2162, %v2158
        %v2711 = vpack.c.b16 %v2163, %v2159
        %v2712 = vpack.c.b16 %v2164, %v2160
        %v2713 = vpack.c.b16 %v2169, %v2165
        %v2714 = vpack.c.b16 %v2170, %v2166
        %v2715 = vpack.c.b16 %v2171, %v2167
        %v2716 = vpack.c.b16 %v2172, %v2168
        %v2717 = vpack.c.b16 %v2177, %v2173
        %v2718 = vpack.c.b16 %v2178, %v2174
        %v2719 = vpack.c.b16 %v2179, %v2175
        %v2720 = vpack.c.b16 %v2180, %v2176
        %v2721 = vpack.c.b16 %v2185, %v2181
        %v2722 = vpack.c.b16 %v2186, %v2182
        %v2723 = vpack.c.b16 %v2187, %v2183
        %v2724 = vpack.c.b16 %v2188, %v2184
        %v2725 = vpack.c.b16 %v2193, %v2189
        %v2726 = vpack.c.b16 %v2194, %v2190
        %v2727 = vpack.c.b16 %v2195, %v2191
        %v2728 = vpack.c.b16 %v2196, %v2192
        %v2729 = vpack.c.b16 %v2201, %v2197
        %v2730 = vpack.c.b16 %v2202, %v2198
        %v2731 = vpack.c.b16 %v2203, %v2199
        %v2732 = vpack.c.b16 %v2204, %v2200
        %v2733 = vpack.c.b16 %v2209, %v2205
        %v2734 = vpack.c.b16 %v2210, %v2206
        %v2735 = vpack.c.b16 %v2211, %v2207
        %v2736 = vpack.c.b16 %v2212, %v2208
        %v2737 = vpack.c.b16 %v2217, %v2213
        %v2738 = vpack.c.b16 %v2218, %v2214
        %v2739 = vpack.c.b16 %v2219, %v2215
        %v2740 = vpack.c.b16 %v2220, %v2216
        %v2741 = vpack.c.b16 %v2225, %v2221
        %v2742 = vpack.c.b16 %v2226, %v2222
        %v2743 = vpack.c.b16 %v2227, %v2223
        %v2744 = vpack.c.b16 %v2228, %v2224
        %v2745 = vpack.c.b16 %v2233, %v2229
        %v2746 = vpack.c.b16 %v2234, %v2230
        %v2747 = vpack.c.b16 %v2235, %v2231
        %v2748 = vpack.c.b16 %v2236, %v2232
        %v2749 = vpack.c.b16 %v2241, %v2237
        %v2750 = vpack.c.b16 %v2242, %v2238
        %v2751 = vpack.c.b16 %v2243, %v2239
        %v2752 = vpack.c.b16 %v2244, %v2240
        %v2753 = vpack.c.b16 %v2249, %v2245
        %v2754 = vpack.c.b16 %v2250, %v2246
        %v2755 = vpack.c.b16 %v2251, %v2247
        %v2756 = vpack.c.b16 %v2252, %v2248
        %v2757 = vpack.c.b16 %v2257, %v2253
        %v2758 = vpack.c.b16 %v2258, %v2254
        %v2759 = vpack.c.b16 %v2259, %v2255
        %v2760 = vpack.c.b16 %v2260, %v2256
        %v2761 = vpack.c.b16 %v2265, %v2261
        %v2762 = vpack.c.b16 %v2266, %v2262
        %v2763 = vpack.c.b16 %v2267, %v2263
        %v2764 = vpack.c.b16 %v2268, %v2264
        %v2765 = vpack.c.b16 %v2273, %v2269
        %v2766 = vpack.c.b16 %v2274, %v2270
        %v2767 = vpack.c.b16 %v2275, %v2271
        %v2768 = vpack.c.b16 %v2276, %v2272
        %v2769 = vpack.c.b16 %v2281, %v2277
        %v2770 = vpack.c.b16 %v2282, %v2278
        %v2771 = vpack.c.b16 %v2283, %v2279
        %v2772 = vpack.c.b16 %v2284, %v2280
        %v2773 = vpack.c.b16 %v2289, %v2285
        %v2774 = vpack.c.b16 %v2290, %v2286
        %v2775 = vpack.c.b16 %v2291, %v2287
        %v2776 = vpack.c.b16 %v2292, %v2288
        %v2777 = vpack.c.b16 %v2297, %v2293
        %v2778 = vpack.c.b16 %v2298, %v2294
        %v2779 = vpack.c.b16 %v2299, %v2295
        %v2780 = vpack.c.b16 %v2300, %v2296
        %v2781 = vpack.c.b16 %v2305, %v2301
        %v2782 = vpack.c.b16 %v2306, %v2302
        %v2783 = vpack.c.b16 %v2307, %v2303
        %v2784 = vpack.c.b16 %v2308, %v2304
        %v2785 = vpack.c.b16 %v2313, %v2309
        %v2786 = vpack.c.b16 %v2314, %v2310
        %v2787 = vpack.c.b16 %v2315, %v2311
        %v2788 = vpack.c.b16 %v2316, %v2312
        %v2789 = vpack.c.b16 %v2321, %v2317
        %v2790 = vpack.c.b16 %v2322, %v2318
        %v2791 = vpack.c.b16 %v2323, %v2319
        %v2792 = vpack.c.b16 %v2324, %v2320
        %v2793 = vpack.c.b16 %v2329, %v2325
        %v2794 = vpack.c.b16 %v2330, %v2326
        %v2795 = vpack.c.b16 %v2331, %v2327
        %v2796 = vpack.c.b16 %v2332, %v2328
        %v2797 = vpack.c.b16 %v2337, %v2333
        %v2798 = vpack.c.b16 %v2338, %v2334
        %v2799 = vpack.c.b16 %v2339, %v2335
        %v2800 = vpack.c.b16 %v2340, %v2336
        %v2801 = vpack.c.b16 %v2345, %v2341
        %v2802 = vpack.c.b16 %v2346, %v2342
        %v2803 = vpack.c.b16 %v2347, %v2343
        %v2804 = vpack.c.b16 %v2348, %v2344
        %v2805 = vpack.c.b16 %v2353, %v2349
        %v2806 = vpack.c.b16 %v2354, %v2350
        %v2807 = vpack.c.b16 %v2355, %v2351
        %v2808 = vpack.c.b16 %v2356, %v2352
        %v2809 = vpack.c.b16 %v2361, %v2357
        %v2810 = vpack.c.b16 %v2362, %v2358
        %v2811 = vpack.c.b16 %v2363, %v2359
        %v2812 = vpack.c.b16 %v2364, %v2360
        %v2813 = vpack.c.b16 %v2369, %v2365
        %v2814 = vpack.c.b16 %v2370, %v2366
        %v2815 = vpack.c.b16 %v2371, %v2367
        %v2816 = vpack.c.b16 %v2372, %v2368
        %v2817 = vpack.c.b16 %v2377, %v2373
        %v2818 = vpack.c.b16 %v2378, %v2374
        %v2819 = vpack.c.b16 %v2379, %v2375
        %v2820 = vpack.c.b16 %v2380, %v2376
        %v2821 = vpack.c.b16 %v2385, %v2381
        %v2822 = vpack.c.b16 %v2386, %v2382
        %v2823 = vpack.c.b16 %v2387, %v2383
        %v2824 = vpack.c.b16 %v2388, %v2384
        %v2825 = vpack.c.b16 %v2393, %v2389
        %v2826 = vpack.c.b16 %v2394, %v2390
        %v2827 = vpack.c.b16 %v2395, %v2391
        %v2828 = vpack.c.b16 %v2396, %v2392
        %v2829 = vpack.c.b16 %v2401, %v2397
        %v2830 = vpack.c.b16 %v2402, %v2398
        %v2831 = vpack.c.b16 %v2403, %v2399
        %v2832 = vpack.c.b16 %v2404, %v2400
        %v2833 = vpack.c.b16 %v2409, %v2405
        %v2834 = vpack.c.b16 %v2410, %v2406
        %v2835 = vpack.c.b16 %v2411, %v2407
        %v2836 = vpack.c.b16 %v2412, %v2408
        %v2837 = vpack.c.b16 %v2417, %v2413
        %v2838 = vpack.c.b16 %v2418, %v2414
        %v2839 = vpack.c.b16 %v2419, %v2415
        %v2840 = vpack.c.b16 %v2420, %v2416
        %v2841 = vpack.c.b16 %v2425, %v2421
        %v2842 = vpack.c.b16 %v2426, %v2422
        %v2843 = vpack.c.b16 %v2427, %v2423
        %v2844 = vpack.c.b16 %v2428, %v2424
        %v2845 = vpack.c.b16 %v2433, %v2429
        %v2846 = vpack.c.b16 %v2434, %v2430
        %v2847 = vpack.c.b16 %v2435, %v2431
        %v2848 = vpack.c.b16 %v2436, %v2432
        %v2849 = vpack.c.b16 %v2441, %v2437
        %v2850 = vpack.c.b16 %v2442, %v2438
        %v2851 = vpack.c.b16 %v2443, %v2439
        %v2852 = vpack.c.b16 %v2444, %v2440
        %v2853 = vpack.c.b16 %v2449, %v2445
        %v2854 = vpack.c.b16 %v2450, %v2446
        %v2855 = vpack.c.b16 %v2451, %v2447
        %v2856 = vpack.c.b16 %v2452, %v2448
        %v2857 = vpack.c.b16 %v2457, %v2453
        %v2858 = vpack.c.b16 %v2458, %v2454
        %v2859 = vpack.c.b16 %v2459, %v2455
        %v2860 = vpack.c.b16 %v2460, %v2456
        %v2861 = vpack.c.b16 %v2465, %v2461
        %v2862 = vpack.c.b16 %v2466, %v2462
        %v2863 = vpack.c.b16 %v2467, %v2463
        %v2864 = vpack.c.b16 %v2468, %v2464
        %v2865 = vpack.c.b16 %v2473, %v2469
        %v2866 = vpack.c.b16 %v2474, %v2470
        %v2867 = vpack.c.b16 %v2475, %v2471
        %v2868 = vpack.c.b16 %v2476, %v2472
        %v2869 = vpack.c.b16 %v2481, %v2477
        %v2870 = vpack.c.b16 %v2482, %v2478
        %v2871 = vpack.c.b16 %v2483, %v2479
        %v2872 = vpack.c.b16 %v2484, %v2480
        %v2873 = vpack.c.b16 %v2489, %v2485
        %v2874 = vpack.c.b16 %v2490, %v2486
        %v2875 = vpack.c.b16 %v2491, %v2487
        %v2876 = vpack.c.b16 %v2492, %v2488
        %v2877 = vpack.c.b16 %v2497, %v2493
        %v2878 = vpack.c.b16 %v2498, %v2494
        %v2879 = vpack.c.b16 %v2499, %v2495
        %v2880 = vpack.c.b16 %v2500, %v2496
        %v2881 = vpack.c.b16 %v2505, %v2501
        %v2882 = vpack.c.b16 %v2506, %v2502
        %v2883 = vpack.c.b16 %v2507, %v2503
        %v2884 = vpack.c.b16 %v2508, %v2504
        %v2885 = vpack.c.b16 %v2513, %v2509
        %v2886 = vpack.c.b16 %v2514, %v2510
        %v2887 = vpack.c.b16 %v2515, %v2511
        %v2888 = vpack.c.b16 %v2516, %v2512
        %v2889 = vpack.c.b16 %v2521, %v2517
        %v2890 = vpack.c.b16 %v2522, %v2518
        %v2891 = vpack.c.b16 %v2523, %v2519
        %v2892 = vpack.c.b16 %v2524, %v2520
        %v2893 = vpack.c.b16 %v2529, %v2525
        %v2894 = vpack.c.b16 %v2530, %v2526
        %v2895 = vpack.c.b16 %v2531, %v2527
        %v2896 = vpack.c.b16 %v2532, %v2528
        %v2897 = vpack.c.b16 %v2537, %v2533
        %v2898 = vpack.c.b16 %v2538, %v2534
        %v2899 = vpack.c.b16 %v2539, %v2535
        %v2900 = vpack.c.b16 %v2540, %v2536
        %v2901 = vpack.c.b16 %v2545, %v2541
        %v2902 = vpack.c.b16 %v2546, %v2542
        %v2903 = vpack.c.b16 %v2547, %v2543
        %v2904 = vpack.c.b16 %v2548, %v2544
        %v2905 = vpack.c.b16 %v2553, %v2549
        %v2906 = vpack.c.b16 %v2554, %v2550
        %v2907 = vpack.c.b16 %v2555, %v2551
        %v2908 = vpack.c.b16 %v2556, %v2552
        %3261 = vmatpush.bf16.msra.mxu0 %v2585
        %3262 = vmatpush.bf16.msra.mxu0 %v2581
        %3263 = vmatpush.bf16.msra.mxu0 %v2577
        %3264 = vmatpush.bf16.msra.mxu0 %v2573
        %3265 = vmatpush.bf16.msra.mxu0 %v2569
        %3266 = vmatpush.bf16.msra.mxu0 %v2565
        %3267 = vmatpush.bf16.msra.mxu0 %v2561
        %3268 = vmatpush.bf16.msra.mxu0 %v2557
        %3269 = vmatmul.bf16.gmra.mxu0 %v1479
        %v3270 = vpop.f32.mrf.mxu0
        %v3271 = vadd.f32 0.0, %v3270
        %v3272 = vpop.f32.mrf.mxu0
        %v3273 = vadd.f32 0.0, %v3272
        %3274 = vdwg.mxu0
        %3275 = vmatpush.bf16.msra.mxu0 %v2617
        %3276 = vmatpush.bf16.msra.mxu0 %v2613
        %3277 = vmatpush.bf16.msra.mxu0 %v2609
        %3278 = vmatpush.bf16.msra.mxu0 %v2605
        %3279 = vmatpush.bf16.msra.mxu0 %v2601
        %3280 = vmatpush.bf16.msra.mxu0 %v2597
        %3281 = vmatpush.bf16.msra.mxu0 %v2593
        %3282 = vmatpush.bf16.msra.mxu0 %v2589
        %3283 = vmatmul.bf16.gmra.mxu0 %v1480
        %v3284 = vpop.f32.mrf.mxu0
        %v3285 = vadd.f32 %v3271, %v3284
        %v3286 = vpop.f32.mrf.mxu0
        %v3287 = vadd.f32 %v3273, %v3286
        %3288 = vdwg.mxu0
        %3289 = vmatpush.bf16.msra.mxu0 %v2649
        %3290 = vmatpush.bf16.msra.mxu0 %v2645
        %3291 = vmatpush.bf16.msra.mxu0 %v2641
        %3292 = vmatpush.bf16.msra.mxu0 %v2637
        %3293 = vmatpush.bf16.msra.mxu0 %v2633
        %3294 = vmatpush.bf16.msra.mxu0 %v2629
        %3295 = vmatpush.bf16.msra.mxu0 %v2625
        %3296 = vmatpush.bf16.msra.mxu0 %v2621
        %3297 = vmatmul.bf16.gmra.mxu0 %v1481
        %v3298 = vpop.f32.mrf.mxu0
        %v3299 = vadd.f32 %v3285, %v3298
        %v3300 = vpop.f32.mrf.mxu0
        %v3301 = vadd.f32 %v3287, %v3300
        %3302 = vdwg.mxu0
        %3303 = vmatpush.bf16.msra.mxu0 %v2681
        %3304 = vmatpush.bf16.msra.mxu0 %v2677
        %3305 = vmatpush.bf16.msra.mxu0 %v2673
        %3306 = vmatpush.bf16.msra.mxu0 %v2669
        %3307 = vmatpush.bf16.msra.mxu0 %v2665
        %3308 = vmatpush.bf16.msra.mxu0 %v2661
        %3309 = vmatpush.bf16.msra.mxu0 %v2657
        %3310 = vmatpush.bf16.msra.mxu0 %v2653
        %3311 = vmatmul.bf16.gmra.mxu0 %v1482
        %v3312 = vpop.f32.mrf.mxu0
        %v3313 = vadd.f32 %v3299, %v3312
        %v3314 = vpop.f32.mrf.mxu0
        %v3315 = vadd.f32 %v3301, %v3314
        %3316 = vdwg.mxu0
        %3317 = vmatpush.bf16.msra.mxu0 %v2713
        %3318 = vmatpush.bf16.msra.mxu0 %v2709
        %3319 = vmatpush.bf16.msra.mxu0 %v2705
        %3320 = vmatpush.bf16.msra.mxu0 %v2701
        %3321 = vmatpush.bf16.msra.mxu0 %v2697
        %3322 = vmatpush.bf16.msra.mxu0 %v2693
        %3323 = vmatpush.bf16.msra.mxu0 %v2689
        %3324 = vmatpush.bf16.msra.mxu0 %v2685
        %3325 = vmatmul.bf16.gmra.mxu0 %v1483
        %v3326 = vpop.f32.mrf.mxu0
        %v3327 = vadd.f32 %v3313, %v3326
        %v3328 = vpop.f32.mrf.mxu0
        %v3329 = vadd.f32 %v3315, %v3328
        %3330 = vdwg.mxu0
        %3331 = vmatpush.bf16.msra.mxu0 %v2745
        %3332 = vmatpush.bf16.msra.mxu0 %v2741
        %3333 = vmatpush.bf16.msra.mxu0 %v2737
        %3334 = vmatpush.bf16.msra.mxu0 %v2733
        %3335 = vmatpush.bf16.msra.mxu0 %v2729
        %3336 = vmatpush.bf16.msra.mxu0 %v2725
        %3337 = vmatpush.bf16.msra.mxu0 %v2721
        %3338 = vmatpush.bf16.msra.mxu0 %v2717
        %3339 = vmatmul.bf16.gmra.mxu0 %v1484
        %v3340 = vpop.f32.mrf.mxu0
        %v3341 = vadd.f32 %v3327, %v3340
        %v3342 = vpop.f32.mrf.mxu0
        %v3343 = vadd.f32 %v3329, %v3342
        %3344 = vdwg.mxu0
        %3345 = vmatpush.bf16.msra.mxu0 %v2777
        %3346 = vmatpush.bf16.msra.mxu0 %v2773
        %3347 = vmatpush.bf16.msra.mxu0 %v2769
        %3348 = vmatpush.bf16.msra.mxu0 %v2765
        %3349 = vmatpush.bf16.msra.mxu0 %v2761
        %3350 = vmatpush.bf16.msra.mxu0 %v2757
        %3351 = vmatpush.bf16.msra.mxu0 %v2753
        %3352 = vmatpush.bf16.msra.mxu0 %v2749
        %3353 = vmatmul.bf16.gmra.mxu0 %v1485
        %v3354 = vpop.f32.mrf.mxu0
        %v3355 = vadd.f32 %v3341, %v3354
        %v3356 = vpop.f32.mrf.mxu0
        %v3357 = vadd.f32 %v3343, %v3356
        %3358 = vdwg.mxu0
        %3359 = vmatpush.bf16.msra.mxu0 %v2809
        %3360 = vmatpush.bf16.msra.mxu0 %v2805
        %3361 = vmatpush.bf16.msra.mxu0 %v2801
        %3362 = vmatpush.bf16.msra.mxu0 %v2797
        %3363 = vmatpush.bf16.msra.mxu0 %v2793
        %3364 = vmatpush.bf16.msra.mxu0 %v2789
        %3365 = vmatpush.bf16.msra.mxu0 %v2785
        %3366 = vmatpush.bf16.msra.mxu0 %v2781
        %3367 = vmatmul.bf16.gmra.mxu0 %v1486
        %v3368 = vpop.f32.mrf.mxu0
        %v3369 = vadd.f32 %v3355, %v3368
        %v3370 = vpop.f32.mrf.mxu0
        %v3371 = vadd.f32 %v3357, %v3370
        %3372 = vdwg.mxu0
        %3373 = vmatpush.bf16.msra.mxu0 %v2841
        %3374 = vmatpush.bf16.msra.mxu0 %v2837
        %3375 = vmatpush.bf16.msra.mxu0 %v2833
        %3376 = vmatpush.bf16.msra.mxu0 %v2829
        %3377 = vmatpush.bf16.msra.mxu0 %v2825
        %3378 = vmatpush.bf16.msra.mxu0 %v2821
        %3379 = vmatpush.bf16.msra.mxu0 %v2817
        %3380 = vmatpush.bf16.msra.mxu0 %v2813
        %3381 = vmatmul.bf16.gmra.mxu0 %v1487
        %v3382 = vpop.f32.mrf.mxu0
        %v3383 = vadd.f32 %v3369, %v3382
        %v3384 = vpop.f32.mrf.mxu0
        %v3385 = vadd.f32 %v3371, %v3384
        %3386 = vdwg.mxu0
        %3387 = vmatpush.bf16.msra.mxu0 %v2873
        %3388 = vmatpush.bf16.msra.mxu0 %v2869
        %3389 = vmatpush.bf16.msra.mxu0 %v2865
        %3390 = vmatpush.bf16.msra.mxu0 %v2861
        %3391 = vmatpush.bf16.msra.mxu0 %v2857
        %3392 = vmatpush.bf16.msra.mxu0 %v2853
        %3393 = vmatpush.bf16.msra.mxu0 %v2849
        %3394 = vmatpush.bf16.msra.mxu0 %v2845
        %3395 = vmatmul.bf16.gmra.mxu0 %v1488
        %v3396 = vpop.f32.mrf.mxu0
        %v3397 = vadd.f32 %v3383, %v3396
        %v3398 = vpop.f32.mrf.mxu0
        %v3399 = vadd.f32 %v3385, %v3398
        %3400 = vdwg.mxu0
        %3401 = vmatpush.bf16.msra.mxu0 %v2905
        %3402 = vmatpush.bf16.msra.mxu0 %v2901
        %3403 = vmatpush.bf16.msra.mxu0 %v2897
        %3404 = vmatpush.bf16.msra.mxu0 %v2893
        %3405 = vmatpush.bf16.msra.mxu0 %v2889
        %3406 = vmatpush.bf16.msra.mxu0 %v2885
        %3407 = vmatpush.bf16.msra.mxu0 %v2881
        %3408 = vmatpush.bf16.msra.mxu0 %v2877
        %3409 = vmatmul.bf16.gmra.mxu0 %v1489
        %v3410 = vpop.f32.mrf.mxu0
        %v3411 = vadd.f32 %v3397, %v3410
        %v3412 = vpop.f32.mrf.mxu0
        %v3413 = vadd.f32 %v3399, %v3412
        %3414 = vdwg.mxu0
        %3415 = vmatpush.bf16.msra.mxu0 %v2586
        %3416 = vmatpush.bf16.msra.mxu0 %v2582
        %3417 = vmatpush.bf16.msra.mxu0 %v2578
        %3418 = vmatpush.bf16.msra.mxu0 %v2574
        %3419 = vmatpush.bf16.msra.mxu0 %v2570
        %3420 = vmatpush.bf16.msra.mxu0 %v2566
        %3421 = vmatpush.bf16.msra.mxu0 %v2562
        %3422 = vmatpush.bf16.msra.mxu0 %v2558
        %3423 = vmatmul.bf16.gmra.mxu0 %v1479
        %v3424 = vpop.f32.mrf.mxu0
        %v3425 = vadd.f32 0.0, %v3424
        %v3426 = vpop.f32.mrf.mxu0
        %v3427 = vadd.f32 0.0, %v3426
        %3428 = vdwg.mxu0
        %3429 = vmatpush.bf16.msra.mxu0 %v2618
        %3430 = vmatpush.bf16.msra.mxu0 %v2614
        %3431 = vmatpush.bf16.msra.mxu0 %v2610
        %3432 = vmatpush.bf16.msra.mxu0 %v2606
        %3433 = vmatpush.bf16.msra.mxu0 %v2602
        %3434 = vmatpush.bf16.msra.mxu0 %v2598
        %3435 = vmatpush.bf16.msra.mxu0 %v2594
        %3436 = vmatpush.bf16.msra.mxu0 %v2590
        %3437 = vmatmul.bf16.gmra.mxu0 %v1480
        %v3438 = vpop.f32.mrf.mxu0
        %v3439 = vadd.f32 %v3425, %v3438
        %v3440 = vpop.f32.mrf.mxu0
        %v3441 = vadd.f32 %v3427, %v3440
        %3442 = vdwg.mxu0
        %3443 = vmatpush.bf16.msra.mxu0 %v2650
        %3444 = vmatpush.bf16.msra.mxu0 %v2646
        %3445 = vmatpush.bf16.msra.mxu0 %v2642
        %3446 = vmatpush.bf16.msra.mxu0 %v2638
        %3447 = vmatpush.bf16.msra.mxu0 %v2634
        %3448 = vmatpush.bf16.msra.mxu0 %v2630
        %3449 = vmatpush.bf16.msra.mxu0 %v2626
        %3450 = vmatpush.bf16.msra.mxu0 %v2622
        %3451 = vmatmul.bf16.gmra.mxu0 %v1481
        %v3452 = vpop.f32.mrf.mxu0
        %v3453 = vadd.f32 %v3439, %v3452
        %v3454 = vpop.f32.mrf.mxu0
        %v3455 = vadd.f32 %v3441, %v3454
        %3456 = vdwg.mxu0
        %3457 = vmatpush.bf16.msra.mxu0 %v2682
        %3458 = vmatpush.bf16.msra.mxu0 %v2678
        %3459 = vmatpush.bf16.msra.mxu0 %v2674
        %3460 = vmatpush.bf16.msra.mxu0 %v2670
        %3461 = vmatpush.bf16.msra.mxu0 %v2666
        %3462 = vmatpush.bf16.msra.mxu0 %v2662
        %3463 = vmatpush.bf16.msra.mxu0 %v2658
        %3464 = vmatpush.bf16.msra.mxu0 %v2654
        %3465 = vmatmul.bf16.gmra.mxu0 %v1482
        %v3466 = vpop.f32.mrf.mxu0
        %v3467 = vadd.f32 %v3453, %v3466
        %v3468 = vpop.f32.mrf.mxu0
        %v3469 = vadd.f32 %v3455, %v3468
        %3470 = vdwg.mxu0
        %3471 = vmatpush.bf16.msra.mxu0 %v2714
        %3472 = vmatpush.bf16.msra.mxu0 %v2710
        %3473 = vmatpush.bf16.msra.mxu0 %v2706
        %3474 = vmatpush.bf16.msra.mxu0 %v2702
        %3475 = vmatpush.bf16.msra.mxu0 %v2698
        %3476 = vmatpush.bf16.msra.mxu0 %v2694
        %3477 = vmatpush.bf16.msra.mxu0 %v2690
        %3478 = vmatpush.bf16.msra.mxu0 %v2686
        %3479 = vmatmul.bf16.gmra.mxu0 %v1483
        %v3480 = vpop.f32.mrf.mxu0
        %v3481 = vadd.f32 %v3467, %v3480
        %v3482 = vpop.f32.mrf.mxu0
        %v3483 = vadd.f32 %v3469, %v3482
        %3484 = vdwg.mxu0
        %3485 = vmatpush.bf16.msra.mxu0 %v2746
        %3486 = vmatpush.bf16.msra.mxu0 %v2742
        %3487 = vmatpush.bf16.msra.mxu0 %v2738
        %3488 = vmatpush.bf16.msra.mxu0 %v2734
        %3489 = vmatpush.bf16.msra.mxu0 %v2730
        %3490 = vmatpush.bf16.msra.mxu0 %v2726
        %3491 = vmatpush.bf16.msra.mxu0 %v2722
        %3492 = vmatpush.bf16.msra.mxu0 %v2718
        %3493 = vmatmul.bf16.gmra.mxu0 %v1484
        %v3494 = vpop.f32.mrf.mxu0
        %v3495 = vadd.f32 %v3481, %v3494
        %v3496 = vpop.f32.mrf.mxu0
        %v3497 = vadd.f32 %v3483, %v3496
        %3498 = vdwg.mxu0
        %3499 = vmatpush.bf16.msra.mxu0 %v2778
        %3500 = vmatpush.bf16.msra.mxu0 %v2774
        %3501 = vmatpush.bf16.msra.mxu0 %v2770
        %3502 = vmatpush.bf16.msra.mxu0 %v2766
        %3503 = vmatpush.bf16.msra.mxu0 %v2762
        %3504 = vmatpush.bf16.msra.mxu0 %v2758
        %3505 = vmatpush.bf16.msra.mxu0 %v2754
        %3506 = vmatpush.bf16.msra.mxu0 %v2750
        %3507 = vmatmul.bf16.gmra.mxu0 %v1485
        %v3508 = vpop.f32.mrf.mxu0
        %v3509 = vadd.f32 %v3495, %v3508
        %v3510 = vpop.f32.mrf.mxu0
        %v3511 = vadd.f32 %v3497, %v3510
        %3512 = vdwg.mxu0
        %3513 = vmatpush.bf16.msra.mxu0 %v2810
        %3514 = vmatpush.bf16.msra.mxu0 %v2806
        %3515 = vmatpush.bf16.msra.mxu0 %v2802
        %3516 = vmatpush.bf16.msra.mxu0 %v2798
        %3517 = vmatpush.bf16.msra.mxu0 %v2794
        %3518 = vmatpush.bf16.msra.mxu0 %v2790
        %3519 = vmatpush.bf16.msra.mxu0 %v2786
        %3520 = vmatpush.bf16.msra.mxu0 %v2782
        %3521 = vmatmul.bf16.gmra.mxu0 %v1486
        %v3522 = vpop.f32.mrf.mxu0
        %v3523 = vadd.f32 %v3509, %v3522
        %v3524 = vpop.f32.mrf.mxu0
        %v3525 = vadd.f32 %v3511, %v3524
        %3526 = vdwg.mxu0
        %3527 = vmatpush.bf16.msra.mxu0 %v2842
        %3528 = vmatpush.bf16.msra.mxu0 %v2838
        %3529 = vmatpush.bf16.msra.mxu0 %v2834
        %3530 = vmatpush.bf16.msra.mxu0 %v2830
        %3531 = vmatpush.bf16.msra.mxu0 %v2826
        %3532 = vmatpush.bf16.msra.mxu0 %v2822
        %3533 = vmatpush.bf16.msra.mxu0 %v2818
        %3534 = vmatpush.bf16.msra.mxu0 %v2814
        %3535 = vmatmul.bf16.gmra.mxu0 %v1487
        %v3536 = vpop.f32.mrf.mxu0
        %v3537 = vadd.f32 %v3523, %v3536
        %v3538 = vpop.f32.mrf.mxu0
        %v3539 = vadd.f32 %v3525, %v3538
        %3540 = vdwg.mxu0
        %3541 = vmatpush.bf16.msra.mxu0 %v2874
        %3542 = vmatpush.bf16.msra.mxu0 %v2870
        %3543 = vmatpush.bf16.msra.mxu0 %v2866
        %3544 = vmatpush.bf16.msra.mxu0 %v2862
        %3545 = vmatpush.bf16.msra.mxu0 %v2858
        %3546 = vmatpush.bf16.msra.mxu0 %v2854
        %3547 = vmatpush.bf16.msra.mxu0 %v2850
        %3548 = vmatpush.bf16.msra.mxu0 %v2846
        %3549 = vmatmul.bf16.gmra.mxu0 %v1488
        %v3550 = vpop.f32.mrf.mxu0
        %v3551 = vadd.f32 %v3537, %v3550
        %v3552 = vpop.f32.mrf.mxu0
        %v3553 = vadd.f32 %v3539, %v3552
        %3554 = vdwg.mxu0
        %3555 = vmatpush.bf16.msra.mxu0 %v2906
        %3556 = vmatpush.bf16.msra.mxu0 %v2902
        %3557 = vmatpush.bf16.msra.mxu0 %v2898
        %3558 = vmatpush.bf16.msra.mxu0 %v2894
        %3559 = vmatpush.bf16.msra.mxu0 %v2890
        %3560 = vmatpush.bf16.msra.mxu0 %v2886
        %3561 = vmatpush.bf16.msra.mxu0 %v2882
        %3562 = vmatpush.bf16.msra.mxu0 %v2878
        %3563 = vmatmul.bf16.gmra.mxu0 %v1489
        %v3564 = vpop.f32.mrf.mxu0
        %v3565 = vadd.f32 %v3551, %v3564
        %v3566 = vpop.f32.mrf.mxu0
        %v3567 = vadd.f32 %v3553, %v3566
        %3568 = vdwg.mxu0
        %3569 = vmatpush.bf16.msra.mxu0 %v2587
        %3570 = vmatpush.bf16.msra.mxu0 %v2583
        %3571 = vmatpush.bf16.msra.mxu0 %v2579
        %3572 = vmatpush.bf16.msra.mxu0 %v2575
        %3573 = vmatpush.bf16.msra.mxu0 %v2571
        %3574 = vmatpush.bf16.msra.mxu0 %v2567
        %3575 = vmatpush.bf16.msra.mxu0 %v2563
        %3576 = vmatpush.bf16.msra.mxu0 %v2559
        %3577 = vmatmul.bf16.gmra.mxu0 %v1479
        %v3578 = vpop.f32.mrf.mxu0
        %v3579 = vadd.f32 0.0, %v3578
        %v3580 = vpop.f32.mrf.mxu0
        %v3581 = vadd.f32 0.0, %v3580
        %3582 = vdwg.mxu0
        %3583 = vmatpush.bf16.msra.mxu0 %v2619
        %3584 = vmatpush.bf16.msra.mxu0 %v2615
        %3585 = vmatpush.bf16.msra.mxu0 %v2611
        %3586 = vmatpush.bf16.msra.mxu0 %v2607
        %3587 = vmatpush.bf16.msra.mxu0 %v2603
        %3588 = vmatpush.bf16.msra.mxu0 %v2599
        %3589 = vmatpush.bf16.msra.mxu0 %v2595
        %3590 = vmatpush.bf16.msra.mxu0 %v2591
        %3591 = vmatmul.bf16.gmra.mxu0 %v1480
        %v3592 = vpop.f32.mrf.mxu0
        %v3593 = vadd.f32 %v3579, %v3592
        %v3594 = vpop.f32.mrf.mxu0
        %v3595 = vadd.f32 %v3581, %v3594
        %3596 = vdwg.mxu0
        %3597 = vmatpush.bf16.msra.mxu0 %v2651
        %3598 = vmatpush.bf16.msra.mxu0 %v2647
        %3599 = vmatpush.bf16.msra.mxu0 %v2643
        %3600 = vmatpush.bf16.msra.mxu0 %v2639
        %3601 = vmatpush.bf16.msra.mxu0 %v2635
        %3602 = vmatpush.bf16.msra.mxu0 %v2631
        %3603 = vmatpush.bf16.msra.mxu0 %v2627
        %3604 = vmatpush.bf16.msra.mxu0 %v2623
        %3605 = vmatmul.bf16.gmra.mxu0 %v1481
        %v3606 = vpop.f32.mrf.mxu0
        %v3607 = vadd.f32 %v3593, %v3606
        %v3608 = vpop.f32.mrf.mxu0
        %v3609 = vadd.f32 %v3595, %v3608
        %3610 = vdwg.mxu0
        %3611 = vmatpush.bf16.msra.mxu0 %v2683
        %3612 = vmatpush.bf16.msra.mxu0 %v2679
        %3613 = vmatpush.bf16.msra.mxu0 %v2675
        %3614 = vmatpush.bf16.msra.mxu0 %v2671
        %3615 = vmatpush.bf16.msra.mxu0 %v2667
        %3616 = vmatpush.bf16.msra.mxu0 %v2663
        %3617 = vmatpush.bf16.msra.mxu0 %v2659
        %3618 = vmatpush.bf16.msra.mxu0 %v2655
        %3619 = vmatmul.bf16.gmra.mxu0 %v1482
        %v3620 = vpop.f32.mrf.mxu0
        %v3621 = vadd.f32 %v3607, %v3620
        %v3622 = vpop.f32.mrf.mxu0
        %v3623 = vadd.f32 %v3609, %v3622
        %3624 = vdwg.mxu0
        %3625 = vmatpush.bf16.msra.mxu0 %v2715
        %3626 = vmatpush.bf16.msra.mxu0 %v2711
        %3627 = vmatpush.bf16.msra.mxu0 %v2707
        %3628 = vmatpush.bf16.msra.mxu0 %v2703
        %3629 = vmatpush.bf16.msra.mxu0 %v2699
        %3630 = vmatpush.bf16.msra.mxu0 %v2695
        %3631 = vmatpush.bf16.msra.mxu0 %v2691
        %3632 = vmatpush.bf16.msra.mxu0 %v2687
        %3633 = vmatmul.bf16.gmra.mxu0 %v1483
        %v3634 = vpop.f32.mrf.mxu0
        %v3635 = vadd.f32 %v3621, %v3634
        %v3636 = vpop.f32.mrf.mxu0
        %v3637 = vadd.f32 %v3623, %v3636
        %3638 = vdwg.mxu0
        %3639 = vmatpush.bf16.msra.mxu0 %v2747
        %3640 = vmatpush.bf16.msra.mxu0 %v2743
        %3641 = vmatpush.bf16.msra.mxu0 %v2739
        %3642 = vmatpush.bf16.msra.mxu0 %v2735
        %3643 = vmatpush.bf16.msra.mxu0 %v2731
        %3644 = vmatpush.bf16.msra.mxu0 %v2727
        %3645 = vmatpush.bf16.msra.mxu0 %v2723
        %3646 = vmatpush.bf16.msra.mxu0 %v2719
        %3647 = vmatmul.bf16.gmra.mxu0 %v1484
        %v3648 = vpop.f32.mrf.mxu0
        %v3649 = vadd.f32 %v3635, %v3648
        %v3650 = vpop.f32.mrf.mxu0
        %v3651 = vadd.f32 %v3637, %v3650
        %3652 = vdwg.mxu0
        %3653 = vmatpush.bf16.msra.mxu0 %v2779
        %3654 = vmatpush.bf16.msra.mxu0 %v2775
        %3655 = vmatpush.bf16.msra.mxu0 %v2771
        %3656 = vmatpush.bf16.msra.mxu0 %v2767
        %3657 = vmatpush.bf16.msra.mxu0 %v2763
        %3658 = vmatpush.bf16.msra.mxu0 %v2759
        %3659 = vmatpush.bf16.msra.mxu0 %v2755
        %3660 = vmatpush.bf16.msra.mxu0 %v2751
        %3661 = vmatmul.bf16.gmra.mxu0 %v1485
        %v3662 = vpop.f32.mrf.mxu0
        %v3663 = vadd.f32 %v3649, %v3662
        %v3664 = vpop.f32.mrf.mxu0
        %v3665 = vadd.f32 %v3651, %v3664
        %3666 = vdwg.mxu0
        %3667 = vmatpush.bf16.msra.mxu0 %v2811
        %3668 = vmatpush.bf16.msra.mxu0 %v2807
        %3669 = vmatpush.bf16.msra.mxu0 %v2803
        %3670 = vmatpush.bf16.msra.mxu0 %v2799
        %3671 = vmatpush.bf16.msra.mxu0 %v2795
        %3672 = vmatpush.bf16.msra.mxu0 %v2791
        %3673 = vmatpush.bf16.msra.mxu0 %v2787
        %3674 = vmatpush.bf16.msra.mxu0 %v2783
        %3675 = vmatmul.bf16.gmra.mxu0 %v1486
        %v3676 = vpop.f32.mrf.mxu0
        %v3677 = vadd.f32 %v3663, %v3676
        %v3678 = vpop.f32.mrf.mxu0
        %v3679 = vadd.f32 %v3665, %v3678
        %3680 = vdwg.mxu0
        %3681 = vmatpush.bf16.msra.mxu0 %v2843
        %3682 = vmatpush.bf16.msra.mxu0 %v2839
        %3683 = vmatpush.bf16.msra.mxu0 %v2835
        %3684 = vmatpush.bf16.msra.mxu0 %v2831
        %3685 = vmatpush.bf16.msra.mxu0 %v2827
        %3686 = vmatpush.bf16.msra.mxu0 %v2823
        %3687 = vmatpush.bf16.msra.mxu0 %v2819
        %3688 = vmatpush.bf16.msra.mxu0 %v2815
        %3689 = vmatmul.bf16.gmra.mxu0 %v1487
        %v3690 = vpop.f32.mrf.mxu0
        %v3691 = vadd.f32 %v3677, %v3690
        %v3692 = vpop.f32.mrf.mxu0
        %v3693 = vadd.f32 %v3679, %v3692
        %3694 = vdwg.mxu0
        %3695 = vmatpush.bf16.msra.mxu0 %v2875
        %3696 = vmatpush.bf16.msra.mxu0 %v2871
        %3697 = vmatpush.bf16.msra.mxu0 %v2867
        %3698 = vmatpush.bf16.msra.mxu0 %v2863
        %3699 = vmatpush.bf16.msra.mxu0 %v2859
        %3700 = vmatpush.bf16.msra.mxu0 %v2855
        %3701 = vmatpush.bf16.msra.mxu0 %v2851
        %3702 = vmatpush.bf16.msra.mxu0 %v2847
        %3703 = vmatmul.bf16.gmra.mxu0 %v1488
        %v3704 = vpop.f32.mrf.mxu0
        %v3705 = vadd.f32 %v3691, %v3704
        %v3706 = vpop.f32.mrf.mxu0
        %v3707 = vadd.f32 %v3693, %v3706
        %3708 = vdwg.mxu0
        %3709 = vmatpush.bf16.msra.mxu0 %v2907
        %3710 = vmatpush.bf16.msra.mxu0 %v2903
        %3711 = vmatpush.bf16.msra.mxu0 %v2899
        %3712 = vmatpush.bf16.msra.mxu0 %v2895
        %3713 = vmatpush.bf16.msra.mxu0 %v2891
        %3714 = vmatpush.bf16.msra.mxu0 %v2887
        %3715 = vmatpush.bf16.msra.mxu0 %v2883
        %3716 = vmatpush.bf16.msra.mxu0 %v2879
        %3717 = vmatmul.bf16.gmra.mxu0 %v1489
        %v3718 = vpop.f32.mrf.mxu0
        %v3719 = vadd.f32 %v3705, %v3718
        %v3720 = vpop.f32.mrf.mxu0
        %v3721 = vadd.f32 %v3707, %v3720
        %3722 = vdwg.mxu0
        %3723 = vmatpush.bf16.msra.mxu0 %v2588
        %3724 = vmatpush.bf16.msra.mxu0 %v2584
        %3725 = vmatpush.bf16.msra.mxu0 %v2580
        %3726 = vmatpush.bf16.msra.mxu0 %v2576
        %3727 = vmatpush.bf16.msra.mxu0 %v2572
        %3728 = vmatpush.bf16.msra.mxu0 %v2568
        %3729 = vmatpush.bf16.msra.mxu0 %v2564
        %3730 = vmatpush.bf16.msra.mxu0 %v2560
        %3731 = vmatmul.bf16.gmra.mxu0 %v1479
        %v3732 = vpop.f32.mrf.mxu0
        %v3733 = vadd.f32 0.0, %v3732
        %v3734 = vpop.f32.mrf.mxu0
        %v3735 = vadd.f32 0.0, %v3734
        %3736 = vdwg.mxu0
        %3737 = vmatpush.bf16.msra.mxu0 %v2620
        %3738 = vmatpush.bf16.msra.mxu0 %v2616
        %3739 = vmatpush.bf16.msra.mxu0 %v2612
        %3740 = vmatpush.bf16.msra.mxu0 %v2608
        %3741 = vmatpush.bf16.msra.mxu0 %v2604
        %3742 = vmatpush.bf16.msra.mxu0 %v2600
        %3743 = vmatpush.bf16.msra.mxu0 %v2596
        %3744 = vmatpush.bf16.msra.mxu0 %v2592
        %3745 = vmatmul.bf16.gmra.mxu0 %v1480
        %v3746 = vpop.f32.mrf.mxu0
        %v3747 = vadd.f32 %v3733, %v3746
        %v3748 = vpop.f32.mrf.mxu0
        %v3749 = vadd.f32 %v3735, %v3748
        %3750 = vdwg.mxu0
        %3751 = vmatpush.bf16.msra.mxu0 %v2652
        %3752 = vmatpush.bf16.msra.mxu0 %v2648
        %3753 = vmatpush.bf16.msra.mxu0 %v2644
        %3754 = vmatpush.bf16.msra.mxu0 %v2640
        %3755 = vmatpush.bf16.msra.mxu0 %v2636
        %3756 = vmatpush.bf16.msra.mxu0 %v2632
        %3757 = vmatpush.bf16.msra.mxu0 %v2628
        %3758 = vmatpush.bf16.msra.mxu0 %v2624
        %3759 = vmatmul.bf16.gmra.mxu0 %v1481
        %v3760 = vpop.f32.mrf.mxu0
        %v3761 = vadd.f32 %v3747, %v3760
        %v3762 = vpop.f32.mrf.mxu0
        %v3763 = vadd.f32 %v3749, %v3762
        %3764 = vdwg.mxu0
        %3765 = vmatpush.bf16.msra.mxu0 %v2684
        %3766 = vmatpush.bf16.msra.mxu0 %v2680
        %3767 = vmatpush.bf16.msra.mxu0 %v2676
        %3768 = vmatpush.bf16.msra.mxu0 %v2672
        %3769 = vmatpush.bf16.msra.mxu0 %v2668
        %3770 = vmatpush.bf16.msra.mxu0 %v2664
        %3771 = vmatpush.bf16.msra.mxu0 %v2660
        %3772 = vmatpush.bf16.msra.mxu0 %v2656
        %3773 = vmatmul.bf16.gmra.mxu0 %v1482
        %v3774 = vpop.f32.mrf.mxu0
        %v3775 = vadd.f32 %v3761, %v3774
        %v3776 = vpop.f32.mrf.mxu0
        %v3777 = vadd.f32 %v3763, %v3776
        %3778 = vdwg.mxu0
        %3779 = vmatpush.bf16.msra.mxu0 %v2716
        %3780 = vmatpush.bf16.msra.mxu0 %v2712
        %3781 = vmatpush.bf16.msra.mxu0 %v2708
        %3782 = vmatpush.bf16.msra.mxu0 %v2704
        %3783 = vmatpush.bf16.msra.mxu0 %v2700
        %3784 = vmatpush.bf16.msra.mxu0 %v2696
        %3785 = vmatpush.bf16.msra.mxu0 %v2692
        %3786 = vmatpush.bf16.msra.mxu0 %v2688
        %3787 = vmatmul.bf16.gmra.mxu0 %v1483
        %v3788 = vpop.f32.mrf.mxu0
        %v3789 = vadd.f32 %v3775, %v3788
        %v3790 = vpop.f32.mrf.mxu0
        %v3791 = vadd.f32 %v3777, %v3790
        %3792 = vdwg.mxu0
        %3793 = vmatpush.bf16.msra.mxu0 %v2748
        %3794 = vmatpush.bf16.msra.mxu0 %v2744
        %3795 = vmatpush.bf16.msra.mxu0 %v2740
        %3796 = vmatpush.bf16.msra.mxu0 %v2736
        %3797 = vmatpush.bf16.msra.mxu0 %v2732
        %3798 = vmatpush.bf16.msra.mxu0 %v2728
        %3799 = vmatpush.bf16.msra.mxu0 %v2724
        %3800 = vmatpush.bf16.msra.mxu0 %v2720
        %3801 = vmatmul.bf16.gmra.mxu0 %v1484
        %v3802 = vpop.f32.mrf.mxu0
        %v3803 = vadd.f32 %v3789, %v3802
        %v3804 = vpop.f32.mrf.mxu0
        %v3805 = vadd.f32 %v3791, %v3804
        %3806 = vdwg.mxu0
        %3807 = vmatpush.bf16.msra.mxu0 %v2780
        %3808 = vmatpush.bf16.msra.mxu0 %v2776
        %3809 = vmatpush.bf16.msra.mxu0 %v2772
        %3810 = vmatpush.bf16.msra.mxu0 %v2768
        %3811 = vmatpush.bf16.msra.mxu0 %v2764
        %3812 = vmatpush.bf16.msra.mxu0 %v2760
        %3813 = vmatpush.bf16.msra.mxu0 %v2756
        %3814 = vmatpush.bf16.msra.mxu0 %v2752
        %3815 = vmatmul.bf16.gmra.mxu0 %v1485
        %v3816 = vpop.f32.mrf.mxu0
        %v3817 = vadd.f32 %v3803, %v3816
        %v3818 = vpop.f32.mrf.mxu0
        %v3819 = vadd.f32 %v3805, %v3818
        %3820 = vdwg.mxu0
        %3821 = vmatpush.bf16.msra.mxu0 %v2812
        %3822 = vmatpush.bf16.msra.mxu0 %v2808
        %3823 = vmatpush.bf16.msra.mxu0 %v2804
        %3824 = vmatpush.bf16.msra.mxu0 %v2800
        %3825 = vmatpush.bf16.msra.mxu0 %v2796
        %3826 = vmatpush.bf16.msra.mxu0 %v2792
        %3827 = vmatpush.bf16.msra.mxu0 %v2788
        %3828 = vmatpush.bf16.msra.mxu0 %v2784
        %3829 = vmatmul.bf16.gmra.mxu0 %v1486
        %v3830 = vpop.f32.mrf.mxu0
        %v3831 = vadd.f32 %v3817, %v3830
        %v3832 = vpop.f32.mrf.mxu0
        %v3833 = vadd.f32 %v3819, %v3832
        %3834 = vdwg.mxu0
        %3835 = vmatpush.bf16.msra.mxu0 %v2844
        %3836 = vmatpush.bf16.msra.mxu0 %v2840
        %3837 = vmatpush.bf16.msra.mxu0 %v2836
        %3838 = vmatpush.bf16.msra.mxu0 %v2832
        %3839 = vmatpush.bf16.msra.mxu0 %v2828
        %3840 = vmatpush.bf16.msra.mxu0 %v2824
        %3841 = vmatpush.bf16.msra.mxu0 %v2820
        %3842 = vmatpush.bf16.msra.mxu0 %v2816
        %3843 = vmatmul.bf16.gmra.mxu0 %v1487
        %v3844 = vpop.f32.mrf.mxu0
        %v3845 = vadd.f32 %v3831, %v3844
        %v3846 = vpop.f32.mrf.mxu0
        %v3847 = vadd.f32 %v3833, %v3846
        %3848 = vdwg.mxu0
        %3849 = vmatpush.bf16.msra.mxu0 %v2876
        %3850 = vmatpush.bf16.msra.mxu0 %v2872
        %3851 = vmatpush.bf16.msra.mxu0 %v2868
        %3852 = vmatpush.bf16.msra.mxu0 %v2864
        %3853 = vmatpush.bf16.msra.mxu0 %v2860
        %3854 = vmatpush.bf16.msra.mxu0 %v2856
        %3855 = vmatpush.bf16.msra.mxu0 %v2852
        %3856 = vmatpush.bf16.msra.mxu0 %v2848
        %3857 = vmatmul.bf16.gmra.mxu0 %v1488
        %v3858 = vpop.f32.mrf.mxu0
        %v3859 = vadd.f32 %v3845, %v3858
        %v3860 = vpop.f32.mrf.mxu0
        %v3861 = vadd.f32 %v3847, %v3860
        %3862 = vdwg.mxu0
        %3863 = vmatpush.bf16.msra.mxu0 %v2908
        %3864 = vmatpush.bf16.msra.mxu0 %v2904
        %3865 = vmatpush.bf16.msra.mxu0 %v2900
        %3866 = vmatpush.bf16.msra.mxu0 %v2896
        %3867 = vmatpush.bf16.msra.mxu0 %v2892
        %3868 = vmatpush.bf16.msra.mxu0 %v2888
        %3869 = vmatpush.bf16.msra.mxu0 %v2884
        %3870 = vmatpush.bf16.msra.mxu0 %v2880
        %3871 = vmatmul.bf16.gmra.mxu0 %v1489
        %v3872 = vpop.f32.mrf.mxu0
        %v3873 = vadd.f32 %v3859, %v3872
        %v3874 = vpop.f32.mrf.mxu0
        %v3875 = vadd.f32 %v3861, %v3874
        %3876 = vdwg.mxu0
        %v3877 = vadd.f32 %v1073, %v3411
        %v3878 = vadd.f32 %v1074, %v3565
        %v3879 = vadd.f32 %v1075, %v3719
        %v3880 = vadd.f32 %v1076, %v3873
        %v3881 = vadd.f32 %v1077, %v3413
        %v3882 = vadd.f32 %v1078, %v3567
        %v3883 = vadd.f32 %v1079, %v3721
        %v3884 = vadd.f32 %v1080, %v3875
        %3885 = vst [vmem:[#allocation2] sm:$0xff] %v3877
        %3886 = vst [vmem:[#allocation2 + $0x8] sm:$0xff] %v3878
        %3887 = vst [vmem:[#allocation2 + $0x10] sm:$0xff] %v3879
        %3888 = vst [vmem:[#allocation2 + $0x18] sm:$0xff] %v3880
        %3889 = vst [vmem:[#allocation2 + $0x20] sm:$0xff] %v3881
        %3890 = vst [vmem:[#allocation2 + $0x28] sm:$0xff] %v3882
        %3891 = vst [vmem:[#allocation2 + $0x30] sm:$0xff] %v3883
        %3892 = vst [vmem:[#allocation2 + $0x38] sm:$0xff] %v3884
        %p3893 = scmp.eq.s32.totalorder %s22, 10
        // Predicated region
        $region90: #{cnn_forward.9} parent=76 // pred_check
          %p3894 = pneg %p3893
        $region91: #{cnn_forward.9} parent=76 // pred_check_branch
          %3896 = sbr.rel (%p3894) target = $region93
        $region92: #{cnn_forward.9} parent=76 // pred_region
          %v3897 = vld [vmem:[#allocation2] sm:$0xff]
          %v3898 = vld [vmem:[#allocation2 + $0x8] sm:$0xff]
          %v3899 = vld [vmem:[#allocation2 + $0x10] sm:$0xff]
          %v3900 = vld [vmem:[#allocation2 + $0x18] sm:$0xff]
          %v3901 = vld [vmem:[#allocation2 + $0x20] sm:$0xff]
          %v3902 = vld [vmem:[#allocation2 + $0x28] sm:$0xff]
          %v3903 = vld [vmem:[#allocation2 + $0x30] sm:$0xff]
          %v3904 = vld [vmem:[#allocation2 + $0x38] sm:$0xff]
          %v3905 = vld [vmem:[%s1052] sm:$0xf]
          %v3906 = vld [vmem:[%s1057] sm:$0xf]
          %v3908 = vperm.slane %v3905, 0
          %v3909 = vperm.slane %v3905, 1
          %v3910 = vperm.slane %v3905, 2
          %v3911 = vperm.slane %v3905, 3
          %v3916 = vmul.f32 %v3897, %v3908
          %v3917 = vmul.f32 %v3898, %v3909
          %v3918 = vmul.f32 %v3899, %v3910
          %v3919 = vmul.f32 %v3900, %v3911
          %v3920 = vmul.f32 %v3901, %v3908
          %v3921 = vmul.f32 %v3902, %v3909
          %v3922 = vmul.f32 %v3903, %v3910
          %v3923 = vmul.f32 %v3904, %v3911
          %v3925 = vperm.slane %v3906, 0
          %v3926 = vperm.slane %v3906, 1
          %v3927 = vperm.slane %v3906, 2
          %v3928 = vperm.slane %v3906, 3
          %v3933 = vadd.f32 %v3916, %v3925
          %v3934 = vadd.f32 %v3917, %v3926
          %v3935 = vadd.f32 %v3918, %v3927
          %v3936 = vadd.f32 %v3919, %v3928
          %v3937 = vadd.f32 %v3920, %v3925
          %v3938 = vadd.f32 %v3921, %v3926
          %v3939 = vadd.f32 %v3922, %v3927
          %v3940 = vadd.f32 %v3923, %v3928
          %v3941 = vxor.u32 %v3933, 2147483648
          %v3942 = vxor.u32 %v3934, 2147483648
          %v3943 = vxor.u32 %v3935, 2147483648
          %v3944 = vxor.u32 %v3936, 2147483648
          %v3945 = vxor.u32 %v3937, 2147483648
          %v3946 = vxor.u32 %v3938, 2147483648
          %v3947 = vxor.u32 %v3939, 2147483648
          %v3948 = vxor.u32 %v3940, 2147483648
          %v3949 = vmul.f32 %v3941, 1.442695
          %v3950 = vpow.pop %v3949
          %v3951 = vmul.f32 %v3942, 1.442695
          %v3952 = vpow.pop %v3951
          %v3953 = vmul.f32 %v3943, 1.442695
          %v3954 = vpow.pop %v3953
          %v3955 = vmul.f32 %v3944, 1.442695
          %v3956 = vpow.pop %v3955
          %v3957 = vmul.f32 %v3945, 1.442695
          %v3958 = vpow.pop %v3957
          %v3959 = vmul.f32 %v3946, 1.442695
          %v3960 = vpow.pop %v3959
          %v3961 = vmul.f32 %v3947, 1.442695
          %v3962 = vpow.pop %v3961
          %v3963 = vmul.f32 %v3948, 1.442695
          %v3964 = vpow.pop %v3963
          %v3965 = vadd.f32 %v3950, 1.0
          %v3966 = vadd.f32 %v3952, 1.0
          %v3967 = vadd.f32 %v3954, 1.0
          %v3968 = vadd.f32 %v3956, 1.0
          %v3969 = vadd.f32 %v3958, 1.0
          %v3970 = vadd.f32 %v3960, 1.0
          %v3971 = vadd.f32 %v3962, 1.0
          %v3972 = vadd.f32 %v3964, 1.0
          %v3973 = vrcp.pop %v3965
          %v3974 = vmul.f32 %v3965, %v3973
          %v3975 = vsub.f32 1.0, %v3974
          %v3976 = vmul.f32 %v3973, %v3975
          %v3977 = vadd.f32 %v3973, %v3976
          %vm3978 = vweird.f32 %v3965
          %vm3979 = vweird.f32 %v3973
          %vm3980 = vmor %vm3978, %vm3979
          %v3981 = vsel %vm3980, %v3973, %v3977
          %v3982 = vand.u32 2147483647, %v3965
          %vm3983 = vcmp.eq.f32.partialorder %v3982, 8.507059e+37
          %v3984 = vand.u32 %v3965, 2147483648
          %v3985 = vor.u32 1.1754944e-38, %v3984
          %v3986 = vsel %vm3983, %v3985, %v3981
          %v3987 = vmul.f32 1.0, %v3986
          %v3988 = vrcp.pop %v3966
          %v3989 = vmul.f32 %v3966, %v3988
          %v3990 = vsub.f32 1.0, %v3989
          %v3991 = vmul.f32 %v3988, %v3990
          %v3992 = vadd.f32 %v3988, %v3991
          %vm3993 = vweird.f32 %v3966
          %vm3994 = vweird.f32 %v3988
          %vm3995 = vmor %vm3993, %vm3994
          %v3996 = vsel %vm3995, %v3988, %v3992
          %v3997 = vand.u32 2147483647, %v3966
          %vm3998 = vcmp.eq.f32.partialorder %v3997, 8.507059e+37
          %v3999 = vand.u32 %v3966, 2147483648
          %v4000 = vor.u32 1.1754944e-38, %v3999
          %v4001 = vsel %vm3998, %v4000, %v3996
          %v4002 = vmul.f32 1.0, %v4001
          %v4003 = vrcp.pop %v3967
          %v4004 = vmul.f32 %v3967, %v4003
          %v4005 = vsub.f32 1.0, %v4004
          %v4006 = vmul.f32 %v4003, %v4005
          %v4007 = vadd.f32 %v4003, %v4006
          %vm4008 = vweird.f32 %v3967
          %vm4009 = vweird.f32 %v4003
          %vm4010 = vmor %vm4008, %vm4009
          %v4011 = vsel %vm4010, %v4003, %v4007
          %v4012 = vand.u32 2147483647, %v3967
          %vm4013 = vcmp.eq.f32.partialorder %v4012, 8.507059e+37
          %v4014 = vand.u32 %v3967, 2147483648
          %v4015 = vor.u32 1.1754944e-38, %v4014
          %v4016 = vsel %vm4013, %v4015, %v4011
          %v4017 = vmul.f32 1.0, %v4016
          %v4018 = vrcp.pop %v3968
          %v4019 = vmul.f32 %v3968, %v4018
          %v4020 = vsub.f32 1.0, %v4019
          %v4021 = vmul.f32 %v4018, %v4020
          %v4022 = vadd.f32 %v4018, %v4021
          %vm4023 = vweird.f32 %v3968
          %vm4024 = vweird.f32 %v4018
          %vm4025 = vmor %vm4023, %vm4024
          %v4026 = vsel %vm4025, %v4018, %v4022
          %v4027 = vand.u32 2147483647, %v3968
          %vm4028 = vcmp.eq.f32.partialorder %v4027, 8.507059e+37
          %v4029 = vand.u32 %v3968, 2147483648
          %v4030 = vor.u32 1.1754944e-38, %v4029
          %v4031 = vsel %vm4028, %v4030, %v4026
          %v4032 = vmul.f32 1.0, %v4031
          %v4033 = vrcp.pop %v3969
          %v4034 = vmul.f32 %v3969, %v4033
          %v4035 = vsub.f32 1.0, %v4034
          %v4036 = vmul.f32 %v4033, %v4035
          %v4037 = vadd.f32 %v4033, %v4036
          %vm4038 = vweird.f32 %v3969
          %vm4039 = vweird.f32 %v4033
          %vm4040 = vmor %vm4038, %vm4039
          %v4041 = vsel %vm4040, %v4033, %v4037
          %v4042 = vand.u32 2147483647, %v3969
          %vm4043 = vcmp.eq.f32.partialorder %v4042, 8.507059e+37
          %v4044 = vand.u32 %v3969, 2147483648
          %v4045 = vor.u32 1.1754944e-38, %v4044
          %v4046 = vsel %vm4043, %v4045, %v4041
          %v4047 = vmul.f32 1.0, %v4046
          %v4048 = vrcp.pop %v3970
          %v4049 = vmul.f32 %v3970, %v4048
          %v4050 = vsub.f32 1.0, %v4049
          %v4051 = vmul.f32 %v4048, %v4050
          %v4052 = vadd.f32 %v4048, %v4051
          %vm4053 = vweird.f32 %v3970
          %vm4054 = vweird.f32 %v4048
          %vm4055 = vmor %vm4053, %vm4054
          %v4056 = vsel %vm4055, %v4048, %v4052
          %v4057 = vand.u32 2147483647, %v3970
          %vm4058 = vcmp.eq.f32.partialorder %v4057, 8.507059e+37
          %v4059 = vand.u32 %v3970, 2147483648
          %v4060 = vor.u32 1.1754944e-38, %v4059
          %v4061 = vsel %vm4058, %v4060, %v4056
          %v4062 = vmul.f32 1.0, %v4061
          %v4063 = vrcp.pop %v3971
          %v4064 = vmul.f32 %v3971, %v4063
          %v4065 = vsub.f32 1.0, %v4064
          %v4066 = vmul.f32 %v4063, %v4065
          %v4067 = vadd.f32 %v4063, %v4066
          %vm4068 = vweird.f32 %v3971
          %vm4069 = vweird.f32 %v4063
          %vm4070 = vmor %vm4068, %vm4069
          %v4071 = vsel %vm4070, %v4063, %v4067
          %v4072 = vand.u32 2147483647, %v3971
          %vm4073 = vcmp.eq.f32.partialorder %v4072, 8.507059e+37
          %v4074 = vand.u32 %v3971, 2147483648
          %v4075 = vor.u32 1.1754944e-38, %v4074
          %v4076 = vsel %vm4073, %v4075, %v4071
          %v4077 = vmul.f32 1.0, %v4076
          %v4078 = vrcp.pop %v3972
          %v4079 = vmul.f32 %v3972, %v4078
          %v4080 = vsub.f32 1.0, %v4079
          %v4081 = vmul.f32 %v4078, %v4080
          %v4082 = vadd.f32 %v4078, %v4081
          %vm4083 = vweird.f32 %v3972
          %vm4084 = vweird.f32 %v4078
          %vm4085 = vmor %vm4083, %vm4084
          %v4086 = vsel %vm4085, %v4078, %v4082
          %v4087 = vand.u32 2147483647, %v3972
          %vm4088 = vcmp.eq.f32.partialorder %v4087, 8.507059e+37
          %v4089 = vand.u32 %v3972, 2147483648
          %v4090 = vor.u32 1.1754944e-38, %v4089
          %v4091 = vsel %vm4088, %v4090, %v4086
          %v4092 = vmul.f32 1.0, %v4091
          %4093 = vst [vmem:[%s1044] sm:$0xff] %v3987
          %4094 = vst [vmem:[%s1044 + $0x8] sm:$0xff] %v4002
          %4095 = vst [vmem:[%s1044 + $0x10] sm:$0xff] %v4017
          %4096 = vst [vmem:[%s1044 + $0x18] sm:$0xff] %v4032
          %4097 = vst [vmem:[%s1044 + $0x20] sm:$0xff] %v4047
          %4098 = vst [vmem:[%s1044 + $0x28] sm:$0xff] %v4062
          %4099 = vst [vmem:[%s1044 + $0x30] sm:$0xff] %v4077
          %4100 = vst [vmem:[%s1044 + $0x38] sm:$0xff] %v4092
        $region93: #{cnn_forward.9} parent=76 // pred_fallthru
          _
        %s4101 = sand.u32 %s152, 1
        %s4102 = sand.u32 %s152, 1
        %s4103 = smul.addr %s4102, 64
        %s4104 = scalar_lea.vmem [#allocation5], %s4103
        // Predicated region
        $region94: #{cnn_forward.9} parent=76 // pred_check
          %p4105 = pneg %p162
        $region95: #{cnn_forward.9} parent=76 // pred_check_branch
          %4107 = sbr.rel (%p4105) target = $region97
        $region96: #{cnn_forward.9} parent=76 // pred_region
          %s4108 = smul.u32 2, %s20
          %s4109 = smul.u32 4, %s21
          %s4110 = smul.addr %s4108, 8
          %s4111 = sadd.s32 %s4109, %s4110
          %s4112 = smul.addr %s4111, 8
          %s4113 = scalar_lea.vmem %s4, %s4112
          // Predicated region
          $region98: #{cnn_forward.9} parent=96 // pred_check
            _
          $region99: #{cnn_forward.9} parent=96 // pred_check_branch
            %4115 = sbr.rel (0) target = $region101
          $region100: #{cnn_forward.9} parent=96 // pred_region
            // Predicated region
            $region102: #{cnn_forward.9} parent=100 // pred_check
              _
            $region103: #{cnn_forward.9} parent=100 // pred_check_branch
              %4117 = sbr.rel (0) target = $region105
            $region104: #{cnn_forward.9} parent=100 // pred_region
              loop: start=0, step=1, limit=1
              $region106: #{cnn_forward.9} parent=104 // loop_pre_header
                _
              $region107: #{cnn_forward.9} parent=104 // loop_header
                %s4119 = sphi 0, %s4123
                %p4120 = scmp.ge.s32.totalorder %s4119, 1
                %s4124 = sphi %s4104, %s4104
                %s4125 = sphi %s4113, %s4113
              $region108: #{cnn_forward.9} parent=104 // loop_header_branch
                %4122 = sbr.rel (%p4120) target = $region112
              $region109: #{cnn_forward.9} parent=104 // loop_body
                %v4126 = vld [vmem:[%s4124] sm:$0xff]
                %4127 = vst [vmem:[%s4125] sm:$0xff] %v4126
                %v4128 = vld [vmem:[%s4124 + $0x8] sm:$0xff]
                %4129 = vst [vmem:[%s4125 + $0x8] sm:$0xff] %v4128
                %v4130 = vld [vmem:[%s4124 + $0x10] sm:$0xff]
                %4131 = vst [vmem:[%s4125 + $0x10] sm:$0xff] %v4130
                %v4132 = vld [vmem:[%s4124 + $0x18] sm:$0xff]
                %4133 = vst [vmem:[%s4125 + $0x18] sm:$0xff] %v4132
                %v4134 = vld [vmem:[%s4124 + $0x20] sm:$0xff]
                %4135 = vst [vmem:[%s4125 + $0x40] sm:$0xff] %v4134
                %v4136 = vld [vmem:[%s4124 + $0x28] sm:$0xff]
                %4137 = vst [vmem:[%s4125 + $0x48] sm:$0xff] %v4136
                %v4138 = vld [vmem:[%s4124 + $0x30] sm:$0xff]
                %4139 = vst [vmem:[%s4125 + $0x50] sm:$0xff] %v4138
                %v4140 = vld [vmem:[%s4124 + $0x38] sm:$0xff]
                %4141 = vst [vmem:[%s4125 + $0x58] sm:$0xff] %v4140
              $region110: #{cnn_forward.9} parent=104 // loop_footer
                %s4123 = sadd.s32 1, %s4119
              $region111: #{cnn_forward.9} parent=104 // loop_footer_branch
                %4118 = sbr.rel target = $region107
              $region112: #{cnn_forward.9} parent=104 // loop_exit
                _
            $region105: #{cnn_forward.9} parent=100 // pred_fallthru
              _
            // Predicated region
            $region113: #{cnn_forward.9} parent=100 // pred_check
              _
            $region114: #{cnn_forward.9} parent=100 // pred_check_branch
              %4143 = sbr.rel target = $region116
            $region115: #{cnn_forward.9} parent=100 // pred_region
              _
            $region116: #{cnn_forward.9} parent=100 // pred_fallthru
              _
          $region101: #{cnn_forward.9} parent=96 // pred_fallthru
            _
          %4144 = vnop
        $region97: #{cnn_forward.9} parent=76 // pred_fallthru
          _
      $region77: #{cnn_forward.9} parent=5 // pred_fallthru
        _
      %p4145 = scmp.le.s32.totalorder 2, %s10
      // Predicated region
      $region117: #{cnn_forward.9} parent=5 // pred_check
        %p4146 = pneg %p4145
      $region118: #{cnn_forward.9} parent=5 // pred_check_branch
        %4148 = sbr.rel (%p4146) target = $region120
      $region119: #{cnn_forward.9} parent=5 // pred_region
        %s4149 = ssub.s32 %s10, 2
        // Predicated region
        $region121: #{cnn_forward.9} parent=119 // pred_check
          %p4150 = pneg %p168
        $region122: #{cnn_forward.9} parent=119 // pred_check_branch
          %4152 = sbr.rel (%p4150) target = $region124
        $region123: #{cnn_forward.9} parent=119 // pred_region
          %s4153 = sand.u32 %s153, 1
          %s4154 = sand.u32 %s153, 1
          %s4155 = smul.addr %s4154, 64
          %s4156 = scalar_lea.vmem [#allocation5], %s4155
        $region124: #{cnn_forward.9} parent=119 // pred_fallthru
          _
      $region120: #{cnn_forward.9} parent=5 // pred_fallthru
        _
    $region6: #{cnn_forward.9} parent=1 // loop_footer
      %s14 = sadd.s32 1, %s10
    $region7: #{cnn_forward.9} parent=1 // loop_footer_branch
      %9 = sbr.rel target = $region3
    $region8: #{cnn_forward.9} parent=1 // loop_exit
      _

</llo_original>
